<compile_context>
chip_gen: v7x
topology: tpu7x:2x2x1
jax: 0.10.0
libtpu: 0.0.40
codegen_flags: <defaults>
</compile_context>

<pallas_src>
import jax
import jax.numpy as jnp
import numpy as np
from jax import lax
from jax.experimental import pallas as pl
from jax.experimental.pallas import tpu as pltpu

jax.config.update("jax_default_matmul_precision", "highest")

# ---- static problem sizes (must satisfy ((D_IN - 4)/5 - 4)/5 integer) ----
D_IN = 124
T_OUT = 8
K = 5                 # conv kernel size
POOL = 5              # max-pool window == stride
C1, C2 = 5, 10        # conv output channels
L1 = D_IN - (K - 1)   # 120
P1 = L1 // POOL       # 24
L2 = P1 - (K - 1)     # 20
P2 = L2 // POOL       # 4
FLAT = C2 * P2        # 40
HID = (FLAT - T_OUT) // 2 + T_OUT   # 24

_R1 = POOL * C1 * P1   # 600 rows of conv1 output (ordered j, c, p;  l = 5p + j)
_R2 = POOL * C2 * P2   # 200 rows of conv2 output (ordered j, c, q;  l = 5q + j)


# ---------------------------------------------------------------------------
# Fused Pallas kernel: whole forward for one batch tile (batch on lanes)
# ---------------------------------------------------------------------------
def _cnn1d_fused_kernel(x_ref, a1_ref, b1_ref, a2_ref, b2_ref,
                        w3_ref, b3_ref, w4_ref, b4_ref, o_ref):
    hp = lax.Precision.HIGHEST
    x = x_ref[...]                                              # (D_IN, TB)

    # conv1 (+bias +relu) as one MXU matmul against the structured matrix A1.
    z1 = jnp.dot(a1_ref[...], x, precision=hp,
                 preferred_element_type=jnp.float32)            # (600, TB)
    z1 = jnp.maximum(z1 + b1_ref[...], 0.0)
    # maxpool(5): max over the 5 leading row-blocks (sublane-aligned slices).
    p1 = z1[0:C1 * P1, :]
    for j in range(1, POOL):
        p1 = jnp.maximum(p1, z1[j * C1 * P1:(j + 1) * C1 * P1, :])   # (120, TB)

    # conv2 (+bias +relu) as one MXU matmul against A2.
    z2 = jnp.dot(a2_ref[...], p1, precision=hp,
                 preferred_element_type=jnp.float32)            # (200, TB)
    z2 = jnp.maximum(z2 + b2_ref[...], 0.0)
    p2 = z2[0:C2 * P2, :]
    for j in range(1, POOL):
        p2 = jnp.maximum(p2, z2[j * C2 * P2:(j + 1) * C2 * P2, :])   # (40, TB)
    # p2 rows are already channel-major (c, q) == torch's .view(B, -1).

    # fc1 + relu
    h = jnp.dot(w3_ref[...], p2, precision=hp,
                preferred_element_type=jnp.float32)             # (24, TB)
    h = jnp.maximum(h + b3_ref[...], 0.0)
    # fc2
    o_ref[...] = (jnp.dot(w4_ref[...], h, precision=hp,
                          preferred_element_type=jnp.float32)
                  + b4_ref[...])                                # (8, TB)


# ---------------------------------------------------------------------------
# One-time weight preprocessing (hoisted out of the forward pass)
# ---------------------------------------------------------------------------
def prepare_kernel_params(params):
    """Lower the PyTorch-shaped params into kernel operands (done once)."""
    w1, b1, w2, b2, wf1, bf1, wf2, bf2 = params

    # conv1 -> dense matrix A1[(j,c,p), d] = w1[c,0,k] at d = 5p + j + k
    jj, cc, pp, kk = np.meshgrid(np.arange(POOL), np.arange(C1),
                                 np.arange(P1), np.arange(K), indexing="ij")
    rows1 = (jj * C1 * P1 + cc * P1 + pp).ravel()
    cols1 = (POOL * pp + jj + kk).ravel()
    A1 = jnp.zeros((_R1, D_IN), jnp.float32)
    A1 = A1.at[rows1, cols1].set(w1[cc.ravel(), 0, kk.ravel()].astype(jnp.float32))
    B1 = jnp.broadcast_to(b1[None, :, None], (POOL, C1, P1)) \
            .reshape(-1, 1).astype(jnp.float32)

    # conv2 -> dense matrix A2[(j,c,q), (ci,p)] = w2[c,ci,k] at p = 5q + j + k
    jj, cc, qq, ci, kk = np.meshgrid(np.arange(POOL), np.arange(C2), np.arange(P2),
                                     np.arange(C1), np.arange(K), indexing="ij")
    rows2 = (jj * C2 * P2 + cc * P2 + qq).ravel()
    cols2 = (ci * P1 + POOL * qq + jj + kk).ravel()
    A2 = jnp.zeros((_R2, C1 * P1), jnp.float32)
    A2 = A2.at[rows2, cols2].set(
        w2[cc.ravel(), ci.ravel(), kk.ravel()].astype(jnp.float32))
    B2 = jnp.broadcast_to(b2[None, :, None], (POOL, C2, P2)) \
            .reshape(-1, 1).astype(jnp.float32)

    W3 = wf1.astype(jnp.float32)                    # (HID, FLAT)
    B3 = bf1.reshape(-1, 1).astype(jnp.float32)     # (HID, 1)
    W4 = wf2.astype(jnp.float32)                    # (T_OUT, HID)
    B4 = bf2.reshape(-1, 1).astype(jnp.float32)     # (T_OUT, 1)
    return (A1, B1, A2, B2, W3, B3, W4, B4)


# ---------------------------------------------------------------------------
# Forward pass
# ---------------------------------------------------------------------------
def cnn1d_forward(x, kernel_params, *, max_batch_tile=512):
    A1, B1, A2, B2, W3, B3, W4, B4 = kernel_params
    B = x.shape[0]
    x2 = x.reshape(B, -1).astype(jnp.float32)               # mirrors x.view(B, 1, -1)
    assert x2.shape[1] == D_IN

    # batch tile: multiple of 128 lanes, capped so tiles stay small on v7x VMEM.
    tb = min(max_batch_tile, 128 * pl.cdiv(B, 128))
    bp = tb * pl.cdiv(B, tb)
    # layout plumbing: pad batch and put it on the lane axis (features x batch).
    x_t = jnp.pad(x2, ((0, bp - B), (0, 0))).T               # (D_IN, bp)

    out_t = pl.pallas_call(
        _cnn1d_fused_kernel,
        out_shape=jax.ShapeDtypeStruct((T_OUT, bp), jnp.float32),
        grid_spec=pltpu.PrefetchScalarGridSpec(
            num_scalar_prefetch=0,
            grid=(bp // tb,),
            in_specs=[
                pl.BlockSpec((D_IN, tb), lambda i: (0, i)),   # x tile (batch on lanes)
                pl.BlockSpec(A1.shape, lambda i: (0, 0)),     # conv1 matrix (resident)
                pl.BlockSpec(B1.shape, lambda i: (0, 0)),
                pl.BlockSpec(A2.shape, lambda i: (0, 0)),     # conv2 matrix (resident)
                pl.BlockSpec(B2.shape, lambda i: (0, 0)),
                pl.BlockSpec(W3.shape, lambda i: (0, 0)),
                pl.BlockSpec(B3.shape, lambda i: (0, 0)),
                pl.BlockSpec(W4.shape, lambda i: (0, 0)),
                pl.BlockSpec(B4.shape, lambda i: (0, 0)),
            ],
            out_specs=pl.BlockSpec((T_OUT, tb), lambda i: (0, i)),
        ),
        compiler_params=pltpu.CompilerParams(
            dimension_semantics=("parallel",),        # batch tiles are independent
            vmem_limit_bytes=32 * 1024 * 1024,        # safe on v5e/v6e/v7x
        ),
    )(x_t, A1, B1, A2, B2, W3, B3, W4, B4)

    return out_t[:, :B].T                                    # (B, T_OUT)


# ---------------------------------------------------------------------------
# Deterministic synthetic parameters (PyTorch module shapes)
# ---------------------------------------------------------------------------
def init_params(key):
    ks = jax.random.split(key, 8)
    w1 = jax.random.normal(ks[0], (C1, 1, K), jnp.float32) * 0.3    # conv1.weight
    b1 = jax.random.normal(ks[1], (C1,), jnp.float32) * 0.1         # conv1.bias
    w2 = jax.random.normal(ks[2], (C2, C1, K), jnp.float32) * 0.2   # conv2.weight
    b2 = jax.random.normal(ks[3], (C2,), jnp.float32) * 0.1         # conv2.bias
    wf1 = jax.random.normal(ks[4], (HID, FLAT), jnp.float32) * 0.1  # fc1.weight
    bf1 = jax.random.normal(ks[5], (HID,), jnp.float32) * 0.1       # fc1.bias
    wf2 = jax.random.normal(ks[6], (T_OUT, HID), jnp.float32) * 0.1  # fc2.weight
    bf2 = jax.random.normal(ks[7], (T_OUT,), jnp.float32) * 0.1      # fc2.bias
    return (w1, b1, w2, b2, wf1, bf1, wf2, bf2)


# Pure-JAX reference (independent code path) for correctness checking.
def ref_forward(x, params):
    w1, b1, w2, b2, wf1, bf1, wf2, bf2 = params
    B = x.shape[0]
    h = x.reshape(B, 1, -1).astype(jnp.float32)
    h = lax.conv_general_dilated(h, w1, (1,), 'VALID',
                                 dimension_numbers=('NCH', 'OIH', 'NCH'))
    h = jax.nn.relu(h + b1[None, :, None])
    h = h.reshape(B, C1, P1, POOL).max(axis=-1)
    h = lax.conv_general_dilated(h, w2, (1,), 'VALID',
                                 dimension_numbers=('NCH', 'OIH', 'NCH'))
    h = jax.nn.relu(h + b2[None, :, None])
    h = h.reshape(B, C2, P2, POOL).max(axis=-1)
    f = h.reshape(B, -1)
    f = jax.nn.relu(f @ wf1.T + bf1)
    return f @ wf2.T + bf2


if __name__ == "__main__":
    key = jax.random.PRNGKey(0)
    pkey, xkey = jax.random.split(key)
    params = init_params(pkey)
    kparams = prepare_kernel_params(params)          # hoisted, done once
    x = jax.random.normal(xkey, (2, D_IN), jnp.float32)   # batch=2, D_in=124

    out = jax.block_until_ready(cnn1d_forward(x, kparams))
    ref = jax.block_until_ready(ref_forward(x, params))
    np.testing.assert_allclose(np.asarray(out), np.asarray(ref), rtol=2e-4, atol=2e-4)
    print("KERNEL_OK")
</pallas_src>

<mosaic_0001>
module attributes {stable_mosaic.version = 11 : i64} {
  func.func @_cnn1d_fused_kernel(%arg0: i32, %arg1: memref<124x128xf32, #tpu.memory_space<vmem>>, %arg2: memref<600x124xf32, #tpu.memory_space<vmem>>, %arg3: memref<600x1xf32, #tpu.memory_space<vmem>>, %arg4: memref<200x120xf32, #tpu.memory_space<vmem>>, %arg5: memref<200x1xf32, #tpu.memory_space<vmem>>, %arg6: memref<24x40xf32, #tpu.memory_space<vmem>>, %arg7: memref<24x1xf32, #tpu.memory_space<vmem>>, %arg8: memref<8x24xf32, #tpu.memory_space<vmem>>, %arg9: memref<8x1xf32, #tpu.memory_space<vmem>>, %arg10: memref<8x128xf32, #tpu.memory_space<vmem>>) attributes {dimension_semantics = [#tpu.dimension_semantics<parallel>], iteration_bounds = array<i64: 1>, scalar_prefetch = 0 : i64, scratch_operands = 0 : i64, tpu.core_type = #tpu.core_type<tc>, window_params = [{transform_indices = @transform_0, window_bounds = array<i64: 124, 128>}, {pipeline_mode = #tpu.pipeline_mode<synchronous>, transform_indices = @transform_1, window_bounds = array<i64: 600, 124>}, {pipeline_mode = #tpu.pipeline_mode<synchronous>, transform_indices = @transform_2, window_bounds = array<i64: 600, 1>}, {pipeline_mode = #tpu.pipeline_mode<synchronous>, transform_indices = @transform_3, window_bounds = array<i64: 200, 120>}, {pipeline_mode = #tpu.pipeline_mode<synchronous>, transform_indices = @transform_4, window_bounds = array<i64: 200, 1>}, {pipeline_mode = #tpu.pipeline_mode<synchronous>, transform_indices = @transform_5, window_bounds = array<i64: 24, 40>}, {pipeline_mode = #tpu.pipeline_mode<synchronous>, transform_indices = @transform_6, window_bounds = array<i64: 24, 1>}, {pipeline_mode = #tpu.pipeline_mode<synchronous>, transform_indices = @transform_7, window_bounds = array<i64: 8, 24>}, {pipeline_mode = #tpu.pipeline_mode<synchronous>, transform_indices = @transform_8, window_bounds = array<i64: 8, 1>}, {transform_indices = @transform_9, window_bounds = array<i64: 8, 128>}]} {
    %c0 = arith.constant 0 : index
    %c0_0 = arith.constant 0 : index
    %0 = vector.load %arg1[%c0, %c0_0] : memref<124x128xf32, #tpu.memory_space<vmem>>, vector<124x128xf32>
    %c0_1 = arith.constant 0 : index
    %c0_2 = arith.constant 0 : index
    %1 = vector.load %arg2[%c0_1, %c0_2] : memref<600x124xf32, #tpu.memory_space<vmem>>, vector<600x124xf32>
    %cst = arith.constant dense<0.000000e+00> : vector<600x128xf32>
    %2 = tpu.matmul %1, %0, %cst {dimension_numbers = #tpu.dot_dimension_numbers<[1], [0], [0], [1], [0, 0, 1, 1], [], []>, precision = #tpu.contract_precision<fp32>} : vector<600x124xf32>, vector<124x128xf32>, vector<600x128xf32> -> vector<600x128xf32>
    %c0_3 = arith.constant 0 : index
    %c0_4 = arith.constant 0 : index
    %3 = vector.load %arg3[%c0_3, %c0_4] : memref<600x1xf32, #tpu.memory_space<vmem>>, vector<600x1xf32>
    %4 = vector.broadcast %3 : vector<600x1xf32> to vector<600x128xf32>
    %5 = arith.addf %2, %4 : vector<600x128xf32>
    %cst_5 = arith.constant 0.000000e+00 : f32
    %6 = vector.broadcast %cst_5 : f32 to vector<600x128xf32>
    %7 = arith.maximumf %5, %6 : vector<600x128xf32>
    %8 = vector.extract_strided_slice %7 {offsets = [0, 0], sizes = [120, 128], strides = [1, 1]} : vector<600x128xf32> to vector<120x128xf32>
    %9 = vector.extract_strided_slice %7 {offsets = [120, 0], sizes = [120, 128], strides = [1, 1]} : vector<600x128xf32> to vector<120x128xf32>
    %10 = arith.maximumf %8, %9 : vector<120x128xf32>
    %11 = vector.extract_strided_slice %7 {offsets = [240, 0], sizes = [120, 128], strides = [1, 1]} : vector<600x128xf32> to vector<120x128xf32>
    %12 = arith.maximumf %10, %11 : vector<120x128xf32>
    %13 = vector.extract_strided_slice %7 {offsets = [360, 0], sizes = [120, 128], strides = [1, 1]} : vector<600x128xf32> to vector<120x128xf32>
    %14 = arith.maximumf %12, %13 : vector<120x128xf32>
    %15 = vector.extract_strided_slice %7 {offsets = [480, 0], sizes = [120, 128], strides = [1, 1]} : vector<600x128xf32> to vector<120x128xf32>
    %16 = arith.maximumf %14, %15 : vector<120x128xf32>
    %c0_6 = arith.constant 0 : index
    %c0_7 = arith.constant 0 : index
    %17 = vector.load %arg4[%c0_6, %c0_7] : memref<200x120xf32, #tpu.memory_space<vmem>>, vector<200x120xf32>
    %cst_8 = arith.constant dense<0.000000e+00> : vector<200x128xf32>
    %18 = tpu.matmul %17, %16, %cst_8 {dimension_numbers = #tpu.dot_dimension_numbers<[1], [0], [0], [1], [0, 0, 1, 1], [], []>, precision = #tpu.contract_precision<fp32>} : vector<200x120xf32>, vector<120x128xf32>, vector<200x128xf32> -> vector<200x128xf32>
    %c0_9 = arith.constant 0 : index
    %c0_10 = arith.constant 0 : index
    %19 = vector.load %arg5[%c0_9, %c0_10] : memref<200x1xf32, #tpu.memory_space<vmem>>, vector<200x1xf32>
    %20 = vector.broadcast %19 : vector<200x1xf32> to vector<200x128xf32>
    %21 = arith.addf %18, %20 : vector<200x128xf32>
    %cst_11 = arith.constant 0.000000e+00 : f32
    %22 = vector.broadcast %cst_11 : f32 to vector<200x128xf32>
    %23 = arith.maximumf %21, %22 : vector<200x128xf32>
    %24 = vector.extract_strided_slice %23 {offsets = [0, 0], sizes = [40, 128], strides = [1, 1]} : vector<200x128xf32> to vector<40x128xf32>
    %25 = vector.extract_strided_slice %23 {offsets = [40, 0], sizes = [40, 128], strides = [1, 1]} : vector<200x128xf32> to vector<40x128xf32>
    %26 = arith.maximumf %24, %25 : vector<40x128xf32>
    %27 = vector.extract_strided_slice %23 {offsets = [80, 0], sizes = [40, 128], strides = [1, 1]} : vector<200x128xf32> to vector<40x128xf32>
    %28 = arith.maximumf %26, %27 : vector<40x128xf32>
    %29 = vector.extract_strided_slice %23 {offsets = [120, 0], sizes = [40, 128], strides = [1, 1]} : vector<200x128xf32> to vector<40x128xf32>
    %30 = arith.maximumf %28, %29 : vector<40x128xf32>
    %31 = vector.extract_strided_slice %23 {offsets = [160, 0], sizes = [40, 128], strides = [1, 1]} : vector<200x128xf32> to vector<40x128xf32>
    %32 = arith.maximumf %30, %31 : vector<40x128xf32>
    %c0_12 = arith.constant 0 : index
    %c0_13 = arith.constant 0 : index
    %33 = vector.load %arg6[%c0_12, %c0_13] : memref<24x40xf32, #tpu.memory_space<vmem>>, vector<24x40xf32>
    %cst_14 = arith.constant dense<0.000000e+00> : vector<24x128xf32>
    %34 = tpu.matmul %33, %32, %cst_14 {dimension_numbers = #tpu.dot_dimension_numbers<[1], [0], [0], [1], [0, 0, 1, 1], [], []>, precision = #tpu.contract_precision<fp32>} : vector<24x40xf32>, vector<40x128xf32>, vector<24x128xf32> -> vector<24x128xf32>
    %c0_15 = arith.constant 0 : index
    %c0_16 = arith.constant 0 : index
    %35 = vector.load %arg7[%c0_15, %c0_16] : memref<24x1xf32, #tpu.memory_space<vmem>>, vector<24x1xf32>
    %36 = vector.broadcast %35 : vector<24x1xf32> to vector<24x128xf32>
    %37 = arith.addf %34, %36 : vector<24x128xf32>
    %cst_17 = arith.constant 0.000000e+00 : f32
    %38 = vector.broadcast %cst_17 : f32 to vector<24x128xf32>
    %39 = arith.maximumf %37, %38 : vector<24x128xf32>
    %c0_18 = arith.constant 0 : index
    %c0_19 = arith.constant 0 : index
    %40 = vector.load %arg8[%c0_18, %c0_19] : memref<8x24xf32, #tpu.memory_space<vmem>>, vector<8x24xf32>
    %cst_20 = arith.constant dense<0.000000e+00> : vector<8x128xf32>
    %41 = tpu.matmul %40, %39, %cst_20 {dimension_numbers = #tpu.dot_dimension_numbers<[1], [0], [0], [1], [0, 0, 1, 1], [], []>, precision = #tpu.contract_precision<fp32>} : vector<8x24xf32>, vector<24x128xf32>, vector<8x128xf32> -> vector<8x128xf32>
    %c0_21 = arith.constant 0 : index
    %c0_22 = arith.constant 0 : index
    %42 = vector.load %arg9[%c0_21, %c0_22] : memref<8x1xf32, #tpu.memory_space<vmem>>, vector<8x1xf32>
    %43 = vector.broadcast %42 : vector<8x1xf32> to vector<8x128xf32>
    %44 = arith.addf %41, %43 : vector<8x128xf32>
    %c0_23 = arith.constant 0 : index
    %c0_24 = arith.constant 0 : index
    %45 = vector.load %arg10[%c0_23, %c0_24] : memref<8x128xf32, #tpu.memory_space<vmem>>, vector<8x128xf32>
    tpu.vector_store %arg10[%c0_23, %c0_24], %44 {strides = array<i32>} : memref<8x128xf32, #tpu.memory_space<vmem>>, vector<8x128xf32>,
    return
  }
  func.func @transform_0(%arg0: i32) -> (i32, i32) {
    %c0_i32 = arith.constant 0 : i32
    %c0_i32_0 = arith.constant 0 : i32
    return %c0_i32, %arg0 : i32, i32
  }
  func.func @transform_1(%arg0: i32) -> (i32, i32) {
    %c0_i32 = arith.constant 0 : i32
    %c0_i32_0 = arith.constant 0 : i32
    %c0_i32_1 = arith.constant 0 : i32
    return %c0_i32, %c0_i32_0 : i32, i32
  }
  func.func @transform_2(%arg0: i32) -> (i32, i32) {
    %c0_i32 = arith.constant 0 : i32
    %c0_i32_0 = arith.constant 0 : i32
    %c0_i32_1 = arith.constant 0 : i32
    return %c0_i32, %c0_i32_0 : i32, i32
  }
  func.func @transform_3(%arg0: i32) -> (i32, i32) {
    %c0_i32 = arith.constant 0 : i32
    %c0_i32_0 = arith.constant 0 : i32
    %c0_i32_1 = arith.constant 0 : i32
    return %c0_i32, %c0_i32_0 : i32, i32
  }
  func.func @transform_4(%arg0: i32) -> (i32, i32) {
    %c0_i32 = arith.constant 0 : i32
    %c0_i32_0 = arith.constant 0 : i32
    %c0_i32_1 = arith.constant 0 : i32
    return %c0_i32, %c0_i32_0 : i32, i32
  }
  func.func @transform_5(%arg0: i32) -> (i32, i32) {
    %c0_i32 = arith.constant 0 : i32
    %c0_i32_0 = arith.constant 0 : i32
    %c0_i32_1 = arith.constant 0 : i32
    return %c0_i32, %c0_i32_0 : i32, i32
  }
  func.func @transform_6(%arg0: i32) -> (i32, i32) {
    %c0_i32 = arith.constant 0 : i32
    %c0_i32_0 = arith.constant 0 : i32
    %c0_i32_1 = arith.constant 0 : i32
    return %c0_i32, %c0_i32_0 : i32, i32
  }
  func.func @transform_7(%arg0: i32) -> (i32, i32) {
    %c0_i32 = arith.constant 0 : i32
    %c0_i32_0 = arith.constant 0 : i32
    %c0_i32_1 = arith.constant 0 : i32
    return %c0_i32, %c0_i32_0 : i32, i32
  }
  func.func @transform_8(%arg0: i32) -> (i32, i32) {
    %c0_i32 = arith.constant 0 : i32
    %c0_i32_0 = arith.constant 0 : i32
    %c0_i32_1 = arith.constant 0 : i32
    return %c0_i32, %c0_i32_0 : i32, i32
  }
  func.func @transform_9(%arg0: i32) -> (i32, i32) {
    %c0_i32 = arith.constant 0 : i32
    %c0_i32_0 = arith.constant 0 : i32
    return %c0_i32, %arg0 : i32, i32
  }
}

</mosaic_0001>

<llo_original>
// kernel: tpu_custom_call.1
$region0: #{tpu_custom_call.1}
  #allocation0 [shape = 'u32[]', space=smem, size = 0x4, offset = 0x4, fixed_abs, tag = 'smem constant byte address 0x4 - core index']
  #allocation1 [shape = 'u32[144,128]{1,0:T(1,128)}', space=vmem, size = 0x12000, scoped, tag = 'internal scratch']
  %s0 = inlined_call_operand.hbm [shape: f32[124,128], index: 0, kind: input, shape index: {}]
  %s1 = inlined_call_operand.vmem [shape: f32[600,124], index: 1, kind: input, shape index: {}]
  %s2 = inlined_call_operand.vmem [shape: f32[600,1], index: 2, kind: input, shape index: {}]
  %s3 = inlined_call_operand.vmem [shape: f32[200,120], index: 3, kind: input, shape index: {}]
  %s4 = inlined_call_operand.vmem [shape: f32[200,1], index: 4, kind: input, shape index: {}]
  %s5 = inlined_call_operand.vmem [shape: f32[24,40], index: 5, kind: input, shape index: {}]
  %s6 = inlined_call_operand.vmem [shape: f32[24,1], index: 6, kind: input, shape index: {}]
  %s7 = inlined_call_operand.vmem [shape: f32[8,24], index: 7, kind: input, shape index: {}]
  %s8 = inlined_call_operand.vmem [shape: f32[8,1], index: 8, kind: input, shape index: {}]
  %s9 = inlined_call_operand.hbm [shape: f32[8,128], index: 9, kind: output, shape index: {}]
  %s10 = sld [smem:[#allocation0]]
  $region50: #{tpu_custom_call.1} parent=0
    _
  %s12 = ssub.s32 1, %s10
  %s13 = scalar_select 0, %s12, %s10
  $region1: #{tpu_custom_call.1} parent=0
    #allocation2 [shape = 'u8[65536]{0}', space=vmem, size = 0x10000, scoped, tag = 'input window, operand 0, single buffered']
    #allocation3 [shape = 's32[1]{0}', space=sflag, size = 0x4, scoped, tag = 'scoped memory for tpu_custom_call.1']
    #allocation4 [shape = 's32[1]{0}', space=sflag, size = 0x4, scoped, tag = 'scoped memory for tpu_custom_call.1']
    #allocation5 [shape = 'u8[4096]{0}', space=vmem, size = 0x1000, scoped, tag = 'output window, operand 0, single buffered']
    %14 = vsyncpa [#allocation3], 0
    %15 = vsyncpa [#allocation4], 0
    // Predicated region
    $region2: #{tpu_custom_call.1} parent=1 // pred_check
      _
    $region3: #{tpu_custom_call.1} parent=1 // pred_check_branch
      %17 = sbr.rel (0) target = $region5
    $region4: #{tpu_custom_call.1} parent=1 // pred_region
      %s19 = ssub.s32 2048, 2048
      %20 = vsyncadd [#allocation3], %s19
      %s21 = sshll.u32 [#allocation2], 4
      %s22 = int_to_ptr.vmem [resolvable:$true] %s21
      %27 = dma.hbm_to_vmem [thread:$0]  %s0, 2048, %s22, [#allocation3], 128, 128, 8
    $region5: #{tpu_custom_call.1} parent=1 // pred_fallthru
      _
    // Predicated region
    $region6: #{tpu_custom_call.1} parent=1 // pred_check
      _
    $region7: #{tpu_custom_call.1} parent=1 // pred_check_branch
      %29 = sbr.rel (0) target = $region9
    $region8: #{tpu_custom_call.1} parent=1 // pred_region
      _
    $region9: #{tpu_custom_call.1} parent=1 // pred_fallthru
      _
    // Predicated region
    $region10: #{tpu_custom_call.1} parent=1 // pred_check
      _
    $region11: #{tpu_custom_call.1} parent=1 // pred_check_branch
      %31 = sbr.rel (0) target = $region13
    $region12: #{tpu_custom_call.1} parent=1 // pred_region
      _
    $region13: #{tpu_custom_call.1} parent=1 // pred_fallthru
      _
    // Predicated region
    $region14: #{tpu_custom_call.1} parent=1 // pred_check
      _
    $region15: #{tpu_custom_call.1} parent=1 // pred_check_branch
      %33 = sbr.rel (0) target = $region17
    $region16: #{tpu_custom_call.1} parent=1 // pred_region
      _
    $region17: #{tpu_custom_call.1} parent=1 // pred_fallthru
      _
    // Predicated region
    $region18: #{tpu_custom_call.1} parent=1 // pred_check
      _
    $region19: #{tpu_custom_call.1} parent=1 // pred_check_branch
      %35 = sbr.rel (0) target = $region21
    $region20: #{tpu_custom_call.1} parent=1 // pred_region
      _
    $region21: #{tpu_custom_call.1} parent=1 // pred_fallthru
      _
    // Predicated region
    $region22: #{tpu_custom_call.1} parent=1 // pred_check
      _
    $region23: #{tpu_custom_call.1} parent=1 // pred_check_branch
      %37 = sbr.rel (0) target = $region25
    $region24: #{tpu_custom_call.1} parent=1 // pred_region
      _
    $region25: #{tpu_custom_call.1} parent=1 // pred_fallthru
      _
    // Predicated region
    $region26: #{tpu_custom_call.1} parent=1 // pred_check
      _
    $region27: #{tpu_custom_call.1} parent=1 // pred_check_branch
      %39 = sbr.rel (0) target = $region29
    $region28: #{tpu_custom_call.1} parent=1 // pred_region
      _
    $region29: #{tpu_custom_call.1} parent=1 // pred_fallthru
      _
    // Predicated region
    $region30: #{tpu_custom_call.1} parent=1 // pred_check
      _
    $region31: #{tpu_custom_call.1} parent=1 // pred_check_branch
      %41 = sbr.rel (0) target = $region33
    $region32: #{tpu_custom_call.1} parent=1 // pred_region
      _
    $region33: #{tpu_custom_call.1} parent=1 // pred_fallthru
      _
    // Predicated region
    $region34: #{tpu_custom_call.1} parent=1 // pred_check
      _
    $region35: #{tpu_custom_call.1} parent=1 // pred_check_branch
      %43 = sbr.rel (0) target = $region37
    $region36: #{tpu_custom_call.1} parent=1 // pred_region
      _
    $region37: #{tpu_custom_call.1} parent=1 // pred_fallthru
      _
    // Predicated region
    $region38: #{tpu_custom_call.1} parent=1 // pred_check
      _
    $region39: #{tpu_custom_call.1} parent=1 // pred_check_branch
      %45 = sbr.rel (0) target = $region41
    $region40: #{tpu_custom_call.1} parent=1 // pred_region
      %46 = dma.done [#allocation3], 2048
    $region41: #{tpu_custom_call.1} parent=1 // pred_fallthru
      _
    %v47 = vld [vmem:[#allocation2] sm:$0xff]
    %v48 = vld [vmem:[#allocation2 + $0x8] sm:$0xff]
    %v49 = vld [vmem:[#allocation2 + $0x10] sm:$0xff]
    %v50 = vld [vmem:[#allocation2 + $0x18] sm:$0xff]
    %v51 = vld [vmem:[#allocation2 + $0x20] sm:$0xff]
    %v52 = vld [vmem:[#allocation2 + $0x28] sm:$0xff]
    %v53 = vld [vmem:[#allocation2 + $0x30] sm:$0xff]
    %v54 = vld [vmem:[#allocation2 + $0x38] sm:$0xff]
    %v55 = vld [vmem:[#allocation2 + $0x40] sm:$0xff]
    %v56 = vld [vmem:[#allocation2 + $0x48] sm:$0xff]
    %v57 = vld [vmem:[#allocation2 + $0x50] sm:$0xff]
    %v58 = vld [vmem:[#allocation2 + $0x58] sm:$0xff]
    %v59 = vld [vmem:[#allocation2 + $0x60] sm:$0xff]
    %v60 = vld [vmem:[#allocation2 + $0x68] sm:$0xff]
    %v61 = vld [vmem:[#allocation2 + $0x70] sm:$0xff]
    %v62 = vld [vmem:[#allocation2 + $0x78] sm:$0xf]
    %v63 = vld [vmem:[%s1] sm:$0xff]
    %v64 = vld [vmem:[%s1 + $0x8] sm:$0xff]
    %v65 = vld [vmem:[%s1 + $0x10] sm:$0xff]
    %v66 = vld [vmem:[%s1 + $0x18] sm:$0xff]
    %v67 = vld [vmem:[%s1 + $0x20] sm:$0xff]
    %v68 = vld [vmem:[%s1 + $0x28] sm:$0xff]
    %v69 = vld [vmem:[%s1 + $0x30] sm:$0xff]
    %v70 = vld [vmem:[%s1 + $0x38] sm:$0xff]
    %v71 = vld [vmem:[%s1 + $0x40] sm:$0xff]
    %v72 = vld [vmem:[%s1 + $0x48] sm:$0xff]
    %v73 = vld [vmem:[%s1 + $0x50] sm:$0xff]
    %v74 = vld [vmem:[%s1 + $0x58] sm:$0xff]
    %v75 = vld [vmem:[%s1 + $0x60] sm:$0xff]
    %v76 = vld [vmem:[%s1 + $0x68] sm:$0xff]
    %v77 = vld [vmem:[%s1 + $0x70] sm:$0xff]
    %v78 = vld [vmem:[%s1 + $0x78] sm:$0xff]
    %v79 = vld [vmem:[%s1 + $0x80] sm:$0xff]
    %v80 = vld [vmem:[%s1 + $0x88] sm:$0xff]
    %v81 = vld [vmem:[%s1 + $0x90] sm:$0xff]
    %v82 = vld [vmem:[%s1 + $0x98] sm:$0xff]
    %v83 = vld [vmem:[%s1 + $0xa0] sm:$0xff]
    %v84 = vld [vmem:[%s1 + $0xa8] sm:$0xff]
    %v85 = vld [vmem:[%s1 + $0xb0] sm:$0xff]
    %v86 = vld [vmem:[%s1 + $0xb8] sm:$0xff]
    %v87 = vld [vmem:[%s1 + $0xc0] sm:$0xff]
    %v88 = vld [vmem:[%s1 + $0xc8] sm:$0xff]
    %v89 = vld [vmem:[%s1 + $0xd0] sm:$0xff]
    %v90 = vld [vmem:[%s1 + $0xd8] sm:$0xff]
    %v91 = vld [vmem:[%s1 + $0xe0] sm:$0xff]
    %v92 = vld [vmem:[%s1 + $0xe8] sm:$0xff]
    %v93 = vld [vmem:[%s1 + $0xf0] sm:$0xff]
    %v94 = vld [vmem:[%s1 + $0xf8] sm:$0xff]
    %v95 = vld [vmem:[%s1 + $0x100] sm:$0xff]
    %v96 = vld [vmem:[%s1 + $0x108] sm:$0xff]
    %v97 = vld [vmem:[%s1 + $0x110] sm:$0xff]
    %v98 = vld [vmem:[%s1 + $0x118] sm:$0xff]
    %v99 = vld [vmem:[%s1 + $0x120] sm:$0xff]
    %v100 = vld [vmem:[%s1 + $0x128] sm:$0xff]
    %v101 = vld [vmem:[%s1 + $0x130] sm:$0xff]
    %v102 = vld [vmem:[%s1 + $0x138] sm:$0xff]
    %v103 = vld [vmem:[%s1 + $0x140] sm:$0xff]
    %v104 = vld [vmem:[%s1 + $0x148] sm:$0xff]
    %v105 = vld [vmem:[%s1 + $0x150] sm:$0xff]
    %v106 = vld [vmem:[%s1 + $0x158] sm:$0xff]
    %v107 = vld [vmem:[%s1 + $0x160] sm:$0xff]
    %v108 = vld [vmem:[%s1 + $0x168] sm:$0xff]
    %v109 = vld [vmem:[%s1 + $0x170] sm:$0xff]
    %v110 = vld [vmem:[%s1 + $0x178] sm:$0xff]
    %v111 = vld [vmem:[%s1 + $0x180] sm:$0xff]
    %v112 = vld [vmem:[%s1 + $0x188] sm:$0xff]
    %v113 = vld [vmem:[%s1 + $0x190] sm:$0xff]
    %v114 = vld [vmem:[%s1 + $0x198] sm:$0xff]
    %v115 = vld [vmem:[%s1 + $0x1a0] sm:$0xff]
    %v116 = vld [vmem:[%s1 + $0x1a8] sm:$0xff]
    %v117 = vld [vmem:[%s1 + $0x1b0] sm:$0xff]
    %v118 = vld [vmem:[%s1 + $0x1b8] sm:$0xff]
    %v119 = vld [vmem:[%s1 + $0x1c0] sm:$0xff]
    %v120 = vld [vmem:[%s1 + $0x1c8] sm:$0xff]
    %v121 = vld [vmem:[%s1 + $0x1d0] sm:$0xff]
    %v122 = vld [vmem:[%s1 + $0x1d8] sm:$0xff]
    %v123 = vld [vmem:[%s1 + $0x1e0] sm:$0xff]
    %v124 = vld [vmem:[%s1 + $0x1e8] sm:$0xff]
    %v125 = vld [vmem:[%s1 + $0x1f0] sm:$0xff]
    %v126 = vld [vmem:[%s1 + $0x1f8] sm:$0xff]
    %v127 = vld [vmem:[%s1 + $0x200] sm:$0xff]
    %v128 = vld [vmem:[%s1 + $0x208] sm:$0xff]
    %v129 = vld [vmem:[%s1 + $0x210] sm:$0xff]
    %v130 = vld [vmem:[%s1 + $0x218] sm:$0xff]
    %v131 = vld [vmem:[%s1 + $0x220] sm:$0xff]
    %v132 = vld [vmem:[%s1 + $0x228] sm:$0xff]
    %v133 = vld [vmem:[%s1 + $0x230] sm:$0xff]
    %v134 = vld [vmem:[%s1 + $0x238] sm:$0xff]
    %v135 = vld [vmem:[%s1 + $0x240] sm:$0xff]
    %v136 = vld [vmem:[%s1 + $0x248] sm:$0xff]
    %v137 = vld [vmem:[%s1 + $0x250] sm:$0xff]
    %v138 = vld [vmem:[%s2] sm:$0xff]
    %v139 = vld [vmem:[%s2 + $0x8] sm:$0xff]
    %v140 = vld [vmem:[%s2 + $0x10] sm:$0xff]
    %v141 = vld [vmem:[%s2 + $0x18] sm:$0xff]
    %v142 = vld [vmem:[%s2 + $0x20] sm:$0xff]
    %v143 = vld [vmem:[%s2 + $0x28] sm:$0xff]
    %v144 = vld [vmem:[%s2 + $0x30] sm:$0xff]
    %v145 = vld [vmem:[%s2 + $0x38] sm:$0xff]
    %v146 = vld [vmem:[%s2 + $0x40] sm:$0xff]
    %v147 = vld [vmem:[%s2 + $0x48] sm:$0xff]
    %v148 = vld [vmem:[%s2 + $0x50] sm:$0xff]
    %v149 = vld [vmem:[%s2 + $0x58] sm:$0xff]
    %v150 = vld [vmem:[%s2 + $0x60] sm:$0xff]
    %v151 = vld [vmem:[%s2 + $0x68] sm:$0xff]
    %v152 = vld [vmem:[%s2 + $0x70] sm:$0xff]
    %v153 = vld [vmem:[%s2 + $0x78] sm:$0xff]
    %v154 = vld [vmem:[%s2 + $0x80] sm:$0xff]
    %v155 = vld [vmem:[%s2 + $0x88] sm:$0xff]
    %v156 = vld [vmem:[%s2 + $0x90] sm:$0xff]
    %v157 = vld [vmem:[%s2 + $0x98] sm:$0xff]
    %v158 = vld [vmem:[%s2 + $0xa0] sm:$0xff]
    %v159 = vld [vmem:[%s2 + $0xa8] sm:$0xff]
    %v160 = vld [vmem:[%s2 + $0xb0] sm:$0xff]
    %v161 = vld [vmem:[%s2 + $0xb8] sm:$0xff]
    %v162 = vld [vmem:[%s2 + $0xc0] sm:$0xff]
    %v163 = vld [vmem:[%s2 + $0xc8] sm:$0xff]
    %v164 = vld [vmem:[%s2 + $0xd0] sm:$0xff]
    %v165 = vld [vmem:[%s2 + $0xd8] sm:$0xff]
    %v166 = vld [vmem:[%s2 + $0xe0] sm:$0xff]
    %v167 = vld [vmem:[%s2 + $0xe8] sm:$0xff]
    %v168 = vld [vmem:[%s2 + $0xf0] sm:$0xff]
    %v169 = vld [vmem:[%s2 + $0xf8] sm:$0xff]
    %v170 = vld [vmem:[%s2 + $0x100] sm:$0xff]
    %v171 = vld [vmem:[%s2 + $0x108] sm:$0xff]
    %v172 = vld [vmem:[%s2 + $0x110] sm:$0xff]
    %v173 = vld [vmem:[%s2 + $0x118] sm:$0xff]
    %v174 = vld [vmem:[%s2 + $0x120] sm:$0xff]
    %v175 = vld [vmem:[%s2 + $0x128] sm:$0xff]
    %v176 = vld [vmem:[%s2 + $0x130] sm:$0xff]
    %v177 = vld [vmem:[%s2 + $0x138] sm:$0xff]
    %v178 = vld [vmem:[%s2 + $0x140] sm:$0xff]
    %v179 = vld [vmem:[%s2 + $0x148] sm:$0xff]
    %v180 = vld [vmem:[%s2 + $0x150] sm:$0xff]
    %v181 = vld [vmem:[%s2 + $0x158] sm:$0xff]
    %v182 = vld [vmem:[%s2 + $0x160] sm:$0xff]
    %v183 = vld [vmem:[%s2 + $0x168] sm:$0xff]
    %v184 = vld [vmem:[%s2 + $0x170] sm:$0xff]
    %v185 = vld [vmem:[%s2 + $0x178] sm:$0xff]
    %v186 = vld [vmem:[%s2 + $0x180] sm:$0xff]
    %v187 = vld [vmem:[%s2 + $0x188] sm:$0xff]
    %v188 = vld [vmem:[%s2 + $0x190] sm:$0xff]
    %v189 = vld [vmem:[%s2 + $0x198] sm:$0xff]
    %v190 = vld [vmem:[%s2 + $0x1a0] sm:$0xff]
    %v191 = vld [vmem:[%s2 + $0x1a8] sm:$0xff]
    %v192 = vld [vmem:[%s2 + $0x1b0] sm:$0xff]
    %v193 = vld [vmem:[%s2 + $0x1b8] sm:$0xff]
    %v194 = vld [vmem:[%s2 + $0x1c0] sm:$0xff]
    %v195 = vld [vmem:[%s2 + $0x1c8] sm:$0xff]
    %v196 = vld [vmem:[%s2 + $0x1d0] sm:$0xff]
    %v197 = vld [vmem:[%s2 + $0x1d8] sm:$0xff]
    %v198 = vld [vmem:[%s2 + $0x1e0] sm:$0xff]
    %v199 = vld [vmem:[%s2 + $0x1e8] sm:$0xff]
    %v200 = vld [vmem:[%s2 + $0x1f0] sm:$0xff]
    %v201 = vld [vmem:[%s2 + $0x1f8] sm:$0xff]
    %v202 = vld [vmem:[%s2 + $0x200] sm:$0xff]
    %v203 = vld [vmem:[%s2 + $0x208] sm:$0xff]
    %v204 = vld [vmem:[%s2 + $0x210] sm:$0xff]
    %v205 = vld [vmem:[%s2 + $0x218] sm:$0xff]
    %v206 = vld [vmem:[%s2 + $0x220] sm:$0xff]
    %v207 = vld [vmem:[%s2 + $0x228] sm:$0xff]
    %v208 = vld [vmem:[%s2 + $0x230] sm:$0xff]
    %v209 = vld [vmem:[%s2 + $0x238] sm:$0xff]
    %v210 = vld [vmem:[%s2 + $0x240] sm:$0xff]
    %v211 = vld [vmem:[%s2 + $0x248] sm:$0xff]
    %v212 = vld [vmem:[%s2 + $0x250] sm:$0xff]
    %214 = vset.pattern.permute.xlu0 0
    %215 = vperm.xlu0 %214, %v138
    %v216 = vpop.permute.xlu0 %215
    %219 = vset.pattern.permute.xlu0 0
    %220 = vperm.xlu0 %219, %v139
    %v221 = vpop.permute.xlu0 %220
    %224 = vset.pattern.permute.xlu0 0
    %225 = vperm.xlu0 %224, %v140
    %v226 = vpop.permute.xlu0 %225
    %229 = vset.pattern.permute.xlu0 0
    %230 = vperm.xlu0 %229, %v141
    %v231 = vpop.permute.xlu0 %230
    %234 = vset.pattern.permute.xlu0 0
    %235 = vperm.xlu0 %234, %v142
    %v236 = vpop.permute.xlu0 %235
    %239 = vset.pattern.permute.xlu0 0
    %240 = vperm.xlu0 %239, %v143
    %v241 = vpop.permute.xlu0 %240
    %244 = vset.pattern.permute.xlu0 0
    %245 = vperm.xlu0 %244, %v144
    %v246 = vpop.permute.xlu0 %245
    %249 = vset.pattern.permute.xlu0 0
    %250 = vperm.xlu0 %249, %v145
    %v251 = vpop.permute.xlu0 %250
    %254 = vset.pattern.permute.xlu0 0
    %255 = vperm.xlu0 %254, %v146
    %v256 = vpop.permute.xlu0 %255
    %259 = vset.pattern.permute.xlu0 0
    %260 = vperm.xlu0 %259, %v147
    %v261 = vpop.permute.xlu0 %260
    %264 = vset.pattern.permute.xlu0 0
    %265 = vperm.xlu0 %264, %v148
    %v266 = vpop.permute.xlu0 %265
    %269 = vset.pattern.permute.xlu0 0
    %270 = vperm.xlu0 %269, %v149
    %v271 = vpop.permute.xlu0 %270
    %274 = vset.pattern.permute.xlu0 0
    %275 = vperm.xlu0 %274, %v150
    %v276 = vpop.permute.xlu0 %275
    %279 = vset.pattern.permute.xlu0 0
    %280 = vperm.xlu0 %279, %v151
    %v281 = vpop.permute.xlu0 %280
    %284 = vset.pattern.permute.xlu0 0
    %285 = vperm.xlu0 %284, %v152
    %v286 = vpop.permute.xlu0 %285
    %289 = vset.pattern.permute.xlu0 0
    %290 = vperm.xlu0 %289, %v153
    %v291 = vpop.permute.xlu0 %290
    %294 = vset.pattern.permute.xlu0 0
    %295 = vperm.xlu0 %294, %v154
    %v296 = vpop.permute.xlu0 %295
    %299 = vset.pattern.permute.xlu0 0
    %300 = vperm.xlu0 %299, %v155
    %v301 = vpop.permute.xlu0 %300
    %304 = vset.pattern.permute.xlu0 0
    %305 = vperm.xlu0 %304, %v156
    %v306 = vpop.permute.xlu0 %305
    %309 = vset.pattern.permute.xlu0 0
    %310 = vperm.xlu0 %309, %v157
    %v311 = vpop.permute.xlu0 %310
    %314 = vset.pattern.permute.xlu0 0
    %315 = vperm.xlu0 %314, %v158
    %v316 = vpop.permute.xlu0 %315
    %319 = vset.pattern.permute.xlu0 0
    %320 = vperm.xlu0 %319, %v159
    %v321 = vpop.permute.xlu0 %320
    %324 = vset.pattern.permute.xlu0 0
    %325 = vperm.xlu0 %324, %v160
    %v326 = vpop.permute.xlu0 %325
    %329 = vset.pattern.permute.xlu0 0
    %330 = vperm.xlu0 %329, %v161
    %v331 = vpop.permute.xlu0 %330
    %334 = vset.pattern.permute.xlu0 0
    %335 = vperm.xlu0 %334, %v162
    %v336 = vpop.permute.xlu0 %335
    %339 = vset.pattern.permute.xlu0 0
    %340 = vperm.xlu0 %339, %v163
    %v341 = vpop.permute.xlu0 %340
    %344 = vset.pattern.permute.xlu0 0
    %345 = vperm.xlu0 %344, %v164
    %v346 = vpop.permute.xlu0 %345
    %349 = vset.pattern.permute.xlu0 0
    %350 = vperm.xlu0 %349, %v165
    %v351 = vpop.permute.xlu0 %350
    %354 = vset.pattern.permute.xlu0 0
    %355 = vperm.xlu0 %354, %v166
    %v356 = vpop.permute.xlu0 %355
    %359 = vset.pattern.permute.xlu0 0
    %360 = vperm.xlu0 %359, %v167
    %v361 = vpop.permute.xlu0 %360
    %364 = vset.pattern.permute.xlu0 0
    %365 = vperm.xlu0 %364, %v168
    %v366 = vpop.permute.xlu0 %365
    %369 = vset.pattern.permute.xlu0 0
    %370 = vperm.xlu0 %369, %v169
    %v371 = vpop.permute.xlu0 %370
    %374 = vset.pattern.permute.xlu0 0
    %375 = vperm.xlu0 %374, %v170
    %v376 = vpop.permute.xlu0 %375
    %379 = vset.pattern.permute.xlu0 0
    %380 = vperm.xlu0 %379, %v171
    %v381 = vpop.permute.xlu0 %380
    %384 = vset.pattern.permute.xlu0 0
    %385 = vperm.xlu0 %384, %v172
    %v386 = vpop.permute.xlu0 %385
    %389 = vset.pattern.permute.xlu0 0
    %390 = vperm.xlu0 %389, %v173
    %v391 = vpop.permute.xlu0 %390
    %394 = vset.pattern.permute.xlu0 0
    %395 = vperm.xlu0 %394, %v174
    %v396 = vpop.permute.xlu0 %395
    %399 = vset.pattern.permute.xlu0 0
    %400 = vperm.xlu0 %399, %v175
    %v401 = vpop.permute.xlu0 %400
    %404 = vset.pattern.permute.xlu0 0
    %405 = vperm.xlu0 %404, %v176
    %v406 = vpop.permute.xlu0 %405
    %409 = vset.pattern.permute.xlu0 0
    %410 = vperm.xlu0 %409, %v177
    %v411 = vpop.permute.xlu0 %410
    %414 = vset.pattern.permute.xlu0 0
    %415 = vperm.xlu0 %414, %v178
    %v416 = vpop.permute.xlu0 %415
    %419 = vset.pattern.permute.xlu0 0
    %420 = vperm.xlu0 %419, %v179
    %v421 = vpop.permute.xlu0 %420
    %424 = vset.pattern.permute.xlu0 0
    %425 = vperm.xlu0 %424, %v180
    %v426 = vpop.permute.xlu0 %425
    %429 = vset.pattern.permute.xlu0 0
    %430 = vperm.xlu0 %429, %v181
    %v431 = vpop.permute.xlu0 %430
    %434 = vset.pattern.permute.xlu0 0
    %435 = vperm.xlu0 %434, %v182
    %v436 = vpop.permute.xlu0 %435
    %439 = vset.pattern.permute.xlu0 0
    %440 = vperm.xlu0 %439, %v183
    %v441 = vpop.permute.xlu0 %440
    %444 = vset.pattern.permute.xlu0 0
    %445 = vperm.xlu0 %444, %v184
    %v446 = vpop.permute.xlu0 %445
    %449 = vset.pattern.permute.xlu0 0
    %450 = vperm.xlu0 %449, %v185
    %v451 = vpop.permute.xlu0 %450
    %454 = vset.pattern.permute.xlu0 0
    %455 = vperm.xlu0 %454, %v186
    %v456 = vpop.permute.xlu0 %455
    %459 = vset.pattern.permute.xlu0 0
    %460 = vperm.xlu0 %459, %v187
    %v461 = vpop.permute.xlu0 %460
    %464 = vset.pattern.permute.xlu0 0
    %465 = vperm.xlu0 %464, %v188
    %v466 = vpop.permute.xlu0 %465
    %469 = vset.pattern.permute.xlu0 0
    %470 = vperm.xlu0 %469, %v189
    %v471 = vpop.permute.xlu0 %470
    %474 = vset.pattern.permute.xlu0 0
    %475 = vperm.xlu0 %474, %v190
    %v476 = vpop.permute.xlu0 %475
    %479 = vset.pattern.permute.xlu0 0
    %480 = vperm.xlu0 %479, %v191
    %v481 = vpop.permute.xlu0 %480
    %484 = vset.pattern.permute.xlu0 0
    %485 = vperm.xlu0 %484, %v192
    %v486 = vpop.permute.xlu0 %485
    %489 = vset.pattern.permute.xlu0 0
    %490 = vperm.xlu0 %489, %v193
    %v491 = vpop.permute.xlu0 %490
    %494 = vset.pattern.permute.xlu0 0
    %495 = vperm.xlu0 %494, %v194
    %v496 = vpop.permute.xlu0 %495
    %499 = vset.pattern.permute.xlu0 0
    %500 = vperm.xlu0 %499, %v195
    %v501 = vpop.permute.xlu0 %500
    %504 = vset.pattern.permute.xlu0 0
    %505 = vperm.xlu0 %504, %v196
    %v506 = vpop.permute.xlu0 %505
    %509 = vset.pattern.permute.xlu0 0
    %510 = vperm.xlu0 %509, %v197
    %v511 = vpop.permute.xlu0 %510
    %514 = vset.pattern.permute.xlu0 0
    %515 = vperm.xlu0 %514, %v198
    %v516 = vpop.permute.xlu0 %515
    %519 = vset.pattern.permute.xlu0 0
    %520 = vperm.xlu0 %519, %v199
    %v521 = vpop.permute.xlu0 %520
    %524 = vset.pattern.permute.xlu0 0
    %525 = vperm.xlu0 %524, %v200
    %v526 = vpop.permute.xlu0 %525
    %529 = vset.pattern.permute.xlu0 0
    %530 = vperm.xlu0 %529, %v201
    %v531 = vpop.permute.xlu0 %530
    %534 = vset.pattern.permute.xlu0 0
    %535 = vperm.xlu0 %534, %v202
    %v536 = vpop.permute.xlu0 %535
    %539 = vset.pattern.permute.xlu0 0
    %540 = vperm.xlu0 %539, %v203
    %v541 = vpop.permute.xlu0 %540
    %544 = vset.pattern.permute.xlu0 0
    %545 = vperm.xlu0 %544, %v204
    %v546 = vpop.permute.xlu0 %545
    %549 = vset.pattern.permute.xlu0 0
    %550 = vperm.xlu0 %549, %v205
    %v551 = vpop.permute.xlu0 %550
    %554 = vset.pattern.permute.xlu0 0
    %555 = vperm.xlu0 %554, %v206
    %v556 = vpop.permute.xlu0 %555
    %559 = vset.pattern.permute.xlu0 0
    %560 = vperm.xlu0 %559, %v207
    %v561 = vpop.permute.xlu0 %560
    %564 = vset.pattern.permute.xlu0 0
    %565 = vperm.xlu0 %564, %v208
    %v566 = vpop.permute.xlu0 %565
    %569 = vset.pattern.permute.xlu0 0
    %570 = vperm.xlu0 %569, %v209
    %v571 = vpop.permute.xlu0 %570
    %574 = vset.pattern.permute.xlu0 0
    %575 = vperm.xlu0 %574, %v210
    %v576 = vpop.permute.xlu0 %575
    %579 = vset.pattern.permute.xlu0 0
    %580 = vperm.xlu0 %579, %v211
    %v581 = vpop.permute.xlu0 %580
    %584 = vset.pattern.permute.xlu0 0
    %585 = vperm.xlu0 %584, %v212
    %v586 = vpop.permute.xlu0 %585
    %vm588 = vcmask 1014784
    %v590 = vsel %vm588, %v63, 0
    %v593 = vsel %vm588, %v64, 0
    %v596 = vsel %vm588, %v65, 0
    %v599 = vsel %vm588, %v66, 0
    %v602 = vsel %vm588, %v67, 0
    %v605 = vsel %vm588, %v68, 0
    %v608 = vsel %vm588, %v69, 0
    %v611 = vsel %vm588, %v70, 0
    %v614 = vsel %vm588, %v71, 0
    %v617 = vsel %vm588, %v72, 0
    %v620 = vsel %vm588, %v73, 0
    %v623 = vsel %vm588, %v74, 0
    %v626 = vsel %vm588, %v75, 0
    %v629 = vsel %vm588, %v76, 0
    %v632 = vsel %vm588, %v77, 0
    %v635 = vsel %vm588, %v78, 0
    %v638 = vsel %vm588, %v79, 0
    %v641 = vsel %vm588, %v80, 0
    %v644 = vsel %vm588, %v81, 0
    %v647 = vsel %vm588, %v82, 0
    %v650 = vsel %vm588, %v83, 0
    %v653 = vsel %vm588, %v84, 0
    %v656 = vsel %vm588, %v85, 0
    %v659 = vsel %vm588, %v86, 0
    %v662 = vsel %vm588, %v87, 0
    %v665 = vsel %vm588, %v88, 0
    %v668 = vsel %vm588, %v89, 0
    %v671 = vsel %vm588, %v90, 0
    %v674 = vsel %vm588, %v91, 0
    %v677 = vsel %vm588, %v92, 0
    %v680 = vsel %vm588, %v93, 0
    %v683 = vsel %vm588, %v94, 0
    %v686 = vsel %vm588, %v95, 0
    %v689 = vsel %vm588, %v96, 0
    %v692 = vsel %vm588, %v97, 0
    %v695 = vsel %vm588, %v98, 0
    %v698 = vsel %vm588, %v99, 0
    %v701 = vsel %vm588, %v100, 0
    %v704 = vsel %vm588, %v101, 0
    %v707 = vsel %vm588, %v102, 0
    %v710 = vsel %vm588, %v103, 0
    %v713 = vsel %vm588, %v104, 0
    %v716 = vsel %vm588, %v105, 0
    %v719 = vsel %vm588, %v106, 0
    %v722 = vsel %vm588, %v107, 0
    %v725 = vsel %vm588, %v108, 0
    %v728 = vsel %vm588, %v109, 0
    %v731 = vsel %vm588, %v110, 0
    %v734 = vsel %vm588, %v111, 0
    %v737 = vsel %vm588, %v112, 0
    %v740 = vsel %vm588, %v113, 0
    %v743 = vsel %vm588, %v114, 0
    %v746 = vsel %vm588, %v115, 0
    %v749 = vsel %vm588, %v116, 0
    %v752 = vsel %vm588, %v117, 0
    %v755 = vsel %vm588, %v118, 0
    %v758 = vsel %vm588, %v119, 0
    %v761 = vsel %vm588, %v120, 0
    %v764 = vsel %vm588, %v121, 0
    %v767 = vsel %vm588, %v122, 0
    %v770 = vsel %vm588, %v123, 0
    %v773 = vsel %vm588, %v124, 0
    %v776 = vsel %vm588, %v125, 0
    %v779 = vsel %vm588, %v126, 0
    %v782 = vsel %vm588, %v127, 0
    %v785 = vsel %vm588, %v128, 0
    %v788 = vsel %vm588, %v129, 0
    %v791 = vsel %vm588, %v130, 0
    %v794 = vsel %vm588, %v131, 0
    %v797 = vsel %vm588, %v132, 0
    %v800 = vsel %vm588, %v133, 0
    %v803 = vsel %vm588, %v134, 0
    %v806 = vsel %vm588, %v135, 0
    %v809 = vsel %vm588, %v136, 0
    %v812 = vsel %vm588, %v137, 0
    %vm814 = vcmask 1043456
    %v816 = vsel %vm814, %v62, 0
    %818 = vmatprep.subr.mxu0 0.0
    %v819 = vand.u32 %v47, 4294901760
    %820 = vmatpush1.msra.mxu0 %v819
    %821 = vmatprep.subr.mxu0 0.0
    %v822 = vand.u32 %v48, 4294901760
    %823 = vmatpush1.msra.mxu0 %v822
    %824 = vmatprep.subr.mxu0 0.0
    %v825 = vand.u32 %v49, 4294901760
    %826 = vmatpush1.msra.mxu0 %v825
    %827 = vmatprep.subr.mxu0 0.0
    %v828 = vand.u32 %v50, 4294901760
    %829 = vmatpush1.msra.mxu0 %v828
    %830 = vmatprep.subr.mxu0 0.0
    %v831 = vand.u32 %v51, 4294901760
    %832 = vmatpush1.msra.mxu0 %v831
    %833 = vmatprep.subr.mxu0 0.0
    %v834 = vand.u32 %v52, 4294901760
    %835 = vmatpush1.msra.mxu0 %v834
    %836 = vmatprep.subr.mxu0 0.0
    %v837 = vand.u32 %v53, 4294901760
    %838 = vmatpush1.msra.mxu0 %v837
    %839 = vmatprep.subr.mxu0 0.0
    %v840 = vand.u32 %v54, 4294901760
    %841 = vmatpush1.msra.mxu0 %v840
    %842 = vmatprep.subr.mxu0 0.0
    %v843 = vand.u32 %v55, 4294901760
    %844 = vmatpush1.msra.mxu0 %v843
    %845 = vmatprep.subr.mxu0 0.0
    %v846 = vand.u32 %v56, 4294901760
    %847 = vmatpush1.msra.mxu0 %v846
    %848 = vmatprep.subr.mxu0 0.0
    %v849 = vand.u32 %v57, 4294901760
    %850 = vmatpush1.msra.mxu0 %v849
    %851 = vmatprep.subr.mxu0 0.0
    %v852 = vand.u32 %v58, 4294901760
    %853 = vmatpush1.msra.mxu0 %v852
    %854 = vmatprep.subr.mxu0 0.0
    %v855 = vand.u32 %v59, 4294901760
    %856 = vmatpush1.msra.mxu0 %v855
    %857 = vmatprep.subr.mxu0 0.0
    %v858 = vand.u32 %v60, 4294901760
    %859 = vmatpush1.msra.mxu0 %v858
    %860 = vmatprep.subr.mxu0 0.0
    %v861 = vand.u32 %v61, 4294901760
    %862 = vmatpush1.msra.mxu0 %v861
    %863 = vmatprep.subr.mxu0 0.0
    %v864 = vand.u32 %v816, 4294901760
    %865 = vmatpush1.msra.mxu0 %v864
    %866 = vmatprep.subr.mxu0 0.0
    %867 = vmatpush1.msra.mxu0 0.0
    %868 = vmatprep.subr.mxu0 0.0
    %869 = vmatpush1.msra.mxu0 0.0
    %870 = vmatprep.subr.mxu0 0.0
    %871 = vmatpush1.msra.mxu0 0.0
    %872 = vmatprep.subr.mxu0 0.0
    %873 = vmatpush1.msra.mxu0 0.0
    %874 = vmatprep.subr.mxu0 0.0
    %875 = vmatpush1.msra.mxu0 0.0
    %876 = vmatprep.subr.mxu0 0.0
    %877 = vmatpush1.msra.mxu0 0.0
    %878 = vmatprep.subr.mxu0 0.0
    %879 = vmatpush1.msra.mxu0 0.0
    %880 = vmatprep.subr.mxu0 0.0
    %881 = vmatpush1.msra.mxu0 0.0
    %882 = vmatprep.subr.mxu0 0.0
    %883 = vmatpush1.msra.mxu0 0.0
    %884 = vmatprep.subr.mxu0 0.0
    %885 = vmatpush1.msra.mxu0 0.0
    %886 = vmatprep.subr.mxu0 0.0
    %887 = vmatpush1.msra.mxu0 0.0
    %888 = vmatprep.subr.mxu0 0.0
    %889 = vmatpush1.msra.mxu0 0.0
    %890 = vmatprep.subr.mxu0 0.0
    %891 = vmatpush1.msra.mxu0 0.0
    %892 = vmatprep.subr.mxu0 0.0
    %893 = vmatpush1.msra.mxu0 0.0
    %894 = vmatprep.subr.mxu0 0.0
    %895 = vmatpush1.msra.mxu0 0.0
    %896 = vmatprep.subr.mxu0 0.0
    %897 = vmatpush1.msra.mxu0 0.0
    %898 = vmatprep.mubr.f32.mxu0 0.0
    %v899 = vand.u32 %v590, 4294901760
    %v900 = vsub.f32 %v590, %v899
    %v901 = vand.u32 %v900, 4294901760
    %v902 = vsub.f32 %v900, %v901
    %v903 = vand.u32 %v902, 4294901760
    %904 = vmatmul.mubr.f32.gmra.mrb[0].mxu0 %v903
    %v905 = vpop.f32.mrb[0].mxu0
    %v906 = vadd.f32 %v216, %v905
    %v907 = vpop.f32.mrb[0].mxu0
    %908 = vmatprep.mubr.f32.mxu0 0.0
    %v909 = vand.u32 %v593, 4294901760
    %v910 = vsub.f32 %v593, %v909
    %v911 = vand.u32 %v910, 4294901760
    %v912 = vsub.f32 %v910, %v911
    %v913 = vand.u32 %v912, 4294901760
    %914 = vmatmul.mubr.f32.gmra.mrb[0].mxu0 %v913
    %v915 = vpop.f32.mrb[0].mxu0
    %v916 = vadd.f32 %v221, %v915
    %v917 = vpop.f32.mrb[0].mxu0
    %918 = vmatprep.mubr.f32.mxu0 0.0
    %v919 = vand.u32 %v596, 4294901760
    %v920 = vsub.f32 %v596, %v919
    %v921 = vand.u32 %v920, 4294901760
    %v922 = vsub.f32 %v920, %v921
    %v923 = vand.u32 %v922, 4294901760
    %924 = vmatmul.mubr.f32.gmra.mrb[0].mxu0 %v923
    %v925 = vpop.f32.mrb[0].mxu0
    %v926 = vadd.f32 %v226, %v925
    %v927 = vpop.f32.mrb[0].mxu0
    %928 = vmatprep.mubr.f32.mxu0 0.0
    %v929 = vand.u32 %v599, 4294901760
    %v930 = vsub.f32 %v599, %v929
    %v931 = vand.u32 %v930, 4294901760
    %v932 = vsub.f32 %v930, %v931
    %v933 = vand.u32 %v932, 4294901760
    %934 = vmatmul.mubr.f32.gmra.mrb[0].mxu0 %v933
    %v935 = vpop.f32.mrb[0].mxu0
    %v936 = vadd.f32 %v231, %v935
    %v937 = vpop.f32.mrb[0].mxu0
    %938 = vmatprep.mubr.f32.mxu0 0.0
    %v939 = vand.u32 %v602, 4294901760
    %v940 = vsub.f32 %v602, %v939
    %v941 = vand.u32 %v940, 4294901760
    %v942 = vsub.f32 %v940, %v941
    %v943 = vand.u32 %v942, 4294901760
    %944 = vmatmul.mubr.f32.gmra.mrb[0].mxu0 %v943
    %v945 = vpop.f32.mrb[0].mxu0
    %v946 = vadd.f32 %v236, %v945
    %v947 = vpop.f32.mrb[0].mxu0
    %948 = vmatprep.mubr.f32.mxu0 0.0
    %v949 = vand.u32 %v605, 4294901760
    %v950 = vsub.f32 %v605, %v949
    %v951 = vand.u32 %v950, 4294901760
    %v952 = vsub.f32 %v950, %v951
    %v953 = vand.u32 %v952, 4294901760
    %954 = vmatmul.mubr.f32.gmra.mrb[0].mxu0 %v953
    %v955 = vpop.f32.mrb[0].mxu0
    %v956 = vadd.f32 %v241, %v955
    %v957 = vpop.f32.mrb[0].mxu0
    %958 = vmatprep.mubr.f32.mxu0 0.0
    %v959 = vand.u32 %v608, 4294901760
    %v960 = vsub.f32 %v608, %v959
    %v961 = vand.u32 %v960, 4294901760
    %v962 = vsub.f32 %v960, %v961
    %v963 = vand.u32 %v962, 4294901760
    %964 = vmatmul.mubr.f32.gmra.mrb[0].mxu0 %v963
    %v965 = vpop.f32.mrb[0].mxu0
    %v966 = vadd.f32 %v246, %v965
    %v967 = vpop.f32.mrb[0].mxu0
    %968 = vmatprep.mubr.f32.mxu0 0.0
    %v969 = vand.u32 %v611, 4294901760
    %v970 = vsub.f32 %v611, %v969
    %v971 = vand.u32 %v970, 4294901760
    %v972 = vsub.f32 %v970, %v971
    %v973 = vand.u32 %v972, 4294901760
    %974 = vmatmul.mubr.f32.gmra.mrb[0].mxu0 %v973
    %v975 = vpop.f32.mrb[0].mxu0
    %v976 = vadd.f32 %v251, %v975
    %v977 = vpop.f32.mrb[0].mxu0
    %978 = vmatprep.mubr.f32.mxu0 0.0
    %v979 = vand.u32 %v614, 4294901760
    %v980 = vsub.f32 %v614, %v979
    %v981 = vand.u32 %v980, 4294901760
    %v982 = vsub.f32 %v980, %v981
    %v983 = vand.u32 %v982, 4294901760
    %984 = vmatmul.mubr.f32.gmra.mrb[0].mxu0 %v983
    %v985 = vpop.f32.mrb[0].mxu0
    %v986 = vadd.f32 %v256, %v985
    %v987 = vpop.f32.mrb[0].mxu0
    %988 = vmatprep.mubr.f32.mxu0 0.0
    %v989 = vand.u32 %v617, 4294901760
    %v990 = vsub.f32 %v617, %v989
    %v991 = vand.u32 %v990, 4294901760
    %v992 = vsub.f32 %v990, %v991
    %v993 = vand.u32 %v992, 4294901760
    %994 = vmatmul.mubr.f32.gmra.mrb[0].mxu0 %v993
    %v995 = vpop.f32.mrb[0].mxu0
    %v996 = vadd.f32 %v261, %v995
    %v997 = vpop.f32.mrb[0].mxu0
    %998 = vmatprep.mubr.f32.mxu0 0.0
    %v999 = vand.u32 %v620, 4294901760
    %v1000 = vsub.f32 %v620, %v999
    %v1001 = vand.u32 %v1000, 4294901760
    %v1002 = vsub.f32 %v1000, %v1001
    %v1003 = vand.u32 %v1002, 4294901760
    %1004 = vmatmul.mubr.f32.gmra.mrb[0].mxu0 %v1003
    %v1005 = vpop.f32.mrb[0].mxu0
    %v1006 = vadd.f32 %v266, %v1005
    %v1007 = vpop.f32.mrb[0].mxu0
    %1008 = vmatprep.mubr.f32.mxu0 0.0
    %v1009 = vand.u32 %v623, 4294901760
    %v1010 = vsub.f32 %v623, %v1009
    %v1011 = vand.u32 %v1010, 4294901760
    %v1012 = vsub.f32 %v1010, %v1011
    %v1013 = vand.u32 %v1012, 4294901760
    %1014 = vmatmul.mubr.f32.gmra.mrb[0].mxu0 %v1013
    %v1015 = vpop.f32.mrb[0].mxu0
    %v1016 = vadd.f32 %v271, %v1015
    %v1017 = vpop.f32.mrb[0].mxu0
    %1018 = vmatprep.mubr.f32.mxu0 0.0
    %v1019 = vand.u32 %v626, 4294901760
    %v1020 = vsub.f32 %v626, %v1019
    %v1021 = vand.u32 %v1020, 4294901760
    %v1022 = vsub.f32 %v1020, %v1021
    %v1023 = vand.u32 %v1022, 4294901760
    %1024 = vmatmul.mubr.f32.gmra.mrb[0].mxu0 %v1023
    %v1025 = vpop.f32.mrb[0].mxu0
    %v1026 = vadd.f32 %v276, %v1025
    %v1027 = vpop.f32.mrb[0].mxu0
    %1028 = vmatprep.mubr.f32.mxu0 0.0
    %v1029 = vand.u32 %v629, 4294901760
    %v1030 = vsub.f32 %v629, %v1029
    %v1031 = vand.u32 %v1030, 4294901760
    %v1032 = vsub.f32 %v1030, %v1031
    %v1033 = vand.u32 %v1032, 4294901760
    %1034 = vmatmul.mubr.f32.gmra.mrb[0].mxu0 %v1033
    %v1035 = vpop.f32.mrb[0].mxu0
    %v1036 = vadd.f32 %v281, %v1035
    %v1037 = vpop.f32.mrb[0].mxu0
    %1038 = vmatprep.mubr.f32.mxu0 0.0
    %v1039 = vand.u32 %v632, 4294901760
    %v1040 = vsub.f32 %v632, %v1039
    %v1041 = vand.u32 %v1040, 4294901760
    %v1042 = vsub.f32 %v1040, %v1041
    %v1043 = vand.u32 %v1042, 4294901760
    %1044 = vmatmul.mubr.f32.gmra.mrb[0].mxu0 %v1043
    %v1045 = vpop.f32.mrb[0].mxu0
    %v1046 = vadd.f32 %v286, %v1045
    %v1047 = vpop.f32.mrb[0].mxu0
    %1048 = vmatprep.mubr.f32.mxu0 0.0
    %v1049 = vand.u32 %v635, 4294901760
    %v1050 = vsub.f32 %v635, %v1049
    %v1051 = vand.u32 %v1050, 4294901760
    %v1052 = vsub.f32 %v1050, %v1051
    %v1053 = vand.u32 %v1052, 4294901760
    %1054 = vmatmul.mubr.f32.gmra.mrb[0].mxu0 %v1053
    %v1055 = vpop.f32.mrb[0].mxu0
    %v1056 = vadd.f32 %v291, %v1055
    %v1057 = vpop.f32.mrb[0].mxu0
    %1058 = vmatprep.mubr.f32.mxu0 0.0
    %v1059 = vand.u32 %v638, 4294901760
    %v1060 = vsub.f32 %v638, %v1059
    %v1061 = vand.u32 %v1060, 4294901760
    %v1062 = vsub.f32 %v1060, %v1061
    %v1063 = vand.u32 %v1062, 4294901760
    %1064 = vmatmul.mubr.f32.gmra.mrb[0].mxu0 %v1063
    %v1065 = vpop.f32.mrb[0].mxu0
    %v1066 = vadd.f32 %v296, %v1065
    %v1067 = vpop.f32.mrb[0].mxu0
    %1068 = vmatprep.mubr.f32.mxu0 0.0
    %v1069 = vand.u32 %v641, 4294901760
    %v1070 = vsub.f32 %v641, %v1069
    %v1071 = vand.u32 %v1070, 4294901760
    %v1072 = vsub.f32 %v1070, %v1071
    %v1073 = vand.u32 %v1072, 4294901760
    %1074 = vmatmul.mubr.f32.gmra.mrb[0].mxu0 %v1073
    %v1075 = vpop.f32.mrb[0].mxu0
    %v1076 = vadd.f32 %v301, %v1075
    %v1077 = vpop.f32.mrb[0].mxu0
    %1078 = vmatprep.mubr.f32.mxu0 0.0
    %v1079 = vand.u32 %v644, 4294901760
    %v1080 = vsub.f32 %v644, %v1079
    %v1081 = vand.u32 %v1080, 4294901760
    %v1082 = vsub.f32 %v1080, %v1081
    %v1083 = vand.u32 %v1082, 4294901760
    %1084 = vmatmul.mubr.f32.gmra.mrb[0].mxu0 %v1083
    %v1085 = vpop.f32.mrb[0].mxu0
    %v1086 = vadd.f32 %v306, %v1085
    %v1087 = vpop.f32.mrb[0].mxu0
    %1088 = vmatprep.mubr.f32.mxu0 0.0
    %v1089 = vand.u32 %v647, 4294901760
    %v1090 = vsub.f32 %v647, %v1089
    %v1091 = vand.u32 %v1090, 4294901760
    %v1092 = vsub.f32 %v1090, %v1091
    %v1093 = vand.u32 %v1092, 4294901760
    %1094 = vmatmul.mubr.f32.gmra.mrb[0].mxu0 %v1093
    %v1095 = vpop.f32.mrb[0].mxu0
    %v1096 = vadd.f32 %v311, %v1095
    %v1097 = vpop.f32.mrb[0].mxu0
    %1098 = vmatprep.mubr.f32.mxu0 0.0
    %v1099 = vand.u32 %v650, 4294901760
    %v1100 = vsub.f32 %v650, %v1099
    %v1101 = vand.u32 %v1100, 4294901760
    %v1102 = vsub.f32 %v1100, %v1101
    %v1103 = vand.u32 %v1102, 4294901760
    %1104 = vmatmul.mubr.f32.gmra.mrb[0].mxu0 %v1103
    %v1105 = vpop.f32.mrb[0].mxu0
    %v1106 = vadd.f32 %v316, %v1105
    %v1107 = vpop.f32.mrb[0].mxu0
    %1108 = vmatprep.mubr.f32.mxu0 0.0
    %v1109 = vand.u32 %v653, 4294901760
    %v1110 = vsub.f32 %v653, %v1109
    %v1111 = vand.u32 %v1110, 4294901760
    %v1112 = vsub.f32 %v1110, %v1111
    %v1113 = vand.u32 %v1112, 4294901760
    %1114 = vmatmul.mubr.f32.gmra.mrb[0].mxu0 %v1113
    %v1115 = vpop.f32.mrb[0].mxu0
    %v1116 = vadd.f32 %v321, %v1115
    %v1117 = vpop.f32.mrb[0].mxu0
    %1118 = vmatprep.mubr.f32.mxu0 0.0
    %v1119 = vand.u32 %v656, 4294901760
    %v1120 = vsub.f32 %v656, %v1119
    %v1121 = vand.u32 %v1120, 4294901760
    %v1122 = vsub.f32 %v1120, %v1121
    %v1123 = vand.u32 %v1122, 4294901760
    %1124 = vmatmul.mubr.f32.gmra.mrb[0].mxu0 %v1123
    %v1125 = vpop.f32.mrb[0].mxu0
    %v1126 = vadd.f32 %v326, %v1125
    %v1127 = vpop.f32.mrb[0].mxu0
    %1128 = vmatprep.mubr.f32.mxu0 0.0
    %v1129 = vand.u32 %v659, 4294901760
    %v1130 = vsub.f32 %v659, %v1129
    %v1131 = vand.u32 %v1130, 4294901760
    %v1132 = vsub.f32 %v1130, %v1131
    %v1133 = vand.u32 %v1132, 4294901760
    %1134 = vmatmul.mubr.f32.gmra.mrb[0].mxu0 %v1133
    %v1135 = vpop.f32.mrb[0].mxu0
    %v1136 = vadd.f32 %v331, %v1135
    %v1137 = vpop.f32.mrb[0].mxu0
    %1138 = vmatprep.mubr.f32.mxu0 0.0
    %v1139 = vand.u32 %v662, 4294901760
    %v1140 = vsub.f32 %v662, %v1139
    %v1141 = vand.u32 %v1140, 4294901760
    %v1142 = vsub.f32 %v1140, %v1141
    %v1143 = vand.u32 %v1142, 4294901760
    %1144 = vmatmul.mubr.f32.gmra.mrb[0].mxu0 %v1143
    %v1145 = vpop.f32.mrb[0].mxu0
    %v1146 = vadd.f32 %v336, %v1145
    %v1147 = vpop.f32.mrb[0].mxu0
    %1148 = vmatprep.mubr.f32.mxu0 0.0
    %v1149 = vand.u32 %v665, 4294901760
    %v1150 = vsub.f32 %v665, %v1149
    %v1151 = vand.u32 %v1150, 4294901760
    %v1152 = vsub.f32 %v1150, %v1151
    %v1153 = vand.u32 %v1152, 4294901760
    %1154 = vmatmul.mubr.f32.gmra.mrb[0].mxu0 %v1153
    %v1155 = vpop.f32.mrb[0].mxu0
    %v1156 = vadd.f32 %v341, %v1155
    %v1157 = vpop.f32.mrb[0].mxu0
    %1158 = vmatprep.mubr.f32.mxu0 0.0
    %v1159 = vand.u32 %v668, 4294901760
    %v1160 = vsub.f32 %v668, %v1159
    %v1161 = vand.u32 %v1160, 4294901760
    %v1162 = vsub.f32 %v1160, %v1161
    %v1163 = vand.u32 %v1162, 4294901760
    %1164 = vmatmul.mubr.f32.gmra.mrb[0].mxu0 %v1163
    %v1165 = vpop.f32.mrb[0].mxu0
    %v1166 = vadd.f32 %v346, %v1165
    %v1167 = vpop.f32.mrb[0].mxu0
    %1168 = vmatprep.mubr.f32.mxu0 0.0
    %v1169 = vand.u32 %v671, 4294901760
    %v1170 = vsub.f32 %v671, %v1169
    %v1171 = vand.u32 %v1170, 4294901760
    %v1172 = vsub.f32 %v1170, %v1171
    %v1173 = vand.u32 %v1172, 4294901760
    %1174 = vmatmul.mubr.f32.gmra.mrb[0].mxu0 %v1173
    %v1175 = vpop.f32.mrb[0].mxu0
    %v1176 = vadd.f32 %v351, %v1175
    %v1177 = vpop.f32.mrb[0].mxu0
    %1178 = vmatprep.mubr.f32.mxu0 0.0
    %v1179 = vand.u32 %v674, 4294901760
    %v1180 = vsub.f32 %v674, %v1179
    %v1181 = vand.u32 %v1180, 4294901760
    %v1182 = vsub.f32 %v1180, %v1181
    %v1183 = vand.u32 %v1182, 4294901760
    %1184 = vmatmul.mubr.f32.gmra.mrb[0].mxu0 %v1183
    %v1185 = vpop.f32.mrb[0].mxu0
    %v1186 = vadd.f32 %v356, %v1185
    %v1187 = vpop.f32.mrb[0].mxu0
    %1188 = vmatprep.mubr.f32.mxu0 0.0
    %v1189 = vand.u32 %v677, 4294901760
    %v1190 = vsub.f32 %v677, %v1189
    %v1191 = vand.u32 %v1190, 4294901760
    %v1192 = vsub.f32 %v1190, %v1191
    %v1193 = vand.u32 %v1192, 4294901760
    %1194 = vmatmul.mubr.f32.gmra.mrb[0].mxu0 %v1193
    %v1195 = vpop.f32.mrb[0].mxu0
    %v1196 = vadd.f32 %v361, %v1195
    %v1197 = vpop.f32.mrb[0].mxu0
    %1198 = vmatprep.mubr.f32.mxu0 0.0
    %v1199 = vand.u32 %v680, 4294901760
    %v1200 = vsub.f32 %v680, %v1199
    %v1201 = vand.u32 %v1200, 4294901760
    %v1202 = vsub.f32 %v1200, %v1201
    %v1203 = vand.u32 %v1202, 4294901760
    %1204 = vmatmul.mubr.f32.gmra.mrb[0].mxu0 %v1203
    %v1205 = vpop.f32.mrb[0].mxu0
    %v1206 = vadd.f32 %v366, %v1205
    %v1207 = vpop.f32.mrb[0].mxu0
    %1208 = vmatprep.mubr.f32.mxu0 0.0
    %v1209 = vand.u32 %v683, 4294901760
    %v1210 = vsub.f32 %v683, %v1209
    %v1211 = vand.u32 %v1210, 4294901760
    %v1212 = vsub.f32 %v1210, %v1211
    %v1213 = vand.u32 %v1212, 4294901760
    %1214 = vmatmul.mubr.f32.gmra.mrb[0].mxu0 %v1213
    %v1215 = vpop.f32.mrb[0].mxu0
    %v1216 = vadd.f32 %v371, %v1215
    %v1217 = vpop.f32.mrb[0].mxu0
    %1218 = vmatprep.mubr.f32.mxu0 0.0
    %v1219 = vand.u32 %v686, 4294901760
    %v1220 = vsub.f32 %v686, %v1219
    %v1221 = vand.u32 %v1220, 4294901760
    %v1222 = vsub.f32 %v1220, %v1221
    %v1223 = vand.u32 %v1222, 4294901760
    %1224 = vmatmul.mubr.f32.gmra.mrb[0].mxu0 %v1223
    %v1225 = vpop.f32.mrb[0].mxu0
    %v1226 = vadd.f32 %v376, %v1225
    %v1227 = vpop.f32.mrb[0].mxu0
    %1228 = vmatprep.mubr.f32.mxu0 0.0
    %v1229 = vand.u32 %v689, 4294901760
    %v1230 = vsub.f32 %v689, %v1229
    %v1231 = vand.u32 %v1230, 4294901760
    %v1232 = vsub.f32 %v1230, %v1231
    %v1233 = vand.u32 %v1232, 4294901760
    %1234 = vmatmul.mubr.f32.gmra.mrb[0].mxu0 %v1233
    %v1235 = vpop.f32.mrb[0].mxu0
    %v1236 = vadd.f32 %v381, %v1235
    %v1237 = vpop.f32.mrb[0].mxu0
    %1238 = vmatprep.mubr.f32.mxu0 0.0
    %v1239 = vand.u32 %v692, 4294901760
    %v1240 = vsub.f32 %v692, %v1239
    %v1241 = vand.u32 %v1240, 4294901760
    %v1242 = vsub.f32 %v1240, %v1241
    %v1243 = vand.u32 %v1242, 4294901760
    %1244 = vmatmul.mubr.f32.gmra.mrb[0].mxu0 %v1243
    %v1245 = vpop.f32.mrb[0].mxu0
    %v1246 = vadd.f32 %v386, %v1245
    %v1247 = vpop.f32.mrb[0].mxu0
    %1248 = vmatprep.mubr.f32.mxu0 0.0
    %v1249 = vand.u32 %v695, 4294901760
    %v1250 = vsub.f32 %v695, %v1249
    %v1251 = vand.u32 %v1250, 4294901760
    %v1252 = vsub.f32 %v1250, %v1251
    %v1253 = vand.u32 %v1252, 4294901760
    %1254 = vmatmul.mubr.f32.gmra.mrb[0].mxu0 %v1253
    %v1255 = vpop.f32.mrb[0].mxu0
    %v1256 = vadd.f32 %v391, %v1255
    %v1257 = vpop.f32.mrb[0].mxu0
    %1258 = vmatprep.mubr.f32.mxu0 0.0
    %v1259 = vand.u32 %v698, 4294901760
    %v1260 = vsub.f32 %v698, %v1259
    %v1261 = vand.u32 %v1260, 4294901760
    %v1262 = vsub.f32 %v1260, %v1261
    %v1263 = vand.u32 %v1262, 4294901760
    %1264 = vmatmul.mubr.f32.gmra.mrb[0].mxu0 %v1263
    %v1265 = vpop.f32.mrb[0].mxu0
    %v1266 = vadd.f32 %v396, %v1265
    %v1267 = vpop.f32.mrb[0].mxu0
    %1268 = vmatprep.mubr.f32.mxu0 0.0
    %v1269 = vand.u32 %v701, 4294901760
    %v1270 = vsub.f32 %v701, %v1269
    %v1271 = vand.u32 %v1270, 4294901760
    %v1272 = vsub.f32 %v1270, %v1271
    %v1273 = vand.u32 %v1272, 4294901760
    %1274 = vmatmul.mubr.f32.gmra.mrb[0].mxu0 %v1273
    %v1275 = vpop.f32.mrb[0].mxu0
    %v1276 = vadd.f32 %v401, %v1275
    %v1277 = vpop.f32.mrb[0].mxu0
    %1278 = vmatprep.mubr.f32.mxu0 0.0
    %v1279 = vand.u32 %v704, 4294901760
    %v1280 = vsub.f32 %v704, %v1279
    %v1281 = vand.u32 %v1280, 4294901760
    %v1282 = vsub.f32 %v1280, %v1281
    %v1283 = vand.u32 %v1282, 4294901760
    %1284 = vmatmul.mubr.f32.gmra.mrb[0].mxu0 %v1283
    %v1285 = vpop.f32.mrb[0].mxu0
    %v1286 = vadd.f32 %v406, %v1285
    %v1287 = vpop.f32.mrb[0].mxu0
    %1288 = vmatprep.mubr.f32.mxu0 0.0
    %v1289 = vand.u32 %v707, 4294901760
    %v1290 = vsub.f32 %v707, %v1289
    %v1291 = vand.u32 %v1290, 4294901760
    %v1292 = vsub.f32 %v1290, %v1291
    %v1293 = vand.u32 %v1292, 4294901760
    %1294 = vmatmul.mubr.f32.gmra.mrb[0].mxu0 %v1293
    %v1295 = vpop.f32.mrb[0].mxu0
    %v1296 = vadd.f32 %v411, %v1295
    %v1297 = vpop.f32.mrb[0].mxu0
    %1298 = vmatprep.mubr.f32.mxu0 0.0
    %v1299 = vand.u32 %v710, 4294901760
    %v1300 = vsub.f32 %v710, %v1299
    %v1301 = vand.u32 %v1300, 4294901760
    %v1302 = vsub.f32 %v1300, %v1301
    %v1303 = vand.u32 %v1302, 4294901760
    %1304 = vmatmul.mubr.f32.gmra.mrb[0].mxu0 %v1303
    %v1305 = vpop.f32.mrb[0].mxu0
    %v1306 = vadd.f32 %v416, %v1305
    %v1307 = vpop.f32.mrb[0].mxu0
    %1308 = vmatprep.mubr.f32.mxu0 0.0
    %v1309 = vand.u32 %v713, 4294901760
    %v1310 = vsub.f32 %v713, %v1309
    %v1311 = vand.u32 %v1310, 4294901760
    %v1312 = vsub.f32 %v1310, %v1311
    %v1313 = vand.u32 %v1312, 4294901760
    %1314 = vmatmul.mubr.f32.gmra.mrb[0].mxu0 %v1313
    %v1315 = vpop.f32.mrb[0].mxu0
    %v1316 = vadd.f32 %v421, %v1315
    %v1317 = vpop.f32.mrb[0].mxu0
    %1318 = vmatprep.mubr.f32.mxu0 0.0
    %v1319 = vand.u32 %v716, 4294901760
    %v1320 = vsub.f32 %v716, %v1319
    %v1321 = vand.u32 %v1320, 4294901760
    %v1322 = vsub.f32 %v1320, %v1321
    %v1323 = vand.u32 %v1322, 4294901760
    %1324 = vmatmul.mubr.f32.gmra.mrb[0].mxu0 %v1323
    %v1325 = vpop.f32.mrb[0].mxu0
    %v1326 = vadd.f32 %v426, %v1325
    %v1327 = vpop.f32.mrb[0].mxu0
    %1328 = vmatprep.mubr.f32.mxu0 0.0
    %v1329 = vand.u32 %v719, 4294901760
    %v1330 = vsub.f32 %v719, %v1329
    %v1331 = vand.u32 %v1330, 4294901760
    %v1332 = vsub.f32 %v1330, %v1331
    %v1333 = vand.u32 %v1332, 4294901760
    %1334 = vmatmul.mubr.f32.gmra.mrb[0].mxu0 %v1333
    %v1335 = vpop.f32.mrb[0].mxu0
    %v1336 = vadd.f32 %v431, %v1335
    %v1337 = vpop.f32.mrb[0].mxu0
    %1338 = vmatprep.mubr.f32.mxu0 0.0
    %v1339 = vand.u32 %v722, 4294901760
    %v1340 = vsub.f32 %v722, %v1339
    %v1341 = vand.u32 %v1340, 4294901760
    %v1342 = vsub.f32 %v1340, %v1341
    %v1343 = vand.u32 %v1342, 4294901760
    %1344 = vmatmul.mubr.f32.gmra.mrb[0].mxu0 %v1343
    %v1345 = vpop.f32.mrb[0].mxu0
    %v1346 = vadd.f32 %v436, %v1345
    %v1347 = vpop.f32.mrb[0].mxu0
    %1348 = vmatprep.mubr.f32.mxu0 0.0
    %v1349 = vand.u32 %v725, 4294901760
    %v1350 = vsub.f32 %v725, %v1349
    %v1351 = vand.u32 %v1350, 4294901760
    %v1352 = vsub.f32 %v1350, %v1351
    %v1353 = vand.u32 %v1352, 4294901760
    %1354 = vmatmul.mubr.f32.gmra.mrb[0].mxu0 %v1353
    %v1355 = vpop.f32.mrb[0].mxu0
    %v1356 = vadd.f32 %v441, %v1355
    %v1357 = vpop.f32.mrb[0].mxu0
    %1358 = vmatprep.mubr.f32.mxu0 0.0
    %v1359 = vand.u32 %v728, 4294901760
    %v1360 = vsub.f32 %v728, %v1359
    %v1361 = vand.u32 %v1360, 4294901760
    %v1362 = vsub.f32 %v1360, %v1361
    %v1363 = vand.u32 %v1362, 4294901760
    %1364 = vmatmul.mubr.f32.gmra.mrb[0].mxu0 %v1363
    %v1365 = vpop.f32.mrb[0].mxu0
    %v1366 = vadd.f32 %v446, %v1365
    %v1367 = vpop.f32.mrb[0].mxu0
    %1368 = vmatprep.mubr.f32.mxu0 0.0
    %v1369 = vand.u32 %v731, 4294901760
    %v1370 = vsub.f32 %v731, %v1369
    %v1371 = vand.u32 %v1370, 4294901760
    %v1372 = vsub.f32 %v1370, %v1371
    %v1373 = vand.u32 %v1372, 4294901760
    %1374 = vmatmul.mubr.f32.gmra.mrb[0].mxu0 %v1373
    %v1375 = vpop.f32.mrb[0].mxu0
    %v1376 = vadd.f32 %v451, %v1375
    %v1377 = vpop.f32.mrb[0].mxu0
    %1378 = vmatprep.mubr.f32.mxu0 0.0
    %v1379 = vand.u32 %v734, 4294901760
    %v1380 = vsub.f32 %v734, %v1379
    %v1381 = vand.u32 %v1380, 4294901760
    %v1382 = vsub.f32 %v1380, %v1381
    %v1383 = vand.u32 %v1382, 4294901760
    %1384 = vmatmul.mubr.f32.gmra.mrb[0].mxu0 %v1383
    %v1385 = vpop.f32.mrb[0].mxu0
    %v1386 = vadd.f32 %v456, %v1385
    %v1387 = vpop.f32.mrb[0].mxu0
    %1388 = vmatprep.mubr.f32.mxu0 0.0
    %v1389 = vand.u32 %v737, 4294901760
    %v1390 = vsub.f32 %v737, %v1389
    %v1391 = vand.u32 %v1390, 4294901760
    %v1392 = vsub.f32 %v1390, %v1391
    %v1393 = vand.u32 %v1392, 4294901760
    %1394 = vmatmul.mubr.f32.gmra.mrb[0].mxu0 %v1393
    %v1395 = vpop.f32.mrb[0].mxu0
    %v1396 = vadd.f32 %v461, %v1395
    %v1397 = vpop.f32.mrb[0].mxu0
    %1398 = vmatprep.mubr.f32.mxu0 0.0
    %v1399 = vand.u32 %v740, 4294901760
    %v1400 = vsub.f32 %v740, %v1399
    %v1401 = vand.u32 %v1400, 4294901760
    %v1402 = vsub.f32 %v1400, %v1401
    %v1403 = vand.u32 %v1402, 4294901760
    %1404 = vmatmul.mubr.f32.gmra.mrb[0].mxu0 %v1403
    %v1405 = vpop.f32.mrb[0].mxu0
    %v1406 = vadd.f32 %v466, %v1405
    %v1407 = vpop.f32.mrb[0].mxu0
    %1408 = vmatprep.mubr.f32.mxu0 0.0
    %v1409 = vand.u32 %v743, 4294901760
    %v1410 = vsub.f32 %v743, %v1409
    %v1411 = vand.u32 %v1410, 4294901760
    %v1412 = vsub.f32 %v1410, %v1411
    %v1413 = vand.u32 %v1412, 4294901760
    %1414 = vmatmul.mubr.f32.gmra.mrb[0].mxu0 %v1413
    %v1415 = vpop.f32.mrb[0].mxu0
    %v1416 = vadd.f32 %v471, %v1415
    %v1417 = vpop.f32.mrb[0].mxu0
    %1418 = vmatprep.mubr.f32.mxu0 0.0
    %v1419 = vand.u32 %v746, 4294901760
    %v1420 = vsub.f32 %v746, %v1419
    %v1421 = vand.u32 %v1420, 4294901760
    %v1422 = vsub.f32 %v1420, %v1421
    %v1423 = vand.u32 %v1422, 4294901760
    %1424 = vmatmul.mubr.f32.gmra.mrb[0].mxu0 %v1423
    %v1425 = vpop.f32.mrb[0].mxu0
    %v1426 = vadd.f32 %v476, %v1425
    %v1427 = vpop.f32.mrb[0].mxu0
    %1428 = vmatprep.mubr.f32.mxu0 0.0
    %v1429 = vand.u32 %v749, 4294901760
    %v1430 = vsub.f32 %v749, %v1429
    %v1431 = vand.u32 %v1430, 4294901760
    %v1432 = vsub.f32 %v1430, %v1431
    %v1433 = vand.u32 %v1432, 4294901760
    %1434 = vmatmul.mubr.f32.gmra.mrb[0].mxu0 %v1433
    %v1435 = vpop.f32.mrb[0].mxu0
    %v1436 = vadd.f32 %v481, %v1435
    %v1437 = vpop.f32.mrb[0].mxu0
    %1438 = vmatprep.mubr.f32.mxu0 0.0
    %v1439 = vand.u32 %v752, 4294901760
    %v1440 = vsub.f32 %v752, %v1439
    %v1441 = vand.u32 %v1440, 4294901760
    %v1442 = vsub.f32 %v1440, %v1441
    %v1443 = vand.u32 %v1442, 4294901760
    %1444 = vmatmul.mubr.f32.gmra.mrb[0].mxu0 %v1443
    %v1445 = vpop.f32.mrb[0].mxu0
    %v1446 = vadd.f32 %v486, %v1445
    %v1447 = vpop.f32.mrb[0].mxu0
    %1448 = vmatprep.mubr.f32.mxu0 0.0
    %v1449 = vand.u32 %v755, 4294901760
    %v1450 = vsub.f32 %v755, %v1449
    %v1451 = vand.u32 %v1450, 4294901760
    %v1452 = vsub.f32 %v1450, %v1451
    %v1453 = vand.u32 %v1452, 4294901760
    %1454 = vmatmul.mubr.f32.gmra.mrb[0].mxu0 %v1453
    %v1455 = vpop.f32.mrb[0].mxu0
    %v1456 = vadd.f32 %v491, %v1455
    %v1457 = vpop.f32.mrb[0].mxu0
    %1458 = vmatprep.mubr.f32.mxu0 0.0
    %v1459 = vand.u32 %v758, 4294901760
    %v1460 = vsub.f32 %v758, %v1459
    %v1461 = vand.u32 %v1460, 4294901760
    %v1462 = vsub.f32 %v1460, %v1461
    %v1463 = vand.u32 %v1462, 4294901760
    %1464 = vmatmul.mubr.f32.gmra.mrb[0].mxu0 %v1463
    %v1465 = vpop.f32.mrb[0].mxu0
    %v1466 = vadd.f32 %v496, %v1465
    %v1467 = vpop.f32.mrb[0].mxu0
    %1468 = vmatprep.mubr.f32.mxu0 0.0
    %v1469 = vand.u32 %v761, 4294901760
    %v1470 = vsub.f32 %v761, %v1469
    %v1471 = vand.u32 %v1470, 4294901760
    %v1472 = vsub.f32 %v1470, %v1471
    %v1473 = vand.u32 %v1472, 4294901760
    %1474 = vmatmul.mubr.f32.gmra.mrb[0].mxu0 %v1473
    %v1475 = vpop.f32.mrb[0].mxu0
    %v1476 = vadd.f32 %v501, %v1475
    %v1477 = vpop.f32.mrb[0].mxu0
    %1478 = vmatprep.mubr.f32.mxu0 0.0
    %v1479 = vand.u32 %v764, 4294901760
    %v1480 = vsub.f32 %v764, %v1479
    %v1481 = vand.u32 %v1480, 4294901760
    %v1482 = vsub.f32 %v1480, %v1481
    %v1483 = vand.u32 %v1482, 4294901760
    %1484 = vmatmul.mubr.f32.gmra.mrb[0].mxu0 %v1483
    %v1485 = vpop.f32.mrb[0].mxu0
    %v1486 = vadd.f32 %v506, %v1485
    %v1487 = vpop.f32.mrb[0].mxu0
    %1488 = vmatprep.mubr.f32.mxu0 0.0
    %v1489 = vand.u32 %v767, 4294901760
    %v1490 = vsub.f32 %v767, %v1489
    %v1491 = vand.u32 %v1490, 4294901760
    %v1492 = vsub.f32 %v1490, %v1491
    %v1493 = vand.u32 %v1492, 4294901760
    %1494 = vmatmul.mubr.f32.gmra.mrb[0].mxu0 %v1493
    %v1495 = vpop.f32.mrb[0].mxu0
    %v1496 = vadd.f32 %v511, %v1495
    %v1497 = vpop.f32.mrb[0].mxu0
    %1498 = vmatprep.mubr.f32.mxu0 0.0
    %v1499 = vand.u32 %v770, 4294901760
    %v1500 = vsub.f32 %v770, %v1499
    %v1501 = vand.u32 %v1500, 4294901760
    %v1502 = vsub.f32 %v1500, %v1501
    %v1503 = vand.u32 %v1502, 4294901760
    %1504 = vmatmul.mubr.f32.gmra.mrb[0].mxu0 %v1503
    %v1505 = vpop.f32.mrb[0].mxu0
    %v1506 = vadd.f32 %v516, %v1505
    %v1507 = vpop.f32.mrb[0].mxu0
    %1508 = vmatprep.mubr.f32.mxu0 0.0
    %v1509 = vand.u32 %v773, 4294901760
    %v1510 = vsub.f32 %v773, %v1509
    %v1511 = vand.u32 %v1510, 4294901760
    %v1512 = vsub.f32 %v1510, %v1511
    %v1513 = vand.u32 %v1512, 4294901760
    %1514 = vmatmul.mubr.f32.gmra.mrb[0].mxu0 %v1513
    %v1515 = vpop.f32.mrb[0].mxu0
    %v1516 = vadd.f32 %v521, %v1515
    %v1517 = vpop.f32.mrb[0].mxu0
    %1518 = vmatprep.mubr.f32.mxu0 0.0
    %v1519 = vand.u32 %v776, 4294901760
    %v1520 = vsub.f32 %v776, %v1519
    %v1521 = vand.u32 %v1520, 4294901760
    %v1522 = vsub.f32 %v1520, %v1521
    %v1523 = vand.u32 %v1522, 4294901760
    %1524 = vmatmul.mubr.f32.gmra.mrb[0].mxu0 %v1523
    %v1525 = vpop.f32.mrb[0].mxu0
    %v1526 = vadd.f32 %v526, %v1525
    %v1527 = vpop.f32.mrb[0].mxu0
    %1528 = vmatprep.mubr.f32.mxu0 0.0
    %v1529 = vand.u32 %v779, 4294901760
    %v1530 = vsub.f32 %v779, %v1529
    %v1531 = vand.u32 %v1530, 4294901760
    %v1532 = vsub.f32 %v1530, %v1531
    %v1533 = vand.u32 %v1532, 4294901760
    %1534 = vmatmul.mubr.f32.gmra.mrb[0].mxu0 %v1533
    %v1535 = vpop.f32.mrb[0].mxu0
    %v1536 = vadd.f32 %v531, %v1535
    %v1537 = vpop.f32.mrb[0].mxu0
    %1538 = vmatprep.mubr.f32.mxu0 0.0
    %v1539 = vand.u32 %v782, 4294901760
    %v1540 = vsub.f32 %v782, %v1539
    %v1541 = vand.u32 %v1540, 4294901760
    %v1542 = vsub.f32 %v1540, %v1541
    %v1543 = vand.u32 %v1542, 4294901760
    %1544 = vmatmul.mubr.f32.gmra.mrb[0].mxu0 %v1543
    %v1545 = vpop.f32.mrb[0].mxu0
    %v1546 = vadd.f32 %v536, %v1545
    %v1547 = vpop.f32.mrb[0].mxu0
    %1548 = vmatprep.mubr.f32.mxu0 0.0
    %v1549 = vand.u32 %v785, 4294901760
    %v1550 = vsub.f32 %v785, %v1549
    %v1551 = vand.u32 %v1550, 4294901760
    %v1552 = vsub.f32 %v1550, %v1551
    %v1553 = vand.u32 %v1552, 4294901760
    %1554 = vmatmul.mubr.f32.gmra.mrb[0].mxu0 %v1553
    %v1555 = vpop.f32.mrb[0].mxu0
    %v1556 = vadd.f32 %v541, %v1555
    %v1557 = vpop.f32.mrb[0].mxu0
    %1558 = vmatprep.mubr.f32.mxu0 0.0
    %v1559 = vand.u32 %v788, 4294901760
    %v1560 = vsub.f32 %v788, %v1559
    %v1561 = vand.u32 %v1560, 4294901760
    %v1562 = vsub.f32 %v1560, %v1561
    %v1563 = vand.u32 %v1562, 4294901760
    %1564 = vmatmul.mubr.f32.gmra.mrb[0].mxu0 %v1563
    %v1565 = vpop.f32.mrb[0].mxu0
    %v1566 = vadd.f32 %v546, %v1565
    %v1567 = vpop.f32.mrb[0].mxu0
    %1568 = vmatprep.mubr.f32.mxu0 0.0
    %v1569 = vand.u32 %v791, 4294901760
    %v1570 = vsub.f32 %v791, %v1569
    %v1571 = vand.u32 %v1570, 4294901760
    %v1572 = vsub.f32 %v1570, %v1571
    %v1573 = vand.u32 %v1572, 4294901760
    %1574 = vmatmul.mubr.f32.gmra.mrb[0].mxu0 %v1573
    %v1575 = vpop.f32.mrb[0].mxu0
    %v1576 = vadd.f32 %v551, %v1575
    %v1577 = vpop.f32.mrb[0].mxu0
    %1578 = vmatprep.mubr.f32.mxu0 0.0
    %v1579 = vand.u32 %v794, 4294901760
    %v1580 = vsub.f32 %v794, %v1579
    %v1581 = vand.u32 %v1580, 4294901760
    %v1582 = vsub.f32 %v1580, %v1581
    %v1583 = vand.u32 %v1582, 4294901760
    %1584 = vmatmul.mubr.f32.gmra.mrb[0].mxu0 %v1583
    %v1585 = vpop.f32.mrb[0].mxu0
    %v1586 = vadd.f32 %v556, %v1585
    %v1587 = vpop.f32.mrb[0].mxu0
    %1588 = vmatprep.mubr.f32.mxu0 0.0
    %v1589 = vand.u32 %v797, 4294901760
    %v1590 = vsub.f32 %v797, %v1589
    %v1591 = vand.u32 %v1590, 4294901760
    %v1592 = vsub.f32 %v1590, %v1591
    %v1593 = vand.u32 %v1592, 4294901760
    %1594 = vmatmul.mubr.f32.gmra.mrb[0].mxu0 %v1593
    %v1595 = vpop.f32.mrb[0].mxu0
    %v1596 = vadd.f32 %v561, %v1595
    %v1597 = vpop.f32.mrb[0].mxu0
    %1598 = vmatprep.mubr.f32.mxu0 0.0
    %v1599 = vand.u32 %v800, 4294901760
    %v1600 = vsub.f32 %v800, %v1599
    %v1601 = vand.u32 %v1600, 4294901760
    %v1602 = vsub.f32 %v1600, %v1601
    %v1603 = vand.u32 %v1602, 4294901760
    %1604 = vmatmul.mubr.f32.gmra.mrb[0].mxu0 %v1603
    %v1605 = vpop.f32.mrb[0].mxu0
    %v1606 = vadd.f32 %v566, %v1605
    %v1607 = vpop.f32.mrb[0].mxu0
    %1608 = vmatprep.mubr.f32.mxu0 0.0
    %v1609 = vand.u32 %v803, 4294901760
    %v1610 = vsub.f32 %v803, %v1609
    %v1611 = vand.u32 %v1610, 4294901760
    %v1612 = vsub.f32 %v1610, %v1611
    %v1613 = vand.u32 %v1612, 4294901760
    %1614 = vmatmul.mubr.f32.gmra.mrb[0].mxu0 %v1613
    %v1615 = vpop.f32.mrb[0].mxu0
    %v1616 = vadd.f32 %v571, %v1615
    %v1617 = vpop.f32.mrb[0].mxu0
    %1618 = vmatprep.mubr.f32.mxu0 0.0
    %v1619 = vand.u32 %v806, 4294901760
    %v1620 = vsub.f32 %v806, %v1619
    %v1621 = vand.u32 %v1620, 4294901760
    %v1622 = vsub.f32 %v1620, %v1621
    %v1623 = vand.u32 %v1622, 4294901760
    %1624 = vmatmul.mubr.f32.gmra.mrb[0].mxu0 %v1623
    %v1625 = vpop.f32.mrb[0].mxu0
    %v1626 = vadd.f32 %v576, %v1625
    %v1627 = vpop.f32.mrb[0].mxu0
    %1628 = vmatprep.mubr.f32.mxu0 0.0
    %v1629 = vand.u32 %v809, 4294901760
    %v1630 = vsub.f32 %v809, %v1629
    %v1631 = vand.u32 %v1630, 4294901760
    %v1632 = vsub.f32 %v1630, %v1631
    %v1633 = vand.u32 %v1632, 4294901760
    %1634 = vmatmul.mubr.f32.gmra.mrb[0].mxu0 %v1633
    %v1635 = vpop.f32.mrb[0].mxu0
    %v1636 = vadd.f32 %v581, %v1635
    %v1637 = vpop.f32.mrb[0].mxu0
    %1638 = vmatprep.mubr.f32.mxu0 0.0
    %v1639 = vand.u32 %v812, 4294901760
    %v1640 = vsub.f32 %v812, %v1639
    %v1641 = vand.u32 %v1640, 4294901760
    %v1642 = vsub.f32 %v1640, %v1641
    %v1643 = vand.u32 %v1642, 4294901760
    %1644 = vmatmul.mubr.f32.gmra.mrb[0].mxu0 %v1643
    %v1645 = vpop.f32.mrb[0].mxu0
    %v1646 = vadd.f32 %v586, %v1645
    %v1647 = vpop.f32.mrb[0].mxu0
    %1648 = vdwg.mxu0
    %1649 = vmatprep.subr.mxu0 0.0
    %v1650 = vand.u32 %v47, 4294901760
    %v1651 = vsub.f32 %v47, %v1650
    %v1652 = vand.u32 %v1651, 4294901760
    %v1653 = vsub.f32 %v1651, %v1652
    %v1654 = vand.u32 %v1653, 4294901760
    %1655 = vmatpush1.msra.mxu0 %v1654
    %1656 = vmatprep.subr.mxu0 0.0
    %v1657 = vand.u32 %v48, 4294901760
    %v1658 = vsub.f32 %v48, %v1657
    %v1659 = vand.u32 %v1658, 4294901760
    %v1660 = vsub.f32 %v1658, %v1659
    %v1661 = vand.u32 %v1660, 4294901760
    %1662 = vmatpush1.msra.mxu0 %v1661
    %1663 = vmatprep.subr.mxu0 0.0
    %v1664 = vand.u32 %v49, 4294901760
    %v1665 = vsub.f32 %v49, %v1664
    %v1666 = vand.u32 %v1665, 4294901760
    %v1667 = vsub.f32 %v1665, %v1666
    %v1668 = vand.u32 %v1667, 4294901760
    %1669 = vmatpush1.msra.mxu0 %v1668
    %1670 = vmatprep.subr.mxu0 0.0
    %v1671 = vand.u32 %v50, 4294901760
    %v1672 = vsub.f32 %v50, %v1671
    %v1673 = vand.u32 %v1672, 4294901760
    %v1674 = vsub.f32 %v1672, %v1673
    %v1675 = vand.u32 %v1674, 4294901760
    %1676 = vmatpush1.msra.mxu0 %v1675
    %1677 = vmatprep.subr.mxu0 0.0
    %v1678 = vand.u32 %v51, 4294901760
    %v1679 = vsub.f32 %v51, %v1678
    %v1680 = vand.u32 %v1679, 4294901760
    %v1681 = vsub.f32 %v1679, %v1680
    %v1682 = vand.u32 %v1681, 4294901760
    %1683 = vmatpush1.msra.mxu0 %v1682
    %1684 = vmatprep.subr.mxu0 0.0
    %v1685 = vand.u32 %v52, 4294901760
    %v1686 = vsub.f32 %v52, %v1685
    %v1687 = vand.u32 %v1686, 4294901760
    %v1688 = vsub.f32 %v1686, %v1687
    %v1689 = vand.u32 %v1688, 4294901760
    %1690 = vmatpush1.msra.mxu0 %v1689
    %1691 = vmatprep.subr.mxu0 0.0
    %v1692 = vand.u32 %v53, 4294901760
    %v1693 = vsub.f32 %v53, %v1692
    %v1694 = vand.u32 %v1693, 4294901760
    %v1695 = vsub.f32 %v1693, %v1694
    %v1696 = vand.u32 %v1695, 4294901760
    %1697 = vmatpush1.msra.mxu0 %v1696
    %1698 = vmatprep.subr.mxu0 0.0
    %v1699 = vand.u32 %v54, 4294901760
    %v1700 = vsub.f32 %v54, %v1699
    %v1701 = vand.u32 %v1700, 4294901760
    %v1702 = vsub.f32 %v1700, %v1701
    %v1703 = vand.u32 %v1702, 4294901760
    %1704 = vmatpush1.msra.mxu0 %v1703
    %1705 = vmatprep.subr.mxu0 0.0
    %v1706 = vand.u32 %v55, 4294901760
    %v1707 = vsub.f32 %v55, %v1706
    %v1708 = vand.u32 %v1707, 4294901760
    %v1709 = vsub.f32 %v1707, %v1708
    %v1710 = vand.u32 %v1709, 4294901760
    %1711 = vmatpush1.msra.mxu0 %v1710
    %1712 = vmatprep.subr.mxu0 0.0
    %v1713 = vand.u32 %v56, 4294901760
    %v1714 = vsub.f32 %v56, %v1713
    %v1715 = vand.u32 %v1714, 4294901760
    %v1716 = vsub.f32 %v1714, %v1715
    %v1717 = vand.u32 %v1716, 4294901760
    %1718 = vmatpush1.msra.mxu0 %v1717
    %1719 = vmatprep.subr.mxu0 0.0
    %v1720 = vand.u32 %v57, 4294901760
    %v1721 = vsub.f32 %v57, %v1720
    %v1722 = vand.u32 %v1721, 4294901760
    %v1723 = vsub.f32 %v1721, %v1722
    %v1724 = vand.u32 %v1723, 4294901760
    %1725 = vmatpush1.msra.mxu0 %v1724
    %1726 = vmatprep.subr.mxu0 0.0
    %v1727 = vand.u32 %v58, 4294901760
    %v1728 = vsub.f32 %v58, %v1727
    %v1729 = vand.u32 %v1728, 4294901760
    %v1730 = vsub.f32 %v1728, %v1729
    %v1731 = vand.u32 %v1730, 4294901760
    %1732 = vmatpush1.msra.mxu0 %v1731
    %1733 = vmatprep.subr.mxu0 0.0
    %v1734 = vand.u32 %v59, 4294901760
    %v1735 = vsub.f32 %v59, %v1734
    %v1736 = vand.u32 %v1735, 4294901760
    %v1737 = vsub.f32 %v1735, %v1736
    %v1738 = vand.u32 %v1737, 4294901760
    %1739 = vmatpush1.msra.mxu0 %v1738
    %1740 = vmatprep.subr.mxu0 0.0
    %v1741 = vand.u32 %v60, 4294901760
    %v1742 = vsub.f32 %v60, %v1741
    %v1743 = vand.u32 %v1742, 4294901760
    %v1744 = vsub.f32 %v1742, %v1743
    %v1745 = vand.u32 %v1744, 4294901760
    %1746 = vmatpush1.msra.mxu0 %v1745
    %1747 = vmatprep.subr.mxu0 0.0
    %v1748 = vand.u32 %v61, 4294901760
    %v1749 = vsub.f32 %v61, %v1748
    %v1750 = vand.u32 %v1749, 4294901760
    %v1751 = vsub.f32 %v1749, %v1750
    %v1752 = vand.u32 %v1751, 4294901760
    %1753 = vmatpush1.msra.mxu0 %v1752
    %1754 = vmatprep.subr.mxu0 0.0
    %v1755 = vand.u32 %v816, 4294901760
    %v1756 = vsub.f32 %v816, %v1755
    %v1757 = vand.u32 %v1756, 4294901760
    %v1758 = vsub.f32 %v1756, %v1757
    %v1759 = vand.u32 %v1758, 4294901760
    %1760 = vmatpush1.msra.mxu0 %v1759
    %1761 = vmatprep.subr.mxu0 0.0
    %1762 = vmatpush1.msra.mxu0 0.0
    %1763 = vmatprep.subr.mxu0 0.0
    %1764 = vmatpush1.msra.mxu0 0.0
    %1765 = vmatprep.subr.mxu0 0.0
    %1766 = vmatpush1.msra.mxu0 0.0
    %1767 = vmatprep.subr.mxu0 0.0
    %1768 = vmatpush1.msra.mxu0 0.0
    %1769 = vmatprep.subr.mxu0 0.0
    %1770 = vmatpush1.msra.mxu0 0.0
    %1771 = vmatprep.subr.mxu0 0.0
    %1772 = vmatpush1.msra.mxu0 0.0
    %1773 = vmatprep.subr.mxu0 0.0
    %1774 = vmatpush1.msra.mxu0 0.0
    %1775 = vmatprep.subr.mxu0 0.0
    %1776 = vmatpush1.msra.mxu0 0.0
    %1777 = vmatprep.subr.mxu0 0.0
    %1778 = vmatpush1.msra.mxu0 0.0
    %1779 = vmatprep.subr.mxu0 0.0
    %1780 = vmatpush1.msra.mxu0 0.0
    %1781 = vmatprep.subr.mxu0 0.0
    %1782 = vmatpush1.msra.mxu0 0.0
    %1783 = vmatprep.subr.mxu0 0.0
    %1784 = vmatpush1.msra.mxu0 0.0
    %1785 = vmatprep.subr.mxu0 0.0
    %1786 = vmatpush1.msra.mxu0 0.0
    %1787 = vmatprep.subr.mxu0 0.0
    %1788 = vmatpush1.msra.mxu0 0.0
    %1789 = vmatprep.subr.mxu0 0.0
    %1790 = vmatpush1.msra.mxu0 0.0
    %1791 = vmatprep.subr.mxu0 0.0
    %1792 = vmatpush1.msra.mxu0 0.0
    %1793 = vmatprep.mubr.f32.mxu0 0.0
    %v1794 = vand.u32 %v590, 4294901760
    %1795 = vmatmul.mubr.f32.gmra.mrb[0].mxu0 %v1794
    %v1796 = vpop.f32.mrb[0].mxu0
    %v1797 = vadd.f32 %v906, %v1796
    %v1798 = vpop.f32.mrb[0].mxu0
    %1799 = vmatprep.mubr.f32.mxu0 0.0
    %v1800 = vand.u32 %v593, 4294901760
    %1801 = vmatmul.mubr.f32.gmra.mrb[0].mxu0 %v1800
    %v1802 = vpop.f32.mrb[0].mxu0
    %v1803 = vadd.f32 %v916, %v1802
    %v1804 = vpop.f32.mrb[0].mxu0
    %1805 = vmatprep.mubr.f32.mxu0 0.0
    %v1806 = vand.u32 %v596, 4294901760
    %1807 = vmatmul.mubr.f32.gmra.mrb[0].mxu0 %v1806
    %v1808 = vpop.f32.mrb[0].mxu0
    %v1809 = vadd.f32 %v926, %v1808
    %v1810 = vpop.f32.mrb[0].mxu0
    %1811 = vmatprep.mubr.f32.mxu0 0.0
    %v1812 = vand.u32 %v599, 4294901760
    %1813 = vmatmul.mubr.f32.gmra.mrb[0].mxu0 %v1812
    %v1814 = vpop.f32.mrb[0].mxu0
    %v1815 = vadd.f32 %v936, %v1814
    %v1816 = vpop.f32.mrb[0].mxu0
    %1817 = vmatprep.mubr.f32.mxu0 0.0
    %v1818 = vand.u32 %v602, 4294901760
    %1819 = vmatmul.mubr.f32.gmra.mrb[0].mxu0 %v1818
    %v1820 = vpop.f32.mrb[0].mxu0
    %v1821 = vadd.f32 %v946, %v1820
    %v1822 = vpop.f32.mrb[0].mxu0
    %1823 = vmatprep.mubr.f32.mxu0 0.0
    %v1824 = vand.u32 %v605, 4294901760
    %1825 = vmatmul.mubr.f32.gmra.mrb[0].mxu0 %v1824
    %v1826 = vpop.f32.mrb[0].mxu0
    %v1827 = vadd.f32 %v956, %v1826
    %v1828 = vpop.f32.mrb[0].mxu0
    %1829 = vmatprep.mubr.f32.mxu0 0.0
    %v1830 = vand.u32 %v608, 4294901760
    %1831 = vmatmul.mubr.f32.gmra.mrb[0].mxu0 %v1830
    %v1832 = vpop.f32.mrb[0].mxu0
    %v1833 = vadd.f32 %v966, %v1832
    %v1834 = vpop.f32.mrb[0].mxu0
    %1835 = vmatprep.mubr.f32.mxu0 0.0
    %v1836 = vand.u32 %v611, 4294901760
    %1837 = vmatmul.mubr.f32.gmra.mrb[0].mxu0 %v1836
    %v1838 = vpop.f32.mrb[0].mxu0
    %v1839 = vadd.f32 %v976, %v1838
    %v1840 = vpop.f32.mrb[0].mxu0
    %1841 = vmatprep.mubr.f32.mxu0 0.0
    %v1842 = vand.u32 %v614, 4294901760
    %1843 = vmatmul.mubr.f32.gmra.mrb[0].mxu0 %v1842
    %v1844 = vpop.f32.mrb[0].mxu0
    %v1845 = vadd.f32 %v986, %v1844
    %v1846 = vpop.f32.mrb[0].mxu0
    %1847 = vmatprep.mubr.f32.mxu0 0.0
    %v1848 = vand.u32 %v617, 4294901760
    %1849 = vmatmul.mubr.f32.gmra.mrb[0].mxu0 %v1848
    %v1850 = vpop.f32.mrb[0].mxu0
    %v1851 = vadd.f32 %v996, %v1850
    %v1852 = vpop.f32.mrb[0].mxu0
    %1853 = vmatprep.mubr.f32.mxu0 0.0
    %v1854 = vand.u32 %v620, 4294901760
    %1855 = vmatmul.mubr.f32.gmra.mrb[0].mxu0 %v1854
    %v1856 = vpop.f32.mrb[0].mxu0
    %v1857 = vadd.f32 %v1006, %v1856
    %v1858 = vpop.f32.mrb[0].mxu0
    %1859 = vmatprep.mubr.f32.mxu0 0.0
    %v1860 = vand.u32 %v623, 4294901760
    %1861 = vmatmul.mubr.f32.gmra.mrb[0].mxu0 %v1860
    %v1862 = vpop.f32.mrb[0].mxu0
    %v1863 = vadd.f32 %v1016, %v1862
    %v1864 = vpop.f32.mrb[0].mxu0
    %1865 = vmatprep.mubr.f32.mxu0 0.0
    %v1866 = vand.u32 %v626, 4294901760
    %1867 = vmatmul.mubr.f32.gmra.mrb[0].mxu0 %v1866
    %v1868 = vpop.f32.mrb[0].mxu0
    %v1869 = vadd.f32 %v1026, %v1868
    %v1870 = vpop.f32.mrb[0].mxu0
    %1871 = vmatprep.mubr.f32.mxu0 0.0
    %v1872 = vand.u32 %v629, 4294901760
    %1873 = vmatmul.mubr.f32.gmra.mrb[0].mxu0 %v1872
    %v1874 = vpop.f32.mrb[0].mxu0
    %v1875 = vadd.f32 %v1036, %v1874
    %v1876 = vpop.f32.mrb[0].mxu0
    %1877 = vmatprep.mubr.f32.mxu0 0.0
    %v1878 = vand.u32 %v632, 4294901760
    %1879 = vmatmul.mubr.f32.gmra.mrb[0].mxu0 %v1878
    %v1880 = vpop.f32.mrb[0].mxu0
    %v1881 = vadd.f32 %v1046, %v1880
    %v1882 = vpop.f32.mrb[0].mxu0
    %1883 = vmatprep.mubr.f32.mxu0 0.0
    %v1884 = vand.u32 %v635, 4294901760
    %1885 = vmatmul.mubr.f32.gmra.mrb[0].mxu0 %v1884
    %v1886 = vpop.f32.mrb[0].mxu0
    %v1887 = vadd.f32 %v1056, %v1886
    %v1888 = vpop.f32.mrb[0].mxu0
    %1889 = vmatprep.mubr.f32.mxu0 0.0
    %v1890 = vand.u32 %v638, 4294901760
    %1891 = vmatmul.mubr.f32.gmra.mrb[0].mxu0 %v1890
    %v1892 = vpop.f32.mrb[0].mxu0
    %v1893 = vadd.f32 %v1066, %v1892
    %v1894 = vpop.f32.mrb[0].mxu0
    %1895 = vmatprep.mubr.f32.mxu0 0.0
    %v1896 = vand.u32 %v641, 4294901760
    %1897 = vmatmul.mubr.f32.gmra.mrb[0].mxu0 %v1896
    %v1898 = vpop.f32.mrb[0].mxu0
    %v1899 = vadd.f32 %v1076, %v1898
    %v1900 = vpop.f32.mrb[0].mxu0
    %1901 = vmatprep.mubr.f32.mxu0 0.0
    %v1902 = vand.u32 %v644, 4294901760
    %1903 = vmatmul.mubr.f32.gmra.mrb[0].mxu0 %v1902
    %v1904 = vpop.f32.mrb[0].mxu0
    %v1905 = vadd.f32 %v1086, %v1904
    %v1906 = vpop.f32.mrb[0].mxu0
    %1907 = vmatprep.mubr.f32.mxu0 0.0
    %v1908 = vand.u32 %v647, 4294901760
    %1909 = vmatmul.mubr.f32.gmra.mrb[0].mxu0 %v1908
    %v1910 = vpop.f32.mrb[0].mxu0
    %v1911 = vadd.f32 %v1096, %v1910
    %v1912 = vpop.f32.mrb[0].mxu0
    %1913 = vmatprep.mubr.f32.mxu0 0.0
    %v1914 = vand.u32 %v650, 4294901760
    %1915 = vmatmul.mubr.f32.gmra.mrb[0].mxu0 %v1914
    %v1916 = vpop.f32.mrb[0].mxu0
    %v1917 = vadd.f32 %v1106, %v1916
    %v1918 = vpop.f32.mrb[0].mxu0
    %1919 = vmatprep.mubr.f32.mxu0 0.0
    %v1920 = vand.u32 %v653, 4294901760
    %1921 = vmatmul.mubr.f32.gmra.mrb[0].mxu0 %v1920
    %v1922 = vpop.f32.mrb[0].mxu0
    %v1923 = vadd.f32 %v1116, %v1922
    %v1924 = vpop.f32.mrb[0].mxu0
    %1925 = vmatprep.mubr.f32.mxu0 0.0
    %v1926 = vand.u32 %v656, 4294901760
    %1927 = vmatmul.mubr.f32.gmra.mrb[0].mxu0 %v1926
    %v1928 = vpop.f32.mrb[0].mxu0
    %v1929 = vadd.f32 %v1126, %v1928
    %v1930 = vpop.f32.mrb[0].mxu0
    %1931 = vmatprep.mubr.f32.mxu0 0.0
    %v1932 = vand.u32 %v659, 4294901760
    %1933 = vmatmul.mubr.f32.gmra.mrb[0].mxu0 %v1932
    %v1934 = vpop.f32.mrb[0].mxu0
    %v1935 = vadd.f32 %v1136, %v1934
    %v1936 = vpop.f32.mrb[0].mxu0
    %1937 = vmatprep.mubr.f32.mxu0 0.0
    %v1938 = vand.u32 %v662, 4294901760
    %1939 = vmatmul.mubr.f32.gmra.mrb[0].mxu0 %v1938
    %v1940 = vpop.f32.mrb[0].mxu0
    %v1941 = vadd.f32 %v1146, %v1940
    %v1942 = vpop.f32.mrb[0].mxu0
    %1943 = vmatprep.mubr.f32.mxu0 0.0
    %v1944 = vand.u32 %v665, 4294901760
    %1945 = vmatmul.mubr.f32.gmra.mrb[0].mxu0 %v1944
    %v1946 = vpop.f32.mrb[0].mxu0
    %v1947 = vadd.f32 %v1156, %v1946
    %v1948 = vpop.f32.mrb[0].mxu0
    %1949 = vmatprep.mubr.f32.mxu0 0.0
    %v1950 = vand.u32 %v668, 4294901760
    %1951 = vmatmul.mubr.f32.gmra.mrb[0].mxu0 %v1950
    %v1952 = vpop.f32.mrb[0].mxu0
    %v1953 = vadd.f32 %v1166, %v1952
    %v1954 = vpop.f32.mrb[0].mxu0
    %1955 = vmatprep.mubr.f32.mxu0 0.0
    %v1956 = vand.u32 %v671, 4294901760
    %1957 = vmatmul.mubr.f32.gmra.mrb[0].mxu0 %v1956
    %v1958 = vpop.f32.mrb[0].mxu0
    %v1959 = vadd.f32 %v1176, %v1958
    %v1960 = vpop.f32.mrb[0].mxu0
    %1961 = vmatprep.mubr.f32.mxu0 0.0
    %v1962 = vand.u32 %v674, 4294901760
    %1963 = vmatmul.mubr.f32.gmra.mrb[0].mxu0 %v1962
    %v1964 = vpop.f32.mrb[0].mxu0
    %v1965 = vadd.f32 %v1186, %v1964
    %v1966 = vpop.f32.mrb[0].mxu0
    %1967 = vmatprep.mubr.f32.mxu0 0.0
    %v1968 = vand.u32 %v677, 4294901760
    %1969 = vmatmul.mubr.f32.gmra.mrb[0].mxu0 %v1968
    %v1970 = vpop.f32.mrb[0].mxu0
    %v1971 = vadd.f32 %v1196, %v1970
    %v1972 = vpop.f32.mrb[0].mxu0
    %1973 = vmatprep.mubr.f32.mxu0 0.0
    %v1974 = vand.u32 %v680, 4294901760
    %1975 = vmatmul.mubr.f32.gmra.mrb[0].mxu0 %v1974
    %v1976 = vpop.f32.mrb[0].mxu0
    %v1977 = vadd.f32 %v1206, %v1976
    %v1978 = vpop.f32.mrb[0].mxu0
    %1979 = vmatprep.mubr.f32.mxu0 0.0
    %v1980 = vand.u32 %v683, 4294901760
    %1981 = vmatmul.mubr.f32.gmra.mrb[0].mxu0 %v1980
    %v1982 = vpop.f32.mrb[0].mxu0
    %v1983 = vadd.f32 %v1216, %v1982
    %v1984 = vpop.f32.mrb[0].mxu0
    %1985 = vmatprep.mubr.f32.mxu0 0.0
    %v1986 = vand.u32 %v686, 4294901760
    %1987 = vmatmul.mubr.f32.gmra.mrb[0].mxu0 %v1986
    %v1988 = vpop.f32.mrb[0].mxu0
    %v1989 = vadd.f32 %v1226, %v1988
    %v1990 = vpop.f32.mrb[0].mxu0
    %1991 = vmatprep.mubr.f32.mxu0 0.0
    %v1992 = vand.u32 %v689, 4294901760
    %1993 = vmatmul.mubr.f32.gmra.mrb[0].mxu0 %v1992
    %v1994 = vpop.f32.mrb[0].mxu0
    %v1995 = vadd.f32 %v1236, %v1994
    %v1996 = vpop.f32.mrb[0].mxu0
    %1997 = vmatprep.mubr.f32.mxu0 0.0
    %v1998 = vand.u32 %v692, 4294901760
    %1999 = vmatmul.mubr.f32.gmra.mrb[0].mxu0 %v1998
    %v2000 = vpop.f32.mrb[0].mxu0
    %v2001 = vadd.f32 %v1246, %v2000
    %v2002 = vpop.f32.mrb[0].mxu0
    %2003 = vmatprep.mubr.f32.mxu0 0.0
    %v2004 = vand.u32 %v695, 4294901760
    %2005 = vmatmul.mubr.f32.gmra.mrb[0].mxu0 %v2004
    %v2006 = vpop.f32.mrb[0].mxu0
    %v2007 = vadd.f32 %v1256, %v2006
    %v2008 = vpop.f32.mrb[0].mxu0
    %2009 = vmatprep.mubr.f32.mxu0 0.0
    %v2010 = vand.u32 %v698, 4294901760
    %2011 = vmatmul.mubr.f32.gmra.mrb[0].mxu0 %v2010
    %v2012 = vpop.f32.mrb[0].mxu0
    %v2013 = vadd.f32 %v1266, %v2012
    %v2014 = vpop.f32.mrb[0].mxu0
    %2015 = vmatprep.mubr.f32.mxu0 0.0
    %v2016 = vand.u32 %v701, 4294901760
    %2017 = vmatmul.mubr.f32.gmra.mrb[0].mxu0 %v2016
    %v2018 = vpop.f32.mrb[0].mxu0
    %v2019 = vadd.f32 %v1276, %v2018
    %v2020 = vpop.f32.mrb[0].mxu0
    %2021 = vmatprep.mubr.f32.mxu0 0.0
    %v2022 = vand.u32 %v704, 4294901760
    %2023 = vmatmul.mubr.f32.gmra.mrb[0].mxu0 %v2022
    %v2024 = vpop.f32.mrb[0].mxu0
    %v2025 = vadd.f32 %v1286, %v2024
    %v2026 = vpop.f32.mrb[0].mxu0
    %2027 = vmatprep.mubr.f32.mxu0 0.0
    %v2028 = vand.u32 %v707, 4294901760
    %2029 = vmatmul.mubr.f32.gmra.mrb[0].mxu0 %v2028
    %v2030 = vpop.f32.mrb[0].mxu0
    %v2031 = vadd.f32 %v1296, %v2030
    %v2032 = vpop.f32.mrb[0].mxu0
    %2033 = vmatprep.mubr.f32.mxu0 0.0
    %v2034 = vand.u32 %v710, 4294901760
    %2035 = vmatmul.mubr.f32.gmra.mrb[0].mxu0 %v2034
    %v2036 = vpop.f32.mrb[0].mxu0
    %v2037 = vadd.f32 %v1306, %v2036
    %v2038 = vpop.f32.mrb[0].mxu0
    %2039 = vmatprep.mubr.f32.mxu0 0.0
    %v2040 = vand.u32 %v713, 4294901760
    %2041 = vmatmul.mubr.f32.gmra.mrb[0].mxu0 %v2040
    %v2042 = vpop.f32.mrb[0].mxu0
    %v2043 = vadd.f32 %v1316, %v2042
    %v2044 = vpop.f32.mrb[0].mxu0
    %2045 = vmatprep.mubr.f32.mxu0 0.0
    %v2046 = vand.u32 %v716, 4294901760
    %2047 = vmatmul.mubr.f32.gmra.mrb[0].mxu0 %v2046
    %v2048 = vpop.f32.mrb[0].mxu0
    %v2049 = vadd.f32 %v1326, %v2048
    %v2050 = vpop.f32.mrb[0].mxu0
    %2051 = vmatprep.mubr.f32.mxu0 0.0
    %v2052 = vand.u32 %v719, 4294901760
    %2053 = vmatmul.mubr.f32.gmra.mrb[0].mxu0 %v2052
    %v2054 = vpop.f32.mrb[0].mxu0
    %v2055 = vadd.f32 %v1336, %v2054
    %v2056 = vpop.f32.mrb[0].mxu0
    %2057 = vmatprep.mubr.f32.mxu0 0.0
    %v2058 = vand.u32 %v722, 4294901760
    %2059 = vmatmul.mubr.f32.gmra.mrb[0].mxu0 %v2058
    %v2060 = vpop.f32.mrb[0].mxu0
    %v2061 = vadd.f32 %v1346, %v2060
    %v2062 = vpop.f32.mrb[0].mxu0
    %2063 = vmatprep.mubr.f32.mxu0 0.0
    %v2064 = vand.u32 %v725, 4294901760
    %2065 = vmatmul.mubr.f32.gmra.mrb[0].mxu0 %v2064
    %v2066 = vpop.f32.mrb[0].mxu0
    %v2067 = vadd.f32 %v1356, %v2066
    %v2068 = vpop.f32.mrb[0].mxu0
    %2069 = vmatprep.mubr.f32.mxu0 0.0
    %v2070 = vand.u32 %v728, 4294901760
    %2071 = vmatmul.mubr.f32.gmra.mrb[0].mxu0 %v2070
    %v2072 = vpop.f32.mrb[0].mxu0
    %v2073 = vadd.f32 %v1366, %v2072
    %v2074 = vpop.f32.mrb[0].mxu0
    %2075 = vmatprep.mubr.f32.mxu0 0.0
    %v2076 = vand.u32 %v731, 4294901760
    %2077 = vmatmul.mubr.f32.gmra.mrb[0].mxu0 %v2076
    %v2078 = vpop.f32.mrb[0].mxu0
    %v2079 = vadd.f32 %v1376, %v2078
    %v2080 = vpop.f32.mrb[0].mxu0
    %2081 = vmatprep.mubr.f32.mxu0 0.0
    %v2082 = vand.u32 %v734, 4294901760
    %2083 = vmatmul.mubr.f32.gmra.mrb[0].mxu0 %v2082
    %v2084 = vpop.f32.mrb[0].mxu0
    %v2085 = vadd.f32 %v1386, %v2084
    %v2086 = vpop.f32.mrb[0].mxu0
    %2087 = vmatprep.mubr.f32.mxu0 0.0
    %v2088 = vand.u32 %v737, 4294901760
    %2089 = vmatmul.mubr.f32.gmra.mrb[0].mxu0 %v2088
    %v2090 = vpop.f32.mrb[0].mxu0
    %v2091 = vadd.f32 %v1396, %v2090
    %v2092 = vpop.f32.mrb[0].mxu0
    %2093 = vmatprep.mubr.f32.mxu0 0.0
    %v2094 = vand.u32 %v740, 4294901760
    %2095 = vmatmul.mubr.f32.gmra.mrb[0].mxu0 %v2094
    %v2096 = vpop.f32.mrb[0].mxu0
    %v2097 = vadd.f32 %v1406, %v2096
    %v2098 = vpop.f32.mrb[0].mxu0
    %2099 = vmatprep.mubr.f32.mxu0 0.0
    %v2100 = vand.u32 %v743, 4294901760
    %2101 = vmatmul.mubr.f32.gmra.mrb[0].mxu0 %v2100
    %v2102 = vpop.f32.mrb[0].mxu0
    %v2103 = vadd.f32 %v1416, %v2102
    %v2104 = vpop.f32.mrb[0].mxu0
    %2105 = vmatprep.mubr.f32.mxu0 0.0
    %v2106 = vand.u32 %v746, 4294901760
    %2107 = vmatmul.mubr.f32.gmra.mrb[0].mxu0 %v2106
    %v2108 = vpop.f32.mrb[0].mxu0
    %v2109 = vadd.f32 %v1426, %v2108
    %v2110 = vpop.f32.mrb[0].mxu0
    %2111 = vmatprep.mubr.f32.mxu0 0.0
    %v2112 = vand.u32 %v749, 4294901760
    %2113 = vmatmul.mubr.f32.gmra.mrb[0].mxu0 %v2112
    %v2114 = vpop.f32.mrb[0].mxu0
    %v2115 = vadd.f32 %v1436, %v2114
    %v2116 = vpop.f32.mrb[0].mxu0
    %2117 = vmatprep.mubr.f32.mxu0 0.0
    %v2118 = vand.u32 %v752, 4294901760
    %2119 = vmatmul.mubr.f32.gmra.mrb[0].mxu0 %v2118
    %v2120 = vpop.f32.mrb[0].mxu0
    %v2121 = vadd.f32 %v1446, %v2120
    %v2122 = vpop.f32.mrb[0].mxu0
    %2123 = vmatprep.mubr.f32.mxu0 0.0
    %v2124 = vand.u32 %v755, 4294901760
    %2125 = vmatmul.mubr.f32.gmra.mrb[0].mxu0 %v2124
    %v2126 = vpop.f32.mrb[0].mxu0
    %v2127 = vadd.f32 %v1456, %v2126
    %v2128 = vpop.f32.mrb[0].mxu0
    %2129 = vmatprep.mubr.f32.mxu0 0.0
    %v2130 = vand.u32 %v758, 4294901760
    %2131 = vmatmul.mubr.f32.gmra.mrb[0].mxu0 %v2130
    %v2132 = vpop.f32.mrb[0].mxu0
    %v2133 = vadd.f32 %v1466, %v2132
    %v2134 = vpop.f32.mrb[0].mxu0
    %2135 = vmatprep.mubr.f32.mxu0 0.0
    %v2136 = vand.u32 %v761, 4294901760
    %2137 = vmatmul.mubr.f32.gmra.mrb[0].mxu0 %v2136
    %v2138 = vpop.f32.mrb[0].mxu0
    %v2139 = vadd.f32 %v1476, %v2138
    %v2140 = vpop.f32.mrb[0].mxu0
    %2141 = vmatprep.mubr.f32.mxu0 0.0
    %v2142 = vand.u32 %v764, 4294901760
    %2143 = vmatmul.mubr.f32.gmra.mrb[0].mxu0 %v2142
    %v2144 = vpop.f32.mrb[0].mxu0
    %v2145 = vadd.f32 %v1486, %v2144
    %v2146 = vpop.f32.mrb[0].mxu0
    %2147 = vmatprep.mubr.f32.mxu0 0.0
    %v2148 = vand.u32 %v767, 4294901760
    %2149 = vmatmul.mubr.f32.gmra.mrb[0].mxu0 %v2148
    %v2150 = vpop.f32.mrb[0].mxu0
    %v2151 = vadd.f32 %v1496, %v2150
    %v2152 = vpop.f32.mrb[0].mxu0
    %2153 = vmatprep.mubr.f32.mxu0 0.0
    %v2154 = vand.u32 %v770, 4294901760
    %2155 = vmatmul.mubr.f32.gmra.mrb[0].mxu0 %v2154
    %v2156 = vpop.f32.mrb[0].mxu0
    %v2157 = vadd.f32 %v1506, %v2156
    %v2158 = vpop.f32.mrb[0].mxu0
    %2159 = vmatprep.mubr.f32.mxu0 0.0
    %v2160 = vand.u32 %v773, 4294901760
    %2161 = vmatmul.mubr.f32.gmra.mrb[0].mxu0 %v2160
    %v2162 = vpop.f32.mrb[0].mxu0
    %v2163 = vadd.f32 %v1516, %v2162
    %v2164 = vpop.f32.mrb[0].mxu0
    %2165 = vmatprep.mubr.f32.mxu0 0.0
    %v2166 = vand.u32 %v776, 4294901760
    %2167 = vmatmul.mubr.f32.gmra.mrb[0].mxu0 %v2166
    %v2168 = vpop.f32.mrb[0].mxu0
    %v2169 = vadd.f32 %v1526, %v2168
    %v2170 = vpop.f32.mrb[0].mxu0
    %2171 = vmatprep.mubr.f32.mxu0 0.0
    %v2172 = vand.u32 %v779, 4294901760
    %2173 = vmatmul.mubr.f32.gmra.mrb[0].mxu0 %v2172
    %v2174 = vpop.f32.mrb[0].mxu0
    %v2175 = vadd.f32 %v1536, %v2174
    %v2176 = vpop.f32.mrb[0].mxu0
    %2177 = vmatprep.mubr.f32.mxu0 0.0
    %v2178 = vand.u32 %v782, 4294901760
    %2179 = vmatmul.mubr.f32.gmra.mrb[0].mxu0 %v2178
    %v2180 = vpop.f32.mrb[0].mxu0
    %v2181 = vadd.f32 %v1546, %v2180
    %v2182 = vpop.f32.mrb[0].mxu0
    %2183 = vmatprep.mubr.f32.mxu0 0.0
    %v2184 = vand.u32 %v785, 4294901760
    %2185 = vmatmul.mubr.f32.gmra.mrb[0].mxu0 %v2184
    %v2186 = vpop.f32.mrb[0].mxu0
    %v2187 = vadd.f32 %v1556, %v2186
    %v2188 = vpop.f32.mrb[0].mxu0
    %2189 = vmatprep.mubr.f32.mxu0 0.0
    %v2190 = vand.u32 %v788, 4294901760
    %2191 = vmatmul.mubr.f32.gmra.mrb[0].mxu0 %v2190
    %v2192 = vpop.f32.mrb[0].mxu0
    %v2193 = vadd.f32 %v1566, %v2192
    %v2194 = vpop.f32.mrb[0].mxu0
    %2195 = vmatprep.mubr.f32.mxu0 0.0
    %v2196 = vand.u32 %v791, 4294901760
    %2197 = vmatmul.mubr.f32.gmra.mrb[0].mxu0 %v2196
    %v2198 = vpop.f32.mrb[0].mxu0
    %v2199 = vadd.f32 %v1576, %v2198
    %v2200 = vpop.f32.mrb[0].mxu0
    %2201 = vmatprep.mubr.f32.mxu0 0.0
    %v2202 = vand.u32 %v794, 4294901760
    %2203 = vmatmul.mubr.f32.gmra.mrb[0].mxu0 %v2202
    %v2204 = vpop.f32.mrb[0].mxu0
    %v2205 = vadd.f32 %v1586, %v2204
    %v2206 = vpop.f32.mrb[0].mxu0
    %2207 = vmatprep.mubr.f32.mxu0 0.0
    %v2208 = vand.u32 %v797, 4294901760
    %2209 = vmatmul.mubr.f32.gmra.mrb[0].mxu0 %v2208
    %v2210 = vpop.f32.mrb[0].mxu0
    %v2211 = vadd.f32 %v1596, %v2210
    %v2212 = vpop.f32.mrb[0].mxu0
    %2213 = vmatprep.mubr.f32.mxu0 0.0
    %v2214 = vand.u32 %v800, 4294901760
    %2215 = vmatmul.mubr.f32.gmra.mrb[0].mxu0 %v2214
    %v2216 = vpop.f32.mrb[0].mxu0
    %v2217 = vadd.f32 %v1606, %v2216
    %v2218 = vpop.f32.mrb[0].mxu0
    %2219 = vmatprep.mubr.f32.mxu0 0.0
    %v2220 = vand.u32 %v803, 4294901760
    %2221 = vmatmul.mubr.f32.gmra.mrb[0].mxu0 %v2220
    %v2222 = vpop.f32.mrb[0].mxu0
    %v2223 = vadd.f32 %v1616, %v2222
    %v2224 = vpop.f32.mrb[0].mxu0
    %2225 = vmatprep.mubr.f32.mxu0 0.0
    %v2226 = vand.u32 %v806, 4294901760
    %2227 = vmatmul.mubr.f32.gmra.mrb[0].mxu0 %v2226
    %v2228 = vpop.f32.mrb[0].mxu0
    %v2229 = vadd.f32 %v1626, %v2228
    %v2230 = vpop.f32.mrb[0].mxu0
    %2231 = vmatprep.mubr.f32.mxu0 0.0
    %v2232 = vand.u32 %v809, 4294901760
    %2233 = vmatmul.mubr.f32.gmra.mrb[0].mxu0 %v2232
    %v2234 = vpop.f32.mrb[0].mxu0
    %v2235 = vadd.f32 %v1636, %v2234
    %v2236 = vpop.f32.mrb[0].mxu0
    %2237 = vmatprep.mubr.f32.mxu0 0.0
    %v2238 = vand.u32 %v812, 4294901760
    %2239 = vmatmul.mubr.f32.gmra.mrb[0].mxu0 %v2238
    %v2240 = vpop.f32.mrb[0].mxu0
    %v2241 = vadd.f32 %v1646, %v2240
    %v2242 = vpop.f32.mrb[0].mxu0
    %2243 = vdwg.mxu0
    %2244 = vmatprep.subr.mxu0 0.0
    %v2245 = vand.u32 %v47, 4294901760
    %v2246 = vsub.f32 %v47, %v2245
    %2247 = vmatpush1.msra.mxu0 %v2246
    %2248 = vmatprep.subr.mxu0 0.0
    %v2249 = vand.u32 %v48, 4294901760
    %v2250 = vsub.f32 %v48, %v2249
    %2251 = vmatpush1.msra.mxu0 %v2250
    %2252 = vmatprep.subr.mxu0 0.0
    %v2253 = vand.u32 %v49, 4294901760
    %v2254 = vsub.f32 %v49, %v2253
    %2255 = vmatpush1.msra.mxu0 %v2254
    %2256 = vmatprep.subr.mxu0 0.0
    %v2257 = vand.u32 %v50, 4294901760
    %v2258 = vsub.f32 %v50, %v2257
    %2259 = vmatpush1.msra.mxu0 %v2258
    %2260 = vmatprep.subr.mxu0 0.0
    %v2261 = vand.u32 %v51, 4294901760
    %v2262 = vsub.f32 %v51, %v2261
    %2263 = vmatpush1.msra.mxu0 %v2262
    %2264 = vmatprep.subr.mxu0 0.0
    %v2265 = vand.u32 %v52, 4294901760
    %v2266 = vsub.f32 %v52, %v2265
    %2267 = vmatpush1.msra.mxu0 %v2266
    %2268 = vmatprep.subr.mxu0 0.0
    %v2269 = vand.u32 %v53, 4294901760
    %v2270 = vsub.f32 %v53, %v2269
    %2271 = vmatpush1.msra.mxu0 %v2270
    %2272 = vmatprep.subr.mxu0 0.0
    %v2273 = vand.u32 %v54, 4294901760
    %v2274 = vsub.f32 %v54, %v2273
    %2275 = vmatpush1.msra.mxu0 %v2274
    %2276 = vmatprep.subr.mxu0 0.0
    %v2277 = vand.u32 %v55, 4294901760
    %v2278 = vsub.f32 %v55, %v2277
    %2279 = vmatpush1.msra.mxu0 %v2278
    %2280 = vmatprep.subr.mxu0 0.0
    %v2281 = vand.u32 %v56, 4294901760
    %v2282 = vsub.f32 %v56, %v2281
    %2283 = vmatpush1.msra.mxu0 %v2282
    %2284 = vmatprep.subr.mxu0 0.0
    %v2285 = vand.u32 %v57, 4294901760
    %v2286 = vsub.f32 %v57, %v2285
    %2287 = vmatpush1.msra.mxu0 %v2286
    %2288 = vmatprep.subr.mxu0 0.0
    %v2289 = vand.u32 %v58, 4294901760
    %v2290 = vsub.f32 %v58, %v2289
    %2291 = vmatpush1.msra.mxu0 %v2290
    %2292 = vmatprep.subr.mxu0 0.0
    %v2293 = vand.u32 %v59, 4294901760
    %v2294 = vsub.f32 %v59, %v2293
    %2295 = vmatpush1.msra.mxu0 %v2294
    %2296 = vmatprep.subr.mxu0 0.0
    %v2297 = vand.u32 %v60, 4294901760
    %v2298 = vsub.f32 %v60, %v2297
    %2299 = vmatpush1.msra.mxu0 %v2298
    %2300 = vmatprep.subr.mxu0 0.0
    %v2301 = vand.u32 %v61, 4294901760
    %v2302 = vsub.f32 %v61, %v2301
    %2303 = vmatpush1.msra.mxu0 %v2302
    %2304 = vmatprep.subr.mxu0 0.0
    %v2305 = vand.u32 %v816, 4294901760
    %v2306 = vsub.f32 %v816, %v2305
    %2307 = vmatpush1.msra.mxu0 %v2306
    %2308 = vmatprep.subr.mxu0 0.0
    %2309 = vmatpush1.msra.mxu0 0.0
    %2310 = vmatprep.subr.mxu0 0.0
    %2311 = vmatpush1.msra.mxu0 0.0
    %2312 = vmatprep.subr.mxu0 0.0
    %2313 = vmatpush1.msra.mxu0 0.0
    %2314 = vmatprep.subr.mxu0 0.0
    %2315 = vmatpush1.msra.mxu0 0.0
    %2316 = vmatprep.subr.mxu0 0.0
    %2317 = vmatpush1.msra.mxu0 0.0
    %2318 = vmatprep.subr.mxu0 0.0
    %2319 = vmatpush1.msra.mxu0 0.0
    %2320 = vmatprep.subr.mxu0 0.0
    %2321 = vmatpush1.msra.mxu0 0.0
    %2322 = vmatprep.subr.mxu0 0.0
    %2323 = vmatpush1.msra.mxu0 0.0
    %2324 = vmatprep.subr.mxu0 0.0
    %2325 = vmatpush1.msra.mxu0 0.0
    %2326 = vmatprep.subr.mxu0 0.0
    %2327 = vmatpush1.msra.mxu0 0.0
    %2328 = vmatprep.subr.mxu0 0.0
    %2329 = vmatpush1.msra.mxu0 0.0
    %2330 = vmatprep.subr.mxu0 0.0
    %2331 = vmatpush1.msra.mxu0 0.0
    %2332 = vmatprep.subr.mxu0 0.0
    %2333 = vmatpush1.msra.mxu0 0.0
    %2334 = vmatprep.subr.mxu0 0.0
    %2335 = vmatpush1.msra.mxu0 0.0
    %2336 = vmatprep.subr.mxu0 0.0
    %2337 = vmatpush1.msra.mxu0 0.0
    %2338 = vmatprep.subr.mxu0 0.0
    %2339 = vmatpush1.msra.mxu0 0.0
    %2340 = vmatprep.mubr.f32.mxu0 0.0
    %v2341 = vand.u32 %v590, 4294901760
    %v2342 = vsub.f32 %v590, %v2341
    %2343 = vmatmul.mubr.f32.gmra.mrb[0].mxu0 %v2342
    %v2344 = vpop.f32.mrb[0].mxu0
    %v2345 = vadd.f32 %v1797, %v2344
    %v2346 = vpop.f32.mrb[0].mxu0
    %2347 = vmatprep.mubr.f32.mxu0 0.0
    %v2348 = vand.u32 %v593, 4294901760
    %v2349 = vsub.f32 %v593, %v2348
    %2350 = vmatmul.mubr.f32.gmra.mrb[0].mxu0 %v2349
    %v2351 = vpop.f32.mrb[0].mxu0
    %v2352 = vadd.f32 %v1803, %v2351
    %v2353 = vpop.f32.mrb[0].mxu0
    %2354 = vmatprep.mubr.f32.mxu0 0.0
    %v2355 = vand.u32 %v596, 4294901760
    %v2356 = vsub.f32 %v596, %v2355
    %2357 = vmatmul.mubr.f32.gmra.mrb[0].mxu0 %v2356
    %v2358 = vpop.f32.mrb[0].mxu0
    %v2359 = vadd.f32 %v1809, %v2358
    %v2360 = vpop.f32.mrb[0].mxu0
    %2361 = vmatprep.mubr.f32.mxu0 0.0
    %v2362 = vand.u32 %v599, 4294901760
    %v2363 = vsub.f32 %v599, %v2362
    %2364 = vmatmul.mubr.f32.gmra.mrb[0].mxu0 %v2363
    %v2365 = vpop.f32.mrb[0].mxu0
    %v2366 = vadd.f32 %v1815, %v2365
    %v2367 = vpop.f32.mrb[0].mxu0
    %2368 = vmatprep.mubr.f32.mxu0 0.0
    %v2369 = vand.u32 %v602, 4294901760
    %v2370 = vsub.f32 %v602, %v2369
    %2371 = vmatmul.mubr.f32.gmra.mrb[0].mxu0 %v2370
    %v2372 = vpop.f32.mrb[0].mxu0
    %v2373 = vadd.f32 %v1821, %v2372
    %v2374 = vpop.f32.mrb[0].mxu0
    %2375 = vmatprep.mubr.f32.mxu0 0.0
    %v2376 = vand.u32 %v605, 4294901760
    %v2377 = vsub.f32 %v605, %v2376
    %2378 = vmatmul.mubr.f32.gmra.mrb[0].mxu0 %v2377
    %v2379 = vpop.f32.mrb[0].mxu0
    %v2380 = vadd.f32 %v1827, %v2379
    %v2381 = vpop.f32.mrb[0].mxu0
    %2382 = vmatprep.mubr.f32.mxu0 0.0
    %v2383 = vand.u32 %v608, 4294901760
    %v2384 = vsub.f32 %v608, %v2383
    %2385 = vmatmul.mubr.f32.gmra.mrb[0].mxu0 %v2384
    %v2386 = vpop.f32.mrb[0].mxu0
    %v2387 = vadd.f32 %v1833, %v2386
    %v2388 = vpop.f32.mrb[0].mxu0
    %2389 = vmatprep.mubr.f32.mxu0 0.0
    %v2390 = vand.u32 %v611, 4294901760
    %v2391 = vsub.f32 %v611, %v2390
    %2392 = vmatmul.mubr.f32.gmra.mrb[0].mxu0 %v2391
    %v2393 = vpop.f32.mrb[0].mxu0
    %v2394 = vadd.f32 %v1839, %v2393
    %v2395 = vpop.f32.mrb[0].mxu0
    %2396 = vmatprep.mubr.f32.mxu0 0.0
    %v2397 = vand.u32 %v614, 4294901760
    %v2398 = vsub.f32 %v614, %v2397
    %2399 = vmatmul.mubr.f32.gmra.mrb[0].mxu0 %v2398
    %v2400 = vpop.f32.mrb[0].mxu0
    %v2401 = vadd.f32 %v1845, %v2400
    %v2402 = vpop.f32.mrb[0].mxu0
    %2403 = vmatprep.mubr.f32.mxu0 0.0
    %v2404 = vand.u32 %v617, 4294901760
    %v2405 = vsub.f32 %v617, %v2404
    %2406 = vmatmul.mubr.f32.gmra.mrb[0].mxu0 %v2405
    %v2407 = vpop.f32.mrb[0].mxu0
    %v2408 = vadd.f32 %v1851, %v2407
    %v2409 = vpop.f32.mrb[0].mxu0
    %2410 = vmatprep.mubr.f32.mxu0 0.0
    %v2411 = vand.u32 %v620, 4294901760
    %v2412 = vsub.f32 %v620, %v2411
    %2413 = vmatmul.mubr.f32.gmra.mrb[0].mxu0 %v2412
    %v2414 = vpop.f32.mrb[0].mxu0
    %v2415 = vadd.f32 %v1857, %v2414
    %v2416 = vpop.f32.mrb[0].mxu0
    %2417 = vmatprep.mubr.f32.mxu0 0.0
    %v2418 = vand.u32 %v623, 4294901760
    %v2419 = vsub.f32 %v623, %v2418
    %2420 = vmatmul.mubr.f32.gmra.mrb[0].mxu0 %v2419
    %v2421 = vpop.f32.mrb[0].mxu0
    %v2422 = vadd.f32 %v1863, %v2421
    %v2423 = vpop.f32.mrb[0].mxu0
    %2424 = vmatprep.mubr.f32.mxu0 0.0
    %v2425 = vand.u32 %v626, 4294901760
    %v2426 = vsub.f32 %v626, %v2425
    %2427 = vmatmul.mubr.f32.gmra.mrb[0].mxu0 %v2426
    %v2428 = vpop.f32.mrb[0].mxu0
    %v2429 = vadd.f32 %v1869, %v2428
    %v2430 = vpop.f32.mrb[0].mxu0
    %2431 = vmatprep.mubr.f32.mxu0 0.0
    %v2432 = vand.u32 %v629, 4294901760
    %v2433 = vsub.f32 %v629, %v2432
    %2434 = vmatmul.mubr.f32.gmra.mrb[0].mxu0 %v2433
    %v2435 = vpop.f32.mrb[0].mxu0
    %v2436 = vadd.f32 %v1875, %v2435
    %v2437 = vpop.f32.mrb[0].mxu0
    %2438 = vmatprep.mubr.f32.mxu0 0.0
    %v2439 = vand.u32 %v632, 4294901760
    %v2440 = vsub.f32 %v632, %v2439
    %2441 = vmatmul.mubr.f32.gmra.mrb[0].mxu0 %v2440
    %v2442 = vpop.f32.mrb[0].mxu0
    %v2443 = vadd.f32 %v1881, %v2442
    %v2444 = vpop.f32.mrb[0].mxu0
    %2445 = vmatprep.mubr.f32.mxu0 0.0
    %v2446 = vand.u32 %v635, 4294901760
    %v2447 = vsub.f32 %v635, %v2446
    %2448 = vmatmul.mubr.f32.gmra.mrb[0].mxu0 %v2447
    %v2449 = vpop.f32.mrb[0].mxu0
    %v2450 = vadd.f32 %v1887, %v2449
    %v2451 = vpop.f32.mrb[0].mxu0
    %2452 = vmatprep.mubr.f32.mxu0 0.0
    %v2453 = vand.u32 %v638, 4294901760
    %v2454 = vsub.f32 %v638, %v2453
    %2455 = vmatmul.mubr.f32.gmra.mrb[0].mxu0 %v2454
    %v2456 = vpop.f32.mrb[0].mxu0
    %v2457 = vadd.f32 %v1893, %v2456
    %v2458 = vpop.f32.mrb[0].mxu0
    %2459 = vmatprep.mubr.f32.mxu0 0.0
    %v2460 = vand.u32 %v641, 4294901760
    %v2461 = vsub.f32 %v641, %v2460
    %2462 = vmatmul.mubr.f32.gmra.mrb[0].mxu0 %v2461
    %v2463 = vpop.f32.mrb[0].mxu0
    %v2464 = vadd.f32 %v1899, %v2463
    %v2465 = vpop.f32.mrb[0].mxu0
    %2466 = vmatprep.mubr.f32.mxu0 0.0
    %v2467 = vand.u32 %v644, 4294901760
    %v2468 = vsub.f32 %v644, %v2467
    %2469 = vmatmul.mubr.f32.gmra.mrb[0].mxu0 %v2468
    %v2470 = vpop.f32.mrb[0].mxu0
    %v2471 = vadd.f32 %v1905, %v2470
    %v2472 = vpop.f32.mrb[0].mxu0
    %2473 = vmatprep.mubr.f32.mxu0 0.0
    %v2474 = vand.u32 %v647, 4294901760
    %v2475 = vsub.f32 %v647, %v2474
    %2476 = vmatmul.mubr.f32.gmra.mrb[0].mxu0 %v2475
    %v2477 = vpop.f32.mrb[0].mxu0
    %v2478 = vadd.f32 %v1911, %v2477
    %v2479 = vpop.f32.mrb[0].mxu0
    %2480 = vmatprep.mubr.f32.mxu0 0.0
    %v2481 = vand.u32 %v650, 4294901760
    %v2482 = vsub.f32 %v650, %v2481
    %2483 = vmatmul.mubr.f32.gmra.mrb[0].mxu0 %v2482
    %v2484 = vpop.f32.mrb[0].mxu0
    %v2485 = vadd.f32 %v1917, %v2484
    %v2486 = vpop.f32.mrb[0].mxu0
    %2487 = vmatprep.mubr.f32.mxu0 0.0
    %v2488 = vand.u32 %v653, 4294901760
    %v2489 = vsub.f32 %v653, %v2488
    %2490 = vmatmul.mubr.f32.gmra.mrb[0].mxu0 %v2489
    %v2491 = vpop.f32.mrb[0].mxu0
    %v2492 = vadd.f32 %v1923, %v2491
    %v2493 = vpop.f32.mrb[0].mxu0
    %2494 = vmatprep.mubr.f32.mxu0 0.0
    %v2495 = vand.u32 %v656, 4294901760
    %v2496 = vsub.f32 %v656, %v2495
    %2497 = vmatmul.mubr.f32.gmra.mrb[0].mxu0 %v2496
    %v2498 = vpop.f32.mrb[0].mxu0
    %v2499 = vadd.f32 %v1929, %v2498
    %v2500 = vpop.f32.mrb[0].mxu0
    %2501 = vmatprep.mubr.f32.mxu0 0.0
    %v2502 = vand.u32 %v659, 4294901760
    %v2503 = vsub.f32 %v659, %v2502
    %2504 = vmatmul.mubr.f32.gmra.mrb[0].mxu0 %v2503
    %v2505 = vpop.f32.mrb[0].mxu0
    %v2506 = vadd.f32 %v1935, %v2505
    %v2507 = vpop.f32.mrb[0].mxu0
    %2508 = vmatprep.mubr.f32.mxu0 0.0
    %v2509 = vand.u32 %v662, 4294901760
    %v2510 = vsub.f32 %v662, %v2509
    %2511 = vmatmul.mubr.f32.gmra.mrb[0].mxu0 %v2510
    %v2512 = vpop.f32.mrb[0].mxu0
    %v2513 = vadd.f32 %v1941, %v2512
    %v2514 = vpop.f32.mrb[0].mxu0
    %2515 = vmatprep.mubr.f32.mxu0 0.0
    %v2516 = vand.u32 %v665, 4294901760
    %v2517 = vsub.f32 %v665, %v2516
    %2518 = vmatmul.mubr.f32.gmra.mrb[0].mxu0 %v2517
    %v2519 = vpop.f32.mrb[0].mxu0
    %v2520 = vadd.f32 %v1947, %v2519
    %v2521 = vpop.f32.mrb[0].mxu0
    %2522 = vmatprep.mubr.f32.mxu0 0.0
    %v2523 = vand.u32 %v668, 4294901760
    %v2524 = vsub.f32 %v668, %v2523
    %2525 = vmatmul.mubr.f32.gmra.mrb[0].mxu0 %v2524
    %v2526 = vpop.f32.mrb[0].mxu0
    %v2527 = vadd.f32 %v1953, %v2526
    %v2528 = vpop.f32.mrb[0].mxu0
    %2529 = vmatprep.mubr.f32.mxu0 0.0
    %v2530 = vand.u32 %v671, 4294901760
    %v2531 = vsub.f32 %v671, %v2530
    %2532 = vmatmul.mubr.f32.gmra.mrb[0].mxu0 %v2531
    %v2533 = vpop.f32.mrb[0].mxu0
    %v2534 = vadd.f32 %v1959, %v2533
    %v2535 = vpop.f32.mrb[0].mxu0
    %2536 = vmatprep.mubr.f32.mxu0 0.0
    %v2537 = vand.u32 %v674, 4294901760
    %v2538 = vsub.f32 %v674, %v2537
    %2539 = vmatmul.mubr.f32.gmra.mrb[0].mxu0 %v2538
    %v2540 = vpop.f32.mrb[0].mxu0
    %v2541 = vadd.f32 %v1965, %v2540
    %v2542 = vpop.f32.mrb[0].mxu0
    %2543 = vmatprep.mubr.f32.mxu0 0.0
    %v2544 = vand.u32 %v677, 4294901760
    %v2545 = vsub.f32 %v677, %v2544
    %2546 = vmatmul.mubr.f32.gmra.mrb[0].mxu0 %v2545
    %v2547 = vpop.f32.mrb[0].mxu0
    %v2548 = vadd.f32 %v1971, %v2547
    %v2549 = vpop.f32.mrb[0].mxu0
    %2550 = vmatprep.mubr.f32.mxu0 0.0
    %v2551 = vand.u32 %v680, 4294901760
    %v2552 = vsub.f32 %v680, %v2551
    %2553 = vmatmul.mubr.f32.gmra.mrb[0].mxu0 %v2552
    %v2554 = vpop.f32.mrb[0].mxu0
    %v2555 = vadd.f32 %v1977, %v2554
    %v2556 = vpop.f32.mrb[0].mxu0
    %2557 = vmatprep.mubr.f32.mxu0 0.0
    %v2558 = vand.u32 %v683, 4294901760
    %v2559 = vsub.f32 %v683, %v2558
    %2560 = vmatmul.mubr.f32.gmra.mrb[0].mxu0 %v2559
    %v2561 = vpop.f32.mrb[0].mxu0
    %v2562 = vadd.f32 %v1983, %v2561
    %v2563 = vpop.f32.mrb[0].mxu0
    %2564 = vmatprep.mubr.f32.mxu0 0.0
    %v2565 = vand.u32 %v686, 4294901760
    %v2566 = vsub.f32 %v686, %v2565
    %2567 = vmatmul.mubr.f32.gmra.mrb[0].mxu0 %v2566
    %v2568 = vpop.f32.mrb[0].mxu0
    %v2569 = vadd.f32 %v1989, %v2568
    %v2570 = vpop.f32.mrb[0].mxu0
    %2571 = vmatprep.mubr.f32.mxu0 0.0
    %v2572 = vand.u32 %v689, 4294901760
    %v2573 = vsub.f32 %v689, %v2572
    %2574 = vmatmul.mubr.f32.gmra.mrb[0].mxu0 %v2573
    %v2575 = vpop.f32.mrb[0].mxu0
    %v2576 = vadd.f32 %v1995, %v2575
    %v2577 = vpop.f32.mrb[0].mxu0
    %2578 = vmatprep.mubr.f32.mxu0 0.0
    %v2579 = vand.u32 %v692, 4294901760
    %v2580 = vsub.f32 %v692, %v2579
    %2581 = vmatmul.mubr.f32.gmra.mrb[0].mxu0 %v2580
    %v2582 = vpop.f32.mrb[0].mxu0
    %v2583 = vadd.f32 %v2001, %v2582
    %v2584 = vpop.f32.mrb[0].mxu0
    %2585 = vmatprep.mubr.f32.mxu0 0.0
    %v2586 = vand.u32 %v695, 4294901760
    %v2587 = vsub.f32 %v695, %v2586
    %2588 = vmatmul.mubr.f32.gmra.mrb[0].mxu0 %v2587
    %v2589 = vpop.f32.mrb[0].mxu0
    %v2590 = vadd.f32 %v2007, %v2589
    %v2591 = vpop.f32.mrb[0].mxu0
    %2592 = vmatprep.mubr.f32.mxu0 0.0
    %v2593 = vand.u32 %v698, 4294901760
    %v2594 = vsub.f32 %v698, %v2593
    %2595 = vmatmul.mubr.f32.gmra.mrb[0].mxu0 %v2594
    %v2596 = vpop.f32.mrb[0].mxu0
    %v2597 = vadd.f32 %v2013, %v2596
    %v2598 = vpop.f32.mrb[0].mxu0
    %2599 = vmatprep.mubr.f32.mxu0 0.0
    %v2600 = vand.u32 %v701, 4294901760
    %v2601 = vsub.f32 %v701, %v2600
    %2602 = vmatmul.mubr.f32.gmra.mrb[0].mxu0 %v2601
    %v2603 = vpop.f32.mrb[0].mxu0
    %v2604 = vadd.f32 %v2019, %v2603
    %v2605 = vpop.f32.mrb[0].mxu0
    %2606 = vmatprep.mubr.f32.mxu0 0.0
    %v2607 = vand.u32 %v704, 4294901760
    %v2608 = vsub.f32 %v704, %v2607
    %2609 = vmatmul.mubr.f32.gmra.mrb[0].mxu0 %v2608
    %v2610 = vpop.f32.mrb[0].mxu0
    %v2611 = vadd.f32 %v2025, %v2610
    %v2612 = vpop.f32.mrb[0].mxu0
    %2613 = vmatprep.mubr.f32.mxu0 0.0
    %v2614 = vand.u32 %v707, 4294901760
    %v2615 = vsub.f32 %v707, %v2614
    %2616 = vmatmul.mubr.f32.gmra.mrb[0].mxu0 %v2615
    %v2617 = vpop.f32.mrb[0].mxu0
    %v2618 = vadd.f32 %v2031, %v2617
    %v2619 = vpop.f32.mrb[0].mxu0
    %2620 = vmatprep.mubr.f32.mxu0 0.0
    %v2621 = vand.u32 %v710, 4294901760
    %v2622 = vsub.f32 %v710, %v2621
    %2623 = vmatmul.mubr.f32.gmra.mrb[0].mxu0 %v2622
    %v2624 = vpop.f32.mrb[0].mxu0
    %v2625 = vadd.f32 %v2037, %v2624
    %v2626 = vpop.f32.mrb[0].mxu0
    %2627 = vmatprep.mubr.f32.mxu0 0.0
    %v2628 = vand.u32 %v713, 4294901760
    %v2629 = vsub.f32 %v713, %v2628
    %2630 = vmatmul.mubr.f32.gmra.mrb[0].mxu0 %v2629
    %v2631 = vpop.f32.mrb[0].mxu0
    %v2632 = vadd.f32 %v2043, %v2631
    %v2633 = vpop.f32.mrb[0].mxu0
    %2634 = vmatprep.mubr.f32.mxu0 0.0
    %v2635 = vand.u32 %v716, 4294901760
    %v2636 = vsub.f32 %v716, %v2635
    %2637 = vmatmul.mubr.f32.gmra.mrb[0].mxu0 %v2636
    %v2638 = vpop.f32.mrb[0].mxu0
    %v2639 = vadd.f32 %v2049, %v2638
    %v2640 = vpop.f32.mrb[0].mxu0
    %2641 = vmatprep.mubr.f32.mxu0 0.0
    %v2642 = vand.u32 %v719, 4294901760
    %v2643 = vsub.f32 %v719, %v2642
    %2644 = vmatmul.mubr.f32.gmra.mrb[0].mxu0 %v2643
    %v2645 = vpop.f32.mrb[0].mxu0
    %v2646 = vadd.f32 %v2055, %v2645
    %v2647 = vpop.f32.mrb[0].mxu0
    %2648 = vmatprep.mubr.f32.mxu0 0.0
    %v2649 = vand.u32 %v722, 4294901760
    %v2650 = vsub.f32 %v722, %v2649
    %2651 = vmatmul.mubr.f32.gmra.mrb[0].mxu0 %v2650
    %v2652 = vpop.f32.mrb[0].mxu0
    %v2653 = vadd.f32 %v2061, %v2652
    %v2654 = vpop.f32.mrb[0].mxu0
    %2655 = vmatprep.mubr.f32.mxu0 0.0
    %v2656 = vand.u32 %v725, 4294901760
    %v2657 = vsub.f32 %v725, %v2656
    %2658 = vmatmul.mubr.f32.gmra.mrb[0].mxu0 %v2657
    %v2659 = vpop.f32.mrb[0].mxu0
    %v2660 = vadd.f32 %v2067, %v2659
    %v2661 = vpop.f32.mrb[0].mxu0
    %2662 = vmatprep.mubr.f32.mxu0 0.0
    %v2663 = vand.u32 %v728, 4294901760
    %v2664 = vsub.f32 %v728, %v2663
    %2665 = vmatmul.mubr.f32.gmra.mrb[0].mxu0 %v2664
    %v2666 = vpop.f32.mrb[0].mxu0
    %v2667 = vadd.f32 %v2073, %v2666
    %v2668 = vpop.f32.mrb[0].mxu0
    %2669 = vmatprep.mubr.f32.mxu0 0.0
    %v2670 = vand.u32 %v731, 4294901760
    %v2671 = vsub.f32 %v731, %v2670
    %2672 = vmatmul.mubr.f32.gmra.mrb[0].mxu0 %v2671
    %v2673 = vpop.f32.mrb[0].mxu0
    %v2674 = vadd.f32 %v2079, %v2673
    %v2675 = vpop.f32.mrb[0].mxu0
    %2676 = vmatprep.mubr.f32.mxu0 0.0
    %v2677 = vand.u32 %v734, 4294901760
    %v2678 = vsub.f32 %v734, %v2677
    %2679 = vmatmul.mubr.f32.gmra.mrb[0].mxu0 %v2678
    %v2680 = vpop.f32.mrb[0].mxu0
    %v2681 = vadd.f32 %v2085, %v2680
    %v2682 = vpop.f32.mrb[0].mxu0
    %2683 = vmatprep.mubr.f32.mxu0 0.0
    %v2684 = vand.u32 %v737, 4294901760
    %v2685 = vsub.f32 %v737, %v2684
    %2686 = vmatmul.mubr.f32.gmra.mrb[0].mxu0 %v2685
    %v2687 = vpop.f32.mrb[0].mxu0
    %v2688 = vadd.f32 %v2091, %v2687
    %v2689 = vpop.f32.mrb[0].mxu0
    %2690 = vmatprep.mubr.f32.mxu0 0.0
    %v2691 = vand.u32 %v740, 4294901760
    %v2692 = vsub.f32 %v740, %v2691
    %2693 = vmatmul.mubr.f32.gmra.mrb[0].mxu0 %v2692
    %v2694 = vpop.f32.mrb[0].mxu0
    %v2695 = vadd.f32 %v2097, %v2694
    %v2696 = vpop.f32.mrb[0].mxu0
    %2697 = vmatprep.mubr.f32.mxu0 0.0
    %v2698 = vand.u32 %v743, 4294901760
    %v2699 = vsub.f32 %v743, %v2698
    %2700 = vmatmul.mubr.f32.gmra.mrb[0].mxu0 %v2699
    %v2701 = vpop.f32.mrb[0].mxu0
    %v2702 = vadd.f32 %v2103, %v2701
    %v2703 = vpop.f32.mrb[0].mxu0
    %2704 = vmatprep.mubr.f32.mxu0 0.0
    %v2705 = vand.u32 %v746, 4294901760
    %v2706 = vsub.f32 %v746, %v2705
    %2707 = vmatmul.mubr.f32.gmra.mrb[0].mxu0 %v2706
    %v2708 = vpop.f32.mrb[0].mxu0
    %v2709 = vadd.f32 %v2109, %v2708
    %v2710 = vpop.f32.mrb[0].mxu0
    %2711 = vmatprep.mubr.f32.mxu0 0.0
    %v2712 = vand.u32 %v749, 4294901760
    %v2713 = vsub.f32 %v749, %v2712
    %2714 = vmatmul.mubr.f32.gmra.mrb[0].mxu0 %v2713
    %v2715 = vpop.f32.mrb[0].mxu0
    %v2716 = vadd.f32 %v2115, %v2715
    %v2717 = vpop.f32.mrb[0].mxu0
    %2718 = vmatprep.mubr.f32.mxu0 0.0
    %v2719 = vand.u32 %v752, 4294901760
    %v2720 = vsub.f32 %v752, %v2719
    %2721 = vmatmul.mubr.f32.gmra.mrb[0].mxu0 %v2720
    %v2722 = vpop.f32.mrb[0].mxu0
    %v2723 = vadd.f32 %v2121, %v2722
    %v2724 = vpop.f32.mrb[0].mxu0
    %2725 = vmatprep.mubr.f32.mxu0 0.0
    %v2726 = vand.u32 %v755, 4294901760
    %v2727 = vsub.f32 %v755, %v2726
    %2728 = vmatmul.mubr.f32.gmra.mrb[0].mxu0 %v2727
    %v2729 = vpop.f32.mrb[0].mxu0
    %v2730 = vadd.f32 %v2127, %v2729
    %v2731 = vpop.f32.mrb[0].mxu0
    %2732 = vmatprep.mubr.f32.mxu0 0.0
    %v2733 = vand.u32 %v758, 4294901760
    %v2734 = vsub.f32 %v758, %v2733
    %2735 = vmatmul.mubr.f32.gmra.mrb[0].mxu0 %v2734
    %v2736 = vpop.f32.mrb[0].mxu0
    %v2737 = vadd.f32 %v2133, %v2736
    %v2738 = vpop.f32.mrb[0].mxu0
    %2739 = vmatprep.mubr.f32.mxu0 0.0
    %v2740 = vand.u32 %v761, 4294901760
    %v2741 = vsub.f32 %v761, %v2740
    %2742 = vmatmul.mubr.f32.gmra.mrb[0].mxu0 %v2741
    %v2743 = vpop.f32.mrb[0].mxu0
    %v2744 = vadd.f32 %v2139, %v2743
    %v2745 = vpop.f32.mrb[0].mxu0
    %2746 = vmatprep.mubr.f32.mxu0 0.0
    %v2747 = vand.u32 %v764, 4294901760
    %v2748 = vsub.f32 %v764, %v2747
    %2749 = vmatmul.mubr.f32.gmra.mrb[0].mxu0 %v2748
    %v2750 = vpop.f32.mrb[0].mxu0
    %v2751 = vadd.f32 %v2145, %v2750
    %v2752 = vpop.f32.mrb[0].mxu0
    %2753 = vmatprep.mubr.f32.mxu0 0.0
    %v2754 = vand.u32 %v767, 4294901760
    %v2755 = vsub.f32 %v767, %v2754
    %2756 = vmatmul.mubr.f32.gmra.mrb[0].mxu0 %v2755
    %v2757 = vpop.f32.mrb[0].mxu0
    %v2758 = vadd.f32 %v2151, %v2757
    %v2759 = vpop.f32.mrb[0].mxu0
    %2760 = vmatprep.mubr.f32.mxu0 0.0
    %v2761 = vand.u32 %v770, 4294901760
    %v2762 = vsub.f32 %v770, %v2761
    %2763 = vmatmul.mubr.f32.gmra.mrb[0].mxu0 %v2762
    %v2764 = vpop.f32.mrb[0].mxu0
    %v2765 = vadd.f32 %v2157, %v2764
    %v2766 = vpop.f32.mrb[0].mxu0
    %2767 = vmatprep.mubr.f32.mxu0 0.0
    %v2768 = vand.u32 %v773, 4294901760
    %v2769 = vsub.f32 %v773, %v2768
    %2770 = vmatmul.mubr.f32.gmra.mrb[0].mxu0 %v2769
    %v2771 = vpop.f32.mrb[0].mxu0
    %v2772 = vadd.f32 %v2163, %v2771
    %v2773 = vpop.f32.mrb[0].mxu0
    %2774 = vmatprep.mubr.f32.mxu0 0.0
    %v2775 = vand.u32 %v776, 4294901760
    %v2776 = vsub.f32 %v776, %v2775
    %2777 = vmatmul.mubr.f32.gmra.mrb[0].mxu0 %v2776
    %v2778 = vpop.f32.mrb[0].mxu0
    %v2779 = vadd.f32 %v2169, %v2778
    %v2780 = vpop.f32.mrb[0].mxu0
    %2781 = vmatprep.mubr.f32.mxu0 0.0
    %v2782 = vand.u32 %v779, 4294901760
    %v2783 = vsub.f32 %v779, %v2782
    %2784 = vmatmul.mubr.f32.gmra.mrb[0].mxu0 %v2783
    %v2785 = vpop.f32.mrb[0].mxu0
    %v2786 = vadd.f32 %v2175, %v2785
    %v2787 = vpop.f32.mrb[0].mxu0
    %2788 = vmatprep.mubr.f32.mxu0 0.0
    %v2789 = vand.u32 %v782, 4294901760
    %v2790 = vsub.f32 %v782, %v2789
    %2791 = vmatmul.mubr.f32.gmra.mrb[0].mxu0 %v2790
    %v2792 = vpop.f32.mrb[0].mxu0
    %v2793 = vadd.f32 %v2181, %v2792
    %v2794 = vpop.f32.mrb[0].mxu0
    %2795 = vmatprep.mubr.f32.mxu0 0.0
    %v2796 = vand.u32 %v785, 4294901760
    %v2797 = vsub.f32 %v785, %v2796
    %2798 = vmatmul.mubr.f32.gmra.mrb[0].mxu0 %v2797
    %v2799 = vpop.f32.mrb[0].mxu0
    %v2800 = vadd.f32 %v2187, %v2799
    %v2801 = vpop.f32.mrb[0].mxu0
    %2802 = vmatprep.mubr.f32.mxu0 0.0
    %v2803 = vand.u32 %v788, 4294901760
    %v2804 = vsub.f32 %v788, %v2803
    %2805 = vmatmul.mubr.f32.gmra.mrb[0].mxu0 %v2804
    %v2806 = vpop.f32.mrb[0].mxu0
    %v2807 = vadd.f32 %v2193, %v2806
    %v2808 = vpop.f32.mrb[0].mxu0
    %2809 = vmatprep.mubr.f32.mxu0 0.0
    %v2810 = vand.u32 %v791, 4294901760
    %v2811 = vsub.f32 %v791, %v2810
    %2812 = vmatmul.mubr.f32.gmra.mrb[0].mxu0 %v2811
    %v2813 = vpop.f32.mrb[0].mxu0
    %v2814 = vadd.f32 %v2199, %v2813
    %v2815 = vpop.f32.mrb[0].mxu0
    %2816 = vmatprep.mubr.f32.mxu0 0.0
    %v2817 = vand.u32 %v794, 4294901760
    %v2818 = vsub.f32 %v794, %v2817
    %2819 = vmatmul.mubr.f32.gmra.mrb[0].mxu0 %v2818
    %v2820 = vpop.f32.mrb[0].mxu0
    %v2821 = vadd.f32 %v2205, %v2820
    %v2822 = vpop.f32.mrb[0].mxu0
    %2823 = vmatprep.mubr.f32.mxu0 0.0
    %v2824 = vand.u32 %v797, 4294901760
    %v2825 = vsub.f32 %v797, %v2824
    %2826 = vmatmul.mubr.f32.gmra.mrb[0].mxu0 %v2825
    %v2827 = vpop.f32.mrb[0].mxu0
    %v2828 = vadd.f32 %v2211, %v2827
    %v2829 = vpop.f32.mrb[0].mxu0
    %2830 = vmatprep.mubr.f32.mxu0 0.0
    %v2831 = vand.u32 %v800, 4294901760
    %v2832 = vsub.f32 %v800, %v2831
    %2833 = vmatmul.mubr.f32.gmra.mrb[0].mxu0 %v2832
    %v2834 = vpop.f32.mrb[0].mxu0
    %v2835 = vadd.f32 %v2217, %v2834
    %v2836 = vpop.f32.mrb[0].mxu0
    %2837 = vmatprep.mubr.f32.mxu0 0.0
    %v2838 = vand.u32 %v803, 4294901760
    %v2839 = vsub.f32 %v803, %v2838
    %2840 = vmatmul.mubr.f32.gmra.mrb[0].mxu0 %v2839
    %v2841 = vpop.f32.mrb[0].mxu0
    %v2842 = vadd.f32 %v2223, %v2841
    %v2843 = vpop.f32.mrb[0].mxu0
    %2844 = vmatprep.mubr.f32.mxu0 0.0
    %v2845 = vand.u32 %v806, 4294901760
    %v2846 = vsub.f32 %v806, %v2845
    %2847 = vmatmul.mubr.f32.gmra.mrb[0].mxu0 %v2846
    %v2848 = vpop.f32.mrb[0].mxu0
    %v2849 = vadd.f32 %v2229, %v2848
    %v2850 = vpop.f32.mrb[0].mxu0
    %2851 = vmatprep.mubr.f32.mxu0 0.0
    %v2852 = vand.u32 %v809, 4294901760
    %v2853 = vsub.f32 %v809, %v2852
    %2854 = vmatmul.mubr.f32.gmra.mrb[0].mxu0 %v2853
    %v2855 = vpop.f32.mrb[0].mxu0
    %v2856 = vadd.f32 %v2235, %v2855
    %v2857 = vpop.f32.mrb[0].mxu0
    %2858 = vmatprep.mubr.f32.mxu0 0.0
    %v2859 = vand.u32 %v812, 4294901760
    %v2860 = vsub.f32 %v812, %v2859
    %2861 = vmatmul.mubr.f32.gmra.mrb[0].mxu0 %v2860
    %v2862 = vpop.f32.mrb[0].mxu0
    %v2863 = vadd.f32 %v2241, %v2862
    %v2864 = vpop.f32.mrb[0].mxu0
    %2865 = vdwg.mxu0
    %2866 = vmatprep.subr.mxu0 0.0
    %v2867 = vand.u32 %v47, 4294901760
    %2868 = vmatpush1.msra.mxu0 %v2867
    %2869 = vmatprep.subr.mxu0 0.0
    %v2870 = vand.u32 %v48, 4294901760
    %2871 = vmatpush1.msra.mxu0 %v2870
    %2872 = vmatprep.subr.mxu0 0.0
    %v2873 = vand.u32 %v49, 4294901760
    %2874 = vmatpush1.msra.mxu0 %v2873
    %2875 = vmatprep.subr.mxu0 0.0
    %v2876 = vand.u32 %v50, 4294901760
    %2877 = vmatpush1.msra.mxu0 %v2876
    %2878 = vmatprep.subr.mxu0 0.0
    %v2879 = vand.u32 %v51, 4294901760
    %2880 = vmatpush1.msra.mxu0 %v2879
    %2881 = vmatprep.subr.mxu0 0.0
    %v2882 = vand.u32 %v52, 4294901760
    %2883 = vmatpush1.msra.mxu0 %v2882
    %2884 = vmatprep.subr.mxu0 0.0
    %v2885 = vand.u32 %v53, 4294901760
    %2886 = vmatpush1.msra.mxu0 %v2885
    %2887 = vmatprep.subr.mxu0 0.0
    %v2888 = vand.u32 %v54, 4294901760
    %2889 = vmatpush1.msra.mxu0 %v2888
    %2890 = vmatprep.subr.mxu0 0.0
    %v2891 = vand.u32 %v55, 4294901760
    %2892 = vmatpush1.msra.mxu0 %v2891
    %2893 = vmatprep.subr.mxu0 0.0
    %v2894 = vand.u32 %v56, 4294901760
    %2895 = vmatpush1.msra.mxu0 %v2894
    %2896 = vmatprep.subr.mxu0 0.0
    %v2897 = vand.u32 %v57, 4294901760
    %2898 = vmatpush1.msra.mxu0 %v2897
    %2899 = vmatprep.subr.mxu0 0.0
    %v2900 = vand.u32 %v58, 4294901760
    %2901 = vmatpush1.msra.mxu0 %v2900
    %2902 = vmatprep.subr.mxu0 0.0
    %v2903 = vand.u32 %v59, 4294901760
    %2904 = vmatpush1.msra.mxu0 %v2903
    %2905 = vmatprep.subr.mxu0 0.0
    %v2906 = vand.u32 %v60, 4294901760
    %2907 = vmatpush1.msra.mxu0 %v2906
    %2908 = vmatprep.subr.mxu0 0.0
    %v2909 = vand.u32 %v61, 4294901760
    %2910 = vmatpush1.msra.mxu0 %v2909
    %2911 = vmatprep.subr.mxu0 0.0
    %v2912 = vand.u32 %v816, 4294901760
    %2913 = vmatpush1.msra.mxu0 %v2912
    %2914 = vmatprep.subr.mxu0 0.0
    %2915 = vmatpush1.msra.mxu0 0.0
    %2916 = vmatprep.subr.mxu0 0.0
    %2917 = vmatpush1.msra.mxu0 0.0
    %2918 = vmatprep.subr.mxu0 0.0
    %2919 = vmatpush1.msra.mxu0 0.0
    %2920 = vmatprep.subr.mxu0 0.0
    %2921 = vmatpush1.msra.mxu0 0.0
    %2922 = vmatprep.subr.mxu0 0.0
    %2923 = vmatpush1.msra.mxu0 0.0
    %2924 = vmatprep.subr.mxu0 0.0
    %2925 = vmatpush1.msra.mxu0 0.0
    %2926 = vmatprep.subr.mxu0 0.0
    %2927 = vmatpush1.msra.mxu0 0.0
    %2928 = vmatprep.subr.mxu0 0.0
    %2929 = vmatpush1.msra.mxu0 0.0
    %2930 = vmatprep.subr.mxu0 0.0
    %2931 = vmatpush1.msra.mxu0 0.0
    %2932 = vmatprep.subr.mxu0 0.0
    %2933 = vmatpush1.msra.mxu0 0.0
    %2934 = vmatprep.subr.mxu0 0.0
    %2935 = vmatpush1.msra.mxu0 0.0
    %2936 = vmatprep.subr.mxu0 0.0
    %2937 = vmatpush1.msra.mxu0 0.0
    %2938 = vmatprep.subr.mxu0 0.0
    %2939 = vmatpush1.msra.mxu0 0.0
    %2940 = vmatprep.subr.mxu0 0.0
    %2941 = vmatpush1.msra.mxu0 0.0
    %2942 = vmatprep.subr.mxu0 0.0
    %2943 = vmatpush1.msra.mxu0 0.0
    %2944 = vmatprep.subr.mxu0 0.0
    %2945 = vmatpush1.msra.mxu0 0.0
    %2946 = vmatprep.mubr.f32.mxu0 0.0
    %v2947 = vand.u32 %v590, 4294901760
    %v2948 = vsub.f32 %v590, %v2947
    %v2949 = vand.u32 %v2948, 4294901760
    %2950 = vmatmul.mubr.f32.gmra.mrb[0].mxu0 %v2949
    %v2951 = vpop.f32.mrb[0].mxu0
    %v2952 = vadd.f32 %v2345, %v2951
    %v2953 = vpop.f32.mrb[0].mxu0
    %2954 = vmatprep.mubr.f32.mxu0 0.0
    %v2955 = vand.u32 %v593, 4294901760
    %v2956 = vsub.f32 %v593, %v2955
    %v2957 = vand.u32 %v2956, 4294901760
    %2958 = vmatmul.mubr.f32.gmra.mrb[0].mxu0 %v2957
    %v2959 = vpop.f32.mrb[0].mxu0
    %v2960 = vadd.f32 %v2352, %v2959
    %v2961 = vpop.f32.mrb[0].mxu0
    %2962 = vmatprep.mubr.f32.mxu0 0.0
    %v2963 = vand.u32 %v596, 4294901760
    %v2964 = vsub.f32 %v596, %v2963
    %v2965 = vand.u32 %v2964, 4294901760
    %2966 = vmatmul.mubr.f32.gmra.mrb[0].mxu0 %v2965
    %v2967 = vpop.f32.mrb[0].mxu0
    %v2968 = vadd.f32 %v2359, %v2967
    %v2969 = vpop.f32.mrb[0].mxu0
    %2970 = vmatprep.mubr.f32.mxu0 0.0
    %v2971 = vand.u32 %v599, 4294901760
    %v2972 = vsub.f32 %v599, %v2971
    %v2973 = vand.u32 %v2972, 4294901760
    %2974 = vmatmul.mubr.f32.gmra.mrb[0].mxu0 %v2973
    %v2975 = vpop.f32.mrb[0].mxu0
    %v2976 = vadd.f32 %v2366, %v2975
    %v2977 = vpop.f32.mrb[0].mxu0
    %2978 = vmatprep.mubr.f32.mxu0 0.0
    %v2979 = vand.u32 %v602, 4294901760
    %v2980 = vsub.f32 %v602, %v2979
    %v2981 = vand.u32 %v2980, 4294901760
    %2982 = vmatmul.mubr.f32.gmra.mrb[0].mxu0 %v2981
    %v2983 = vpop.f32.mrb[0].mxu0
    %v2984 = vadd.f32 %v2373, %v2983
    %v2985 = vpop.f32.mrb[0].mxu0
    %2986 = vmatprep.mubr.f32.mxu0 0.0
    %v2987 = vand.u32 %v605, 4294901760
    %v2988 = vsub.f32 %v605, %v2987
    %v2989 = vand.u32 %v2988, 4294901760
    %2990 = vmatmul.mubr.f32.gmra.mrb[0].mxu0 %v2989
    %v2991 = vpop.f32.mrb[0].mxu0
    %v2992 = vadd.f32 %v2380, %v2991
    %v2993 = vpop.f32.mrb[0].mxu0
    %2994 = vmatprep.mubr.f32.mxu0 0.0
    %v2995 = vand.u32 %v608, 4294901760
    %v2996 = vsub.f32 %v608, %v2995
    %v2997 = vand.u32 %v2996, 4294901760
    %2998 = vmatmul.mubr.f32.gmra.mrb[0].mxu0 %v2997
    %v2999 = vpop.f32.mrb[0].mxu0
    %v3000 = vadd.f32 %v2387, %v2999
    %v3001 = vpop.f32.mrb[0].mxu0
    %3002 = vmatprep.mubr.f32.mxu0 0.0
    %v3003 = vand.u32 %v611, 4294901760
    %v3004 = vsub.f32 %v611, %v3003
    %v3005 = vand.u32 %v3004, 4294901760
    %3006 = vmatmul.mubr.f32.gmra.mrb[0].mxu0 %v3005
    %v3007 = vpop.f32.mrb[0].mxu0
    %v3008 = vadd.f32 %v2394, %v3007
    %v3009 = vpop.f32.mrb[0].mxu0
    %3010 = vmatprep.mubr.f32.mxu0 0.0
    %v3011 = vand.u32 %v614, 4294901760
    %v3012 = vsub.f32 %v614, %v3011
    %v3013 = vand.u32 %v3012, 4294901760
    %3014 = vmatmul.mubr.f32.gmra.mrb[0].mxu0 %v3013
    %v3015 = vpop.f32.mrb[0].mxu0
    %v3016 = vadd.f32 %v2401, %v3015
    %v3017 = vpop.f32.mrb[0].mxu0
    %3018 = vmatprep.mubr.f32.mxu0 0.0
    %v3019 = vand.u32 %v617, 4294901760
    %v3020 = vsub.f32 %v617, %v3019
    %v3021 = vand.u32 %v3020, 4294901760
    %3022 = vmatmul.mubr.f32.gmra.mrb[0].mxu0 %v3021
    %v3023 = vpop.f32.mrb[0].mxu0
    %v3024 = vadd.f32 %v2408, %v3023
    %v3025 = vpop.f32.mrb[0].mxu0
    %3026 = vmatprep.mubr.f32.mxu0 0.0
    %v3027 = vand.u32 %v620, 4294901760
    %v3028 = vsub.f32 %v620, %v3027
    %v3029 = vand.u32 %v3028, 4294901760
    %3030 = vmatmul.mubr.f32.gmra.mrb[0].mxu0 %v3029
    %v3031 = vpop.f32.mrb[0].mxu0
    %v3032 = vadd.f32 %v2415, %v3031
    %v3033 = vpop.f32.mrb[0].mxu0
    %3034 = vmatprep.mubr.f32.mxu0 0.0
    %v3035 = vand.u32 %v623, 4294901760
    %v3036 = vsub.f32 %v623, %v3035
    %v3037 = vand.u32 %v3036, 4294901760
    %3038 = vmatmul.mubr.f32.gmra.mrb[0].mxu0 %v3037
    %v3039 = vpop.f32.mrb[0].mxu0
    %v3040 = vadd.f32 %v2422, %v3039
    %v3041 = vpop.f32.mrb[0].mxu0
    %3042 = vmatprep.mubr.f32.mxu0 0.0
    %v3043 = vand.u32 %v626, 4294901760
    %v3044 = vsub.f32 %v626, %v3043
    %v3045 = vand.u32 %v3044, 4294901760
    %3046 = vmatmul.mubr.f32.gmra.mrb[0].mxu0 %v3045
    %v3047 = vpop.f32.mrb[0].mxu0
    %v3048 = vadd.f32 %v2429, %v3047
    %v3049 = vpop.f32.mrb[0].mxu0
    %3050 = vmatprep.mubr.f32.mxu0 0.0
    %v3051 = vand.u32 %v629, 4294901760
    %v3052 = vsub.f32 %v629, %v3051
    %v3053 = vand.u32 %v3052, 4294901760
    %3054 = vmatmul.mubr.f32.gmra.mrb[0].mxu0 %v3053
    %v3055 = vpop.f32.mrb[0].mxu0
    %v3056 = vadd.f32 %v2436, %v3055
    %v3057 = vpop.f32.mrb[0].mxu0
    %3058 = vmatprep.mubr.f32.mxu0 0.0
    %v3059 = vand.u32 %v632, 4294901760
    %v3060 = vsub.f32 %v632, %v3059
    %v3061 = vand.u32 %v3060, 4294901760
    %3062 = vmatmul.mubr.f32.gmra.mrb[0].mxu0 %v3061
    %v3063 = vpop.f32.mrb[0].mxu0
    %v3064 = vadd.f32 %v2443, %v3063
    %v3065 = vpop.f32.mrb[0].mxu0
    %3066 = vmatprep.mubr.f32.mxu0 0.0
    %v3067 = vand.u32 %v635, 4294901760
    %v3068 = vsub.f32 %v635, %v3067
    %v3069 = vand.u32 %v3068, 4294901760
    %3070 = vmatmul.mubr.f32.gmra.mrb[0].mxu0 %v3069
    %v3071 = vpop.f32.mrb[0].mxu0
    %v3072 = vadd.f32 %v2450, %v3071
    %v3073 = vpop.f32.mrb[0].mxu0
    %3074 = vmatprep.mubr.f32.mxu0 0.0
    %v3075 = vand.u32 %v638, 4294901760
    %v3076 = vsub.f32 %v638, %v3075
    %v3077 = vand.u32 %v3076, 4294901760
    %3078 = vmatmul.mubr.f32.gmra.mrb[0].mxu0 %v3077
    %v3079 = vpop.f32.mrb[0].mxu0
    %v3080 = vadd.f32 %v2457, %v3079
    %v3081 = vpop.f32.mrb[0].mxu0
    %3082 = vmatprep.mubr.f32.mxu0 0.0
    %v3083 = vand.u32 %v641, 4294901760
    %v3084 = vsub.f32 %v641, %v3083
    %v3085 = vand.u32 %v3084, 4294901760
    %3086 = vmatmul.mubr.f32.gmra.mrb[0].mxu0 %v3085
    %v3087 = vpop.f32.mrb[0].mxu0
    %v3088 = vadd.f32 %v2464, %v3087
    %v3089 = vpop.f32.mrb[0].mxu0
    %3090 = vmatprep.mubr.f32.mxu0 0.0
    %v3091 = vand.u32 %v644, 4294901760
    %v3092 = vsub.f32 %v644, %v3091
    %v3093 = vand.u32 %v3092, 4294901760
    %3094 = vmatmul.mubr.f32.gmra.mrb[0].mxu0 %v3093
    %v3095 = vpop.f32.mrb[0].mxu0
    %v3096 = vadd.f32 %v2471, %v3095
    %v3097 = vpop.f32.mrb[0].mxu0
    %3098 = vmatprep.mubr.f32.mxu0 0.0
    %v3099 = vand.u32 %v647, 4294901760
    %v3100 = vsub.f32 %v647, %v3099
    %v3101 = vand.u32 %v3100, 4294901760
    %3102 = vmatmul.mubr.f32.gmra.mrb[0].mxu0 %v3101
    %v3103 = vpop.f32.mrb[0].mxu0
    %v3104 = vadd.f32 %v2478, %v3103
    %v3105 = vpop.f32.mrb[0].mxu0
    %3106 = vmatprep.mubr.f32.mxu0 0.0
    %v3107 = vand.u32 %v650, 4294901760
    %v3108 = vsub.f32 %v650, %v3107
    %v3109 = vand.u32 %v3108, 4294901760
    %3110 = vmatmul.mubr.f32.gmra.mrb[0].mxu0 %v3109
    %v3111 = vpop.f32.mrb[0].mxu0
    %v3112 = vadd.f32 %v2485, %v3111
    %v3113 = vpop.f32.mrb[0].mxu0
    %3114 = vmatprep.mubr.f32.mxu0 0.0
    %v3115 = vand.u32 %v653, 4294901760
    %v3116 = vsub.f32 %v653, %v3115
    %v3117 = vand.u32 %v3116, 4294901760
    %3118 = vmatmul.mubr.f32.gmra.mrb[0].mxu0 %v3117
    %v3119 = vpop.f32.mrb[0].mxu0
    %v3120 = vadd.f32 %v2492, %v3119
    %v3121 = vpop.f32.mrb[0].mxu0
    %3122 = vmatprep.mubr.f32.mxu0 0.0
    %v3123 = vand.u32 %v656, 4294901760
    %v3124 = vsub.f32 %v656, %v3123
    %v3125 = vand.u32 %v3124, 4294901760
    %3126 = vmatmul.mubr.f32.gmra.mrb[0].mxu0 %v3125
    %v3127 = vpop.f32.mrb[0].mxu0
    %v3128 = vadd.f32 %v2499, %v3127
    %v3129 = vpop.f32.mrb[0].mxu0
    %3130 = vmatprep.mubr.f32.mxu0 0.0
    %v3131 = vand.u32 %v659, 4294901760
    %v3132 = vsub.f32 %v659, %v3131
    %v3133 = vand.u32 %v3132, 4294901760
    %3134 = vmatmul.mubr.f32.gmra.mrb[0].mxu0 %v3133
    %v3135 = vpop.f32.mrb[0].mxu0
    %v3136 = vadd.f32 %v2506, %v3135
    %v3137 = vpop.f32.mrb[0].mxu0
    %3138 = vmatprep.mubr.f32.mxu0 0.0
    %v3139 = vand.u32 %v662, 4294901760
    %v3140 = vsub.f32 %v662, %v3139
    %v3141 = vand.u32 %v3140, 4294901760
    %3142 = vmatmul.mubr.f32.gmra.mrb[0].mxu0 %v3141
    %v3143 = vpop.f32.mrb[0].mxu0
    %v3144 = vadd.f32 %v2513, %v3143
    %v3145 = vpop.f32.mrb[0].mxu0
    %3146 = vmatprep.mubr.f32.mxu0 0.0
    %v3147 = vand.u32 %v665, 4294901760
    %v3148 = vsub.f32 %v665, %v3147
    %v3149 = vand.u32 %v3148, 4294901760
    %3150 = vmatmul.mubr.f32.gmra.mrb[0].mxu0 %v3149
    %v3151 = vpop.f32.mrb[0].mxu0
    %v3152 = vadd.f32 %v2520, %v3151
    %v3153 = vpop.f32.mrb[0].mxu0
    %3154 = vmatprep.mubr.f32.mxu0 0.0
    %v3155 = vand.u32 %v668, 4294901760
    %v3156 = vsub.f32 %v668, %v3155
    %v3157 = vand.u32 %v3156, 4294901760
    %3158 = vmatmul.mubr.f32.gmra.mrb[0].mxu0 %v3157
    %v3159 = vpop.f32.mrb[0].mxu0
    %v3160 = vadd.f32 %v2527, %v3159
    %v3161 = vpop.f32.mrb[0].mxu0
    %3162 = vmatprep.mubr.f32.mxu0 0.0
    %v3163 = vand.u32 %v671, 4294901760
    %v3164 = vsub.f32 %v671, %v3163
    %v3165 = vand.u32 %v3164, 4294901760
    %3166 = vmatmul.mubr.f32.gmra.mrb[0].mxu0 %v3165
    %v3167 = vpop.f32.mrb[0].mxu0
    %v3168 = vadd.f32 %v2534, %v3167
    %v3169 = vpop.f32.mrb[0].mxu0
    %3170 = vmatprep.mubr.f32.mxu0 0.0
    %v3171 = vand.u32 %v674, 4294901760
    %v3172 = vsub.f32 %v674, %v3171
    %v3173 = vand.u32 %v3172, 4294901760
    %3174 = vmatmul.mubr.f32.gmra.mrb[0].mxu0 %v3173
    %v3175 = vpop.f32.mrb[0].mxu0
    %v3176 = vadd.f32 %v2541, %v3175
    %v3177 = vpop.f32.mrb[0].mxu0
    %3178 = vmatprep.mubr.f32.mxu0 0.0
    %v3179 = vand.u32 %v677, 4294901760
    %v3180 = vsub.f32 %v677, %v3179
    %v3181 = vand.u32 %v3180, 4294901760
    %3182 = vmatmul.mubr.f32.gmra.mrb[0].mxu0 %v3181
    %v3183 = vpop.f32.mrb[0].mxu0
    %v3184 = vadd.f32 %v2548, %v3183
    %v3185 = vpop.f32.mrb[0].mxu0
    %3186 = vmatprep.mubr.f32.mxu0 0.0
    %v3187 = vand.u32 %v680, 4294901760
    %v3188 = vsub.f32 %v680, %v3187
    %v3189 = vand.u32 %v3188, 4294901760
    %3190 = vmatmul.mubr.f32.gmra.mrb[0].mxu0 %v3189
    %v3191 = vpop.f32.mrb[0].mxu0
    %v3192 = vadd.f32 %v2555, %v3191
    %v3193 = vpop.f32.mrb[0].mxu0
    %3194 = vmatprep.mubr.f32.mxu0 0.0
    %v3195 = vand.u32 %v683, 4294901760
    %v3196 = vsub.f32 %v683, %v3195
    %v3197 = vand.u32 %v3196, 4294901760
    %3198 = vmatmul.mubr.f32.gmra.mrb[0].mxu0 %v3197
    %v3199 = vpop.f32.mrb[0].mxu0
    %v3200 = vadd.f32 %v2562, %v3199
    %v3201 = vpop.f32.mrb[0].mxu0
    %3202 = vmatprep.mubr.f32.mxu0 0.0
    %v3203 = vand.u32 %v686, 4294901760
    %v3204 = vsub.f32 %v686, %v3203
    %v3205 = vand.u32 %v3204, 4294901760
    %3206 = vmatmul.mubr.f32.gmra.mrb[0].mxu0 %v3205
    %v3207 = vpop.f32.mrb[0].mxu0
    %v3208 = vadd.f32 %v2569, %v3207
    %v3209 = vpop.f32.mrb[0].mxu0
    %3210 = vmatprep.mubr.f32.mxu0 0.0
    %v3211 = vand.u32 %v689, 4294901760
    %v3212 = vsub.f32 %v689, %v3211
    %v3213 = vand.u32 %v3212, 4294901760
    %3214 = vmatmul.mubr.f32.gmra.mrb[0].mxu0 %v3213
    %v3215 = vpop.f32.mrb[0].mxu0
    %v3216 = vadd.f32 %v2576, %v3215
    %v3217 = vpop.f32.mrb[0].mxu0
    %3218 = vmatprep.mubr.f32.mxu0 0.0
    %v3219 = vand.u32 %v692, 4294901760
    %v3220 = vsub.f32 %v692, %v3219
    %v3221 = vand.u32 %v3220, 4294901760
    %3222 = vmatmul.mubr.f32.gmra.mrb[0].mxu0 %v3221
    %v3223 = vpop.f32.mrb[0].mxu0
    %v3224 = vadd.f32 %v2583, %v3223
    %v3225 = vpop.f32.mrb[0].mxu0
    %3226 = vmatprep.mubr.f32.mxu0 0.0
    %v3227 = vand.u32 %v695, 4294901760
    %v3228 = vsub.f32 %v695, %v3227
    %v3229 = vand.u32 %v3228, 4294901760
    %3230 = vmatmul.mubr.f32.gmra.mrb[0].mxu0 %v3229
    %v3231 = vpop.f32.mrb[0].mxu0
    %v3232 = vadd.f32 %v2590, %v3231
    %v3233 = vpop.f32.mrb[0].mxu0
    %3234 = vmatprep.mubr.f32.mxu0 0.0
    %v3235 = vand.u32 %v698, 4294901760
    %v3236 = vsub.f32 %v698, %v3235
    %v3237 = vand.u32 %v3236, 4294901760
    %3238 = vmatmul.mubr.f32.gmra.mrb[0].mxu0 %v3237
    %v3239 = vpop.f32.mrb[0].mxu0
    %v3240 = vadd.f32 %v2597, %v3239
    %v3241 = vpop.f32.mrb[0].mxu0
    %3242 = vmatprep.mubr.f32.mxu0 0.0
    %v3243 = vand.u32 %v701, 4294901760
    %v3244 = vsub.f32 %v701, %v3243
    %v3245 = vand.u32 %v3244, 4294901760
    %3246 = vmatmul.mubr.f32.gmra.mrb[0].mxu0 %v3245
    %v3247 = vpop.f32.mrb[0].mxu0
    %v3248 = vadd.f32 %v2604, %v3247
    %v3249 = vpop.f32.mrb[0].mxu0
    %3250 = vmatprep.mubr.f32.mxu0 0.0
    %v3251 = vand.u32 %v704, 4294901760
    %v3252 = vsub.f32 %v704, %v3251
    %v3253 = vand.u32 %v3252, 4294901760
    %3254 = vmatmul.mubr.f32.gmra.mrb[0].mxu0 %v3253
    %v3255 = vpop.f32.mrb[0].mxu0
    %v3256 = vadd.f32 %v2611, %v3255
    %v3257 = vpop.f32.mrb[0].mxu0
    %3258 = vmatprep.mubr.f32.mxu0 0.0
    %v3259 = vand.u32 %v707, 4294901760
    %v3260 = vsub.f32 %v707, %v3259
    %v3261 = vand.u32 %v3260, 4294901760
    %3262 = vmatmul.mubr.f32.gmra.mrb[0].mxu0 %v3261
    %v3263 = vpop.f32.mrb[0].mxu0
    %v3264 = vadd.f32 %v2618, %v3263
    %v3265 = vpop.f32.mrb[0].mxu0
    %3266 = vmatprep.mubr.f32.mxu0 0.0
    %v3267 = vand.u32 %v710, 4294901760
    %v3268 = vsub.f32 %v710, %v3267
    %v3269 = vand.u32 %v3268, 4294901760
    %3270 = vmatmul.mubr.f32.gmra.mrb[0].mxu0 %v3269
    %v3271 = vpop.f32.mrb[0].mxu0
    %v3272 = vadd.f32 %v2625, %v3271
    %v3273 = vpop.f32.mrb[0].mxu0
    %3274 = vmatprep.mubr.f32.mxu0 0.0
    %v3275 = vand.u32 %v713, 4294901760
    %v3276 = vsub.f32 %v713, %v3275
    %v3277 = vand.u32 %v3276, 4294901760
    %3278 = vmatmul.mubr.f32.gmra.mrb[0].mxu0 %v3277
    %v3279 = vpop.f32.mrb[0].mxu0
    %v3280 = vadd.f32 %v2632, %v3279
    %v3281 = vpop.f32.mrb[0].mxu0
    %3282 = vmatprep.mubr.f32.mxu0 0.0
    %v3283 = vand.u32 %v716, 4294901760
    %v3284 = vsub.f32 %v716, %v3283
    %v3285 = vand.u32 %v3284, 4294901760
    %3286 = vmatmul.mubr.f32.gmra.mrb[0].mxu0 %v3285
    %v3287 = vpop.f32.mrb[0].mxu0
    %v3288 = vadd.f32 %v2639, %v3287
    %v3289 = vpop.f32.mrb[0].mxu0
    %3290 = vmatprep.mubr.f32.mxu0 0.0
    %v3291 = vand.u32 %v719, 4294901760
    %v3292 = vsub.f32 %v719, %v3291
    %v3293 = vand.u32 %v3292, 4294901760
    %3294 = vmatmul.mubr.f32.gmra.mrb[0].mxu0 %v3293
    %v3295 = vpop.f32.mrb[0].mxu0
    %v3296 = vadd.f32 %v2646, %v3295
    %v3297 = vpop.f32.mrb[0].mxu0
    %3298 = vmatprep.mubr.f32.mxu0 0.0
    %v3299 = vand.u32 %v722, 4294901760
    %v3300 = vsub.f32 %v722, %v3299
    %v3301 = vand.u32 %v3300, 4294901760
    %3302 = vmatmul.mubr.f32.gmra.mrb[0].mxu0 %v3301
    %v3303 = vpop.f32.mrb[0].mxu0
    %v3304 = vadd.f32 %v2653, %v3303
    %v3305 = vpop.f32.mrb[0].mxu0
    %3306 = vmatprep.mubr.f32.mxu0 0.0
    %v3307 = vand.u32 %v725, 4294901760
    %v3308 = vsub.f32 %v725, %v3307
    %v3309 = vand.u32 %v3308, 4294901760
    %3310 = vmatmul.mubr.f32.gmra.mrb[0].mxu0 %v3309
    %v3311 = vpop.f32.mrb[0].mxu0
    %v3312 = vadd.f32 %v2660, %v3311
    %v3313 = vpop.f32.mrb[0].mxu0
    %3314 = vmatprep.mubr.f32.mxu0 0.0
    %v3315 = vand.u32 %v728, 4294901760
    %v3316 = vsub.f32 %v728, %v3315
    %v3317 = vand.u32 %v3316, 4294901760
    %3318 = vmatmul.mubr.f32.gmra.mrb[0].mxu0 %v3317
    %v3319 = vpop.f32.mrb[0].mxu0
    %v3320 = vadd.f32 %v2667, %v3319
    %v3321 = vpop.f32.mrb[0].mxu0
    %3322 = vmatprep.mubr.f32.mxu0 0.0
    %v3323 = vand.u32 %v731, 4294901760
    %v3324 = vsub.f32 %v731, %v3323
    %v3325 = vand.u32 %v3324, 4294901760
    %3326 = vmatmul.mubr.f32.gmra.mrb[0].mxu0 %v3325
    %v3327 = vpop.f32.mrb[0].mxu0
    %v3328 = vadd.f32 %v2674, %v3327
    %v3329 = vpop.f32.mrb[0].mxu0
    %3330 = vmatprep.mubr.f32.mxu0 0.0
    %v3331 = vand.u32 %v734, 4294901760
    %v3332 = vsub.f32 %v734, %v3331
    %v3333 = vand.u32 %v3332, 4294901760
    %3334 = vmatmul.mubr.f32.gmra.mrb[0].mxu0 %v3333
    %v3335 = vpop.f32.mrb[0].mxu0
    %v3336 = vadd.f32 %v2681, %v3335
    %v3337 = vpop.f32.mrb[0].mxu0
    %3338 = vmatprep.mubr.f32.mxu0 0.0
    %v3339 = vand.u32 %v737, 4294901760
    %v3340 = vsub.f32 %v737, %v3339
    %v3341 = vand.u32 %v3340, 4294901760
    %3342 = vmatmul.mubr.f32.gmra.mrb[0].mxu0 %v3341
    %v3343 = vpop.f32.mrb[0].mxu0
    %v3344 = vadd.f32 %v2688, %v3343
    %v3345 = vpop.f32.mrb[0].mxu0
    %3346 = vmatprep.mubr.f32.mxu0 0.0
    %v3347 = vand.u32 %v740, 4294901760
    %v3348 = vsub.f32 %v740, %v3347
    %v3349 = vand.u32 %v3348, 4294901760
    %3350 = vmatmul.mubr.f32.gmra.mrb[0].mxu0 %v3349
    %v3351 = vpop.f32.mrb[0].mxu0
    %v3352 = vadd.f32 %v2695, %v3351
    %v3353 = vpop.f32.mrb[0].mxu0
    %3354 = vmatprep.mubr.f32.mxu0 0.0
    %v3355 = vand.u32 %v743, 4294901760
    %v3356 = vsub.f32 %v743, %v3355
    %v3357 = vand.u32 %v3356, 4294901760
    %3358 = vmatmul.mubr.f32.gmra.mrb[0].mxu0 %v3357
    %v3359 = vpop.f32.mrb[0].mxu0
    %v3360 = vadd.f32 %v2702, %v3359
    %v3361 = vpop.f32.mrb[0].mxu0
    %3362 = vmatprep.mubr.f32.mxu0 0.0
    %v3363 = vand.u32 %v746, 4294901760
    %v3364 = vsub.f32 %v746, %v3363
    %v3365 = vand.u32 %v3364, 4294901760
    %3366 = vmatmul.mubr.f32.gmra.mrb[0].mxu0 %v3365
    %v3367 = vpop.f32.mrb[0].mxu0
    %v3368 = vadd.f32 %v2709, %v3367
    %v3369 = vpop.f32.mrb[0].mxu0
    %3370 = vmatprep.mubr.f32.mxu0 0.0
    %v3371 = vand.u32 %v749, 4294901760
    %v3372 = vsub.f32 %v749, %v3371
    %v3373 = vand.u32 %v3372, 4294901760
    %3374 = vmatmul.mubr.f32.gmra.mrb[0].mxu0 %v3373
    %v3375 = vpop.f32.mrb[0].mxu0
    %v3376 = vadd.f32 %v2716, %v3375
    %v3377 = vpop.f32.mrb[0].mxu0
    %3378 = vmatprep.mubr.f32.mxu0 0.0
    %v3379 = vand.u32 %v752, 4294901760
    %v3380 = vsub.f32 %v752, %v3379
    %v3381 = vand.u32 %v3380, 4294901760
    %3382 = vmatmul.mubr.f32.gmra.mrb[0].mxu0 %v3381
    %v3383 = vpop.f32.mrb[0].mxu0
    %v3384 = vadd.f32 %v2723, %v3383
    %v3385 = vpop.f32.mrb[0].mxu0
    %3386 = vmatprep.mubr.f32.mxu0 0.0
    %v3387 = vand.u32 %v755, 4294901760
    %v3388 = vsub.f32 %v755, %v3387
    %v3389 = vand.u32 %v3388, 4294901760
    %3390 = vmatmul.mubr.f32.gmra.mrb[0].mxu0 %v3389
    %v3391 = vpop.f32.mrb[0].mxu0
    %v3392 = vadd.f32 %v2730, %v3391
    %v3393 = vpop.f32.mrb[0].mxu0
    %3394 = vmatprep.mubr.f32.mxu0 0.0
    %v3395 = vand.u32 %v758, 4294901760
    %v3396 = vsub.f32 %v758, %v3395
    %v3397 = vand.u32 %v3396, 4294901760
    %3398 = vmatmul.mubr.f32.gmra.mrb[0].mxu0 %v3397
    %v3399 = vpop.f32.mrb[0].mxu0
    %v3400 = vadd.f32 %v2737, %v3399
    %v3401 = vpop.f32.mrb[0].mxu0
    %3402 = vmatprep.mubr.f32.mxu0 0.0
    %v3403 = vand.u32 %v761, 4294901760
    %v3404 = vsub.f32 %v761, %v3403
    %v3405 = vand.u32 %v3404, 4294901760
    %3406 = vmatmul.mubr.f32.gmra.mrb[0].mxu0 %v3405
    %v3407 = vpop.f32.mrb[0].mxu0
    %v3408 = vadd.f32 %v2744, %v3407
    %v3409 = vpop.f32.mrb[0].mxu0
    %3410 = vmatprep.mubr.f32.mxu0 0.0
    %v3411 = vand.u32 %v764, 4294901760
    %v3412 = vsub.f32 %v764, %v3411
    %v3413 = vand.u32 %v3412, 4294901760
    %3414 = vmatmul.mubr.f32.gmra.mrb[0].mxu0 %v3413
    %v3415 = vpop.f32.mrb[0].mxu0
    %v3416 = vadd.f32 %v2751, %v3415
    %v3417 = vpop.f32.mrb[0].mxu0
    %3418 = vmatprep.mubr.f32.mxu0 0.0
    %v3419 = vand.u32 %v767, 4294901760
    %v3420 = vsub.f32 %v767, %v3419
    %v3421 = vand.u32 %v3420, 4294901760
    %3422 = vmatmul.mubr.f32.gmra.mrb[0].mxu0 %v3421
    %v3423 = vpop.f32.mrb[0].mxu0
    %v3424 = vadd.f32 %v2758, %v3423
    %v3425 = vpop.f32.mrb[0].mxu0
    %3426 = vmatprep.mubr.f32.mxu0 0.0
    %v3427 = vand.u32 %v770, 4294901760
    %v3428 = vsub.f32 %v770, %v3427
    %v3429 = vand.u32 %v3428, 4294901760
    %3430 = vmatmul.mubr.f32.gmra.mrb[0].mxu0 %v3429
    %v3431 = vpop.f32.mrb[0].mxu0
    %v3432 = vadd.f32 %v2765, %v3431
    %v3433 = vpop.f32.mrb[0].mxu0
    %3434 = vmatprep.mubr.f32.mxu0 0.0
    %v3435 = vand.u32 %v773, 4294901760
    %v3436 = vsub.f32 %v773, %v3435
    %v3437 = vand.u32 %v3436, 4294901760
    %3438 = vmatmul.mubr.f32.gmra.mrb[0].mxu0 %v3437
    %v3439 = vpop.f32.mrb[0].mxu0
    %v3440 = vadd.f32 %v2772, %v3439
    %v3441 = vpop.f32.mrb[0].mxu0
    %3442 = vmatprep.mubr.f32.mxu0 0.0
    %v3443 = vand.u32 %v776, 4294901760
    %v3444 = vsub.f32 %v776, %v3443
    %v3445 = vand.u32 %v3444, 4294901760
    %3446 = vmatmul.mubr.f32.gmra.mrb[0].mxu0 %v3445
    %v3447 = vpop.f32.mrb[0].mxu0
    %v3448 = vadd.f32 %v2779, %v3447
    %v3449 = vpop.f32.mrb[0].mxu0
    %3450 = vmatprep.mubr.f32.mxu0 0.0
    %v3451 = vand.u32 %v779, 4294901760
    %v3452 = vsub.f32 %v779, %v3451
    %v3453 = vand.u32 %v3452, 4294901760
    %3454 = vmatmul.mubr.f32.gmra.mrb[0].mxu0 %v3453
    %v3455 = vpop.f32.mrb[0].mxu0
    %v3456 = vadd.f32 %v2786, %v3455
    %v3457 = vpop.f32.mrb[0].mxu0
    %3458 = vmatprep.mubr.f32.mxu0 0.0
    %v3459 = vand.u32 %v782, 4294901760
    %v3460 = vsub.f32 %v782, %v3459
    %v3461 = vand.u32 %v3460, 4294901760
    %3462 = vmatmul.mubr.f32.gmra.mrb[0].mxu0 %v3461
    %v3463 = vpop.f32.mrb[0].mxu0
    %v3464 = vadd.f32 %v2793, %v3463
    %v3465 = vpop.f32.mrb[0].mxu0
    %3466 = vmatprep.mubr.f32.mxu0 0.0
    %v3467 = vand.u32 %v785, 4294901760
    %v3468 = vsub.f32 %v785, %v3467
    %v3469 = vand.u32 %v3468, 4294901760
    %3470 = vmatmul.mubr.f32.gmra.mrb[0].mxu0 %v3469
    %v3471 = vpop.f32.mrb[0].mxu0
    %v3472 = vadd.f32 %v2800, %v3471
    %v3473 = vpop.f32.mrb[0].mxu0
    %3474 = vmatprep.mubr.f32.mxu0 0.0
    %v3475 = vand.u32 %v788, 4294901760
    %v3476 = vsub.f32 %v788, %v3475
    %v3477 = vand.u32 %v3476, 4294901760
    %3478 = vmatmul.mubr.f32.gmra.mrb[0].mxu0 %v3477
    %v3479 = vpop.f32.mrb[0].mxu0
    %v3480 = vadd.f32 %v2807, %v3479
    %v3481 = vpop.f32.mrb[0].mxu0
    %3482 = vmatprep.mubr.f32.mxu0 0.0
    %v3483 = vand.u32 %v791, 4294901760
    %v3484 = vsub.f32 %v791, %v3483
    %v3485 = vand.u32 %v3484, 4294901760
    %3486 = vmatmul.mubr.f32.gmra.mrb[0].mxu0 %v3485
    %v3487 = vpop.f32.mrb[0].mxu0
    %v3488 = vadd.f32 %v2814, %v3487
    %v3489 = vpop.f32.mrb[0].mxu0
    %3490 = vmatprep.mubr.f32.mxu0 0.0
    %v3491 = vand.u32 %v794, 4294901760
    %v3492 = vsub.f32 %v794, %v3491
    %v3493 = vand.u32 %v3492, 4294901760
    %3494 = vmatmul.mubr.f32.gmra.mrb[0].mxu0 %v3493
    %v3495 = vpop.f32.mrb[0].mxu0
    %v3496 = vadd.f32 %v2821, %v3495
    %v3497 = vpop.f32.mrb[0].mxu0
    %3498 = vmatprep.mubr.f32.mxu0 0.0
    %v3499 = vand.u32 %v797, 4294901760
    %v3500 = vsub.f32 %v797, %v3499
    %v3501 = vand.u32 %v3500, 4294901760
    %3502 = vmatmul.mubr.f32.gmra.mrb[0].mxu0 %v3501
    %v3503 = vpop.f32.mrb[0].mxu0
    %v3504 = vadd.f32 %v2828, %v3503
    %v3505 = vpop.f32.mrb[0].mxu0
    %3506 = vmatprep.mubr.f32.mxu0 0.0
    %v3507 = vand.u32 %v800, 4294901760
    %v3508 = vsub.f32 %v800, %v3507
    %v3509 = vand.u32 %v3508, 4294901760
    %3510 = vmatmul.mubr.f32.gmra.mrb[0].mxu0 %v3509
    %v3511 = vpop.f32.mrb[0].mxu0
    %v3512 = vadd.f32 %v2835, %v3511
    %v3513 = vpop.f32.mrb[0].mxu0
    %3514 = vmatprep.mubr.f32.mxu0 0.0
    %v3515 = vand.u32 %v803, 4294901760
    %v3516 = vsub.f32 %v803, %v3515
    %v3517 = vand.u32 %v3516, 4294901760
    %3518 = vmatmul.mubr.f32.gmra.mrb[0].mxu0 %v3517
    %v3519 = vpop.f32.mrb[0].mxu0
    %v3520 = vadd.f32 %v2842, %v3519
    %v3521 = vpop.f32.mrb[0].mxu0
    %3522 = vmatprep.mubr.f32.mxu0 0.0
    %v3523 = vand.u32 %v806, 4294901760
    %v3524 = vsub.f32 %v806, %v3523
    %v3525 = vand.u32 %v3524, 4294901760
    %3526 = vmatmul.mubr.f32.gmra.mrb[0].mxu0 %v3525
    %v3527 = vpop.f32.mrb[0].mxu0
    %v3528 = vadd.f32 %v2849, %v3527
    %v3529 = vpop.f32.mrb[0].mxu0
    %3530 = vmatprep.mubr.f32.mxu0 0.0
    %v3531 = vand.u32 %v809, 4294901760
    %v3532 = vsub.f32 %v809, %v3531
    %v3533 = vand.u32 %v3532, 4294901760
    %3534 = vmatmul.mubr.f32.gmra.mrb[0].mxu0 %v3533
    %v3535 = vpop.f32.mrb[0].mxu0
    %v3536 = vadd.f32 %v2856, %v3535
    %v3537 = vpop.f32.mrb[0].mxu0
    %3538 = vmatprep.mubr.f32.mxu0 0.0
    %v3539 = vand.u32 %v812, 4294901760
    %v3540 = vsub.f32 %v812, %v3539
    %v3541 = vand.u32 %v3540, 4294901760
    %3542 = vmatmul.mubr.f32.gmra.mrb[0].mxu0 %v3541
    %v3543 = vpop.f32.mrb[0].mxu0
    %v3544 = vadd.f32 %v2863, %v3543
    %v3545 = vpop.f32.mrb[0].mxu0
    %3546 = vdwg.mxu0
    %3547 = vmatprep.subr.mxu0 0.0
    %v3548 = vand.u32 %v47, 4294901760
    %v3549 = vsub.f32 %v47, %v3548
    %v3550 = vand.u32 %v3549, 4294901760
    %3551 = vmatpush1.msra.mxu0 %v3550
    %3552 = vmatprep.subr.mxu0 0.0
    %v3553 = vand.u32 %v48, 4294901760
    %v3554 = vsub.f32 %v48, %v3553
    %v3555 = vand.u32 %v3554, 4294901760
    %3556 = vmatpush1.msra.mxu0 %v3555
    %3557 = vmatprep.subr.mxu0 0.0
    %v3558 = vand.u32 %v49, 4294901760
    %v3559 = vsub.f32 %v49, %v3558
    %v3560 = vand.u32 %v3559, 4294901760
    %3561 = vmatpush1.msra.mxu0 %v3560
    %3562 = vmatprep.subr.mxu0 0.0
    %v3563 = vand.u32 %v50, 4294901760
    %v3564 = vsub.f32 %v50, %v3563
    %v3565 = vand.u32 %v3564, 4294901760
    %3566 = vmatpush1.msra.mxu0 %v3565
    %3567 = vmatprep.subr.mxu0 0.0
    %v3568 = vand.u32 %v51, 4294901760
    %v3569 = vsub.f32 %v51, %v3568
    %v3570 = vand.u32 %v3569, 4294901760
    %3571 = vmatpush1.msra.mxu0 %v3570
    %3572 = vmatprep.subr.mxu0 0.0
    %v3573 = vand.u32 %v52, 4294901760
    %v3574 = vsub.f32 %v52, %v3573
    %v3575 = vand.u32 %v3574, 4294901760
    %3576 = vmatpush1.msra.mxu0 %v3575
    %3577 = vmatprep.subr.mxu0 0.0
    %v3578 = vand.u32 %v53, 4294901760
    %v3579 = vsub.f32 %v53, %v3578
    %v3580 = vand.u32 %v3579, 4294901760
    %3581 = vmatpush1.msra.mxu0 %v3580
    %3582 = vmatprep.subr.mxu0 0.0
    %v3583 = vand.u32 %v54, 4294901760
    %v3584 = vsub.f32 %v54, %v3583
    %v3585 = vand.u32 %v3584, 4294901760
    %3586 = vmatpush1.msra.mxu0 %v3585
    %3587 = vmatprep.subr.mxu0 0.0
    %v3588 = vand.u32 %v55, 4294901760
    %v3589 = vsub.f32 %v55, %v3588
    %v3590 = vand.u32 %v3589, 4294901760
    %3591 = vmatpush1.msra.mxu0 %v3590
    %3592 = vmatprep.subr.mxu0 0.0
    %v3593 = vand.u32 %v56, 4294901760
    %v3594 = vsub.f32 %v56, %v3593
    %v3595 = vand.u32 %v3594, 4294901760
    %3596 = vmatpush1.msra.mxu0 %v3595
    %3597 = vmatprep.subr.mxu0 0.0
    %v3598 = vand.u32 %v57, 4294901760
    %v3599 = vsub.f32 %v57, %v3598
    %v3600 = vand.u32 %v3599, 4294901760
    %3601 = vmatpush1.msra.mxu0 %v3600
    %3602 = vmatprep.subr.mxu0 0.0
    %v3603 = vand.u32 %v58, 4294901760
    %v3604 = vsub.f32 %v58, %v3603
    %v3605 = vand.u32 %v3604, 4294901760
    %3606 = vmatpush1.msra.mxu0 %v3605
    %3607 = vmatprep.subr.mxu0 0.0
    %v3608 = vand.u32 %v59, 4294901760
    %v3609 = vsub.f32 %v59, %v3608
    %v3610 = vand.u32 %v3609, 4294901760
    %3611 = vmatpush1.msra.mxu0 %v3610
    %3612 = vmatprep.subr.mxu0 0.0
    %v3613 = vand.u32 %v60, 4294901760
    %v3614 = vsub.f32 %v60, %v3613
    %v3615 = vand.u32 %v3614, 4294901760
    %3616 = vmatpush1.msra.mxu0 %v3615
    %3617 = vmatprep.subr.mxu0 0.0
    %v3618 = vand.u32 %v61, 4294901760
    %v3619 = vsub.f32 %v61, %v3618
    %v3620 = vand.u32 %v3619, 4294901760
    %3621 = vmatpush1.msra.mxu0 %v3620
    %3622 = vmatprep.subr.mxu0 0.0
    %v3623 = vand.u32 %v816, 4294901760
    %v3624 = vsub.f32 %v816, %v3623
    %v3625 = vand.u32 %v3624, 4294901760
    %3626 = vmatpush1.msra.mxu0 %v3625
    %3627 = vmatprep.subr.mxu0 0.0
    %3628 = vmatpush1.msra.mxu0 0.0
    %3629 = vmatprep.subr.mxu0 0.0
    %3630 = vmatpush1.msra.mxu0 0.0
    %3631 = vmatprep.subr.mxu0 0.0
    %3632 = vmatpush1.msra.mxu0 0.0
    %3633 = vmatprep.subr.mxu0 0.0
    %3634 = vmatpush1.msra.mxu0 0.0
    %3635 = vmatprep.subr.mxu0 0.0
    %3636 = vmatpush1.msra.mxu0 0.0
    %3637 = vmatprep.subr.mxu0 0.0
    %3638 = vmatpush1.msra.mxu0 0.0
    %3639 = vmatprep.subr.mxu0 0.0
    %3640 = vmatpush1.msra.mxu0 0.0
    %3641 = vmatprep.subr.mxu0 0.0
    %3642 = vmatpush1.msra.mxu0 0.0
    %3643 = vmatprep.subr.mxu0 0.0
    %3644 = vmatpush1.msra.mxu0 0.0
    %3645 = vmatprep.subr.mxu0 0.0
    %3646 = vmatpush1.msra.mxu0 0.0
    %3647 = vmatprep.subr.mxu0 0.0
    %3648 = vmatpush1.msra.mxu0 0.0
    %3649 = vmatprep.subr.mxu0 0.0
    %3650 = vmatpush1.msra.mxu0 0.0
    %3651 = vmatprep.subr.mxu0 0.0
    %3652 = vmatpush1.msra.mxu0 0.0
    %3653 = vmatprep.subr.mxu0 0.0
    %3654 = vmatpush1.msra.mxu0 0.0
    %3655 = vmatprep.subr.mxu0 0.0
    %3656 = vmatpush1.msra.mxu0 0.0
    %3657 = vmatprep.subr.mxu0 0.0
    %3658 = vmatpush1.msra.mxu0 0.0
    %3659 = vmatprep.mubr.f32.mxu0 0.0
    %v3660 = vand.u32 %v590, 4294901760
    %3661 = vmatmul.mubr.f32.gmra.mrb[0].mxu0 %v3660
    %v3662 = vpop.f32.mrb[0].mxu0
    %v3663 = vadd.f32 %v2952, %v3662
    %v3664 = vpop.f32.mrb[0].mxu0
    %3665 = vmatprep.mubr.f32.mxu0 0.0
    %v3666 = vand.u32 %v593, 4294901760
    %3667 = vmatmul.mubr.f32.gmra.mrb[0].mxu0 %v3666
    %v3668 = vpop.f32.mrb[0].mxu0
    %v3669 = vadd.f32 %v2960, %v3668
    %v3670 = vpop.f32.mrb[0].mxu0
    %3671 = vmatprep.mubr.f32.mxu0 0.0
    %v3672 = vand.u32 %v596, 4294901760
    %3673 = vmatmul.mubr.f32.gmra.mrb[0].mxu0 %v3672
    %v3674 = vpop.f32.mrb[0].mxu0
    %v3675 = vadd.f32 %v2968, %v3674
    %v3676 = vpop.f32.mrb[0].mxu0
    %3677 = vmatprep.mubr.f32.mxu0 0.0
    %v3678 = vand.u32 %v599, 4294901760
    %3679 = vmatmul.mubr.f32.gmra.mrb[0].mxu0 %v3678
    %v3680 = vpop.f32.mrb[0].mxu0
    %v3681 = vadd.f32 %v2976, %v3680
    %v3682 = vpop.f32.mrb[0].mxu0
    %3683 = vmatprep.mubr.f32.mxu0 0.0
    %v3684 = vand.u32 %v602, 4294901760
    %3685 = vmatmul.mubr.f32.gmra.mrb[0].mxu0 %v3684
    %v3686 = vpop.f32.mrb[0].mxu0
    %v3687 = vadd.f32 %v2984, %v3686
    %v3688 = vpop.f32.mrb[0].mxu0
    %3689 = vmatprep.mubr.f32.mxu0 0.0
    %v3690 = vand.u32 %v605, 4294901760
    %3691 = vmatmul.mubr.f32.gmra.mrb[0].mxu0 %v3690
    %v3692 = vpop.f32.mrb[0].mxu0
    %v3693 = vadd.f32 %v2992, %v3692
    %v3694 = vpop.f32.mrb[0].mxu0
    %3695 = vmatprep.mubr.f32.mxu0 0.0
    %v3696 = vand.u32 %v608, 4294901760
    %3697 = vmatmul.mubr.f32.gmra.mrb[0].mxu0 %v3696
    %v3698 = vpop.f32.mrb[0].mxu0
    %v3699 = vadd.f32 %v3000, %v3698
    %v3700 = vpop.f32.mrb[0].mxu0
    %3701 = vmatprep.mubr.f32.mxu0 0.0
    %v3702 = vand.u32 %v611, 4294901760
    %3703 = vmatmul.mubr.f32.gmra.mrb[0].mxu0 %v3702
    %v3704 = vpop.f32.mrb[0].mxu0
    %v3705 = vadd.f32 %v3008, %v3704
    %v3706 = vpop.f32.mrb[0].mxu0
    %3707 = vmatprep.mubr.f32.mxu0 0.0
    %v3708 = vand.u32 %v614, 4294901760
    %3709 = vmatmul.mubr.f32.gmra.mrb[0].mxu0 %v3708
    %v3710 = vpop.f32.mrb[0].mxu0
    %v3711 = vadd.f32 %v3016, %v3710
    %v3712 = vpop.f32.mrb[0].mxu0
    %3713 = vmatprep.mubr.f32.mxu0 0.0
    %v3714 = vand.u32 %v617, 4294901760
    %3715 = vmatmul.mubr.f32.gmra.mrb[0].mxu0 %v3714
    %v3716 = vpop.f32.mrb[0].mxu0
    %v3717 = vadd.f32 %v3024, %v3716
    %v3718 = vpop.f32.mrb[0].mxu0
    %3719 = vmatprep.mubr.f32.mxu0 0.0
    %v3720 = vand.u32 %v620, 4294901760
    %3721 = vmatmul.mubr.f32.gmra.mrb[0].mxu0 %v3720
    %v3722 = vpop.f32.mrb[0].mxu0
    %v3723 = vadd.f32 %v3032, %v3722
    %v3724 = vpop.f32.mrb[0].mxu0
    %3725 = vmatprep.mubr.f32.mxu0 0.0
    %v3726 = vand.u32 %v623, 4294901760
    %3727 = vmatmul.mubr.f32.gmra.mrb[0].mxu0 %v3726
    %v3728 = vpop.f32.mrb[0].mxu0
    %v3729 = vadd.f32 %v3040, %v3728
    %v3730 = vpop.f32.mrb[0].mxu0
    %3731 = vmatprep.mubr.f32.mxu0 0.0
    %v3732 = vand.u32 %v626, 4294901760
    %3733 = vmatmul.mubr.f32.gmra.mrb[0].mxu0 %v3732
    %v3734 = vpop.f32.mrb[0].mxu0
    %v3735 = vadd.f32 %v3048, %v3734
    %v3736 = vpop.f32.mrb[0].mxu0
    %3737 = vmatprep.mubr.f32.mxu0 0.0
    %v3738 = vand.u32 %v629, 4294901760
    %3739 = vmatmul.mubr.f32.gmra.mrb[0].mxu0 %v3738
    %v3740 = vpop.f32.mrb[0].mxu0
    %v3741 = vadd.f32 %v3056, %v3740
    %v3742 = vpop.f32.mrb[0].mxu0
    %3743 = vmatprep.mubr.f32.mxu0 0.0
    %v3744 = vand.u32 %v632, 4294901760
    %3745 = vmatmul.mubr.f32.gmra.mrb[0].mxu0 %v3744
    %v3746 = vpop.f32.mrb[0].mxu0
    %v3747 = vadd.f32 %v3064, %v3746
    %v3748 = vpop.f32.mrb[0].mxu0
    %3749 = vmatprep.mubr.f32.mxu0 0.0
    %v3750 = vand.u32 %v635, 4294901760
    %3751 = vmatmul.mubr.f32.gmra.mrb[0].mxu0 %v3750
    %v3752 = vpop.f32.mrb[0].mxu0
    %v3753 = vadd.f32 %v3072, %v3752
    %v3754 = vpop.f32.mrb[0].mxu0
    %3755 = vmatprep.mubr.f32.mxu0 0.0
    %v3756 = vand.u32 %v638, 4294901760
    %3757 = vmatmul.mubr.f32.gmra.mrb[0].mxu0 %v3756
    %v3758 = vpop.f32.mrb[0].mxu0
    %v3759 = vadd.f32 %v3080, %v3758
    %v3760 = vpop.f32.mrb[0].mxu0
    %3761 = vmatprep.mubr.f32.mxu0 0.0
    %v3762 = vand.u32 %v641, 4294901760
    %3763 = vmatmul.mubr.f32.gmra.mrb[0].mxu0 %v3762
    %v3764 = vpop.f32.mrb[0].mxu0
    %v3765 = vadd.f32 %v3088, %v3764
    %v3766 = vpop.f32.mrb[0].mxu0
    %3767 = vmatprep.mubr.f32.mxu0 0.0
    %v3768 = vand.u32 %v644, 4294901760
    %3769 = vmatmul.mubr.f32.gmra.mrb[0].mxu0 %v3768
    %v3770 = vpop.f32.mrb[0].mxu0
    %v3771 = vadd.f32 %v3096, %v3770
    %v3772 = vpop.f32.mrb[0].mxu0
    %3773 = vmatprep.mubr.f32.mxu0 0.0
    %v3774 = vand.u32 %v647, 4294901760
    %3775 = vmatmul.mubr.f32.gmra.mrb[0].mxu0 %v3774
    %v3776 = vpop.f32.mrb[0].mxu0
    %v3777 = vadd.f32 %v3104, %v3776
    %v3778 = vpop.f32.mrb[0].mxu0
    %3779 = vmatprep.mubr.f32.mxu0 0.0
    %v3780 = vand.u32 %v650, 4294901760
    %3781 = vmatmul.mubr.f32.gmra.mrb[0].mxu0 %v3780
    %v3782 = vpop.f32.mrb[0].mxu0
    %v3783 = vadd.f32 %v3112, %v3782
    %v3784 = vpop.f32.mrb[0].mxu0
    %3785 = vmatprep.mubr.f32.mxu0 0.0
    %v3786 = vand.u32 %v653, 4294901760
    %3787 = vmatmul.mubr.f32.gmra.mrb[0].mxu0 %v3786
    %v3788 = vpop.f32.mrb[0].mxu0
    %v3789 = vadd.f32 %v3120, %v3788
    %v3790 = vpop.f32.mrb[0].mxu0
    %3791 = vmatprep.mubr.f32.mxu0 0.0
    %v3792 = vand.u32 %v656, 4294901760
    %3793 = vmatmul.mubr.f32.gmra.mrb[0].mxu0 %v3792
    %v3794 = vpop.f32.mrb[0].mxu0
    %v3795 = vadd.f32 %v3128, %v3794
    %v3796 = vpop.f32.mrb[0].mxu0
    %3797 = vmatprep.mubr.f32.mxu0 0.0
    %v3798 = vand.u32 %v659, 4294901760
    %3799 = vmatmul.mubr.f32.gmra.mrb[0].mxu0 %v3798
    %v3800 = vpop.f32.mrb[0].mxu0
    %v3801 = vadd.f32 %v3136, %v3800
    %v3802 = vpop.f32.mrb[0].mxu0
    %3803 = vmatprep.mubr.f32.mxu0 0.0
    %v3804 = vand.u32 %v662, 4294901760
    %3805 = vmatmul.mubr.f32.gmra.mrb[0].mxu0 %v3804
    %v3806 = vpop.f32.mrb[0].mxu0
    %v3807 = vadd.f32 %v3144, %v3806
    %v3808 = vpop.f32.mrb[0].mxu0
    %3809 = vmatprep.mubr.f32.mxu0 0.0
    %v3810 = vand.u32 %v665, 4294901760
    %3811 = vmatmul.mubr.f32.gmra.mrb[0].mxu0 %v3810
    %v3812 = vpop.f32.mrb[0].mxu0
    %v3813 = vadd.f32 %v3152, %v3812
    %v3814 = vpop.f32.mrb[0].mxu0
    %3815 = vmatprep.mubr.f32.mxu0 0.0
    %v3816 = vand.u32 %v668, 4294901760
    %3817 = vmatmul.mubr.f32.gmra.mrb[0].mxu0 %v3816
    %v3818 = vpop.f32.mrb[0].mxu0
    %v3819 = vadd.f32 %v3160, %v3818
    %v3820 = vpop.f32.mrb[0].mxu0
    %3821 = vmatprep.mubr.f32.mxu0 0.0
    %v3822 = vand.u32 %v671, 4294901760
    %3823 = vmatmul.mubr.f32.gmra.mrb[0].mxu0 %v3822
    %v3824 = vpop.f32.mrb[0].mxu0
    %v3825 = vadd.f32 %v3168, %v3824
    %v3826 = vpop.f32.mrb[0].mxu0
    %3827 = vmatprep.mubr.f32.mxu0 0.0
    %v3828 = vand.u32 %v674, 4294901760
    %3829 = vmatmul.mubr.f32.gmra.mrb[0].mxu0 %v3828
    %v3830 = vpop.f32.mrb[0].mxu0
    %v3831 = vadd.f32 %v3176, %v3830
    %v3832 = vpop.f32.mrb[0].mxu0
    %3833 = vmatprep.mubr.f32.mxu0 0.0
    %v3834 = vand.u32 %v677, 4294901760
    %3835 = vmatmul.mubr.f32.gmra.mrb[0].mxu0 %v3834
    %v3836 = vpop.f32.mrb[0].mxu0
    %v3837 = vadd.f32 %v3184, %v3836
    %v3838 = vpop.f32.mrb[0].mxu0
    %3839 = vmatprep.mubr.f32.mxu0 0.0
    %v3840 = vand.u32 %v680, 4294901760
    %3841 = vmatmul.mubr.f32.gmra.mrb[0].mxu0 %v3840
    %v3842 = vpop.f32.mrb[0].mxu0
    %v3843 = vadd.f32 %v3192, %v3842
    %v3844 = vpop.f32.mrb[0].mxu0
    %3845 = vmatprep.mubr.f32.mxu0 0.0
    %v3846 = vand.u32 %v683, 4294901760
    %3847 = vmatmul.mubr.f32.gmra.mrb[0].mxu0 %v3846
    %v3848 = vpop.f32.mrb[0].mxu0
    %v3849 = vadd.f32 %v3200, %v3848
    %v3850 = vpop.f32.mrb[0].mxu0
    %3851 = vmatprep.mubr.f32.mxu0 0.0
    %v3852 = vand.u32 %v686, 4294901760
    %3853 = vmatmul.mubr.f32.gmra.mrb[0].mxu0 %v3852
    %v3854 = vpop.f32.mrb[0].mxu0
    %v3855 = vadd.f32 %v3208, %v3854
    %v3856 = vpop.f32.mrb[0].mxu0
    %3857 = vmatprep.mubr.f32.mxu0 0.0
    %v3858 = vand.u32 %v689, 4294901760
    %3859 = vmatmul.mubr.f32.gmra.mrb[0].mxu0 %v3858
    %v3860 = vpop.f32.mrb[0].mxu0
    %v3861 = vadd.f32 %v3216, %v3860
    %v3862 = vpop.f32.mrb[0].mxu0
    %3863 = vmatprep.mubr.f32.mxu0 0.0
    %v3864 = vand.u32 %v692, 4294901760
    %3865 = vmatmul.mubr.f32.gmra.mrb[0].mxu0 %v3864
    %v3866 = vpop.f32.mrb[0].mxu0
    %v3867 = vadd.f32 %v3224, %v3866
    %v3868 = vpop.f32.mrb[0].mxu0
    %3869 = vmatprep.mubr.f32.mxu0 0.0
    %v3870 = vand.u32 %v695, 4294901760
    %3871 = vmatmul.mubr.f32.gmra.mrb[0].mxu0 %v3870
    %v3872 = vpop.f32.mrb[0].mxu0
    %v3873 = vadd.f32 %v3232, %v3872
    %v3874 = vpop.f32.mrb[0].mxu0
    %3875 = vmatprep.mubr.f32.mxu0 0.0
    %v3876 = vand.u32 %v698, 4294901760
    %3877 = vmatmul.mubr.f32.gmra.mrb[0].mxu0 %v3876
    %v3878 = vpop.f32.mrb[0].mxu0
    %v3879 = vadd.f32 %v3240, %v3878
    %v3880 = vpop.f32.mrb[0].mxu0
    %3881 = vmatprep.mubr.f32.mxu0 0.0
    %v3882 = vand.u32 %v701, 4294901760
    %3883 = vmatmul.mubr.f32.gmra.mrb[0].mxu0 %v3882
    %v3884 = vpop.f32.mrb[0].mxu0
    %v3885 = vadd.f32 %v3248, %v3884
    %v3886 = vpop.f32.mrb[0].mxu0
    %3887 = vmatprep.mubr.f32.mxu0 0.0
    %v3888 = vand.u32 %v704, 4294901760
    %3889 = vmatmul.mubr.f32.gmra.mrb[0].mxu0 %v3888
    %v3890 = vpop.f32.mrb[0].mxu0
    %v3891 = vadd.f32 %v3256, %v3890
    %v3892 = vpop.f32.mrb[0].mxu0
    %3893 = vmatprep.mubr.f32.mxu0 0.0
    %v3894 = vand.u32 %v707, 4294901760
    %3895 = vmatmul.mubr.f32.gmra.mrb[0].mxu0 %v3894
    %v3896 = vpop.f32.mrb[0].mxu0
    %v3897 = vadd.f32 %v3264, %v3896
    %v3898 = vpop.f32.mrb[0].mxu0
    %3899 = vmatprep.mubr.f32.mxu0 0.0
    %v3900 = vand.u32 %v710, 4294901760
    %3901 = vmatmul.mubr.f32.gmra.mrb[0].mxu0 %v3900
    %v3902 = vpop.f32.mrb[0].mxu0
    %v3903 = vadd.f32 %v3272, %v3902
    %v3904 = vpop.f32.mrb[0].mxu0
    %3905 = vmatprep.mubr.f32.mxu0 0.0
    %v3906 = vand.u32 %v713, 4294901760
    %3907 = vmatmul.mubr.f32.gmra.mrb[0].mxu0 %v3906
    %v3908 = vpop.f32.mrb[0].mxu0
    %v3909 = vadd.f32 %v3280, %v3908
    %v3910 = vpop.f32.mrb[0].mxu0
    %3911 = vmatprep.mubr.f32.mxu0 0.0
    %v3912 = vand.u32 %v716, 4294901760
    %3913 = vmatmul.mubr.f32.gmra.mrb[0].mxu0 %v3912
    %v3914 = vpop.f32.mrb[0].mxu0
    %v3915 = vadd.f32 %v3288, %v3914
    %v3916 = vpop.f32.mrb[0].mxu0
    %3917 = vmatprep.mubr.f32.mxu0 0.0
    %v3918 = vand.u32 %v719, 4294901760
    %3919 = vmatmul.mubr.f32.gmra.mrb[0].mxu0 %v3918
    %v3920 = vpop.f32.mrb[0].mxu0
    %v3921 = vadd.f32 %v3296, %v3920
    %v3922 = vpop.f32.mrb[0].mxu0
    %3923 = vmatprep.mubr.f32.mxu0 0.0
    %v3924 = vand.u32 %v722, 4294901760
    %3925 = vmatmul.mubr.f32.gmra.mrb[0].mxu0 %v3924
    %v3926 = vpop.f32.mrb[0].mxu0
    %v3927 = vadd.f32 %v3304, %v3926
    %v3928 = vpop.f32.mrb[0].mxu0
    %3929 = vmatprep.mubr.f32.mxu0 0.0
    %v3930 = vand.u32 %v725, 4294901760
    %3931 = vmatmul.mubr.f32.gmra.mrb[0].mxu0 %v3930
    %v3932 = vpop.f32.mrb[0].mxu0
    %v3933 = vadd.f32 %v3312, %v3932
    %v3934 = vpop.f32.mrb[0].mxu0
    %3935 = vmatprep.mubr.f32.mxu0 0.0
    %v3936 = vand.u32 %v728, 4294901760
    %3937 = vmatmul.mubr.f32.gmra.mrb[0].mxu0 %v3936
    %v3938 = vpop.f32.mrb[0].mxu0
    %v3939 = vadd.f32 %v3320, %v3938
    %v3940 = vpop.f32.mrb[0].mxu0
    %3941 = vmatprep.mubr.f32.mxu0 0.0
    %v3942 = vand.u32 %v731, 4294901760
    %3943 = vmatmul.mubr.f32.gmra.mrb[0].mxu0 %v3942
    %v3944 = vpop.f32.mrb[0].mxu0
    %v3945 = vadd.f32 %v3328, %v3944
    %v3946 = vpop.f32.mrb[0].mxu0
    %3947 = vmatprep.mubr.f32.mxu0 0.0
    %v3948 = vand.u32 %v734, 4294901760
    %3949 = vmatmul.mubr.f32.gmra.mrb[0].mxu0 %v3948
    %v3950 = vpop.f32.mrb[0].mxu0
    %v3951 = vadd.f32 %v3336, %v3950
    %v3952 = vpop.f32.mrb[0].mxu0
    %3953 = vmatprep.mubr.f32.mxu0 0.0
    %v3954 = vand.u32 %v737, 4294901760
    %3955 = vmatmul.mubr.f32.gmra.mrb[0].mxu0 %v3954
    %v3956 = vpop.f32.mrb[0].mxu0
    %v3957 = vadd.f32 %v3344, %v3956
    %v3958 = vpop.f32.mrb[0].mxu0
    %3959 = vmatprep.mubr.f32.mxu0 0.0
    %v3960 = vand.u32 %v740, 4294901760
    %3961 = vmatmul.mubr.f32.gmra.mrb[0].mxu0 %v3960
    %v3962 = vpop.f32.mrb[0].mxu0
    %v3963 = vadd.f32 %v3352, %v3962
    %v3964 = vpop.f32.mrb[0].mxu0
    %3965 = vmatprep.mubr.f32.mxu0 0.0
    %v3966 = vand.u32 %v743, 4294901760
    %3967 = vmatmul.mubr.f32.gmra.mrb[0].mxu0 %v3966
    %v3968 = vpop.f32.mrb[0].mxu0
    %v3969 = vadd.f32 %v3360, %v3968
    %v3970 = vpop.f32.mrb[0].mxu0
    %3971 = vmatprep.mubr.f32.mxu0 0.0
    %v3972 = vand.u32 %v746, 4294901760
    %3973 = vmatmul.mubr.f32.gmra.mrb[0].mxu0 %v3972
    %v3974 = vpop.f32.mrb[0].mxu0
    %v3975 = vadd.f32 %v3368, %v3974
    %v3976 = vpop.f32.mrb[0].mxu0
    %3977 = vmatprep.mubr.f32.mxu0 0.0
    %v3978 = vand.u32 %v749, 4294901760
    %3979 = vmatmul.mubr.f32.gmra.mrb[0].mxu0 %v3978
    %v3980 = vpop.f32.mrb[0].mxu0
    %v3981 = vadd.f32 %v3376, %v3980
    %v3982 = vpop.f32.mrb[0].mxu0
    %3983 = vmatprep.mubr.f32.mxu0 0.0
    %v3984 = vand.u32 %v752, 4294901760
    %3985 = vmatmul.mubr.f32.gmra.mrb[0].mxu0 %v3984
    %v3986 = vpop.f32.mrb[0].mxu0
    %v3987 = vadd.f32 %v3384, %v3986
    %v3988 = vpop.f32.mrb[0].mxu0
    %3989 = vmatprep.mubr.f32.mxu0 0.0
    %v3990 = vand.u32 %v755, 4294901760
    %3991 = vmatmul.mubr.f32.gmra.mrb[0].mxu0 %v3990
    %v3992 = vpop.f32.mrb[0].mxu0
    %v3993 = vadd.f32 %v3392, %v3992
    %v3994 = vpop.f32.mrb[0].mxu0
    %3995 = vmatprep.mubr.f32.mxu0 0.0
    %v3996 = vand.u32 %v758, 4294901760
    %3997 = vmatmul.mubr.f32.gmra.mrb[0].mxu0 %v3996
    %v3998 = vpop.f32.mrb[0].mxu0
    %v3999 = vadd.f32 %v3400, %v3998
    %v4000 = vpop.f32.mrb[0].mxu0
    %4001 = vmatprep.mubr.f32.mxu0 0.0
    %v4002 = vand.u32 %v761, 4294901760
    %4003 = vmatmul.mubr.f32.gmra.mrb[0].mxu0 %v4002
    %v4004 = vpop.f32.mrb[0].mxu0
    %v4005 = vadd.f32 %v3408, %v4004
    %v4006 = vpop.f32.mrb[0].mxu0
    %4007 = vmatprep.mubr.f32.mxu0 0.0
    %v4008 = vand.u32 %v764, 4294901760
    %4009 = vmatmul.mubr.f32.gmra.mrb[0].mxu0 %v4008
    %v4010 = vpop.f32.mrb[0].mxu0
    %v4011 = vadd.f32 %v3416, %v4010
    %v4012 = vpop.f32.mrb[0].mxu0
    %4013 = vmatprep.mubr.f32.mxu0 0.0
    %v4014 = vand.u32 %v767, 4294901760
    %4015 = vmatmul.mubr.f32.gmra.mrb[0].mxu0 %v4014
    %v4016 = vpop.f32.mrb[0].mxu0
    %v4017 = vadd.f32 %v3424, %v4016
    %v4018 = vpop.f32.mrb[0].mxu0
    %4019 = vmatprep.mubr.f32.mxu0 0.0
    %v4020 = vand.u32 %v770, 4294901760
    %4021 = vmatmul.mubr.f32.gmra.mrb[0].mxu0 %v4020
    %v4022 = vpop.f32.mrb[0].mxu0
    %v4023 = vadd.f32 %v3432, %v4022
    %v4024 = vpop.f32.mrb[0].mxu0
    %4025 = vmatprep.mubr.f32.mxu0 0.0
    %v4026 = vand.u32 %v773, 4294901760
    %4027 = vmatmul.mubr.f32.gmra.mrb[0].mxu0 %v4026
    %v4028 = vpop.f32.mrb[0].mxu0
    %v4029 = vadd.f32 %v3440, %v4028
    %v4030 = vpop.f32.mrb[0].mxu0
    %4031 = vmatprep.mubr.f32.mxu0 0.0
    %v4032 = vand.u32 %v776, 4294901760
    %4033 = vmatmul.mubr.f32.gmra.mrb[0].mxu0 %v4032
    %v4034 = vpop.f32.mrb[0].mxu0
    %v4035 = vadd.f32 %v3448, %v4034
    %v4036 = vpop.f32.mrb[0].mxu0
    %4037 = vmatprep.mubr.f32.mxu0 0.0
    %v4038 = vand.u32 %v779, 4294901760
    %4039 = vmatmul.mubr.f32.gmra.mrb[0].mxu0 %v4038
    %v4040 = vpop.f32.mrb[0].mxu0
    %v4041 = vadd.f32 %v3456, %v4040
    %v4042 = vpop.f32.mrb[0].mxu0
    %4043 = vmatprep.mubr.f32.mxu0 0.0
    %v4044 = vand.u32 %v782, 4294901760
    %4045 = vmatmul.mubr.f32.gmra.mrb[0].mxu0 %v4044
    %v4046 = vpop.f32.mrb[0].mxu0
    %v4047 = vadd.f32 %v3464, %v4046
    %v4048 = vpop.f32.mrb[0].mxu0
    %4049 = vmatprep.mubr.f32.mxu0 0.0
    %v4050 = vand.u32 %v785, 4294901760
    %4051 = vmatmul.mubr.f32.gmra.mrb[0].mxu0 %v4050
    %v4052 = vpop.f32.mrb[0].mxu0
    %v4053 = vadd.f32 %v3472, %v4052
    %v4054 = vpop.f32.mrb[0].mxu0
    %4055 = vmatprep.mubr.f32.mxu0 0.0
    %v4056 = vand.u32 %v788, 4294901760
    %4057 = vmatmul.mubr.f32.gmra.mrb[0].mxu0 %v4056
    %v4058 = vpop.f32.mrb[0].mxu0
    %v4059 = vadd.f32 %v3480, %v4058
    %v4060 = vpop.f32.mrb[0].mxu0
    %4061 = vmatprep.mubr.f32.mxu0 0.0
    %v4062 = vand.u32 %v791, 4294901760
    %4063 = vmatmul.mubr.f32.gmra.mrb[0].mxu0 %v4062
    %v4064 = vpop.f32.mrb[0].mxu0
    %v4065 = vadd.f32 %v3488, %v4064
    %v4066 = vpop.f32.mrb[0].mxu0
    %4067 = vmatprep.mubr.f32.mxu0 0.0
    %v4068 = vand.u32 %v794, 4294901760
    %4069 = vmatmul.mubr.f32.gmra.mrb[0].mxu0 %v4068
    %v4070 = vpop.f32.mrb[0].mxu0
    %v4071 = vadd.f32 %v3496, %v4070
    %v4072 = vpop.f32.mrb[0].mxu0
    %4073 = vmatprep.mubr.f32.mxu0 0.0
    %v4074 = vand.u32 %v797, 4294901760
    %4075 = vmatmul.mubr.f32.gmra.mrb[0].mxu0 %v4074
    %v4076 = vpop.f32.mrb[0].mxu0
    %v4077 = vadd.f32 %v3504, %v4076
    %v4078 = vpop.f32.mrb[0].mxu0
    %4079 = vmatprep.mubr.f32.mxu0 0.0
    %v4080 = vand.u32 %v800, 4294901760
    %4081 = vmatmul.mubr.f32.gmra.mrb[0].mxu0 %v4080
    %v4082 = vpop.f32.mrb[0].mxu0
    %v4083 = vadd.f32 %v3512, %v4082
    %v4084 = vpop.f32.mrb[0].mxu0
    %4085 = vmatprep.mubr.f32.mxu0 0.0
    %v4086 = vand.u32 %v803, 4294901760
    %4087 = vmatmul.mubr.f32.gmra.mrb[0].mxu0 %v4086
    %v4088 = vpop.f32.mrb[0].mxu0
    %v4089 = vadd.f32 %v3520, %v4088
    %v4090 = vpop.f32.mrb[0].mxu0
    %4091 = vmatprep.mubr.f32.mxu0 0.0
    %v4092 = vand.u32 %v806, 4294901760
    %4093 = vmatmul.mubr.f32.gmra.mrb[0].mxu0 %v4092
    %v4094 = vpop.f32.mrb[0].mxu0
    %v4095 = vadd.f32 %v3528, %v4094
    %v4096 = vpop.f32.mrb[0].mxu0
    %4097 = vmatprep.mubr.f32.mxu0 0.0
    %v4098 = vand.u32 %v809, 4294901760
    %4099 = vmatmul.mubr.f32.gmra.mrb[0].mxu0 %v4098
    %v4100 = vpop.f32.mrb[0].mxu0
    %v4101 = vadd.f32 %v3536, %v4100
    %v4102 = vpop.f32.mrb[0].mxu0
    %4103 = vmatprep.mubr.f32.mxu0 0.0
    %v4104 = vand.u32 %v812, 4294901760
    %4105 = vmatmul.mubr.f32.gmra.mrb[0].mxu0 %v4104
    %v4106 = vpop.f32.mrb[0].mxu0
    %v4107 = vadd.f32 %v3544, %v4106
    %v4108 = vpop.f32.mrb[0].mxu0
    %4109 = vdwg.mxu0
    %4110 = vmatprep.subr.mxu0 0.0
    %v4111 = vand.u32 %v47, 4294901760
    %4112 = vmatpush1.msra.mxu0 %v4111
    %4113 = vmatprep.subr.mxu0 0.0
    %v4114 = vand.u32 %v48, 4294901760
    %4115 = vmatpush1.msra.mxu0 %v4114
    %4116 = vmatprep.subr.mxu0 0.0
    %v4117 = vand.u32 %v49, 4294901760
    %4118 = vmatpush1.msra.mxu0 %v4117
    %4119 = vmatprep.subr.mxu0 0.0
    %v4120 = vand.u32 %v50, 4294901760
    %4121 = vmatpush1.msra.mxu0 %v4120
    %4122 = vmatprep.subr.mxu0 0.0
    %v4123 = vand.u32 %v51, 4294901760
    %4124 = vmatpush1.msra.mxu0 %v4123
    %4125 = vmatprep.subr.mxu0 0.0
    %v4126 = vand.u32 %v52, 4294901760
    %4127 = vmatpush1.msra.mxu0 %v4126
    %4128 = vmatprep.subr.mxu0 0.0
    %v4129 = vand.u32 %v53, 4294901760
    %4130 = vmatpush1.msra.mxu0 %v4129
    %4131 = vmatprep.subr.mxu0 0.0
    %v4132 = vand.u32 %v54, 4294901760
    %4133 = vmatpush1.msra.mxu0 %v4132
    %4134 = vmatprep.subr.mxu0 0.0
    %v4135 = vand.u32 %v55, 4294901760
    %4136 = vmatpush1.msra.mxu0 %v4135
    %4137 = vmatprep.subr.mxu0 0.0
    %v4138 = vand.u32 %v56, 4294901760
    %4139 = vmatpush1.msra.mxu0 %v4138
    %4140 = vmatprep.subr.mxu0 0.0
    %v4141 = vand.u32 %v57, 4294901760
    %4142 = vmatpush1.msra.mxu0 %v4141
    %4143 = vmatprep.subr.mxu0 0.0
    %v4144 = vand.u32 %v58, 4294901760
    %4145 = vmatpush1.msra.mxu0 %v4144
    %4146 = vmatprep.subr.mxu0 0.0
    %v4147 = vand.u32 %v59, 4294901760
    %4148 = vmatpush1.msra.mxu0 %v4147
    %4149 = vmatprep.subr.mxu0 0.0
    %v4150 = vand.u32 %v60, 4294901760
    %4151 = vmatpush1.msra.mxu0 %v4150
    %4152 = vmatprep.subr.mxu0 0.0
    %v4153 = vand.u32 %v61, 4294901760
    %4154 = vmatpush1.msra.mxu0 %v4153
    %4155 = vmatprep.subr.mxu0 0.0
    %v4156 = vand.u32 %v816, 4294901760
    %4157 = vmatpush1.msra.mxu0 %v4156
    %4158 = vmatprep.subr.mxu0 0.0
    %4159 = vmatpush1.msra.mxu0 0.0
    %4160 = vmatprep.subr.mxu0 0.0
    %4161 = vmatpush1.msra.mxu0 0.0
    %4162 = vmatprep.subr.mxu0 0.0
    %4163 = vmatpush1.msra.mxu0 0.0
    %4164 = vmatprep.subr.mxu0 0.0
    %4165 = vmatpush1.msra.mxu0 0.0
    %4166 = vmatprep.subr.mxu0 0.0
    %4167 = vmatpush1.msra.mxu0 0.0
    %4168 = vmatprep.subr.mxu0 0.0
    %4169 = vmatpush1.msra.mxu0 0.0
    %4170 = vmatprep.subr.mxu0 0.0
    %4171 = vmatpush1.msra.mxu0 0.0
    %4172 = vmatprep.subr.mxu0 0.0
    %4173 = vmatpush1.msra.mxu0 0.0
    %4174 = vmatprep.subr.mxu0 0.0
    %4175 = vmatpush1.msra.mxu0 0.0
    %4176 = vmatprep.subr.mxu0 0.0
    %4177 = vmatpush1.msra.mxu0 0.0
    %4178 = vmatprep.subr.mxu0 0.0
    %4179 = vmatpush1.msra.mxu0 0.0
    %4180 = vmatprep.subr.mxu0 0.0
    %4181 = vmatpush1.msra.mxu0 0.0
    %4182 = vmatprep.subr.mxu0 0.0
    %4183 = vmatpush1.msra.mxu0 0.0
    %4184 = vmatprep.subr.mxu0 0.0
    %4185 = vmatpush1.msra.mxu0 0.0
    %4186 = vmatprep.subr.mxu0 0.0
    %4187 = vmatpush1.msra.mxu0 0.0
    %4188 = vmatprep.subr.mxu0 0.0
    %4189 = vmatpush1.msra.mxu0 0.0
    %4190 = vmatprep.mubr.f32.mxu0 0.0
    %v4191 = vand.u32 %v590, 4294901760
    %4192 = vmatmul.mubr.f32.gmra.mrb[0].mxu0 %v4191
    %v4193 = vpop.f32.mrb[0].mxu0
    %v4194 = vadd.f32 %v3663, %v4193
    %v4195 = vpop.f32.mrb[0].mxu0
    %4196 = vmatprep.mubr.f32.mxu0 0.0
    %v4197 = vand.u32 %v593, 4294901760
    %4198 = vmatmul.mubr.f32.gmra.mrb[0].mxu0 %v4197
    %v4199 = vpop.f32.mrb[0].mxu0
    %v4200 = vadd.f32 %v3669, %v4199
    %v4201 = vpop.f32.mrb[0].mxu0
    %4202 = vmatprep.mubr.f32.mxu0 0.0
    %v4203 = vand.u32 %v596, 4294901760
    %4204 = vmatmul.mubr.f32.gmra.mrb[0].mxu0 %v4203
    %v4205 = vpop.f32.mrb[0].mxu0
    %v4206 = vadd.f32 %v3675, %v4205
    %v4207 = vpop.f32.mrb[0].mxu0
    %4208 = vmatprep.mubr.f32.mxu0 0.0
    %v4209 = vand.u32 %v599, 4294901760
    %4210 = vmatmul.mubr.f32.gmra.mrb[0].mxu0 %v4209
    %v4211 = vpop.f32.mrb[0].mxu0
    %v4212 = vadd.f32 %v3681, %v4211
    %v4213 = vpop.f32.mrb[0].mxu0
    %4214 = vmatprep.mubr.f32.mxu0 0.0
    %v4215 = vand.u32 %v602, 4294901760
    %4216 = vmatmul.mubr.f32.gmra.mrb[0].mxu0 %v4215
    %v4217 = vpop.f32.mrb[0].mxu0
    %v4218 = vadd.f32 %v3687, %v4217
    %v4219 = vpop.f32.mrb[0].mxu0
    %4220 = vmatprep.mubr.f32.mxu0 0.0
    %v4221 = vand.u32 %v605, 4294901760
    %4222 = vmatmul.mubr.f32.gmra.mrb[0].mxu0 %v4221
    %v4223 = vpop.f32.mrb[0].mxu0
    %v4224 = vadd.f32 %v3693, %v4223
    %v4225 = vpop.f32.mrb[0].mxu0
    %4226 = vmatprep.mubr.f32.mxu0 0.0
    %v4227 = vand.u32 %v608, 4294901760
    %4228 = vmatmul.mubr.f32.gmra.mrb[0].mxu0 %v4227
    %v4229 = vpop.f32.mrb[0].mxu0
    %v4230 = vadd.f32 %v3699, %v4229
    %v4231 = vpop.f32.mrb[0].mxu0
    %4232 = vmatprep.mubr.f32.mxu0 0.0
    %v4233 = vand.u32 %v611, 4294901760
    %4234 = vmatmul.mubr.f32.gmra.mrb[0].mxu0 %v4233
    %v4235 = vpop.f32.mrb[0].mxu0
    %v4236 = vadd.f32 %v3705, %v4235
    %v4237 = vpop.f32.mrb[0].mxu0
    %4238 = vmatprep.mubr.f32.mxu0 0.0
    %v4239 = vand.u32 %v614, 4294901760
    %4240 = vmatmul.mubr.f32.gmra.mrb[0].mxu0 %v4239
    %v4241 = vpop.f32.mrb[0].mxu0
    %v4242 = vadd.f32 %v3711, %v4241
    %v4243 = vpop.f32.mrb[0].mxu0
    %4244 = vmatprep.mubr.f32.mxu0 0.0
    %v4245 = vand.u32 %v617, 4294901760
    %4246 = vmatmul.mubr.f32.gmra.mrb[0].mxu0 %v4245
    %v4247 = vpop.f32.mrb[0].mxu0
    %v4248 = vadd.f32 %v3717, %v4247
    %v4249 = vpop.f32.mrb[0].mxu0
    %4250 = vmatprep.mubr.f32.mxu0 0.0
    %v4251 = vand.u32 %v620, 4294901760
    %4252 = vmatmul.mubr.f32.gmra.mrb[0].mxu0 %v4251
    %v4253 = vpop.f32.mrb[0].mxu0
    %v4254 = vadd.f32 %v3723, %v4253
    %v4255 = vpop.f32.mrb[0].mxu0
    %4256 = vmatprep.mubr.f32.mxu0 0.0
    %v4257 = vand.u32 %v623, 4294901760
    %4258 = vmatmul.mubr.f32.gmra.mrb[0].mxu0 %v4257
    %v4259 = vpop.f32.mrb[0].mxu0
    %v4260 = vadd.f32 %v3729, %v4259
    %v4261 = vpop.f32.mrb[0].mxu0
    %4262 = vmatprep.mubr.f32.mxu0 0.0
    %v4263 = vand.u32 %v626, 4294901760
    %4264 = vmatmul.mubr.f32.gmra.mrb[0].mxu0 %v4263
    %v4265 = vpop.f32.mrb[0].mxu0
    %v4266 = vadd.f32 %v3735, %v4265
    %v4267 = vpop.f32.mrb[0].mxu0
    %4268 = vmatprep.mubr.f32.mxu0 0.0
    %v4269 = vand.u32 %v629, 4294901760
    %4270 = vmatmul.mubr.f32.gmra.mrb[0].mxu0 %v4269
    %v4271 = vpop.f32.mrb[0].mxu0
    %v4272 = vadd.f32 %v3741, %v4271
    %v4273 = vpop.f32.mrb[0].mxu0
    %4274 = vmatprep.mubr.f32.mxu0 0.0
    %v4275 = vand.u32 %v632, 4294901760
    %4276 = vmatmul.mubr.f32.gmra.mrb[0].mxu0 %v4275
    %v4277 = vpop.f32.mrb[0].mxu0
    %v4278 = vadd.f32 %v3747, %v4277
    %v4279 = vpop.f32.mrb[0].mxu0
    %4280 = vmatprep.mubr.f32.mxu0 0.0
    %v4281 = vand.u32 %v635, 4294901760
    %4282 = vmatmul.mubr.f32.gmra.mrb[0].mxu0 %v4281
    %v4283 = vpop.f32.mrb[0].mxu0
    %v4284 = vadd.f32 %v3753, %v4283
    %v4285 = vpop.f32.mrb[0].mxu0
    %4286 = vmatprep.mubr.f32.mxu0 0.0
    %v4287 = vand.u32 %v638, 4294901760
    %4288 = vmatmul.mubr.f32.gmra.mrb[0].mxu0 %v4287
    %v4289 = vpop.f32.mrb[0].mxu0
    %v4290 = vadd.f32 %v3759, %v4289
    %v4291 = vpop.f32.mrb[0].mxu0
    %4292 = vmatprep.mubr.f32.mxu0 0.0
    %v4293 = vand.u32 %v641, 4294901760
    %4294 = vmatmul.mubr.f32.gmra.mrb[0].mxu0 %v4293
    %v4295 = vpop.f32.mrb[0].mxu0
    %v4296 = vadd.f32 %v3765, %v4295
    %v4297 = vpop.f32.mrb[0].mxu0
    %4298 = vmatprep.mubr.f32.mxu0 0.0
    %v4299 = vand.u32 %v644, 4294901760
    %4300 = vmatmul.mubr.f32.gmra.mrb[0].mxu0 %v4299
    %v4301 = vpop.f32.mrb[0].mxu0
    %v4302 = vadd.f32 %v3771, %v4301
    %v4303 = vpop.f32.mrb[0].mxu0
    %4304 = vmatprep.mubr.f32.mxu0 0.0
    %v4305 = vand.u32 %v647, 4294901760
    %4306 = vmatmul.mubr.f32.gmra.mrb[0].mxu0 %v4305
    %v4307 = vpop.f32.mrb[0].mxu0
    %v4308 = vadd.f32 %v3777, %v4307
    %v4309 = vpop.f32.mrb[0].mxu0
    %4310 = vmatprep.mubr.f32.mxu0 0.0
    %v4311 = vand.u32 %v650, 4294901760
    %4312 = vmatmul.mubr.f32.gmra.mrb[0].mxu0 %v4311
    %v4313 = vpop.f32.mrb[0].mxu0
    %v4314 = vadd.f32 %v3783, %v4313
    %v4315 = vpop.f32.mrb[0].mxu0
    %4316 = vmatprep.mubr.f32.mxu0 0.0
    %v4317 = vand.u32 %v653, 4294901760
    %4318 = vmatmul.mubr.f32.gmra.mrb[0].mxu0 %v4317
    %v4319 = vpop.f32.mrb[0].mxu0
    %v4320 = vadd.f32 %v3789, %v4319
    %v4321 = vpop.f32.mrb[0].mxu0
    %4322 = vmatprep.mubr.f32.mxu0 0.0
    %v4323 = vand.u32 %v656, 4294901760
    %4324 = vmatmul.mubr.f32.gmra.mrb[0].mxu0 %v4323
    %v4325 = vpop.f32.mrb[0].mxu0
    %v4326 = vadd.f32 %v3795, %v4325
    %v4327 = vpop.f32.mrb[0].mxu0
    %4328 = vmatprep.mubr.f32.mxu0 0.0
    %v4329 = vand.u32 %v659, 4294901760
    %4330 = vmatmul.mubr.f32.gmra.mrb[0].mxu0 %v4329
    %v4331 = vpop.f32.mrb[0].mxu0
    %v4332 = vadd.f32 %v3801, %v4331
    %v4333 = vpop.f32.mrb[0].mxu0
    %4334 = vmatprep.mubr.f32.mxu0 0.0
    %v4335 = vand.u32 %v662, 4294901760
    %4336 = vmatmul.mubr.f32.gmra.mrb[0].mxu0 %v4335
    %v4337 = vpop.f32.mrb[0].mxu0
    %v4338 = vadd.f32 %v3807, %v4337
    %v4339 = vpop.f32.mrb[0].mxu0
    %4340 = vmatprep.mubr.f32.mxu0 0.0
    %v4341 = vand.u32 %v665, 4294901760
    %4342 = vmatmul.mubr.f32.gmra.mrb[0].mxu0 %v4341
    %v4343 = vpop.f32.mrb[0].mxu0
    %v4344 = vadd.f32 %v3813, %v4343
    %v4345 = vpop.f32.mrb[0].mxu0
    %4346 = vmatprep.mubr.f32.mxu0 0.0
    %v4347 = vand.u32 %v668, 4294901760
    %4348 = vmatmul.mubr.f32.gmra.mrb[0].mxu0 %v4347
    %v4349 = vpop.f32.mrb[0].mxu0
    %v4350 = vadd.f32 %v3819, %v4349
    %v4351 = vpop.f32.mrb[0].mxu0
    %4352 = vmatprep.mubr.f32.mxu0 0.0
    %v4353 = vand.u32 %v671, 4294901760
    %4354 = vmatmul.mubr.f32.gmra.mrb[0].mxu0 %v4353
    %v4355 = vpop.f32.mrb[0].mxu0
    %v4356 = vadd.f32 %v3825, %v4355
    %v4357 = vpop.f32.mrb[0].mxu0
    %4358 = vmatprep.mubr.f32.mxu0 0.0
    %v4359 = vand.u32 %v674, 4294901760
    %4360 = vmatmul.mubr.f32.gmra.mrb[0].mxu0 %v4359
    %v4361 = vpop.f32.mrb[0].mxu0
    %v4362 = vadd.f32 %v3831, %v4361
    %v4363 = vpop.f32.mrb[0].mxu0
    %4364 = vmatprep.mubr.f32.mxu0 0.0
    %v4365 = vand.u32 %v677, 4294901760
    %4366 = vmatmul.mubr.f32.gmra.mrb[0].mxu0 %v4365
    %v4367 = vpop.f32.mrb[0].mxu0
    %v4368 = vadd.f32 %v3837, %v4367
    %v4369 = vpop.f32.mrb[0].mxu0
    %4370 = vmatprep.mubr.f32.mxu0 0.0
    %v4371 = vand.u32 %v680, 4294901760
    %4372 = vmatmul.mubr.f32.gmra.mrb[0].mxu0 %v4371
    %v4373 = vpop.f32.mrb[0].mxu0
    %v4374 = vadd.f32 %v3843, %v4373
    %v4375 = vpop.f32.mrb[0].mxu0
    %4376 = vmatprep.mubr.f32.mxu0 0.0
    %v4377 = vand.u32 %v683, 4294901760
    %4378 = vmatmul.mubr.f32.gmra.mrb[0].mxu0 %v4377
    %v4379 = vpop.f32.mrb[0].mxu0
    %v4380 = vadd.f32 %v3849, %v4379
    %v4381 = vpop.f32.mrb[0].mxu0
    %4382 = vmatprep.mubr.f32.mxu0 0.0
    %v4383 = vand.u32 %v686, 4294901760
    %4384 = vmatmul.mubr.f32.gmra.mrb[0].mxu0 %v4383
    %v4385 = vpop.f32.mrb[0].mxu0
    %v4386 = vadd.f32 %v3855, %v4385
    %v4387 = vpop.f32.mrb[0].mxu0
    %4388 = vmatprep.mubr.f32.mxu0 0.0
    %v4389 = vand.u32 %v689, 4294901760
    %4390 = vmatmul.mubr.f32.gmra.mrb[0].mxu0 %v4389
    %v4391 = vpop.f32.mrb[0].mxu0
    %v4392 = vadd.f32 %v3861, %v4391
    %v4393 = vpop.f32.mrb[0].mxu0
    %4394 = vmatprep.mubr.f32.mxu0 0.0
    %v4395 = vand.u32 %v692, 4294901760
    %4396 = vmatmul.mubr.f32.gmra.mrb[0].mxu0 %v4395
    %v4397 = vpop.f32.mrb[0].mxu0
    %v4398 = vadd.f32 %v3867, %v4397
    %v4399 = vpop.f32.mrb[0].mxu0
    %4400 = vmatprep.mubr.f32.mxu0 0.0
    %v4401 = vand.u32 %v695, 4294901760
    %4402 = vmatmul.mubr.f32.gmra.mrb[0].mxu0 %v4401
    %v4403 = vpop.f32.mrb[0].mxu0
    %v4404 = vadd.f32 %v3873, %v4403
    %v4405 = vpop.f32.mrb[0].mxu0
    %4406 = vmatprep.mubr.f32.mxu0 0.0
    %v4407 = vand.u32 %v698, 4294901760
    %4408 = vmatmul.mubr.f32.gmra.mrb[0].mxu0 %v4407
    %v4409 = vpop.f32.mrb[0].mxu0
    %v4410 = vadd.f32 %v3879, %v4409
    %v4411 = vpop.f32.mrb[0].mxu0
    %4412 = vmatprep.mubr.f32.mxu0 0.0
    %v4413 = vand.u32 %v701, 4294901760
    %4414 = vmatmul.mubr.f32.gmra.mrb[0].mxu0 %v4413
    %v4415 = vpop.f32.mrb[0].mxu0
    %v4416 = vadd.f32 %v3885, %v4415
    %v4417 = vpop.f32.mrb[0].mxu0
    %4418 = vmatprep.mubr.f32.mxu0 0.0
    %v4419 = vand.u32 %v704, 4294901760
    %4420 = vmatmul.mubr.f32.gmra.mrb[0].mxu0 %v4419
    %v4421 = vpop.f32.mrb[0].mxu0
    %v4422 = vadd.f32 %v3891, %v4421
    %v4423 = vpop.f32.mrb[0].mxu0
    %4424 = vmatprep.mubr.f32.mxu0 0.0
    %v4425 = vand.u32 %v707, 4294901760
    %4426 = vmatmul.mubr.f32.gmra.mrb[0].mxu0 %v4425
    %v4427 = vpop.f32.mrb[0].mxu0
    %v4428 = vadd.f32 %v3897, %v4427
    %v4429 = vpop.f32.mrb[0].mxu0
    %4430 = vmatprep.mubr.f32.mxu0 0.0
    %v4431 = vand.u32 %v710, 4294901760
    %4432 = vmatmul.mubr.f32.gmra.mrb[0].mxu0 %v4431
    %v4433 = vpop.f32.mrb[0].mxu0
    %v4434 = vadd.f32 %v3903, %v4433
    %v4435 = vpop.f32.mrb[0].mxu0
    %4436 = vmatprep.mubr.f32.mxu0 0.0
    %v4437 = vand.u32 %v713, 4294901760
    %4438 = vmatmul.mubr.f32.gmra.mrb[0].mxu0 %v4437
    %v4439 = vpop.f32.mrb[0].mxu0
    %v4440 = vadd.f32 %v3909, %v4439
    %v4441 = vpop.f32.mrb[0].mxu0
    %4442 = vmatprep.mubr.f32.mxu0 0.0
    %v4443 = vand.u32 %v716, 4294901760
    %4444 = vmatmul.mubr.f32.gmra.mrb[0].mxu0 %v4443
    %v4445 = vpop.f32.mrb[0].mxu0
    %v4446 = vadd.f32 %v3915, %v4445
    %v4447 = vpop.f32.mrb[0].mxu0
    %4448 = vmatprep.mubr.f32.mxu0 0.0
    %v4449 = vand.u32 %v719, 4294901760
    %4450 = vmatmul.mubr.f32.gmra.mrb[0].mxu0 %v4449
    %v4451 = vpop.f32.mrb[0].mxu0
    %v4452 = vadd.f32 %v3921, %v4451
    %v4453 = vpop.f32.mrb[0].mxu0
    %4454 = vmatprep.mubr.f32.mxu0 0.0
    %v4455 = vand.u32 %v722, 4294901760
    %4456 = vmatmul.mubr.f32.gmra.mrb[0].mxu0 %v4455
    %v4457 = vpop.f32.mrb[0].mxu0
    %v4458 = vadd.f32 %v3927, %v4457
    %v4459 = vpop.f32.mrb[0].mxu0
    %4460 = vmatprep.mubr.f32.mxu0 0.0
    %v4461 = vand.u32 %v725, 4294901760
    %4462 = vmatmul.mubr.f32.gmra.mrb[0].mxu0 %v4461
    %v4463 = vpop.f32.mrb[0].mxu0
    %v4464 = vadd.f32 %v3933, %v4463
    %v4465 = vpop.f32.mrb[0].mxu0
    %4466 = vmatprep.mubr.f32.mxu0 0.0
    %v4467 = vand.u32 %v728, 4294901760
    %4468 = vmatmul.mubr.f32.gmra.mrb[0].mxu0 %v4467
    %v4469 = vpop.f32.mrb[0].mxu0
    %v4470 = vadd.f32 %v3939, %v4469
    %v4471 = vpop.f32.mrb[0].mxu0
    %4472 = vmatprep.mubr.f32.mxu0 0.0
    %v4473 = vand.u32 %v731, 4294901760
    %4474 = vmatmul.mubr.f32.gmra.mrb[0].mxu0 %v4473
    %v4475 = vpop.f32.mrb[0].mxu0
    %v4476 = vadd.f32 %v3945, %v4475
    %v4477 = vpop.f32.mrb[0].mxu0
    %4478 = vmatprep.mubr.f32.mxu0 0.0
    %v4479 = vand.u32 %v734, 4294901760
    %4480 = vmatmul.mubr.f32.gmra.mrb[0].mxu0 %v4479
    %v4481 = vpop.f32.mrb[0].mxu0
    %v4482 = vadd.f32 %v3951, %v4481
    %v4483 = vpop.f32.mrb[0].mxu0
    %4484 = vmatprep.mubr.f32.mxu0 0.0
    %v4485 = vand.u32 %v737, 4294901760
    %4486 = vmatmul.mubr.f32.gmra.mrb[0].mxu0 %v4485
    %v4487 = vpop.f32.mrb[0].mxu0
    %v4488 = vadd.f32 %v3957, %v4487
    %v4489 = vpop.f32.mrb[0].mxu0
    %4490 = vmatprep.mubr.f32.mxu0 0.0
    %v4491 = vand.u32 %v740, 4294901760
    %4492 = vmatmul.mubr.f32.gmra.mrb[0].mxu0 %v4491
    %v4493 = vpop.f32.mrb[0].mxu0
    %v4494 = vadd.f32 %v3963, %v4493
    %v4495 = vpop.f32.mrb[0].mxu0
    %4496 = vmatprep.mubr.f32.mxu0 0.0
    %v4497 = vand.u32 %v743, 4294901760
    %4498 = vmatmul.mubr.f32.gmra.mrb[0].mxu0 %v4497
    %v4499 = vpop.f32.mrb[0].mxu0
    %v4500 = vadd.f32 %v3969, %v4499
    %v4501 = vpop.f32.mrb[0].mxu0
    %4502 = vmatprep.mubr.f32.mxu0 0.0
    %v4503 = vand.u32 %v746, 4294901760
    %4504 = vmatmul.mubr.f32.gmra.mrb[0].mxu0 %v4503
    %v4505 = vpop.f32.mrb[0].mxu0
    %v4506 = vadd.f32 %v3975, %v4505
    %v4507 = vpop.f32.mrb[0].mxu0
    %4508 = vmatprep.mubr.f32.mxu0 0.0
    %v4509 = vand.u32 %v749, 4294901760
    %4510 = vmatmul.mubr.f32.gmra.mrb[0].mxu0 %v4509
    %v4511 = vpop.f32.mrb[0].mxu0
    %v4512 = vadd.f32 %v3981, %v4511
    %v4513 = vpop.f32.mrb[0].mxu0
    %4514 = vmatprep.mubr.f32.mxu0 0.0
    %v4515 = vand.u32 %v752, 4294901760
    %4516 = vmatmul.mubr.f32.gmra.mrb[0].mxu0 %v4515
    %v4517 = vpop.f32.mrb[0].mxu0
    %v4518 = vadd.f32 %v3987, %v4517
    %v4519 = vpop.f32.mrb[0].mxu0
    %4520 = vmatprep.mubr.f32.mxu0 0.0
    %v4521 = vand.u32 %v755, 4294901760
    %4522 = vmatmul.mubr.f32.gmra.mrb[0].mxu0 %v4521
    %v4523 = vpop.f32.mrb[0].mxu0
    %v4524 = vadd.f32 %v3993, %v4523
    %v4525 = vpop.f32.mrb[0].mxu0
    %4526 = vmatprep.mubr.f32.mxu0 0.0
    %v4527 = vand.u32 %v758, 4294901760
    %4528 = vmatmul.mubr.f32.gmra.mrb[0].mxu0 %v4527
    %v4529 = vpop.f32.mrb[0].mxu0
    %v4530 = vadd.f32 %v3999, %v4529
    %v4531 = vpop.f32.mrb[0].mxu0
    %4532 = vmatprep.mubr.f32.mxu0 0.0
    %v4533 = vand.u32 %v761, 4294901760
    %4534 = vmatmul.mubr.f32.gmra.mrb[0].mxu0 %v4533
    %v4535 = vpop.f32.mrb[0].mxu0
    %v4536 = vadd.f32 %v4005, %v4535
    %v4537 = vpop.f32.mrb[0].mxu0
    %4538 = vmatprep.mubr.f32.mxu0 0.0
    %v4539 = vand.u32 %v764, 4294901760
    %4540 = vmatmul.mubr.f32.gmra.mrb[0].mxu0 %v4539
    %v4541 = vpop.f32.mrb[0].mxu0
    %v4542 = vadd.f32 %v4011, %v4541
    %v4543 = vpop.f32.mrb[0].mxu0
    %4544 = vmatprep.mubr.f32.mxu0 0.0
    %v4545 = vand.u32 %v767, 4294901760
    %4546 = vmatmul.mubr.f32.gmra.mrb[0].mxu0 %v4545
    %v4547 = vpop.f32.mrb[0].mxu0
    %v4548 = vadd.f32 %v4017, %v4547
    %v4549 = vpop.f32.mrb[0].mxu0
    %4550 = vmatprep.mubr.f32.mxu0 0.0
    %v4551 = vand.u32 %v770, 4294901760
    %4552 = vmatmul.mubr.f32.gmra.mrb[0].mxu0 %v4551
    %v4553 = vpop.f32.mrb[0].mxu0
    %v4554 = vadd.f32 %v4023, %v4553
    %v4555 = vpop.f32.mrb[0].mxu0
    %4556 = vmatprep.mubr.f32.mxu0 0.0
    %v4557 = vand.u32 %v773, 4294901760
    %4558 = vmatmul.mubr.f32.gmra.mrb[0].mxu0 %v4557
    %v4559 = vpop.f32.mrb[0].mxu0
    %v4560 = vadd.f32 %v4029, %v4559
    %v4561 = vpop.f32.mrb[0].mxu0
    %4562 = vmatprep.mubr.f32.mxu0 0.0
    %v4563 = vand.u32 %v776, 4294901760
    %4564 = vmatmul.mubr.f32.gmra.mrb[0].mxu0 %v4563
    %v4565 = vpop.f32.mrb[0].mxu0
    %v4566 = vadd.f32 %v4035, %v4565
    %v4567 = vpop.f32.mrb[0].mxu0
    %4568 = vmatprep.mubr.f32.mxu0 0.0
    %v4569 = vand.u32 %v779, 4294901760
    %4570 = vmatmul.mubr.f32.gmra.mrb[0].mxu0 %v4569
    %v4571 = vpop.f32.mrb[0].mxu0
    %v4572 = vadd.f32 %v4041, %v4571
    %v4573 = vpop.f32.mrb[0].mxu0
    %4574 = vmatprep.mubr.f32.mxu0 0.0
    %v4575 = vand.u32 %v782, 4294901760
    %4576 = vmatmul.mubr.f32.gmra.mrb[0].mxu0 %v4575
    %v4577 = vpop.f32.mrb[0].mxu0
    %v4578 = vadd.f32 %v4047, %v4577
    %v4579 = vpop.f32.mrb[0].mxu0
    %4580 = vmatprep.mubr.f32.mxu0 0.0
    %v4581 = vand.u32 %v785, 4294901760
    %4582 = vmatmul.mubr.f32.gmra.mrb[0].mxu0 %v4581
    %v4583 = vpop.f32.mrb[0].mxu0
    %v4584 = vadd.f32 %v4053, %v4583
    %v4585 = vpop.f32.mrb[0].mxu0
    %4586 = vmatprep.mubr.f32.mxu0 0.0
    %v4587 = vand.u32 %v788, 4294901760
    %4588 = vmatmul.mubr.f32.gmra.mrb[0].mxu0 %v4587
    %v4589 = vpop.f32.mrb[0].mxu0
    %v4590 = vadd.f32 %v4059, %v4589
    %v4591 = vpop.f32.mrb[0].mxu0
    %4592 = vmatprep.mubr.f32.mxu0 0.0
    %v4593 = vand.u32 %v791, 4294901760
    %4594 = vmatmul.mubr.f32.gmra.mrb[0].mxu0 %v4593
    %v4595 = vpop.f32.mrb[0].mxu0
    %v4596 = vadd.f32 %v4065, %v4595
    %v4597 = vpop.f32.mrb[0].mxu0
    %4598 = vmatprep.mubr.f32.mxu0 0.0
    %v4599 = vand.u32 %v794, 4294901760
    %4600 = vmatmul.mubr.f32.gmra.mrb[0].mxu0 %v4599
    %v4601 = vpop.f32.mrb[0].mxu0
    %v4602 = vadd.f32 %v4071, %v4601
    %v4603 = vpop.f32.mrb[0].mxu0
    %4604 = vmatprep.mubr.f32.mxu0 0.0
    %v4605 = vand.u32 %v797, 4294901760
    %4606 = vmatmul.mubr.f32.gmra.mrb[0].mxu0 %v4605
    %v4607 = vpop.f32.mrb[0].mxu0
    %v4608 = vadd.f32 %v4077, %v4607
    %v4609 = vpop.f32.mrb[0].mxu0
    %4610 = vmatprep.mubr.f32.mxu0 0.0
    %v4611 = vand.u32 %v800, 4294901760
    %4612 = vmatmul.mubr.f32.gmra.mrb[0].mxu0 %v4611
    %v4613 = vpop.f32.mrb[0].mxu0
    %v4614 = vadd.f32 %v4083, %v4613
    %v4615 = vpop.f32.mrb[0].mxu0
    %4616 = vmatprep.mubr.f32.mxu0 0.0
    %v4617 = vand.u32 %v803, 4294901760
    %4618 = vmatmul.mubr.f32.gmra.mrb[0].mxu0 %v4617
    %v4619 = vpop.f32.mrb[0].mxu0
    %v4620 = vadd.f32 %v4089, %v4619
    %v4621 = vpop.f32.mrb[0].mxu0
    %4622 = vmatprep.mubr.f32.mxu0 0.0
    %v4623 = vand.u32 %v806, 4294901760
    %4624 = vmatmul.mubr.f32.gmra.mrb[0].mxu0 %v4623
    %v4625 = vpop.f32.mrb[0].mxu0
    %v4626 = vadd.f32 %v4095, %v4625
    %v4627 = vpop.f32.mrb[0].mxu0
    %4628 = vmatprep.mubr.f32.mxu0 0.0
    %v4629 = vand.u32 %v809, 4294901760
    %4630 = vmatmul.mubr.f32.gmra.mrb[0].mxu0 %v4629
    %v4631 = vpop.f32.mrb[0].mxu0
    %v4632 = vadd.f32 %v4101, %v4631
    %v4633 = vpop.f32.mrb[0].mxu0
    %4634 = vmatprep.mubr.f32.mxu0 0.0
    %v4635 = vand.u32 %v812, 4294901760
    %4636 = vmatmul.mubr.f32.gmra.mrb[0].mxu0 %v4635
    %v4637 = vpop.f32.mrb[0].mxu0
    %v4638 = vadd.f32 %v4107, %v4637
    %v4639 = vpop.f32.mrb[0].mxu0
    %4640 = vdwg.mxu0
    %v4641 = vmax.f32 %v4194, 0.0
    %v4642 = vmax.f32 %v4200, 0.0
    %v4643 = vmax.f32 %v4206, 0.0
    %v4644 = vmax.f32 %v4212, 0.0
    %v4645 = vmax.f32 %v4218, 0.0
    %v4646 = vmax.f32 %v4224, 0.0
    %v4647 = vmax.f32 %v4230, 0.0
    %v4648 = vmax.f32 %v4236, 0.0
    %v4649 = vmax.f32 %v4242, 0.0
    %v4650 = vmax.f32 %v4248, 0.0
    %v4651 = vmax.f32 %v4254, 0.0
    %v4652 = vmax.f32 %v4260, 0.0
    %v4653 = vmax.f32 %v4266, 0.0
    %v4654 = vmax.f32 %v4272, 0.0
    %v4655 = vmax.f32 %v4278, 0.0
    %v4656 = vmax.f32 %v4284, 0.0
    %v4657 = vmax.f32 %v4290, 0.0
    %v4658 = vmax.f32 %v4296, 0.0
    %v4659 = vmax.f32 %v4302, 0.0
    %v4660 = vmax.f32 %v4308, 0.0
    %v4661 = vmax.f32 %v4314, 0.0
    %v4662 = vmax.f32 %v4320, 0.0
    %v4663 = vmax.f32 %v4326, 0.0
    %v4664 = vmax.f32 %v4332, 0.0
    %v4665 = vmax.f32 %v4338, 0.0
    %v4666 = vmax.f32 %v4344, 0.0
    %v4667 = vmax.f32 %v4350, 0.0
    %v4668 = vmax.f32 %v4356, 0.0
    %v4669 = vmax.f32 %v4362, 0.0
    %v4670 = vmax.f32 %v4368, 0.0
    %v4671 = vmax.f32 %v4374, 0.0
    %v4672 = vmax.f32 %v4380, 0.0
    %v4673 = vmax.f32 %v4386, 0.0
    %v4674 = vmax.f32 %v4392, 0.0
    %v4675 = vmax.f32 %v4398, 0.0
    %v4676 = vmax.f32 %v4404, 0.0
    %v4677 = vmax.f32 %v4410, 0.0
    %v4678 = vmax.f32 %v4416, 0.0
    %v4679 = vmax.f32 %v4422, 0.0
    %v4680 = vmax.f32 %v4428, 0.0
    %v4681 = vmax.f32 %v4434, 0.0
    %v4682 = vmax.f32 %v4440, 0.0
    %v4683 = vmax.f32 %v4446, 0.0
    %v4684 = vmax.f32 %v4452, 0.0
    %v4685 = vmax.f32 %v4458, 0.0
    %v4686 = vmax.f32 %v4464, 0.0
    %v4687 = vmax.f32 %v4470, 0.0
    %v4688 = vmax.f32 %v4476, 0.0
    %v4689 = vmax.f32 %v4482, 0.0
    %v4690 = vmax.f32 %v4488, 0.0
    %v4691 = vmax.f32 %v4494, 0.0
    %v4692 = vmax.f32 %v4500, 0.0
    %v4693 = vmax.f32 %v4506, 0.0
    %v4694 = vmax.f32 %v4512, 0.0
    %v4695 = vmax.f32 %v4518, 0.0
    %v4696 = vmax.f32 %v4524, 0.0
    %v4697 = vmax.f32 %v4530, 0.0
    %v4698 = vmax.f32 %v4536, 0.0
    %v4699 = vmax.f32 %v4542, 0.0
    %v4700 = vmax.f32 %v4548, 0.0
    %v4701 = vmax.f32 %v4554, 0.0
    %v4702 = vmax.f32 %v4560, 0.0
    %v4703 = vmax.f32 %v4566, 0.0
    %v4704 = vmax.f32 %v4572, 0.0
    %v4705 = vmax.f32 %v4578, 0.0
    %v4706 = vmax.f32 %v4584, 0.0
    %v4707 = vmax.f32 %v4590, 0.0
    %v4708 = vmax.f32 %v4596, 0.0
    %v4709 = vmax.f32 %v4602, 0.0
    %v4710 = vmax.f32 %v4608, 0.0
    %v4711 = vmax.f32 %v4614, 0.0
    %v4712 = vmax.f32 %v4620, 0.0
    %v4713 = vmax.f32 %v4626, 0.0
    %v4714 = vmax.f32 %v4632, 0.0
    %v4715 = vmax.f32 %v4638, 0.0
    %v4716 = vmax.f32 %v4641, %v4656
    %v4717 = vmax.f32 %v4642, %v4657
    %v4718 = vmax.f32 %v4643, %v4658
    %v4719 = vmax.f32 %v4644, %v4659
    %v4720 = vmax.f32 %v4645, %v4660
    %v4721 = vmax.f32 %v4646, %v4661
    %v4722 = vmax.f32 %v4647, %v4662
    %v4723 = vmax.f32 %v4648, %v4663
    %v4724 = vmax.f32 %v4649, %v4664
    %v4725 = vmax.f32 %v4650, %v4665
    %v4726 = vmax.f32 %v4651, %v4666
    %v4727 = vmax.f32 %v4652, %v4667
    %v4728 = vmax.f32 %v4653, %v4668
    %v4729 = vmax.f32 %v4654, %v4669
    %v4730 = vmax.f32 %v4655, %v4670
    %v4731 = vmax.f32 %v4716, %v4671
    %v4732 = vmax.f32 %v4717, %v4672
    %v4733 = vmax.f32 %v4718, %v4673
    %v4734 = vmax.f32 %v4719, %v4674
    %v4735 = vmax.f32 %v4720, %v4675
    %v4736 = vmax.f32 %v4721, %v4676
    %v4737 = vmax.f32 %v4722, %v4677
    %v4738 = vmax.f32 %v4723, %v4678
    %v4739 = vmax.f32 %v4724, %v4679
    %v4740 = vmax.f32 %v4725, %v4680
    %v4741 = vmax.f32 %v4726, %v4681
    %v4742 = vmax.f32 %v4727, %v4682
    %v4743 = vmax.f32 %v4728, %v4683
    %v4744 = vmax.f32 %v4729, %v4684
    %v4745 = vmax.f32 %v4730, %v4685
    %v4746 = vmax.f32 %v4731, %v4686
    %v4747 = vmax.f32 %v4732, %v4687
    %v4748 = vmax.f32 %v4733, %v4688
    %v4749 = vmax.f32 %v4734, %v4689
    %v4750 = vmax.f32 %v4735, %v4690
    %v4751 = vmax.f32 %v4736, %v4691
    %v4752 = vmax.f32 %v4737, %v4692
    %v4753 = vmax.f32 %v4738, %v4693
    %v4754 = vmax.f32 %v4739, %v4694
    %v4755 = vmax.f32 %v4740, %v4695
    %v4756 = vmax.f32 %v4741, %v4696
    %v4757 = vmax.f32 %v4742, %v4697
    %v4758 = vmax.f32 %v4743, %v4698
    %v4759 = vmax.f32 %v4744, %v4699
    %v4760 = vmax.f32 %v4745, %v4700
    %v4761 = vmax.f32 %v4746, %v4701
    %v4762 = vmax.f32 %v4747, %v4702
    %v4763 = vmax.f32 %v4748, %v4703
    %v4764 = vmax.f32 %v4749, %v4704
    %v4765 = vmax.f32 %v4750, %v4705
    %v4766 = vmax.f32 %v4751, %v4706
    %v4767 = vmax.f32 %v4752, %v4707
    %v4768 = vmax.f32 %v4753, %v4708
    %v4769 = vmax.f32 %v4754, %v4709
    %v4770 = vmax.f32 %v4755, %v4710
    %v4771 = vmax.f32 %v4756, %v4711
    %v4772 = vmax.f32 %v4757, %v4712
    %v4773 = vmax.f32 %v4758, %v4713
    %v4774 = vmax.f32 %v4759, %v4714
    %v4775 = vmax.f32 %v4760, %v4715
    %v4776 = vld [vmem:[%s3] sm:$0xff]
    %v4777 = vld [vmem:[%s3 + $0x8] sm:$0xff]
    %v4778 = vld [vmem:[%s3 + $0x10] sm:$0xff]
    %v4779 = vld [vmem:[%s3 + $0x18] sm:$0xff]
    %v4780 = vld [vmem:[%s3 + $0x20] sm:$0xff]
    %v4781 = vld [vmem:[%s3 + $0x28] sm:$0xff]
    %v4782 = vld [vmem:[%s3 + $0x30] sm:$0xff]
    %v4783 = vld [vmem:[%s3 + $0x38] sm:$0xff]
    %v4784 = vld [vmem:[%s3 + $0x40] sm:$0xff]
    %v4785 = vld [vmem:[%s3 + $0x48] sm:$0xff]
    %v4786 = vld [vmem:[%s3 + $0x50] sm:$0xff]
    %v4787 = vld [vmem:[%s3 + $0x58] sm:$0xff]
    %v4788 = vld [vmem:[%s3 + $0x60] sm:$0xff]
    %v4789 = vld [vmem:[%s3 + $0x68] sm:$0xff]
    %v4790 = vld [vmem:[%s3 + $0x70] sm:$0xff]
    %v4791 = vld [vmem:[%s3 + $0x78] sm:$0xff]
    %v4792 = vld [vmem:[%s3 + $0x80] sm:$0xff]
    %v4793 = vld [vmem:[%s3 + $0x88] sm:$0xff]
    %v4794 = vld [vmem:[%s3 + $0x90] sm:$0xff]
    %v4795 = vld [vmem:[%s3 + $0x98] sm:$0xff]
    %v4796 = vld [vmem:[%s3 + $0xa0] sm:$0xff]
    %v4797 = vld [vmem:[%s3 + $0xa8] sm:$0xff]
    %v4798 = vld [vmem:[%s3 + $0xb0] sm:$0xff]
    %v4799 = vld [vmem:[%s3 + $0xb8] sm:$0xff]
    %v4800 = vld [vmem:[%s3 + $0xc0] sm:$0xff]
    %v4801 = vld [vmem:[%s4] sm:$0xff]
    %v4802 = vld [vmem:[%s4 + $0x8] sm:$0xff]
    %v4803 = vld [vmem:[%s4 + $0x10] sm:$0xff]
    %v4804 = vld [vmem:[%s4 + $0x18] sm:$0xff]
    %v4805 = vld [vmem:[%s4 + $0x20] sm:$0xff]
    %v4806 = vld [vmem:[%s4 + $0x28] sm:$0xff]
    %v4807 = vld [vmem:[%s4 + $0x30] sm:$0xff]
    %v4808 = vld [vmem:[%s4 + $0x38] sm:$0xff]
    %v4809 = vld [vmem:[%s4 + $0x40] sm:$0xff]
    %v4810 = vld [vmem:[%s4 + $0x48] sm:$0xff]
    %v4811 = vld [vmem:[%s4 + $0x50] sm:$0xff]
    %v4812 = vld [vmem:[%s4 + $0x58] sm:$0xff]
    %v4813 = vld [vmem:[%s4 + $0x60] sm:$0xff]
    %v4814 = vld [vmem:[%s4 + $0x68] sm:$0xff]
    %v4815 = vld [vmem:[%s4 + $0x70] sm:$0xff]
    %v4816 = vld [vmem:[%s4 + $0x78] sm:$0xff]
    %v4817 = vld [vmem:[%s4 + $0x80] sm:$0xff]
    %v4818 = vld [vmem:[%s4 + $0x88] sm:$0xff]
    %v4819 = vld [vmem:[%s4 + $0x90] sm:$0xff]
    %v4820 = vld [vmem:[%s4 + $0x98] sm:$0xff]
    %v4821 = vld [vmem:[%s4 + $0xa0] sm:$0xff]
    %v4822 = vld [vmem:[%s4 + $0xa8] sm:$0xff]
    %v4823 = vld [vmem:[%s4 + $0xb0] sm:$0xff]
    %v4824 = vld [vmem:[%s4 + $0xb8] sm:$0xff]
    %v4825 = vld [vmem:[%s4 + $0xc0] sm:$0xff]
    %4827 = vset.pattern.permute.xlu0 0
    %4828 = vperm.xlu0 %4827, %v4801
    %v4829 = vpop.permute.xlu0 %4828
    %4832 = vset.pattern.permute.xlu0 0
    %4833 = vperm.xlu0 %4832, %v4802
    %v4834 = vpop.permute.xlu0 %4833
    %4837 = vset.pattern.permute.xlu0 0
    %4838 = vperm.xlu0 %4837, %v4803
    %v4839 = vpop.permute.xlu0 %4838
    %4842 = vset.pattern.permute.xlu0 0
    %4843 = vperm.xlu0 %4842, %v4804
    %v4844 = vpop.permute.xlu0 %4843
    %4847 = vset.pattern.permute.xlu0 0
    %4848 = vperm.xlu0 %4847, %v4805
    %v4849 = vpop.permute.xlu0 %4848
    %4852 = vset.pattern.permute.xlu0 0
    %4853 = vperm.xlu0 %4852, %v4806
    %v4854 = vpop.permute.xlu0 %4853
    %4857 = vset.pattern.permute.xlu0 0
    %4858 = vperm.xlu0 %4857, %v4807
    %v4859 = vpop.permute.xlu0 %4858
    %4862 = vset.pattern.permute.xlu0 0
    %4863 = vperm.xlu0 %4862, %v4808
    %v4864 = vpop.permute.xlu0 %4863
    %4867 = vset.pattern.permute.xlu0 0
    %4868 = vperm.xlu0 %4867, %v4809
    %v4869 = vpop.permute.xlu0 %4868
    %4872 = vset.pattern.permute.xlu0 0
    %4873 = vperm.xlu0 %4872, %v4810
    %v4874 = vpop.permute.xlu0 %4873
    %4877 = vset.pattern.permute.xlu0 0
    %4878 = vperm.xlu0 %4877, %v4811
    %v4879 = vpop.permute.xlu0 %4878
    %4882 = vset.pattern.permute.xlu0 0
    %4883 = vperm.xlu0 %4882, %v4812
    %v4884 = vpop.permute.xlu0 %4883
    %4887 = vset.pattern.permute.xlu0 0
    %4888 = vperm.xlu0 %4887, %v4813
    %v4889 = vpop.permute.xlu0 %4888
    %4892 = vset.pattern.permute.xlu0 0
    %4893 = vperm.xlu0 %4892, %v4814
    %v4894 = vpop.permute.xlu0 %4893
    %4897 = vset.pattern.permute.xlu0 0
    %4898 = vperm.xlu0 %4897, %v4815
    %v4899 = vpop.permute.xlu0 %4898
    %4902 = vset.pattern.permute.xlu0 0
    %4903 = vperm.xlu0 %4902, %v4816
    %v4904 = vpop.permute.xlu0 %4903
    %4907 = vset.pattern.permute.xlu0 0
    %4908 = vperm.xlu0 %4907, %v4817
    %v4909 = vpop.permute.xlu0 %4908
    %4912 = vset.pattern.permute.xlu0 0
    %4913 = vperm.xlu0 %4912, %v4818
    %v4914 = vpop.permute.xlu0 %4913
    %4917 = vset.pattern.permute.xlu0 0
    %4918 = vperm.xlu0 %4917, %v4819
    %v4919 = vpop.permute.xlu0 %4918
    %4922 = vset.pattern.permute.xlu0 0
    %4923 = vperm.xlu0 %4922, %v4820
    %v4924 = vpop.permute.xlu0 %4923
    %4927 = vset.pattern.permute.xlu0 0
    %4928 = vperm.xlu0 %4927, %v4821
    %v4929 = vpop.permute.xlu0 %4928
    %4932 = vset.pattern.permute.xlu0 0
    %4933 = vperm.xlu0 %4932, %v4822
    %v4934 = vpop.permute.xlu0 %4933
    %4937 = vset.pattern.permute.xlu0 0
    %4938 = vperm.xlu0 %4937, %v4823
    %v4939 = vpop.permute.xlu0 %4938
    %4942 = vset.pattern.permute.xlu0 0
    %4943 = vperm.xlu0 %4942, %v4824
    %v4944 = vpop.permute.xlu0 %4943
    %4947 = vset.pattern.permute.xlu0 0
    %4948 = vperm.xlu0 %4947, %v4825
    %v4949 = vpop.permute.xlu0 %4948
    %vm4951 = vcmask 982016
    %v4953 = vsel %vm4951, %v4776, 0
    %v4956 = vsel %vm4951, %v4777, 0
    %v4959 = vsel %vm4951, %v4778, 0
    %v4962 = vsel %vm4951, %v4779, 0
    %v4965 = vsel %vm4951, %v4780, 0
    %v4968 = vsel %vm4951, %v4781, 0
    %v4971 = vsel %vm4951, %v4782, 0
    %v4974 = vsel %vm4951, %v4783, 0
    %v4977 = vsel %vm4951, %v4784, 0
    %v4980 = vsel %vm4951, %v4785, 0
    %v4983 = vsel %vm4951, %v4786, 0
    %v4986 = vsel %vm4951, %v4787, 0
    %v4989 = vsel %vm4951, %v4788, 0
    %v4992 = vsel %vm4951, %v4789, 0
    %v4995 = vsel %vm4951, %v4790, 0
    %v4998 = vsel %vm4951, %v4791, 0
    %v5001 = vsel %vm4951, %v4792, 0
    %v5004 = vsel %vm4951, %v4793, 0
    %v5007 = vsel %vm4951, %v4794, 0
    %v5010 = vsel %vm4951, %v4795, 0
    %v5013 = vsel %vm4951, %v4796, 0
    %v5016 = vsel %vm4951, %v4797, 0
    %v5019 = vsel %vm4951, %v4798, 0
    %v5022 = vsel %vm4951, %v4799, 0
    %v5025 = vsel %vm4951, %v4800, 0
    %5027 = vmatprep.subr.mxu0 0.0
    %v5028 = vand.u32 %v4761, 4294901760
    %5029 = vmatpush1.msra.mxu0 %v5028
    %5030 = vmatprep.subr.mxu0 0.0
    %v5031 = vand.u32 %v4762, 4294901760
    %5032 = vmatpush1.msra.mxu0 %v5031
    %5033 = vmatprep.subr.mxu0 0.0
    %v5034 = vand.u32 %v4763, 4294901760
    %5035 = vmatpush1.msra.mxu0 %v5034
    %5036 = vmatprep.subr.mxu0 0.0
    %v5037 = vand.u32 %v4764, 4294901760
    %5038 = vmatpush1.msra.mxu0 %v5037
    %5039 = vmatprep.subr.mxu0 0.0
    %v5040 = vand.u32 %v4765, 4294901760
    %5041 = vmatpush1.msra.mxu0 %v5040
    %5042 = vmatprep.subr.mxu0 0.0
    %v5043 = vand.u32 %v4766, 4294901760
    %5044 = vmatpush1.msra.mxu0 %v5043
    %5045 = vmatprep.subr.mxu0 0.0
    %v5046 = vand.u32 %v4767, 4294901760
    %5047 = vmatpush1.msra.mxu0 %v5046
    %5048 = vmatprep.subr.mxu0 0.0
    %v5049 = vand.u32 %v4768, 4294901760
    %5050 = vmatpush1.msra.mxu0 %v5049
    %5051 = vmatprep.subr.mxu0 0.0
    %v5052 = vand.u32 %v4769, 4294901760
    %5053 = vmatpush1.msra.mxu0 %v5052
    %5054 = vmatprep.subr.mxu0 0.0
    %v5055 = vand.u32 %v4770, 4294901760
    %5056 = vmatpush1.msra.mxu0 %v5055
    %5057 = vmatprep.subr.mxu0 0.0
    %v5058 = vand.u32 %v4771, 4294901760
    %5059 = vmatpush1.msra.mxu0 %v5058
    %5060 = vmatprep.subr.mxu0 0.0
    %v5061 = vand.u32 %v4772, 4294901760
    %5062 = vmatpush1.msra.mxu0 %v5061
    %5063 = vmatprep.subr.mxu0 0.0
    %v5064 = vand.u32 %v4773, 4294901760
    %5065 = vmatpush1.msra.mxu0 %v5064
    %5066 = vmatprep.subr.mxu0 0.0
    %v5067 = vand.u32 %v4774, 4294901760
    %5068 = vmatpush1.msra.mxu0 %v5067
    %5069 = vmatprep.subr.mxu0 0.0
    %v5070 = vand.u32 %v4775, 4294901760
    %5071 = vmatpush1.msra.mxu0 %v5070
    %5072 = vmatprep.subr.mxu0 0.0
    %5073 = vmatpush1.msra.mxu0 0.0
    %5074 = vmatprep.subr.mxu0 0.0
    %5075 = vmatpush1.msra.mxu0 0.0
    %5076 = vmatprep.subr.mxu0 0.0
    %5077 = vmatpush1.msra.mxu0 0.0
    %5078 = vmatprep.subr.mxu0 0.0
    %5079 = vmatpush1.msra.mxu0 0.0
    %5080 = vmatprep.subr.mxu0 0.0
    %5081 = vmatpush1.msra.mxu0 0.0
    %5082 = vmatprep.subr.mxu0 0.0
    %5083 = vmatpush1.msra.mxu0 0.0
    %5084 = vmatprep.subr.mxu0 0.0
    %5085 = vmatpush1.msra.mxu0 0.0
    %5086 = vmatprep.subr.mxu0 0.0
    %5087 = vmatpush1.msra.mxu0 0.0
    %5088 = vmatprep.subr.mxu0 0.0
    %5089 = vmatpush1.msra.mxu0 0.0
    %5090 = vmatprep.subr.mxu0 0.0
    %5091 = vmatpush1.msra.mxu0 0.0
    %5092 = vmatprep.subr.mxu0 0.0
    %5093 = vmatpush1.msra.mxu0 0.0
    %5094 = vmatprep.subr.mxu0 0.0
    %5095 = vmatpush1.msra.mxu0 0.0
    %5096 = vmatprep.subr.mxu0 0.0
    %5097 = vmatpush1.msra.mxu0 0.0
    %5098 = vmatprep.subr.mxu0 0.0
    %5099 = vmatpush1.msra.mxu0 0.0
    %5100 = vmatprep.subr.mxu0 0.0
    %5101 = vmatpush1.msra.mxu0 0.0
    %5102 = vmatprep.subr.mxu0 0.0
    %5103 = vmatpush1.msra.mxu0 0.0
    %5104 = vmatprep.subr.mxu0 0.0
    %5105 = vmatpush1.msra.mxu0 0.0
    %5106 = vmatprep.mubr.f32.mxu0 0.0
    %v5107 = vand.u32 %v4953, 4294901760
    %v5108 = vsub.f32 %v4953, %v5107
    %v5109 = vand.u32 %v5108, 4294901760
    %v5110 = vsub.f32 %v5108, %v5109
    %v5111 = vand.u32 %v5110, 4294901760
    %5112 = vmatmul.mubr.f32.gmra.mrb[0].mxu0 %v5111
    %v5113 = vpop.f32.mrb[0].mxu0
    %v5114 = vadd.f32 %v4829, %v5113
    %v5115 = vpop.f32.mrb[0].mxu0
    %5116 = vmatprep.mubr.f32.mxu0 0.0
    %v5117 = vand.u32 %v4956, 4294901760
    %v5118 = vsub.f32 %v4956, %v5117
    %v5119 = vand.u32 %v5118, 4294901760
    %v5120 = vsub.f32 %v5118, %v5119
    %v5121 = vand.u32 %v5120, 4294901760
    %5122 = vmatmul.mubr.f32.gmra.mrb[0].mxu0 %v5121
    %v5123 = vpop.f32.mrb[0].mxu0
    %v5124 = vadd.f32 %v4834, %v5123
    %v5125 = vpop.f32.mrb[0].mxu0
    %5126 = vmatprep.mubr.f32.mxu0 0.0
    %v5127 = vand.u32 %v4959, 4294901760
    %v5128 = vsub.f32 %v4959, %v5127
    %v5129 = vand.u32 %v5128, 4294901760
    %v5130 = vsub.f32 %v5128, %v5129
    %v5131 = vand.u32 %v5130, 4294901760
    %5132 = vmatmul.mubr.f32.gmra.mrb[0].mxu0 %v5131
    %v5133 = vpop.f32.mrb[0].mxu0
    %v5134 = vadd.f32 %v4839, %v5133
    %v5135 = vpop.f32.mrb[0].mxu0
    %5136 = vmatprep.mubr.f32.mxu0 0.0
    %v5137 = vand.u32 %v4962, 4294901760
    %v5138 = vsub.f32 %v4962, %v5137
    %v5139 = vand.u32 %v5138, 4294901760
    %v5140 = vsub.f32 %v5138, %v5139
    %v5141 = vand.u32 %v5140, 4294901760
    %5142 = vmatmul.mubr.f32.gmra.mrb[0].mxu0 %v5141
    %v5143 = vpop.f32.mrb[0].mxu0
    %v5144 = vadd.f32 %v4844, %v5143
    %v5145 = vpop.f32.mrb[0].mxu0
    %5146 = vmatprep.mubr.f32.mxu0 0.0
    %v5147 = vand.u32 %v4965, 4294901760
    %v5148 = vsub.f32 %v4965, %v5147
    %v5149 = vand.u32 %v5148, 4294901760
    %v5150 = vsub.f32 %v5148, %v5149
    %v5151 = vand.u32 %v5150, 4294901760
    %5152 = vmatmul.mubr.f32.gmra.mrb[0].mxu0 %v5151
    %v5153 = vpop.f32.mrb[0].mxu0
    %v5154 = vadd.f32 %v4849, %v5153
    %v5155 = vpop.f32.mrb[0].mxu0
    %5156 = vmatprep.mubr.f32.mxu0 0.0
    %v5157 = vand.u32 %v4968, 4294901760
    %v5158 = vsub.f32 %v4968, %v5157
    %v5159 = vand.u32 %v5158, 4294901760
    %v5160 = vsub.f32 %v5158, %v5159
    %v5161 = vand.u32 %v5160, 4294901760
    %5162 = vmatmul.mubr.f32.gmra.mrb[0].mxu0 %v5161
    %v5163 = vpop.f32.mrb[0].mxu0
    %v5164 = vadd.f32 %v4854, %v5163
    %v5165 = vpop.f32.mrb[0].mxu0
    %5166 = vmatprep.mubr.f32.mxu0 0.0
    %v5167 = vand.u32 %v4971, 4294901760
    %v5168 = vsub.f32 %v4971, %v5167
    %v5169 = vand.u32 %v5168, 4294901760
    %v5170 = vsub.f32 %v5168, %v5169
    %v5171 = vand.u32 %v5170, 4294901760
    %5172 = vmatmul.mubr.f32.gmra.mrb[0].mxu0 %v5171
    %v5173 = vpop.f32.mrb[0].mxu0
    %v5174 = vadd.f32 %v4859, %v5173
    %v5175 = vpop.f32.mrb[0].mxu0
    %5176 = vmatprep.mubr.f32.mxu0 0.0
    %v5177 = vand.u32 %v4974, 4294901760
    %v5178 = vsub.f32 %v4974, %v5177
    %v5179 = vand.u32 %v5178, 4294901760
    %v5180 = vsub.f32 %v5178, %v5179
    %v5181 = vand.u32 %v5180, 4294901760
    %5182 = vmatmul.mubr.f32.gmra.mrb[0].mxu0 %v5181
    %v5183 = vpop.f32.mrb[0].mxu0
    %v5184 = vadd.f32 %v4864, %v5183
    %v5185 = vpop.f32.mrb[0].mxu0
    %5186 = vmatprep.mubr.f32.mxu0 0.0
    %v5187 = vand.u32 %v4977, 4294901760
    %v5188 = vsub.f32 %v4977, %v5187
    %v5189 = vand.u32 %v5188, 4294901760
    %v5190 = vsub.f32 %v5188, %v5189
    %v5191 = vand.u32 %v5190, 4294901760
    %5192 = vmatmul.mubr.f32.gmra.mrb[0].mxu0 %v5191
    %v5193 = vpop.f32.mrb[0].mxu0
    %v5194 = vadd.f32 %v4869, %v5193
    %v5195 = vpop.f32.mrb[0].mxu0
    %5196 = vmatprep.mubr.f32.mxu0 0.0
    %v5197 = vand.u32 %v4980, 4294901760
    %v5198 = vsub.f32 %v4980, %v5197
    %v5199 = vand.u32 %v5198, 4294901760
    %v5200 = vsub.f32 %v5198, %v5199
    %v5201 = vand.u32 %v5200, 4294901760
    %5202 = vmatmul.mubr.f32.gmra.mrb[0].mxu0 %v5201
    %v5203 = vpop.f32.mrb[0].mxu0
    %v5204 = vadd.f32 %v4874, %v5203
    %v5205 = vpop.f32.mrb[0].mxu0
    %5206 = vmatprep.mubr.f32.mxu0 0.0
    %v5207 = vand.u32 %v4983, 4294901760
    %v5208 = vsub.f32 %v4983, %v5207
    %v5209 = vand.u32 %v5208, 4294901760
    %v5210 = vsub.f32 %v5208, %v5209
    %v5211 = vand.u32 %v5210, 4294901760
    %5212 = vmatmul.mubr.f32.gmra.mrb[0].mxu0 %v5211
    %v5213 = vpop.f32.mrb[0].mxu0
    %v5214 = vadd.f32 %v4879, %v5213
    %v5215 = vpop.f32.mrb[0].mxu0
    %5216 = vmatprep.mubr.f32.mxu0 0.0
    %v5217 = vand.u32 %v4986, 4294901760
    %v5218 = vsub.f32 %v4986, %v5217
    %v5219 = vand.u32 %v5218, 4294901760
    %v5220 = vsub.f32 %v5218, %v5219
    %v5221 = vand.u32 %v5220, 4294901760
    %5222 = vmatmul.mubr.f32.gmra.mrb[0].mxu0 %v5221
    %v5223 = vpop.f32.mrb[0].mxu0
    %v5224 = vadd.f32 %v4884, %v5223
    %v5225 = vpop.f32.mrb[0].mxu0
    %5226 = vmatprep.mubr.f32.mxu0 0.0
    %v5227 = vand.u32 %v4989, 4294901760
    %v5228 = vsub.f32 %v4989, %v5227
    %v5229 = vand.u32 %v5228, 4294901760
    %v5230 = vsub.f32 %v5228, %v5229
    %v5231 = vand.u32 %v5230, 4294901760
    %5232 = vmatmul.mubr.f32.gmra.mrb[0].mxu0 %v5231
    %v5233 = vpop.f32.mrb[0].mxu0
    %v5234 = vadd.f32 %v4889, %v5233
    %v5235 = vpop.f32.mrb[0].mxu0
    %5236 = vmatprep.mubr.f32.mxu0 0.0
    %v5237 = vand.u32 %v4992, 4294901760
    %v5238 = vsub.f32 %v4992, %v5237
    %v5239 = vand.u32 %v5238, 4294901760
    %v5240 = vsub.f32 %v5238, %v5239
    %v5241 = vand.u32 %v5240, 4294901760
    %5242 = vmatmul.mubr.f32.gmra.mrb[0].mxu0 %v5241
    %v5243 = vpop.f32.mrb[0].mxu0
    %v5244 = vadd.f32 %v4894, %v5243
    %v5245 = vpop.f32.mrb[0].mxu0
    %5246 = vmatprep.mubr.f32.mxu0 0.0
    %v5247 = vand.u32 %v4995, 4294901760
    %v5248 = vsub.f32 %v4995, %v5247
    %v5249 = vand.u32 %v5248, 4294901760
    %v5250 = vsub.f32 %v5248, %v5249
    %v5251 = vand.u32 %v5250, 4294901760
    %5252 = vmatmul.mubr.f32.gmra.mrb[0].mxu0 %v5251
    %v5253 = vpop.f32.mrb[0].mxu0
    %v5254 = vadd.f32 %v4899, %v5253
    %v5255 = vpop.f32.mrb[0].mxu0
    %5256 = vmatprep.mubr.f32.mxu0 0.0
    %v5257 = vand.u32 %v4998, 4294901760
    %v5258 = vsub.f32 %v4998, %v5257
    %v5259 = vand.u32 %v5258, 4294901760
    %v5260 = vsub.f32 %v5258, %v5259
    %v5261 = vand.u32 %v5260, 4294901760
    %5262 = vmatmul.mubr.f32.gmra.mrb[0].mxu0 %v5261
    %v5263 = vpop.f32.mrb[0].mxu0
    %v5264 = vadd.f32 %v4904, %v5263
    %v5265 = vpop.f32.mrb[0].mxu0
    %5266 = vmatprep.mubr.f32.mxu0 0.0
    %v5267 = vand.u32 %v5001, 4294901760
    %v5268 = vsub.f32 %v5001, %v5267
    %v5269 = vand.u32 %v5268, 4294901760
    %v5270 = vsub.f32 %v5268, %v5269
    %v5271 = vand.u32 %v5270, 4294901760
    %5272 = vmatmul.mubr.f32.gmra.mrb[0].mxu0 %v5271
    %v5273 = vpop.f32.mrb[0].mxu0
    %v5274 = vadd.f32 %v4909, %v5273
    %v5275 = vpop.f32.mrb[0].mxu0
    %5276 = vmatprep.mubr.f32.mxu0 0.0
    %v5277 = vand.u32 %v5004, 4294901760
    %v5278 = vsub.f32 %v5004, %v5277
    %v5279 = vand.u32 %v5278, 4294901760
    %v5280 = vsub.f32 %v5278, %v5279
    %v5281 = vand.u32 %v5280, 4294901760
    %5282 = vmatmul.mubr.f32.gmra.mrb[0].mxu0 %v5281
    %v5283 = vpop.f32.mrb[0].mxu0
    %v5284 = vadd.f32 %v4914, %v5283
    %v5285 = vpop.f32.mrb[0].mxu0
    %5286 = vmatprep.mubr.f32.mxu0 0.0
    %v5287 = vand.u32 %v5007, 4294901760
    %v5288 = vsub.f32 %v5007, %v5287
    %v5289 = vand.u32 %v5288, 4294901760
    %v5290 = vsub.f32 %v5288, %v5289
    %v5291 = vand.u32 %v5290, 4294901760
    %5292 = vmatmul.mubr.f32.gmra.mrb[0].mxu0 %v5291
    %v5293 = vpop.f32.mrb[0].mxu0
    %v5294 = vadd.f32 %v4919, %v5293
    %v5295 = vpop.f32.mrb[0].mxu0
    %5296 = vmatprep.mubr.f32.mxu0 0.0
    %v5297 = vand.u32 %v5010, 4294901760
    %v5298 = vsub.f32 %v5010, %v5297
    %v5299 = vand.u32 %v5298, 4294901760
    %v5300 = vsub.f32 %v5298, %v5299
    %v5301 = vand.u32 %v5300, 4294901760
    %5302 = vmatmul.mubr.f32.gmra.mrb[0].mxu0 %v5301
    %v5303 = vpop.f32.mrb[0].mxu0
    %v5304 = vadd.f32 %v4924, %v5303
    %v5305 = vpop.f32.mrb[0].mxu0
    %5306 = vmatprep.mubr.f32.mxu0 0.0
    %v5307 = vand.u32 %v5013, 4294901760
    %v5308 = vsub.f32 %v5013, %v5307
    %v5309 = vand.u32 %v5308, 4294901760
    %v5310 = vsub.f32 %v5308, %v5309
    %v5311 = vand.u32 %v5310, 4294901760
    %5312 = vmatmul.mubr.f32.gmra.mrb[0].mxu0 %v5311
    %v5313 = vpop.f32.mrb[0].mxu0
    %v5314 = vadd.f32 %v4929, %v5313
    %v5315 = vpop.f32.mrb[0].mxu0
    %5316 = vmatprep.mubr.f32.mxu0 0.0
    %v5317 = vand.u32 %v5016, 4294901760
    %v5318 = vsub.f32 %v5016, %v5317
    %v5319 = vand.u32 %v5318, 4294901760
    %v5320 = vsub.f32 %v5318, %v5319
    %v5321 = vand.u32 %v5320, 4294901760
    %5322 = vmatmul.mubr.f32.gmra.mrb[0].mxu0 %v5321
    %v5323 = vpop.f32.mrb[0].mxu0
    %v5324 = vadd.f32 %v4934, %v5323
    %v5325 = vpop.f32.mrb[0].mxu0
    %5326 = vmatprep.mubr.f32.mxu0 0.0
    %v5327 = vand.u32 %v5019, 4294901760
    %v5328 = vsub.f32 %v5019, %v5327
    %v5329 = vand.u32 %v5328, 4294901760
    %v5330 = vsub.f32 %v5328, %v5329
    %v5331 = vand.u32 %v5330, 4294901760
    %5332 = vmatmul.mubr.f32.gmra.mrb[0].mxu0 %v5331
    %v5333 = vpop.f32.mrb[0].mxu0
    %v5334 = vadd.f32 %v4939, %v5333
    %v5335 = vpop.f32.mrb[0].mxu0
    %5336 = vmatprep.mubr.f32.mxu0 0.0
    %v5337 = vand.u32 %v5022, 4294901760
    %v5338 = vsub.f32 %v5022, %v5337
    %v5339 = vand.u32 %v5338, 4294901760
    %v5340 = vsub.f32 %v5338, %v5339
    %v5341 = vand.u32 %v5340, 4294901760
    %5342 = vmatmul.mubr.f32.gmra.mrb[0].mxu0 %v5341
    %v5343 = vpop.f32.mrb[0].mxu0
    %v5344 = vadd.f32 %v4944, %v5343
    %v5345 = vpop.f32.mrb[0].mxu0
    %5346 = vmatprep.mubr.f32.mxu0 0.0
    %v5347 = vand.u32 %v5025, 4294901760
    %v5348 = vsub.f32 %v5025, %v5347
    %v5349 = vand.u32 %v5348, 4294901760
    %v5350 = vsub.f32 %v5348, %v5349
    %v5351 = vand.u32 %v5350, 4294901760
    %5352 = vmatmul.mubr.f32.gmra.mrb[0].mxu0 %v5351
    %v5353 = vpop.f32.mrb[0].mxu0
    %v5354 = vadd.f32 %v4949, %v5353
    %v5355 = vpop.f32.mrb[0].mxu0
    %5356 = vdwg.mxu0
    %5357 = vmatprep.subr.mxu0 0.0
    %v5358 = vand.u32 %v4761, 4294901760
    %v5359 = vsub.f32 %v4761, %v5358
    %v5360 = vand.u32 %v5359, 4294901760
    %v5361 = vsub.f32 %v5359, %v5360
    %v5362 = vand.u32 %v5361, 4294901760
    %5363 = vmatpush1.msra.mxu0 %v5362
    %5364 = vmatprep.subr.mxu0 0.0
    %v5365 = vand.u32 %v4762, 4294901760
    %v5366 = vsub.f32 %v4762, %v5365
    %v5367 = vand.u32 %v5366, 4294901760
    %v5368 = vsub.f32 %v5366, %v5367
    %v5369 = vand.u32 %v5368, 4294901760
    %5370 = vmatpush1.msra.mxu0 %v5369
    %5371 = vmatprep.subr.mxu0 0.0
    %v5372 = vand.u32 %v4763, 4294901760
    %v5373 = vsub.f32 %v4763, %v5372
    %v5374 = vand.u32 %v5373, 4294901760
    %v5375 = vsub.f32 %v5373, %v5374
    %v5376 = vand.u32 %v5375, 4294901760
    %5377 = vmatpush1.msra.mxu0 %v5376
    %5378 = vmatprep.subr.mxu0 0.0
    %v5379 = vand.u32 %v4764, 4294901760
    %v5380 = vsub.f32 %v4764, %v5379
    %v5381 = vand.u32 %v5380, 4294901760
    %v5382 = vsub.f32 %v5380, %v5381
    %v5383 = vand.u32 %v5382, 4294901760
    %5384 = vmatpush1.msra.mxu0 %v5383
    %5385 = vmatprep.subr.mxu0 0.0
    %v5386 = vand.u32 %v4765, 4294901760
    %v5387 = vsub.f32 %v4765, %v5386
    %v5388 = vand.u32 %v5387, 4294901760
    %v5389 = vsub.f32 %v5387, %v5388
    %v5390 = vand.u32 %v5389, 4294901760
    %5391 = vmatpush1.msra.mxu0 %v5390
    %5392 = vmatprep.subr.mxu0 0.0
    %v5393 = vand.u32 %v4766, 4294901760
    %v5394 = vsub.f32 %v4766, %v5393
    %v5395 = vand.u32 %v5394, 4294901760
    %v5396 = vsub.f32 %v5394, %v5395
    %v5397 = vand.u32 %v5396, 4294901760
    %5398 = vmatpush1.msra.mxu0 %v5397
    %5399 = vmatprep.subr.mxu0 0.0
    %v5400 = vand.u32 %v4767, 4294901760
    %v5401 = vsub.f32 %v4767, %v5400
    %v5402 = vand.u32 %v5401, 4294901760
    %v5403 = vsub.f32 %v5401, %v5402
    %v5404 = vand.u32 %v5403, 4294901760
    %5405 = vmatpush1.msra.mxu0 %v5404
    %5406 = vmatprep.subr.mxu0 0.0
    %v5407 = vand.u32 %v4768, 4294901760
    %v5408 = vsub.f32 %v4768, %v5407
    %v5409 = vand.u32 %v5408, 4294901760
    %v5410 = vsub.f32 %v5408, %v5409
    %v5411 = vand.u32 %v5410, 4294901760
    %5412 = vmatpush1.msra.mxu0 %v5411
    %5413 = vmatprep.subr.mxu0 0.0
    %v5414 = vand.u32 %v4769, 4294901760
    %v5415 = vsub.f32 %v4769, %v5414
    %v5416 = vand.u32 %v5415, 4294901760
    %v5417 = vsub.f32 %v5415, %v5416
    %v5418 = vand.u32 %v5417, 4294901760
    %5419 = vmatpush1.msra.mxu0 %v5418
    %5420 = vmatprep.subr.mxu0 0.0
    %v5421 = vand.u32 %v4770, 4294901760
    %v5422 = vsub.f32 %v4770, %v5421
    %v5423 = vand.u32 %v5422, 4294901760
    %v5424 = vsub.f32 %v5422, %v5423
    %v5425 = vand.u32 %v5424, 4294901760
    %5426 = vmatpush1.msra.mxu0 %v5425
    %5427 = vmatprep.subr.mxu0 0.0
    %v5428 = vand.u32 %v4771, 4294901760
    %v5429 = vsub.f32 %v4771, %v5428
    %v5430 = vand.u32 %v5429, 4294901760
    %v5431 = vsub.f32 %v5429, %v5430
    %v5432 = vand.u32 %v5431, 4294901760
    %5433 = vmatpush1.msra.mxu0 %v5432
    %5434 = vmatprep.subr.mxu0 0.0
    %v5435 = vand.u32 %v4772, 4294901760
    %v5436 = vsub.f32 %v4772, %v5435
    %v5437 = vand.u32 %v5436, 4294901760
    %v5438 = vsub.f32 %v5436, %v5437
    %v5439 = vand.u32 %v5438, 4294901760
    %5440 = vmatpush1.msra.mxu0 %v5439
    %5441 = vmatprep.subr.mxu0 0.0
    %v5442 = vand.u32 %v4773, 4294901760
    %v5443 = vsub.f32 %v4773, %v5442
    %v5444 = vand.u32 %v5443, 4294901760
    %v5445 = vsub.f32 %v5443, %v5444
    %v5446 = vand.u32 %v5445, 4294901760
    %5447 = vmatpush1.msra.mxu0 %v5446
    %5448 = vmatprep.subr.mxu0 0.0
    %v5449 = vand.u32 %v4774, 4294901760
    %v5450 = vsub.f32 %v4774, %v5449
    %v5451 = vand.u32 %v5450, 4294901760
    %v5452 = vsub.f32 %v5450, %v5451
    %v5453 = vand.u32 %v5452, 4294901760
    %5454 = vmatpush1.msra.mxu0 %v5453
    %5455 = vmatprep.subr.mxu0 0.0
    %v5456 = vand.u32 %v4775, 4294901760
    %v5457 = vsub.f32 %v4775, %v5456
    %v5458 = vand.u32 %v5457, 4294901760
    %v5459 = vsub.f32 %v5457, %v5458
    %v5460 = vand.u32 %v5459, 4294901760
    %5461 = vmatpush1.msra.mxu0 %v5460
    %5462 = vmatprep.subr.mxu0 0.0
    %5463 = vmatpush1.msra.mxu0 0.0
    %5464 = vmatprep.subr.mxu0 0.0
    %5465 = vmatpush1.msra.mxu0 0.0
    %5466 = vmatprep.subr.mxu0 0.0
    %5467 = vmatpush1.msra.mxu0 0.0
    %5468 = vmatprep.subr.mxu0 0.0
    %5469 = vmatpush1.msra.mxu0 0.0
    %5470 = vmatprep.subr.mxu0 0.0
    %5471 = vmatpush1.msra.mxu0 0.0
    %5472 = vmatprep.subr.mxu0 0.0
    %5473 = vmatpush1.msra.mxu0 0.0
    %5474 = vmatprep.subr.mxu0 0.0
    %5475 = vmatpush1.msra.mxu0 0.0
    %5476 = vmatprep.subr.mxu0 0.0
    %5477 = vmatpush1.msra.mxu0 0.0
    %5478 = vmatprep.subr.mxu0 0.0
    %5479 = vmatpush1.msra.mxu0 0.0
    %5480 = vmatprep.subr.mxu0 0.0
    %5481 = vmatpush1.msra.mxu0 0.0
    %5482 = vmatprep.subr.mxu0 0.0
    %5483 = vmatpush1.msra.mxu0 0.0
    %5484 = vmatprep.subr.mxu0 0.0
    %5485 = vmatpush1.msra.mxu0 0.0
    %5486 = vmatprep.subr.mxu0 0.0
    %5487 = vmatpush1.msra.mxu0 0.0
    %5488 = vmatprep.subr.mxu0 0.0
    %5489 = vmatpush1.msra.mxu0 0.0
    %5490 = vmatprep.subr.mxu0 0.0
    %5491 = vmatpush1.msra.mxu0 0.0
    %5492 = vmatprep.subr.mxu0 0.0
    %5493 = vmatpush1.msra.mxu0 0.0
    %5494 = vmatprep.subr.mxu0 0.0
    %5495 = vmatpush1.msra.mxu0 0.0
    %5496 = vmatprep.mubr.f32.mxu0 0.0
    %v5497 = vand.u32 %v4953, 4294901760
    %5498 = vmatmul.mubr.f32.gmra.mrb[0].mxu0 %v5497
    %v5499 = vpop.f32.mrb[0].mxu0
    %v5500 = vadd.f32 %v5114, %v5499
    %v5501 = vpop.f32.mrb[0].mxu0
    %5502 = vmatprep.mubr.f32.mxu0 0.0
    %v5503 = vand.u32 %v4956, 4294901760
    %5504 = vmatmul.mubr.f32.gmra.mrb[0].mxu0 %v5503
    %v5505 = vpop.f32.mrb[0].mxu0
    %v5506 = vadd.f32 %v5124, %v5505
    %v5507 = vpop.f32.mrb[0].mxu0
    %5508 = vmatprep.mubr.f32.mxu0 0.0
    %v5509 = vand.u32 %v4959, 4294901760
    %5510 = vmatmul.mubr.f32.gmra.mrb[0].mxu0 %v5509
    %v5511 = vpop.f32.mrb[0].mxu0
    %v5512 = vadd.f32 %v5134, %v5511
    %v5513 = vpop.f32.mrb[0].mxu0
    %5514 = vmatprep.mubr.f32.mxu0 0.0
    %v5515 = vand.u32 %v4962, 4294901760
    %5516 = vmatmul.mubr.f32.gmra.mrb[0].mxu0 %v5515
    %v5517 = vpop.f32.mrb[0].mxu0
    %v5518 = vadd.f32 %v5144, %v5517
    %v5519 = vpop.f32.mrb[0].mxu0
    %5520 = vmatprep.mubr.f32.mxu0 0.0
    %v5521 = vand.u32 %v4965, 4294901760
    %5522 = vmatmul.mubr.f32.gmra.mrb[0].mxu0 %v5521
    %v5523 = vpop.f32.mrb[0].mxu0
    %v5524 = vadd.f32 %v5154, %v5523
    %v5525 = vpop.f32.mrb[0].mxu0
    %5526 = vmatprep.mubr.f32.mxu0 0.0
    %v5527 = vand.u32 %v4968, 4294901760
    %5528 = vmatmul.mubr.f32.gmra.mrb[0].mxu0 %v5527
    %v5529 = vpop.f32.mrb[0].mxu0
    %v5530 = vadd.f32 %v5164, %v5529
    %v5531 = vpop.f32.mrb[0].mxu0
    %5532 = vmatprep.mubr.f32.mxu0 0.0
    %v5533 = vand.u32 %v4971, 4294901760
    %5534 = vmatmul.mubr.f32.gmra.mrb[0].mxu0 %v5533
    %v5535 = vpop.f32.mrb[0].mxu0
    %v5536 = vadd.f32 %v5174, %v5535
    %v5537 = vpop.f32.mrb[0].mxu0
    %5538 = vmatprep.mubr.f32.mxu0 0.0
    %v5539 = vand.u32 %v4974, 4294901760
    %5540 = vmatmul.mubr.f32.gmra.mrb[0].mxu0 %v5539
    %v5541 = vpop.f32.mrb[0].mxu0
    %v5542 = vadd.f32 %v5184, %v5541
    %v5543 = vpop.f32.mrb[0].mxu0
    %5544 = vmatprep.mubr.f32.mxu0 0.0
    %v5545 = vand.u32 %v4977, 4294901760
    %5546 = vmatmul.mubr.f32.gmra.mrb[0].mxu0 %v5545
    %v5547 = vpop.f32.mrb[0].mxu0
    %v5548 = vadd.f32 %v5194, %v5547
    %v5549 = vpop.f32.mrb[0].mxu0
    %5550 = vmatprep.mubr.f32.mxu0 0.0
    %v5551 = vand.u32 %v4980, 4294901760
    %5552 = vmatmul.mubr.f32.gmra.mrb[0].mxu0 %v5551
    %v5553 = vpop.f32.mrb[0].mxu0
    %v5554 = vadd.f32 %v5204, %v5553
    %v5555 = vpop.f32.mrb[0].mxu0
    %5556 = vmatprep.mubr.f32.mxu0 0.0
    %v5557 = vand.u32 %v4983, 4294901760
    %5558 = vmatmul.mubr.f32.gmra.mrb[0].mxu0 %v5557
    %v5559 = vpop.f32.mrb[0].mxu0
    %v5560 = vadd.f32 %v5214, %v5559
    %v5561 = vpop.f32.mrb[0].mxu0
    %5562 = vmatprep.mubr.f32.mxu0 0.0
    %v5563 = vand.u32 %v4986, 4294901760
    %5564 = vmatmul.mubr.f32.gmra.mrb[0].mxu0 %v5563
    %v5565 = vpop.f32.mrb[0].mxu0
    %v5566 = vadd.f32 %v5224, %v5565
    %v5567 = vpop.f32.mrb[0].mxu0
    %5568 = vmatprep.mubr.f32.mxu0 0.0
    %v5569 = vand.u32 %v4989, 4294901760
    %5570 = vmatmul.mubr.f32.gmra.mrb[0].mxu0 %v5569
    %v5571 = vpop.f32.mrb[0].mxu0
    %v5572 = vadd.f32 %v5234, %v5571
    %v5573 = vpop.f32.mrb[0].mxu0
    %5574 = vmatprep.mubr.f32.mxu0 0.0
    %v5575 = vand.u32 %v4992, 4294901760
    %5576 = vmatmul.mubr.f32.gmra.mrb[0].mxu0 %v5575
    %v5577 = vpop.f32.mrb[0].mxu0
    %v5578 = vadd.f32 %v5244, %v5577
    %v5579 = vpop.f32.mrb[0].mxu0
    %5580 = vmatprep.mubr.f32.mxu0 0.0
    %v5581 = vand.u32 %v4995, 4294901760
    %5582 = vmatmul.mubr.f32.gmra.mrb[0].mxu0 %v5581
    %v5583 = vpop.f32.mrb[0].mxu0
    %v5584 = vadd.f32 %v5254, %v5583
    %v5585 = vpop.f32.mrb[0].mxu0
    %5586 = vmatprep.mubr.f32.mxu0 0.0
    %v5587 = vand.u32 %v4998, 4294901760
    %5588 = vmatmul.mubr.f32.gmra.mrb[0].mxu0 %v5587
    %v5589 = vpop.f32.mrb[0].mxu0
    %v5590 = vadd.f32 %v5264, %v5589
    %v5591 = vpop.f32.mrb[0].mxu0
    %5592 = vmatprep.mubr.f32.mxu0 0.0
    %v5593 = vand.u32 %v5001, 4294901760
    %5594 = vmatmul.mubr.f32.gmra.mrb[0].mxu0 %v5593
    %v5595 = vpop.f32.mrb[0].mxu0
    %v5596 = vadd.f32 %v5274, %v5595
    %v5597 = vpop.f32.mrb[0].mxu0
    %5598 = vmatprep.mubr.f32.mxu0 0.0
    %v5599 = vand.u32 %v5004, 4294901760
    %5600 = vmatmul.mubr.f32.gmra.mrb[0].mxu0 %v5599
    %v5601 = vpop.f32.mrb[0].mxu0
    %v5602 = vadd.f32 %v5284, %v5601
    %v5603 = vpop.f32.mrb[0].mxu0
    %5604 = vmatprep.mubr.f32.mxu0 0.0
    %v5605 = vand.u32 %v5007, 4294901760
    %5606 = vmatmul.mubr.f32.gmra.mrb[0].mxu0 %v5605
    %v5607 = vpop.f32.mrb[0].mxu0
    %v5608 = vadd.f32 %v5294, %v5607
    %v5609 = vpop.f32.mrb[0].mxu0
    %5610 = vmatprep.mubr.f32.mxu0 0.0
    %v5611 = vand.u32 %v5010, 4294901760
    %5612 = vmatmul.mubr.f32.gmra.mrb[0].mxu0 %v5611
    %v5613 = vpop.f32.mrb[0].mxu0
    %v5614 = vadd.f32 %v5304, %v5613
    %v5615 = vpop.f32.mrb[0].mxu0
    %5616 = vmatprep.mubr.f32.mxu0 0.0
    %v5617 = vand.u32 %v5013, 4294901760
    %5618 = vmatmul.mubr.f32.gmra.mrb[0].mxu0 %v5617
    %v5619 = vpop.f32.mrb[0].mxu0
    %v5620 = vadd.f32 %v5314, %v5619
    %v5621 = vpop.f32.mrb[0].mxu0
    %5622 = vmatprep.mubr.f32.mxu0 0.0
    %v5623 = vand.u32 %v5016, 4294901760
    %5624 = vmatmul.mubr.f32.gmra.mrb[0].mxu0 %v5623
    %v5625 = vpop.f32.mrb[0].mxu0
    %v5626 = vadd.f32 %v5324, %v5625
    %v5627 = vpop.f32.mrb[0].mxu0
    %5628 = vmatprep.mubr.f32.mxu0 0.0
    %v5629 = vand.u32 %v5019, 4294901760
    %5630 = vmatmul.mubr.f32.gmra.mrb[0].mxu0 %v5629
    %v5631 = vpop.f32.mrb[0].mxu0
    %v5632 = vadd.f32 %v5334, %v5631
    %v5633 = vpop.f32.mrb[0].mxu0
    %5634 = vmatprep.mubr.f32.mxu0 0.0
    %v5635 = vand.u32 %v5022, 4294901760
    %5636 = vmatmul.mubr.f32.gmra.mrb[0].mxu0 %v5635
    %v5637 = vpop.f32.mrb[0].mxu0
    %v5638 = vadd.f32 %v5344, %v5637
    %v5639 = vpop.f32.mrb[0].mxu0
    %5640 = vmatprep.mubr.f32.mxu0 0.0
    %v5641 = vand.u32 %v5025, 4294901760
    %5642 = vmatmul.mubr.f32.gmra.mrb[0].mxu0 %v5641
    %v5643 = vpop.f32.mrb[0].mxu0
    %v5644 = vadd.f32 %v5354, %v5643
    %v5645 = vpop.f32.mrb[0].mxu0
    %5646 = vdwg.mxu0
    %5647 = vmatprep.subr.mxu0 0.0
    %v5648 = vand.u32 %v4761, 4294901760
    %v5649 = vsub.f32 %v4761, %v5648
    %5650 = vmatpush1.msra.mxu0 %v5649
    %5651 = vmatprep.subr.mxu0 0.0
    %v5652 = vand.u32 %v4762, 4294901760
    %v5653 = vsub.f32 %v4762, %v5652
    %5654 = vmatpush1.msra.mxu0 %v5653
    %5655 = vmatprep.subr.mxu0 0.0
    %v5656 = vand.u32 %v4763, 4294901760
    %v5657 = vsub.f32 %v4763, %v5656
    %5658 = vmatpush1.msra.mxu0 %v5657
    %5659 = vmatprep.subr.mxu0 0.0
    %v5660 = vand.u32 %v4764, 4294901760
    %v5661 = vsub.f32 %v4764, %v5660
    %5662 = vmatpush1.msra.mxu0 %v5661
    %5663 = vmatprep.subr.mxu0 0.0
    %v5664 = vand.u32 %v4765, 4294901760
    %v5665 = vsub.f32 %v4765, %v5664
    %5666 = vmatpush1.msra.mxu0 %v5665
    %5667 = vmatprep.subr.mxu0 0.0
    %v5668 = vand.u32 %v4766, 4294901760
    %v5669 = vsub.f32 %v4766, %v5668
    %5670 = vmatpush1.msra.mxu0 %v5669
    %5671 = vmatprep.subr.mxu0 0.0
    %v5672 = vand.u32 %v4767, 4294901760
    %v5673 = vsub.f32 %v4767, %v5672
    %5674 = vmatpush1.msra.mxu0 %v5673
    %5675 = vmatprep.subr.mxu0 0.0
    %v5676 = vand.u32 %v4768, 4294901760
    %v5677 = vsub.f32 %v4768, %v5676
    %5678 = vmatpush1.msra.mxu0 %v5677
    %5679 = vmatprep.subr.mxu0 0.0
    %v5680 = vand.u32 %v4769, 4294901760
    %v5681 = vsub.f32 %v4769, %v5680
    %5682 = vmatpush1.msra.mxu0 %v5681
    %5683 = vmatprep.subr.mxu0 0.0
    %v5684 = vand.u32 %v4770, 4294901760
    %v5685 = vsub.f32 %v4770, %v5684
    %5686 = vmatpush1.msra.mxu0 %v5685
    %5687 = vmatprep.subr.mxu0 0.0
    %v5688 = vand.u32 %v4771, 4294901760
    %v5689 = vsub.f32 %v4771, %v5688
    %5690 = vmatpush1.msra.mxu0 %v5689
    %5691 = vmatprep.subr.mxu0 0.0
    %v5692 = vand.u32 %v4772, 4294901760
    %v5693 = vsub.f32 %v4772, %v5692
    %5694 = vmatpush1.msra.mxu0 %v5693
    %5695 = vmatprep.subr.mxu0 0.0
    %v5696 = vand.u32 %v4773, 4294901760
    %v5697 = vsub.f32 %v4773, %v5696
    %5698 = vmatpush1.msra.mxu0 %v5697
    %5699 = vmatprep.subr.mxu0 0.0
    %v5700 = vand.u32 %v4774, 4294901760
    %v5701 = vsub.f32 %v4774, %v5700
    %5702 = vmatpush1.msra.mxu0 %v5701
    %5703 = vmatprep.subr.mxu0 0.0
    %v5704 = vand.u32 %v4775, 4294901760
    %v5705 = vsub.f32 %v4775, %v5704
    %5706 = vmatpush1.msra.mxu0 %v5705
    %5707 = vmatprep.subr.mxu0 0.0
    %5708 = vmatpush1.msra.mxu0 0.0
    %5709 = vmatprep.subr.mxu0 0.0
    %5710 = vmatpush1.msra.mxu0 0.0
    %5711 = vmatprep.subr.mxu0 0.0
    %5712 = vmatpush1.msra.mxu0 0.0
    %5713 = vmatprep.subr.mxu0 0.0
    %5714 = vmatpush1.msra.mxu0 0.0
    %5715 = vmatprep.subr.mxu0 0.0
    %5716 = vmatpush1.msra.mxu0 0.0
    %5717 = vmatprep.subr.mxu0 0.0
    %5718 = vmatpush1.msra.mxu0 0.0
    %5719 = vmatprep.subr.mxu0 0.0
    %5720 = vmatpush1.msra.mxu0 0.0
    %5721 = vmatprep.subr.mxu0 0.0
    %5722 = vmatpush1.msra.mxu0 0.0
    %5723 = vmatprep.subr.mxu0 0.0
    %5724 = vmatpush1.msra.mxu0 0.0
    %5725 = vmatprep.subr.mxu0 0.0
    %5726 = vmatpush1.msra.mxu0 0.0
    %5727 = vmatprep.subr.mxu0 0.0
    %5728 = vmatpush1.msra.mxu0 0.0
    %5729 = vmatprep.subr.mxu0 0.0
    %5730 = vmatpush1.msra.mxu0 0.0
    %5731 = vmatprep.subr.mxu0 0.0
    %5732 = vmatpush1.msra.mxu0 0.0
    %5733 = vmatprep.subr.mxu0 0.0
    %5734 = vmatpush1.msra.mxu0 0.0
    %5735 = vmatprep.subr.mxu0 0.0
    %5736 = vmatpush1.msra.mxu0 0.0
    %5737 = vmatprep.subr.mxu0 0.0
    %5738 = vmatpush1.msra.mxu0 0.0
    %5739 = vmatprep.subr.mxu0 0.0
    %5740 = vmatpush1.msra.mxu0 0.0
    %5741 = vmatprep.mubr.f32.mxu0 0.0
    %v5742 = vand.u32 %v4953, 4294901760
    %v5743 = vsub.f32 %v4953, %v5742
    %5744 = vmatmul.mubr.f32.gmra.mrb[0].mxu0 %v5743
    %v5745 = vpop.f32.mrb[0].mxu0
    %v5746 = vadd.f32 %v5500, %v5745
    %v5747 = vpop.f32.mrb[0].mxu0
    %5748 = vmatprep.mubr.f32.mxu0 0.0
    %v5749 = vand.u32 %v4956, 4294901760
    %v5750 = vsub.f32 %v4956, %v5749
    %5751 = vmatmul.mubr.f32.gmra.mrb[0].mxu0 %v5750
    %v5752 = vpop.f32.mrb[0].mxu0
    %v5753 = vadd.f32 %v5506, %v5752
    %v5754 = vpop.f32.mrb[0].mxu0
    %5755 = vmatprep.mubr.f32.mxu0 0.0
    %v5756 = vand.u32 %v4959, 4294901760
    %v5757 = vsub.f32 %v4959, %v5756
    %5758 = vmatmul.mubr.f32.gmra.mrb[0].mxu0 %v5757
    %v5759 = vpop.f32.mrb[0].mxu0
    %v5760 = vadd.f32 %v5512, %v5759
    %v5761 = vpop.f32.mrb[0].mxu0
    %5762 = vmatprep.mubr.f32.mxu0 0.0
    %v5763 = vand.u32 %v4962, 4294901760
    %v5764 = vsub.f32 %v4962, %v5763
    %5765 = vmatmul.mubr.f32.gmra.mrb[0].mxu0 %v5764
    %v5766 = vpop.f32.mrb[0].mxu0
    %v5767 = vadd.f32 %v5518, %v5766
    %v5768 = vpop.f32.mrb[0].mxu0
    %5769 = vmatprep.mubr.f32.mxu0 0.0
    %v5770 = vand.u32 %v4965, 4294901760
    %v5771 = vsub.f32 %v4965, %v5770
    %5772 = vmatmul.mubr.f32.gmra.mrb[0].mxu0 %v5771
    %v5773 = vpop.f32.mrb[0].mxu0
    %v5774 = vadd.f32 %v5524, %v5773
    %v5775 = vpop.f32.mrb[0].mxu0
    %5776 = vmatprep.mubr.f32.mxu0 0.0
    %v5777 = vand.u32 %v4968, 4294901760
    %v5778 = vsub.f32 %v4968, %v5777
    %5779 = vmatmul.mubr.f32.gmra.mrb[0].mxu0 %v5778
    %v5780 = vpop.f32.mrb[0].mxu0
    %v5781 = vadd.f32 %v5530, %v5780
    %v5782 = vpop.f32.mrb[0].mxu0
    %5783 = vmatprep.mubr.f32.mxu0 0.0
    %v5784 = vand.u32 %v4971, 4294901760
    %v5785 = vsub.f32 %v4971, %v5784
    %5786 = vmatmul.mubr.f32.gmra.mrb[0].mxu0 %v5785
    %v5787 = vpop.f32.mrb[0].mxu0
    %v5788 = vadd.f32 %v5536, %v5787
    %v5789 = vpop.f32.mrb[0].mxu0
    %5790 = vmatprep.mubr.f32.mxu0 0.0
    %v5791 = vand.u32 %v4974, 4294901760
    %v5792 = vsub.f32 %v4974, %v5791
    %5793 = vmatmul.mubr.f32.gmra.mrb[0].mxu0 %v5792
    %v5794 = vpop.f32.mrb[0].mxu0
    %v5795 = vadd.f32 %v5542, %v5794
    %v5796 = vpop.f32.mrb[0].mxu0
    %5797 = vmatprep.mubr.f32.mxu0 0.0
    %v5798 = vand.u32 %v4977, 4294901760
    %v5799 = vsub.f32 %v4977, %v5798
    %5800 = vmatmul.mubr.f32.gmra.mrb[0].mxu0 %v5799
    %v5801 = vpop.f32.mrb[0].mxu0
    %v5802 = vadd.f32 %v5548, %v5801
    %v5803 = vpop.f32.mrb[0].mxu0
    %5804 = vmatprep.mubr.f32.mxu0 0.0
    %v5805 = vand.u32 %v4980, 4294901760
    %v5806 = vsub.f32 %v4980, %v5805
    %5807 = vmatmul.mubr.f32.gmra.mrb[0].mxu0 %v5806
    %v5808 = vpop.f32.mrb[0].mxu0
    %v5809 = vadd.f32 %v5554, %v5808
    %v5810 = vpop.f32.mrb[0].mxu0
    %5811 = vmatprep.mubr.f32.mxu0 0.0
    %v5812 = vand.u32 %v4983, 4294901760
    %v5813 = vsub.f32 %v4983, %v5812
    %5814 = vmatmul.mubr.f32.gmra.mrb[0].mxu0 %v5813
    %v5815 = vpop.f32.mrb[0].mxu0
    %v5816 = vadd.f32 %v5560, %v5815
    %v5817 = vpop.f32.mrb[0].mxu0
    %5818 = vmatprep.mubr.f32.mxu0 0.0
    %v5819 = vand.u32 %v4986, 4294901760
    %v5820 = vsub.f32 %v4986, %v5819
    %5821 = vmatmul.mubr.f32.gmra.mrb[0].mxu0 %v5820
    %v5822 = vpop.f32.mrb[0].mxu0
    %v5823 = vadd.f32 %v5566, %v5822
    %v5824 = vpop.f32.mrb[0].mxu0
    %5825 = vmatprep.mubr.f32.mxu0 0.0
    %v5826 = vand.u32 %v4989, 4294901760
    %v5827 = vsub.f32 %v4989, %v5826
    %5828 = vmatmul.mubr.f32.gmra.mrb[0].mxu0 %v5827
    %v5829 = vpop.f32.mrb[0].mxu0
    %v5830 = vadd.f32 %v5572, %v5829
    %v5831 = vpop.f32.mrb[0].mxu0
    %5832 = vmatprep.mubr.f32.mxu0 0.0
    %v5833 = vand.u32 %v4992, 4294901760
    %v5834 = vsub.f32 %v4992, %v5833
    %5835 = vmatmul.mubr.f32.gmra.mrb[0].mxu0 %v5834
    %v5836 = vpop.f32.mrb[0].mxu0
    %v5837 = vadd.f32 %v5578, %v5836
    %v5838 = vpop.f32.mrb[0].mxu0
    %5839 = vmatprep.mubr.f32.mxu0 0.0
    %v5840 = vand.u32 %v4995, 4294901760
    %v5841 = vsub.f32 %v4995, %v5840
    %5842 = vmatmul.mubr.f32.gmra.mrb[0].mxu0 %v5841
    %v5843 = vpop.f32.mrb[0].mxu0
    %v5844 = vadd.f32 %v5584, %v5843
    %v5845 = vpop.f32.mrb[0].mxu0
    %5846 = vmatprep.mubr.f32.mxu0 0.0
    %v5847 = vand.u32 %v4998, 4294901760
    %v5848 = vsub.f32 %v4998, %v5847
    %5849 = vmatmul.mubr.f32.gmra.mrb[0].mxu0 %v5848
    %v5850 = vpop.f32.mrb[0].mxu0
    %v5851 = vadd.f32 %v5590, %v5850
    %v5852 = vpop.f32.mrb[0].mxu0
    %5853 = vmatprep.mubr.f32.mxu0 0.0
    %v5854 = vand.u32 %v5001, 4294901760
    %v5855 = vsub.f32 %v5001, %v5854
    %5856 = vmatmul.mubr.f32.gmra.mrb[0].mxu0 %v5855
    %v5857 = vpop.f32.mrb[0].mxu0
    %v5858 = vadd.f32 %v5596, %v5857
    %v5859 = vpop.f32.mrb[0].mxu0
    %5860 = vmatprep.mubr.f32.mxu0 0.0
    %v5861 = vand.u32 %v5004, 4294901760
    %v5862 = vsub.f32 %v5004, %v5861
    %5863 = vmatmul.mubr.f32.gmra.mrb[0].mxu0 %v5862
    %v5864 = vpop.f32.mrb[0].mxu0
    %v5865 = vadd.f32 %v5602, %v5864
    %v5866 = vpop.f32.mrb[0].mxu0
    %5867 = vmatprep.mubr.f32.mxu0 0.0
    %v5868 = vand.u32 %v5007, 4294901760
    %v5869 = vsub.f32 %v5007, %v5868
    %5870 = vmatmul.mubr.f32.gmra.mrb[0].mxu0 %v5869
    %v5871 = vpop.f32.mrb[0].mxu0
    %v5872 = vadd.f32 %v5608, %v5871
    %v5873 = vpop.f32.mrb[0].mxu0
    %5874 = vmatprep.mubr.f32.mxu0 0.0
    %v5875 = vand.u32 %v5010, 4294901760
    %v5876 = vsub.f32 %v5010, %v5875
    %5877 = vmatmul.mubr.f32.gmra.mrb[0].mxu0 %v5876
    %v5878 = vpop.f32.mrb[0].mxu0
    %v5879 = vadd.f32 %v5614, %v5878
    %v5880 = vpop.f32.mrb[0].mxu0
    %5881 = vmatprep.mubr.f32.mxu0 0.0
    %v5882 = vand.u32 %v5013, 4294901760
    %v5883 = vsub.f32 %v5013, %v5882
    %5884 = vmatmul.mubr.f32.gmra.mrb[0].mxu0 %v5883
    %v5885 = vpop.f32.mrb[0].mxu0
    %v5886 = vadd.f32 %v5620, %v5885
    %v5887 = vpop.f32.mrb[0].mxu0
    %5888 = vmatprep.mubr.f32.mxu0 0.0
    %v5889 = vand.u32 %v5016, 4294901760
    %v5890 = vsub.f32 %v5016, %v5889
    %5891 = vmatmul.mubr.f32.gmra.mrb[0].mxu0 %v5890
    %v5892 = vpop.f32.mrb[0].mxu0
    %v5893 = vadd.f32 %v5626, %v5892
    %v5894 = vpop.f32.mrb[0].mxu0
    %5895 = vmatprep.mubr.f32.mxu0 0.0
    %v5896 = vand.u32 %v5019, 4294901760
    %v5897 = vsub.f32 %v5019, %v5896
    %5898 = vmatmul.mubr.f32.gmra.mrb[0].mxu0 %v5897
    %v5899 = vpop.f32.mrb[0].mxu0
    %v5900 = vadd.f32 %v5632, %v5899
    %v5901 = vpop.f32.mrb[0].mxu0
    %5902 = vmatprep.mubr.f32.mxu0 0.0
    %v5903 = vand.u32 %v5022, 4294901760
    %v5904 = vsub.f32 %v5022, %v5903
    %5905 = vmatmul.mubr.f32.gmra.mrb[0].mxu0 %v5904
    %v5906 = vpop.f32.mrb[0].mxu0
    %v5907 = vadd.f32 %v5638, %v5906
    %v5908 = vpop.f32.mrb[0].mxu0
    %5909 = vmatprep.mubr.f32.mxu0 0.0
    %v5910 = vand.u32 %v5025, 4294901760
    %v5911 = vsub.f32 %v5025, %v5910
    %5912 = vmatmul.mubr.f32.gmra.mrb[0].mxu0 %v5911
    %v5913 = vpop.f32.mrb[0].mxu0
    %v5914 = vadd.f32 %v5644, %v5913
    %v5915 = vpop.f32.mrb[0].mxu0
    %5916 = vdwg.mxu0
    %5917 = vmatprep.subr.mxu0 0.0
    %v5918 = vand.u32 %v4761, 4294901760
    %5919 = vmatpush1.msra.mxu0 %v5918
    %5920 = vmatprep.subr.mxu0 0.0
    %v5921 = vand.u32 %v4762, 4294901760
    %5922 = vmatpush1.msra.mxu0 %v5921
    %5923 = vmatprep.subr.mxu0 0.0
    %v5924 = vand.u32 %v4763, 4294901760
    %5925 = vmatpush1.msra.mxu0 %v5924
    %5926 = vmatprep.subr.mxu0 0.0
    %v5927 = vand.u32 %v4764, 4294901760
    %5928 = vmatpush1.msra.mxu0 %v5927
    %5929 = vmatprep.subr.mxu0 0.0
    %v5930 = vand.u32 %v4765, 4294901760
    %5931 = vmatpush1.msra.mxu0 %v5930
    %5932 = vmatprep.subr.mxu0 0.0
    %v5933 = vand.u32 %v4766, 4294901760
    %5934 = vmatpush1.msra.mxu0 %v5933
    %5935 = vmatprep.subr.mxu0 0.0
    %v5936 = vand.u32 %v4767, 4294901760
    %5937 = vmatpush1.msra.mxu0 %v5936
    %5938 = vmatprep.subr.mxu0 0.0
    %v5939 = vand.u32 %v4768, 4294901760
    %5940 = vmatpush1.msra.mxu0 %v5939
    %5941 = vmatprep.subr.mxu0 0.0
    %v5942 = vand.u32 %v4769, 4294901760
    %5943 = vmatpush1.msra.mxu0 %v5942
    %5944 = vmatprep.subr.mxu0 0.0
    %v5945 = vand.u32 %v4770, 4294901760
    %5946 = vmatpush1.msra.mxu0 %v5945
    %5947 = vmatprep.subr.mxu0 0.0
    %v5948 = vand.u32 %v4771, 4294901760
    %5949 = vmatpush1.msra.mxu0 %v5948
    %5950 = vmatprep.subr.mxu0 0.0
    %v5951 = vand.u32 %v4772, 4294901760
    %5952 = vmatpush1.msra.mxu0 %v5951
    %5953 = vmatprep.subr.mxu0 0.0
    %v5954 = vand.u32 %v4773, 4294901760
    %5955 = vmatpush1.msra.mxu0 %v5954
    %5956 = vmatprep.subr.mxu0 0.0
    %v5957 = vand.u32 %v4774, 4294901760
    %5958 = vmatpush1.msra.mxu0 %v5957
    %5959 = vmatprep.subr.mxu0 0.0
    %v5960 = vand.u32 %v4775, 4294901760
    %5961 = vmatpush1.msra.mxu0 %v5960
    %5962 = vmatprep.subr.mxu0 0.0
    %5963 = vmatpush1.msra.mxu0 0.0
    %5964 = vmatprep.subr.mxu0 0.0
    %5965 = vmatpush1.msra.mxu0 0.0
    %5966 = vmatprep.subr.mxu0 0.0
    %5967 = vmatpush1.msra.mxu0 0.0
    %5968 = vmatprep.subr.mxu0 0.0
    %5969 = vmatpush1.msra.mxu0 0.0
    %5970 = vmatprep.subr.mxu0 0.0
    %5971 = vmatpush1.msra.mxu0 0.0
    %5972 = vmatprep.subr.mxu0 0.0
    %5973 = vmatpush1.msra.mxu0 0.0
    %5974 = vmatprep.subr.mxu0 0.0
    %5975 = vmatpush1.msra.mxu0 0.0
    %5976 = vmatprep.subr.mxu0 0.0
    %5977 = vmatpush1.msra.mxu0 0.0
    %5978 = vmatprep.subr.mxu0 0.0
    %5979 = vmatpush1.msra.mxu0 0.0
    %5980 = vmatprep.subr.mxu0 0.0
    %5981 = vmatpush1.msra.mxu0 0.0
    %5982 = vmatprep.subr.mxu0 0.0
    %5983 = vmatpush1.msra.mxu0 0.0
    %5984 = vmatprep.subr.mxu0 0.0
    %5985 = vmatpush1.msra.mxu0 0.0
    %5986 = vmatprep.subr.mxu0 0.0
    %5987 = vmatpush1.msra.mxu0 0.0
    %5988 = vmatprep.subr.mxu0 0.0
    %5989 = vmatpush1.msra.mxu0 0.0
    %5990 = vmatprep.subr.mxu0 0.0
    %5991 = vmatpush1.msra.mxu0 0.0
    %5992 = vmatprep.subr.mxu0 0.0
    %5993 = vmatpush1.msra.mxu0 0.0
    %5994 = vmatprep.subr.mxu0 0.0
    %5995 = vmatpush1.msra.mxu0 0.0
    %5996 = vmatprep.mubr.f32.mxu0 0.0
    %v5997 = vand.u32 %v4953, 4294901760
    %v5998 = vsub.f32 %v4953, %v5997
    %v5999 = vand.u32 %v5998, 4294901760
    %6000 = vmatmul.mubr.f32.gmra.mrb[0].mxu0 %v5999
    %v6001 = vpop.f32.mrb[0].mxu0
    %v6002 = vadd.f32 %v5746, %v6001
    %v6003 = vpop.f32.mrb[0].mxu0
    %6004 = vmatprep.mubr.f32.mxu0 0.0
    %v6005 = vand.u32 %v4956, 4294901760
    %v6006 = vsub.f32 %v4956, %v6005
    %v6007 = vand.u32 %v6006, 4294901760
    %6008 = vmatmul.mubr.f32.gmra.mrb[0].mxu0 %v6007
    %v6009 = vpop.f32.mrb[0].mxu0
    %v6010 = vadd.f32 %v5753, %v6009
    %v6011 = vpop.f32.mrb[0].mxu0
    %6012 = vmatprep.mubr.f32.mxu0 0.0
    %v6013 = vand.u32 %v4959, 4294901760
    %v6014 = vsub.f32 %v4959, %v6013
    %v6015 = vand.u32 %v6014, 4294901760
    %6016 = vmatmul.mubr.f32.gmra.mrb[0].mxu0 %v6015
    %v6017 = vpop.f32.mrb[0].mxu0
    %v6018 = vadd.f32 %v5760, %v6017
    %v6019 = vpop.f32.mrb[0].mxu0
    %6020 = vmatprep.mubr.f32.mxu0 0.0
    %v6021 = vand.u32 %v4962, 4294901760
    %v6022 = vsub.f32 %v4962, %v6021
    %v6023 = vand.u32 %v6022, 4294901760
    %6024 = vmatmul.mubr.f32.gmra.mrb[0].mxu0 %v6023
    %v6025 = vpop.f32.mrb[0].mxu0
    %v6026 = vadd.f32 %v5767, %v6025
    %v6027 = vpop.f32.mrb[0].mxu0
    %6028 = vmatprep.mubr.f32.mxu0 0.0
    %v6029 = vand.u32 %v4965, 4294901760
    %v6030 = vsub.f32 %v4965, %v6029
    %v6031 = vand.u32 %v6030, 4294901760
    %6032 = vmatmul.mubr.f32.gmra.mrb[0].mxu0 %v6031
    %v6033 = vpop.f32.mrb[0].mxu0
    %v6034 = vadd.f32 %v5774, %v6033
    %v6035 = vpop.f32.mrb[0].mxu0
    %6036 = vmatprep.mubr.f32.mxu0 0.0
    %v6037 = vand.u32 %v4968, 4294901760
    %v6038 = vsub.f32 %v4968, %v6037
    %v6039 = vand.u32 %v6038, 4294901760
    %6040 = vmatmul.mubr.f32.gmra.mrb[0].mxu0 %v6039
    %v6041 = vpop.f32.mrb[0].mxu0
    %v6042 = vadd.f32 %v5781, %v6041
    %v6043 = vpop.f32.mrb[0].mxu0
    %6044 = vmatprep.mubr.f32.mxu0 0.0
    %v6045 = vand.u32 %v4971, 4294901760
    %v6046 = vsub.f32 %v4971, %v6045
    %v6047 = vand.u32 %v6046, 4294901760
    %6048 = vmatmul.mubr.f32.gmra.mrb[0].mxu0 %v6047
    %v6049 = vpop.f32.mrb[0].mxu0
    %v6050 = vadd.f32 %v5788, %v6049
    %v6051 = vpop.f32.mrb[0].mxu0
    %6052 = vmatprep.mubr.f32.mxu0 0.0
    %v6053 = vand.u32 %v4974, 4294901760
    %v6054 = vsub.f32 %v4974, %v6053
    %v6055 = vand.u32 %v6054, 4294901760
    %6056 = vmatmul.mubr.f32.gmra.mrb[0].mxu0 %v6055
    %v6057 = vpop.f32.mrb[0].mxu0
    %v6058 = vadd.f32 %v5795, %v6057
    %v6059 = vpop.f32.mrb[0].mxu0
    %6060 = vmatprep.mubr.f32.mxu0 0.0
    %v6061 = vand.u32 %v4977, 4294901760
    %v6062 = vsub.f32 %v4977, %v6061
    %v6063 = vand.u32 %v6062, 4294901760
    %6064 = vmatmul.mubr.f32.gmra.mrb[0].mxu0 %v6063
    %v6065 = vpop.f32.mrb[0].mxu0
    %v6066 = vadd.f32 %v5802, %v6065
    %v6067 = vpop.f32.mrb[0].mxu0
    %6068 = vmatprep.mubr.f32.mxu0 0.0
    %v6069 = vand.u32 %v4980, 4294901760
    %v6070 = vsub.f32 %v4980, %v6069
    %v6071 = vand.u32 %v6070, 4294901760
    %6072 = vmatmul.mubr.f32.gmra.mrb[0].mxu0 %v6071
    %v6073 = vpop.f32.mrb[0].mxu0
    %v6074 = vadd.f32 %v5809, %v6073
    %v6075 = vpop.f32.mrb[0].mxu0
    %6076 = vmatprep.mubr.f32.mxu0 0.0
    %v6077 = vand.u32 %v4983, 4294901760
    %v6078 = vsub.f32 %v4983, %v6077
    %v6079 = vand.u32 %v6078, 4294901760
    %6080 = vmatmul.mubr.f32.gmra.mrb[0].mxu0 %v6079
    %v6081 = vpop.f32.mrb[0].mxu0
    %v6082 = vadd.f32 %v5816, %v6081
    %v6083 = vpop.f32.mrb[0].mxu0
    %6084 = vmatprep.mubr.f32.mxu0 0.0
    %v6085 = vand.u32 %v4986, 4294901760
    %v6086 = vsub.f32 %v4986, %v6085
    %v6087 = vand.u32 %v6086, 4294901760
    %6088 = vmatmul.mubr.f32.gmra.mrb[0].mxu0 %v6087
    %v6089 = vpop.f32.mrb[0].mxu0
    %v6090 = vadd.f32 %v5823, %v6089
    %v6091 = vpop.f32.mrb[0].mxu0
    %6092 = vmatprep.mubr.f32.mxu0 0.0
    %v6093 = vand.u32 %v4989, 4294901760
    %v6094 = vsub.f32 %v4989, %v6093
    %v6095 = vand.u32 %v6094, 4294901760
    %6096 = vmatmul.mubr.f32.gmra.mrb[0].mxu0 %v6095
    %v6097 = vpop.f32.mrb[0].mxu0
    %v6098 = vadd.f32 %v5830, %v6097
    %v6099 = vpop.f32.mrb[0].mxu0
    %6100 = vmatprep.mubr.f32.mxu0 0.0
    %v6101 = vand.u32 %v4992, 4294901760
    %v6102 = vsub.f32 %v4992, %v6101
    %v6103 = vand.u32 %v6102, 4294901760
    %6104 = vmatmul.mubr.f32.gmra.mrb[0].mxu0 %v6103
    %v6105 = vpop.f32.mrb[0].mxu0
    %v6106 = vadd.f32 %v5837, %v6105
    %v6107 = vpop.f32.mrb[0].mxu0
    %6108 = vmatprep.mubr.f32.mxu0 0.0
    %v6109 = vand.u32 %v4995, 4294901760
    %v6110 = vsub.f32 %v4995, %v6109
    %v6111 = vand.u32 %v6110, 4294901760
    %6112 = vmatmul.mubr.f32.gmra.mrb[0].mxu0 %v6111
    %v6113 = vpop.f32.mrb[0].mxu0
    %v6114 = vadd.f32 %v5844, %v6113
    %v6115 = vpop.f32.mrb[0].mxu0
    %6116 = vmatprep.mubr.f32.mxu0 0.0
    %v6117 = vand.u32 %v4998, 4294901760
    %v6118 = vsub.f32 %v4998, %v6117
    %v6119 = vand.u32 %v6118, 4294901760
    %6120 = vmatmul.mubr.f32.gmra.mrb[0].mxu0 %v6119
    %v6121 = vpop.f32.mrb[0].mxu0
    %v6122 = vadd.f32 %v5851, %v6121
    %v6123 = vpop.f32.mrb[0].mxu0
    %6124 = vmatprep.mubr.f32.mxu0 0.0
    %v6125 = vand.u32 %v5001, 4294901760
    %v6126 = vsub.f32 %v5001, %v6125
    %v6127 = vand.u32 %v6126, 4294901760
    %6128 = vmatmul.mubr.f32.gmra.mrb[0].mxu0 %v6127
    %v6129 = vpop.f32.mrb[0].mxu0
    %v6130 = vadd.f32 %v5858, %v6129
    %v6131 = vpop.f32.mrb[0].mxu0
    %6132 = vmatprep.mubr.f32.mxu0 0.0
    %v6133 = vand.u32 %v5004, 4294901760
    %v6134 = vsub.f32 %v5004, %v6133
    %v6135 = vand.u32 %v6134, 4294901760
    %6136 = vmatmul.mubr.f32.gmra.mrb[0].mxu0 %v6135
    %v6137 = vpop.f32.mrb[0].mxu0
    %v6138 = vadd.f32 %v5865, %v6137
    %v6139 = vpop.f32.mrb[0].mxu0
    %6140 = vmatprep.mubr.f32.mxu0 0.0
    %v6141 = vand.u32 %v5007, 4294901760
    %v6142 = vsub.f32 %v5007, %v6141
    %v6143 = vand.u32 %v6142, 4294901760
    %6144 = vmatmul.mubr.f32.gmra.mrb[0].mxu0 %v6143
    %v6145 = vpop.f32.mrb[0].mxu0
    %v6146 = vadd.f32 %v5872, %v6145
    %v6147 = vpop.f32.mrb[0].mxu0
    %6148 = vmatprep.mubr.f32.mxu0 0.0
    %v6149 = vand.u32 %v5010, 4294901760
    %v6150 = vsub.f32 %v5010, %v6149
    %v6151 = vand.u32 %v6150, 4294901760
    %6152 = vmatmul.mubr.f32.gmra.mrb[0].mxu0 %v6151
    %v6153 = vpop.f32.mrb[0].mxu0
    %v6154 = vadd.f32 %v5879, %v6153
    %v6155 = vpop.f32.mrb[0].mxu0
    %6156 = vmatprep.mubr.f32.mxu0 0.0
    %v6157 = vand.u32 %v5013, 4294901760
    %v6158 = vsub.f32 %v5013, %v6157
    %v6159 = vand.u32 %v6158, 4294901760
    %6160 = vmatmul.mubr.f32.gmra.mrb[0].mxu0 %v6159
    %v6161 = vpop.f32.mrb[0].mxu0
    %v6162 = vadd.f32 %v5886, %v6161
    %v6163 = vpop.f32.mrb[0].mxu0
    %6164 = vmatprep.mubr.f32.mxu0 0.0
    %v6165 = vand.u32 %v5016, 4294901760
    %v6166 = vsub.f32 %v5016, %v6165
    %v6167 = vand.u32 %v6166, 4294901760
    %6168 = vmatmul.mubr.f32.gmra.mrb[0].mxu0 %v6167
    %v6169 = vpop.f32.mrb[0].mxu0
    %v6170 = vadd.f32 %v5893, %v6169
    %v6171 = vpop.f32.mrb[0].mxu0
    %6172 = vmatprep.mubr.f32.mxu0 0.0
    %v6173 = vand.u32 %v5019, 4294901760
    %v6174 = vsub.f32 %v5019, %v6173
    %v6175 = vand.u32 %v6174, 4294901760
    %6176 = vmatmul.mubr.f32.gmra.mrb[0].mxu0 %v6175
    %v6177 = vpop.f32.mrb[0].mxu0
    %v6178 = vadd.f32 %v5900, %v6177
    %v6179 = vpop.f32.mrb[0].mxu0
    %6180 = vmatprep.mubr.f32.mxu0 0.0
    %v6181 = vand.u32 %v5022, 4294901760
    %v6182 = vsub.f32 %v5022, %v6181
    %v6183 = vand.u32 %v6182, 4294901760
    %6184 = vmatmul.mubr.f32.gmra.mrb[0].mxu0 %v6183
    %v6185 = vpop.f32.mrb[0].mxu0
    %v6186 = vadd.f32 %v5907, %v6185
    %v6187 = vpop.f32.mrb[0].mxu0
    %6188 = vmatprep.mubr.f32.mxu0 0.0
    %v6189 = vand.u32 %v5025, 4294901760
    %v6190 = vsub.f32 %v5025, %v6189
    %v6191 = vand.u32 %v6190, 4294901760
    %6192 = vmatmul.mubr.f32.gmra.mrb[0].mxu0 %v6191
    %v6193 = vpop.f32.mrb[0].mxu0
    %v6194 = vadd.f32 %v5914, %v6193
    %v6195 = vpop.f32.mrb[0].mxu0
    %6196 = vdwg.mxu0
    %6197 = vmatprep.subr.mxu0 0.0
    %v6198 = vand.u32 %v4761, 4294901760
    %v6199 = vsub.f32 %v4761, %v6198
    %v6200 = vand.u32 %v6199, 4294901760
    %6201 = vmatpush1.msra.mxu0 %v6200
    %6202 = vmatprep.subr.mxu0 0.0
    %v6203 = vand.u32 %v4762, 4294901760
    %v6204 = vsub.f32 %v4762, %v6203
    %v6205 = vand.u32 %v6204, 4294901760
    %6206 = vmatpush1.msra.mxu0 %v6205
    %6207 = vmatprep.subr.mxu0 0.0
    %v6208 = vand.u32 %v4763, 4294901760
    %v6209 = vsub.f32 %v4763, %v6208
    %v6210 = vand.u32 %v6209, 4294901760
    %6211 = vmatpush1.msra.mxu0 %v6210
    %6212 = vmatprep.subr.mxu0 0.0
    %v6213 = vand.u32 %v4764, 4294901760
    %v6214 = vsub.f32 %v4764, %v6213
    %v6215 = vand.u32 %v6214, 4294901760
    %6216 = vmatpush1.msra.mxu0 %v6215
    %6217 = vmatprep.subr.mxu0 0.0
    %v6218 = vand.u32 %v4765, 4294901760
    %v6219 = vsub.f32 %v4765, %v6218
    %v6220 = vand.u32 %v6219, 4294901760
    %6221 = vmatpush1.msra.mxu0 %v6220
    %6222 = vmatprep.subr.mxu0 0.0
    %v6223 = vand.u32 %v4766, 4294901760
    %v6224 = vsub.f32 %v4766, %v6223
    %v6225 = vand.u32 %v6224, 4294901760
    %6226 = vmatpush1.msra.mxu0 %v6225
    %6227 = vmatprep.subr.mxu0 0.0
    %v6228 = vand.u32 %v4767, 4294901760
    %v6229 = vsub.f32 %v4767, %v6228
    %v6230 = vand.u32 %v6229, 4294901760
    %6231 = vmatpush1.msra.mxu0 %v6230
    %6232 = vmatprep.subr.mxu0 0.0
    %v6233 = vand.u32 %v4768, 4294901760
    %v6234 = vsub.f32 %v4768, %v6233
    %v6235 = vand.u32 %v6234, 4294901760
    %6236 = vmatpush1.msra.mxu0 %v6235
    %6237 = vmatprep.subr.mxu0 0.0
    %v6238 = vand.u32 %v4769, 4294901760
    %v6239 = vsub.f32 %v4769, %v6238
    %v6240 = vand.u32 %v6239, 4294901760
    %6241 = vmatpush1.msra.mxu0 %v6240
    %6242 = vmatprep.subr.mxu0 0.0
    %v6243 = vand.u32 %v4770, 4294901760
    %v6244 = vsub.f32 %v4770, %v6243
    %v6245 = vand.u32 %v6244, 4294901760
    %6246 = vmatpush1.msra.mxu0 %v6245
    %6247 = vmatprep.subr.mxu0 0.0
    %v6248 = vand.u32 %v4771, 4294901760
    %v6249 = vsub.f32 %v4771, %v6248
    %v6250 = vand.u32 %v6249, 4294901760
    %6251 = vmatpush1.msra.mxu0 %v6250
    %6252 = vmatprep.subr.mxu0 0.0
    %v6253 = vand.u32 %v4772, 4294901760
    %v6254 = vsub.f32 %v4772, %v6253
    %v6255 = vand.u32 %v6254, 4294901760
    %6256 = vmatpush1.msra.mxu0 %v6255
    %6257 = vmatprep.subr.mxu0 0.0
    %v6258 = vand.u32 %v4773, 4294901760
    %v6259 = vsub.f32 %v4773, %v6258
    %v6260 = vand.u32 %v6259, 4294901760
    %6261 = vmatpush1.msra.mxu0 %v6260
    %6262 = vmatprep.subr.mxu0 0.0
    %v6263 = vand.u32 %v4774, 4294901760
    %v6264 = vsub.f32 %v4774, %v6263
    %v6265 = vand.u32 %v6264, 4294901760
    %6266 = vmatpush1.msra.mxu0 %v6265
    %6267 = vmatprep.subr.mxu0 0.0
    %v6268 = vand.u32 %v4775, 4294901760
    %v6269 = vsub.f32 %v4775, %v6268
    %v6270 = vand.u32 %v6269, 4294901760
    %6271 = vmatpush1.msra.mxu0 %v6270
    %6272 = vmatprep.subr.mxu0 0.0
    %6273 = vmatpush1.msra.mxu0 0.0
    %6274 = vmatprep.subr.mxu0 0.0
    %6275 = vmatpush1.msra.mxu0 0.0
    %6276 = vmatprep.subr.mxu0 0.0
    %6277 = vmatpush1.msra.mxu0 0.0
    %6278 = vmatprep.subr.mxu0 0.0
    %6279 = vmatpush1.msra.mxu0 0.0
    %6280 = vmatprep.subr.mxu0 0.0
    %6281 = vmatpush1.msra.mxu0 0.0
    %6282 = vmatprep.subr.mxu0 0.0
    %6283 = vmatpush1.msra.mxu0 0.0
    %6284 = vmatprep.subr.mxu0 0.0
    %6285 = vmatpush1.msra.mxu0 0.0
    %6286 = vmatprep.subr.mxu0 0.0
    %6287 = vmatpush1.msra.mxu0 0.0
    %6288 = vmatprep.subr.mxu0 0.0
    %6289 = vmatpush1.msra.mxu0 0.0
    %6290 = vmatprep.subr.mxu0 0.0
    %6291 = vmatpush1.msra.mxu0 0.0
    %6292 = vmatprep.subr.mxu0 0.0
    %6293 = vmatpush1.msra.mxu0 0.0
    %6294 = vmatprep.subr.mxu0 0.0
    %6295 = vmatpush1.msra.mxu0 0.0
    %6296 = vmatprep.subr.mxu0 0.0
    %6297 = vmatpush1.msra.mxu0 0.0
    %6298 = vmatprep.subr.mxu0 0.0
    %6299 = vmatpush1.msra.mxu0 0.0
    %6300 = vmatprep.subr.mxu0 0.0
    %6301 = vmatpush1.msra.mxu0 0.0
    %6302 = vmatprep.subr.mxu0 0.0
    %6303 = vmatpush1.msra.mxu0 0.0
    %6304 = vmatprep.subr.mxu0 0.0
    %6305 = vmatpush1.msra.mxu0 0.0
    %6306 = vmatprep.mubr.f32.mxu0 0.0
    %v6307 = vand.u32 %v4953, 4294901760
    %6308 = vmatmul.mubr.f32.gmra.mrb[0].mxu0 %v6307
    %v6309 = vpop.f32.mrb[0].mxu0
    %v6310 = vadd.f32 %v6002, %v6309
    %v6311 = vpop.f32.mrb[0].mxu0
    %6312 = vmatprep.mubr.f32.mxu0 0.0
    %v6313 = vand.u32 %v4956, 4294901760
    %6314 = vmatmul.mubr.f32.gmra.mrb[0].mxu0 %v6313
    %v6315 = vpop.f32.mrb[0].mxu0
    %v6316 = vadd.f32 %v6010, %v6315
    %v6317 = vpop.f32.mrb[0].mxu0
    %6318 = vmatprep.mubr.f32.mxu0 0.0
    %v6319 = vand.u32 %v4959, 4294901760
    %6320 = vmatmul.mubr.f32.gmra.mrb[0].mxu0 %v6319
    %v6321 = vpop.f32.mrb[0].mxu0
    %v6322 = vadd.f32 %v6018, %v6321
    %v6323 = vpop.f32.mrb[0].mxu0
    %6324 = vmatprep.mubr.f32.mxu0 0.0
    %v6325 = vand.u32 %v4962, 4294901760
    %6326 = vmatmul.mubr.f32.gmra.mrb[0].mxu0 %v6325
    %v6327 = vpop.f32.mrb[0].mxu0
    %v6328 = vadd.f32 %v6026, %v6327
    %v6329 = vpop.f32.mrb[0].mxu0
    %6330 = vmatprep.mubr.f32.mxu0 0.0
    %v6331 = vand.u32 %v4965, 4294901760
    %6332 = vmatmul.mubr.f32.gmra.mrb[0].mxu0 %v6331
    %v6333 = vpop.f32.mrb[0].mxu0
    %v6334 = vadd.f32 %v6034, %v6333
    %v6335 = vpop.f32.mrb[0].mxu0
    %6336 = vmatprep.mubr.f32.mxu0 0.0
    %v6337 = vand.u32 %v4968, 4294901760
    %6338 = vmatmul.mubr.f32.gmra.mrb[0].mxu0 %v6337
    %v6339 = vpop.f32.mrb[0].mxu0
    %v6340 = vadd.f32 %v6042, %v6339
    %v6341 = vpop.f32.mrb[0].mxu0
    %6342 = vmatprep.mubr.f32.mxu0 0.0
    %v6343 = vand.u32 %v4971, 4294901760
    %6344 = vmatmul.mubr.f32.gmra.mrb[0].mxu0 %v6343
    %v6345 = vpop.f32.mrb[0].mxu0
    %v6346 = vadd.f32 %v6050, %v6345
    %v6347 = vpop.f32.mrb[0].mxu0
    %6348 = vmatprep.mubr.f32.mxu0 0.0
    %v6349 = vand.u32 %v4974, 4294901760
    %6350 = vmatmul.mubr.f32.gmra.mrb[0].mxu0 %v6349
    %v6351 = vpop.f32.mrb[0].mxu0
    %v6352 = vadd.f32 %v6058, %v6351
    %v6353 = vpop.f32.mrb[0].mxu0
    %6354 = vmatprep.mubr.f32.mxu0 0.0
    %v6355 = vand.u32 %v4977, 4294901760
    %6356 = vmatmul.mubr.f32.gmra.mrb[0].mxu0 %v6355
    %v6357 = vpop.f32.mrb[0].mxu0
    %v6358 = vadd.f32 %v6066, %v6357
    %v6359 = vpop.f32.mrb[0].mxu0
    %6360 = vmatprep.mubr.f32.mxu0 0.0
    %v6361 = vand.u32 %v4980, 4294901760
    %6362 = vmatmul.mubr.f32.gmra.mrb[0].mxu0 %v6361
    %v6363 = vpop.f32.mrb[0].mxu0
    %v6364 = vadd.f32 %v6074, %v6363
    %v6365 = vpop.f32.mrb[0].mxu0
    %6366 = vmatprep.mubr.f32.mxu0 0.0
    %v6367 = vand.u32 %v4983, 4294901760
    %6368 = vmatmul.mubr.f32.gmra.mrb[0].mxu0 %v6367
    %v6369 = vpop.f32.mrb[0].mxu0
    %v6370 = vadd.f32 %v6082, %v6369
    %v6371 = vpop.f32.mrb[0].mxu0
    %6372 = vmatprep.mubr.f32.mxu0 0.0
    %v6373 = vand.u32 %v4986, 4294901760
    %6374 = vmatmul.mubr.f32.gmra.mrb[0].mxu0 %v6373
    %v6375 = vpop.f32.mrb[0].mxu0
    %v6376 = vadd.f32 %v6090, %v6375
    %v6377 = vpop.f32.mrb[0].mxu0
    %6378 = vmatprep.mubr.f32.mxu0 0.0
    %v6379 = vand.u32 %v4989, 4294901760
    %6380 = vmatmul.mubr.f32.gmra.mrb[0].mxu0 %v6379
    %v6381 = vpop.f32.mrb[0].mxu0
    %v6382 = vadd.f32 %v6098, %v6381
    %v6383 = vpop.f32.mrb[0].mxu0
    %6384 = vmatprep.mubr.f32.mxu0 0.0
    %v6385 = vand.u32 %v4992, 4294901760
    %6386 = vmatmul.mubr.f32.gmra.mrb[0].mxu0 %v6385
    %v6387 = vpop.f32.mrb[0].mxu0
    %v6388 = vadd.f32 %v6106, %v6387
    %v6389 = vpop.f32.mrb[0].mxu0
    %6390 = vmatprep.mubr.f32.mxu0 0.0
    %v6391 = vand.u32 %v4995, 4294901760
    %6392 = vmatmul.mubr.f32.gmra.mrb[0].mxu0 %v6391
    %v6393 = vpop.f32.mrb[0].mxu0
    %v6394 = vadd.f32 %v6114, %v6393
    %v6395 = vpop.f32.mrb[0].mxu0
    %6396 = vmatprep.mubr.f32.mxu0 0.0
    %v6397 = vand.u32 %v4998, 4294901760
    %6398 = vmatmul.mubr.f32.gmra.mrb[0].mxu0 %v6397
    %v6399 = vpop.f32.mrb[0].mxu0
    %v6400 = vadd.f32 %v6122, %v6399
    %v6401 = vpop.f32.mrb[0].mxu0
    %6402 = vmatprep.mubr.f32.mxu0 0.0
    %v6403 = vand.u32 %v5001, 4294901760
    %6404 = vmatmul.mubr.f32.gmra.mrb[0].mxu0 %v6403
    %v6405 = vpop.f32.mrb[0].mxu0
    %v6406 = vadd.f32 %v6130, %v6405
    %v6407 = vpop.f32.mrb[0].mxu0
    %6408 = vmatprep.mubr.f32.mxu0 0.0
    %v6409 = vand.u32 %v5004, 4294901760
    %6410 = vmatmul.mubr.f32.gmra.mrb[0].mxu0 %v6409
    %v6411 = vpop.f32.mrb[0].mxu0
    %v6412 = vadd.f32 %v6138, %v6411
    %v6413 = vpop.f32.mrb[0].mxu0
    %6414 = vmatprep.mubr.f32.mxu0 0.0
    %v6415 = vand.u32 %v5007, 4294901760
    %6416 = vmatmul.mubr.f32.gmra.mrb[0].mxu0 %v6415
    %v6417 = vpop.f32.mrb[0].mxu0
    %v6418 = vadd.f32 %v6146, %v6417
    %v6419 = vpop.f32.mrb[0].mxu0
    %6420 = vmatprep.mubr.f32.mxu0 0.0
    %v6421 = vand.u32 %v5010, 4294901760
    %6422 = vmatmul.mubr.f32.gmra.mrb[0].mxu0 %v6421
    %v6423 = vpop.f32.mrb[0].mxu0
    %v6424 = vadd.f32 %v6154, %v6423
    %v6425 = vpop.f32.mrb[0].mxu0
    %6426 = vmatprep.mubr.f32.mxu0 0.0
    %v6427 = vand.u32 %v5013, 4294901760
    %6428 = vmatmul.mubr.f32.gmra.mrb[0].mxu0 %v6427
    %v6429 = vpop.f32.mrb[0].mxu0
    %v6430 = vadd.f32 %v6162, %v6429
    %v6431 = vpop.f32.mrb[0].mxu0
    %6432 = vmatprep.mubr.f32.mxu0 0.0
    %v6433 = vand.u32 %v5016, 4294901760
    %6434 = vmatmul.mubr.f32.gmra.mrb[0].mxu0 %v6433
    %v6435 = vpop.f32.mrb[0].mxu0
    %v6436 = vadd.f32 %v6170, %v6435
    %v6437 = vpop.f32.mrb[0].mxu0
    %6438 = vmatprep.mubr.f32.mxu0 0.0
    %v6439 = vand.u32 %v5019, 4294901760
    %6440 = vmatmul.mubr.f32.gmra.mrb[0].mxu0 %v6439
    %v6441 = vpop.f32.mrb[0].mxu0
    %v6442 = vadd.f32 %v6178, %v6441
    %v6443 = vpop.f32.mrb[0].mxu0
    %6444 = vmatprep.mubr.f32.mxu0 0.0
    %v6445 = vand.u32 %v5022, 4294901760
    %6446 = vmatmul.mubr.f32.gmra.mrb[0].mxu0 %v6445
    %v6447 = vpop.f32.mrb[0].mxu0
    %v6448 = vadd.f32 %v6186, %v6447
    %v6449 = vpop.f32.mrb[0].mxu0
    %6450 = vmatprep.mubr.f32.mxu0 0.0
    %v6451 = vand.u32 %v5025, 4294901760
    %6452 = vmatmul.mubr.f32.gmra.mrb[0].mxu0 %v6451
    %v6453 = vpop.f32.mrb[0].mxu0
    %v6454 = vadd.f32 %v6194, %v6453
    %v6455 = vpop.f32.mrb[0].mxu0
    %6456 = vdwg.mxu0
    %6457 = vmatprep.subr.mxu0 0.0
    %v6458 = vand.u32 %v4761, 4294901760
    %6459 = vmatpush1.msra.mxu0 %v6458
    %6460 = vmatprep.subr.mxu0 0.0
    %v6461 = vand.u32 %v4762, 4294901760
    %6462 = vmatpush1.msra.mxu0 %v6461
    %6463 = vmatprep.subr.mxu0 0.0
    %v6464 = vand.u32 %v4763, 4294901760
    %6465 = vmatpush1.msra.mxu0 %v6464
    %6466 = vmatprep.subr.mxu0 0.0
    %v6467 = vand.u32 %v4764, 4294901760
    %6468 = vmatpush1.msra.mxu0 %v6467
    %6469 = vmatprep.subr.mxu0 0.0
    %v6470 = vand.u32 %v4765, 4294901760
    %6471 = vmatpush1.msra.mxu0 %v6470
    %6472 = vmatprep.subr.mxu0 0.0
    %v6473 = vand.u32 %v4766, 4294901760
    %6474 = vmatpush1.msra.mxu0 %v6473
    %6475 = vmatprep.subr.mxu0 0.0
    %v6476 = vand.u32 %v4767, 4294901760
    %6477 = vmatpush1.msra.mxu0 %v6476
    %6478 = vmatprep.subr.mxu0 0.0
    %v6479 = vand.u32 %v4768, 4294901760
    %6480 = vmatpush1.msra.mxu0 %v6479
    %6481 = vmatprep.subr.mxu0 0.0
    %v6482 = vand.u32 %v4769, 4294901760
    %6483 = vmatpush1.msra.mxu0 %v6482
    %6484 = vmatprep.subr.mxu0 0.0
    %v6485 = vand.u32 %v4770, 4294901760
    %6486 = vmatpush1.msra.mxu0 %v6485
    %6487 = vmatprep.subr.mxu0 0.0
    %v6488 = vand.u32 %v4771, 4294901760
    %6489 = vmatpush1.msra.mxu0 %v6488
    %6490 = vmatprep.subr.mxu0 0.0
    %v6491 = vand.u32 %v4772, 4294901760
    %6492 = vmatpush1.msra.mxu0 %v6491
    %6493 = vmatprep.subr.mxu0 0.0
    %v6494 = vand.u32 %v4773, 4294901760
    %6495 = vmatpush1.msra.mxu0 %v6494
    %6496 = vmatprep.subr.mxu0 0.0
    %v6497 = vand.u32 %v4774, 4294901760
    %6498 = vmatpush1.msra.mxu0 %v6497
    %6499 = vmatprep.subr.mxu0 0.0
    %v6500 = vand.u32 %v4775, 4294901760
    %6501 = vmatpush1.msra.mxu0 %v6500
    %6502 = vmatprep.subr.mxu0 0.0
    %6503 = vmatpush1.msra.mxu0 0.0
    %6504 = vmatprep.subr.mxu0 0.0
    %6505 = vmatpush1.msra.mxu0 0.0
    %6506 = vmatprep.subr.mxu0 0.0
    %6507 = vmatpush1.msra.mxu0 0.0
    %6508 = vmatprep.subr.mxu0 0.0
    %6509 = vmatpush1.msra.mxu0 0.0
    %6510 = vmatprep.subr.mxu0 0.0
    %6511 = vmatpush1.msra.mxu0 0.0
    %6512 = vmatprep.subr.mxu0 0.0
    %6513 = vmatpush1.msra.mxu0 0.0
    %6514 = vmatprep.subr.mxu0 0.0
    %6515 = vmatpush1.msra.mxu0 0.0
    %6516 = vmatprep.subr.mxu0 0.0
    %6517 = vmatpush1.msra.mxu0 0.0
    %6518 = vmatprep.subr.mxu0 0.0
    %6519 = vmatpush1.msra.mxu0 0.0
    %6520 = vmatprep.subr.mxu0 0.0
    %6521 = vmatpush1.msra.mxu0 0.0
    %6522 = vmatprep.subr.mxu0 0.0
    %6523 = vmatpush1.msra.mxu0 0.0
    %6524 = vmatprep.subr.mxu0 0.0
    %6525 = vmatpush1.msra.mxu0 0.0
    %6526 = vmatprep.subr.mxu0 0.0
    %6527 = vmatpush1.msra.mxu0 0.0
    %6528 = vmatprep.subr.mxu0 0.0
    %6529 = vmatpush1.msra.mxu0 0.0
    %6530 = vmatprep.subr.mxu0 0.0
    %6531 = vmatpush1.msra.mxu0 0.0
    %6532 = vmatprep.subr.mxu0 0.0
    %6533 = vmatpush1.msra.mxu0 0.0
    %6534 = vmatprep.subr.mxu0 0.0
    %6535 = vmatpush1.msra.mxu0 0.0
    %6536 = vmatprep.mubr.f32.mxu0 0.0
    %v6537 = vand.u32 %v4953, 4294901760
    %6538 = vmatmul.mubr.f32.gmra.mrb[0].mxu0 %v6537
    %v6539 = vpop.f32.mrb[0].mxu0
    %v6540 = vadd.f32 %v6310, %v6539
    %v6541 = vpop.f32.mrb[0].mxu0
    %6542 = vmatprep.mubr.f32.mxu0 0.0
    %v6543 = vand.u32 %v4956, 4294901760
    %6544 = vmatmul.mubr.f32.gmra.mrb[0].mxu0 %v6543
    %v6545 = vpop.f32.mrb[0].mxu0
    %v6546 = vadd.f32 %v6316, %v6545
    %v6547 = vpop.f32.mrb[0].mxu0
    %6548 = vmatprep.mubr.f32.mxu0 0.0
    %v6549 = vand.u32 %v4959, 4294901760
    %6550 = vmatmul.mubr.f32.gmra.mrb[0].mxu0 %v6549
    %v6551 = vpop.f32.mrb[0].mxu0
    %v6552 = vadd.f32 %v6322, %v6551
    %v6553 = vpop.f32.mrb[0].mxu0
    %6554 = vmatprep.mubr.f32.mxu0 0.0
    %v6555 = vand.u32 %v4962, 4294901760
    %6556 = vmatmul.mubr.f32.gmra.mrb[0].mxu0 %v6555
    %v6557 = vpop.f32.mrb[0].mxu0
    %v6558 = vadd.f32 %v6328, %v6557
    %v6559 = vpop.f32.mrb[0].mxu0
    %6560 = vmatprep.mubr.f32.mxu0 0.0
    %v6561 = vand.u32 %v4965, 4294901760
    %6562 = vmatmul.mubr.f32.gmra.mrb[0].mxu0 %v6561
    %v6563 = vpop.f32.mrb[0].mxu0
    %v6564 = vadd.f32 %v6334, %v6563
    %v6565 = vpop.f32.mrb[0].mxu0
    %6566 = vmatprep.mubr.f32.mxu0 0.0
    %v6567 = vand.u32 %v4968, 4294901760
    %6568 = vmatmul.mubr.f32.gmra.mrb[0].mxu0 %v6567
    %v6569 = vpop.f32.mrb[0].mxu0
    %v6570 = vadd.f32 %v6340, %v6569
    %v6571 = vpop.f32.mrb[0].mxu0
    %6572 = vmatprep.mubr.f32.mxu0 0.0
    %v6573 = vand.u32 %v4971, 4294901760
    %6574 = vmatmul.mubr.f32.gmra.mrb[0].mxu0 %v6573
    %v6575 = vpop.f32.mrb[0].mxu0
    %v6576 = vadd.f32 %v6346, %v6575
    %v6577 = vpop.f32.mrb[0].mxu0
    %6578 = vmatprep.mubr.f32.mxu0 0.0
    %v6579 = vand.u32 %v4974, 4294901760
    %6580 = vmatmul.mubr.f32.gmra.mrb[0].mxu0 %v6579
    %v6581 = vpop.f32.mrb[0].mxu0
    %v6582 = vadd.f32 %v6352, %v6581
    %v6583 = vpop.f32.mrb[0].mxu0
    %6584 = vmatprep.mubr.f32.mxu0 0.0
    %v6585 = vand.u32 %v4977, 4294901760
    %6586 = vmatmul.mubr.f32.gmra.mrb[0].mxu0 %v6585
    %v6587 = vpop.f32.mrb[0].mxu0
    %v6588 = vadd.f32 %v6358, %v6587
    %v6589 = vpop.f32.mrb[0].mxu0
    %6590 = vmatprep.mubr.f32.mxu0 0.0
    %v6591 = vand.u32 %v4980, 4294901760
    %6592 = vmatmul.mubr.f32.gmra.mrb[0].mxu0 %v6591
    %v6593 = vpop.f32.mrb[0].mxu0
    %v6594 = vadd.f32 %v6364, %v6593
    %v6595 = vpop.f32.mrb[0].mxu0
    %6596 = vmatprep.mubr.f32.mxu0 0.0
    %v6597 = vand.u32 %v4983, 4294901760
    %6598 = vmatmul.mubr.f32.gmra.mrb[0].mxu0 %v6597
    %v6599 = vpop.f32.mrb[0].mxu0
    %v6600 = vadd.f32 %v6370, %v6599
    %v6601 = vpop.f32.mrb[0].mxu0
    %6602 = vmatprep.mubr.f32.mxu0 0.0
    %v6603 = vand.u32 %v4986, 4294901760
    %6604 = vmatmul.mubr.f32.gmra.mrb[0].mxu0 %v6603
    %v6605 = vpop.f32.mrb[0].mxu0
    %v6606 = vadd.f32 %v6376, %v6605
    %v6607 = vpop.f32.mrb[0].mxu0
    %6608 = vmatprep.mubr.f32.mxu0 0.0
    %v6609 = vand.u32 %v4989, 4294901760
    %6610 = vmatmul.mubr.f32.gmra.mrb[0].mxu0 %v6609
    %v6611 = vpop.f32.mrb[0].mxu0
    %v6612 = vadd.f32 %v6382, %v6611
    %v6613 = vpop.f32.mrb[0].mxu0
    %6614 = vmatprep.mubr.f32.mxu0 0.0
    %v6615 = vand.u32 %v4992, 4294901760
    %6616 = vmatmul.mubr.f32.gmra.mrb[0].mxu0 %v6615
    %v6617 = vpop.f32.mrb[0].mxu0
    %v6618 = vadd.f32 %v6388, %v6617
    %v6619 = vpop.f32.mrb[0].mxu0
    %6620 = vmatprep.mubr.f32.mxu0 0.0
    %v6621 = vand.u32 %v4995, 4294901760
    %6622 = vmatmul.mubr.f32.gmra.mrb[0].mxu0 %v6621
    %v6623 = vpop.f32.mrb[0].mxu0
    %v6624 = vadd.f32 %v6394, %v6623
    %v6625 = vpop.f32.mrb[0].mxu0
    %6626 = vmatprep.mubr.f32.mxu0 0.0
    %v6627 = vand.u32 %v4998, 4294901760
    %6628 = vmatmul.mubr.f32.gmra.mrb[0].mxu0 %v6627
    %v6629 = vpop.f32.mrb[0].mxu0
    %v6630 = vadd.f32 %v6400, %v6629
    %v6631 = vpop.f32.mrb[0].mxu0
    %6632 = vmatprep.mubr.f32.mxu0 0.0
    %v6633 = vand.u32 %v5001, 4294901760
    %6634 = vmatmul.mubr.f32.gmra.mrb[0].mxu0 %v6633
    %v6635 = vpop.f32.mrb[0].mxu0
    %v6636 = vadd.f32 %v6406, %v6635
    %v6637 = vpop.f32.mrb[0].mxu0
    %6638 = vmatprep.mubr.f32.mxu0 0.0
    %v6639 = vand.u32 %v5004, 4294901760
    %6640 = vmatmul.mubr.f32.gmra.mrb[0].mxu0 %v6639
    %v6641 = vpop.f32.mrb[0].mxu0
    %v6642 = vadd.f32 %v6412, %v6641
    %v6643 = vpop.f32.mrb[0].mxu0
    %6644 = vmatprep.mubr.f32.mxu0 0.0
    %v6645 = vand.u32 %v5007, 4294901760
    %6646 = vmatmul.mubr.f32.gmra.mrb[0].mxu0 %v6645
    %v6647 = vpop.f32.mrb[0].mxu0
    %v6648 = vadd.f32 %v6418, %v6647
    %v6649 = vpop.f32.mrb[0].mxu0
    %6650 = vmatprep.mubr.f32.mxu0 0.0
    %v6651 = vand.u32 %v5010, 4294901760
    %6652 = vmatmul.mubr.f32.gmra.mrb[0].mxu0 %v6651
    %v6653 = vpop.f32.mrb[0].mxu0
    %v6654 = vadd.f32 %v6424, %v6653
    %v6655 = vpop.f32.mrb[0].mxu0
    %6656 = vmatprep.mubr.f32.mxu0 0.0
    %v6657 = vand.u32 %v5013, 4294901760
    %6658 = vmatmul.mubr.f32.gmra.mrb[0].mxu0 %v6657
    %v6659 = vpop.f32.mrb[0].mxu0
    %v6660 = vadd.f32 %v6430, %v6659
    %v6661 = vpop.f32.mrb[0].mxu0
    %6662 = vmatprep.mubr.f32.mxu0 0.0
    %v6663 = vand.u32 %v5016, 4294901760
    %6664 = vmatmul.mubr.f32.gmra.mrb[0].mxu0 %v6663
    %v6665 = vpop.f32.mrb[0].mxu0
    %v6666 = vadd.f32 %v6436, %v6665
    %v6667 = vpop.f32.mrb[0].mxu0
    %6668 = vmatprep.mubr.f32.mxu0 0.0
    %v6669 = vand.u32 %v5019, 4294901760
    %6670 = vmatmul.mubr.f32.gmra.mrb[0].mxu0 %v6669
    %v6671 = vpop.f32.mrb[0].mxu0
    %v6672 = vadd.f32 %v6442, %v6671
    %v6673 = vpop.f32.mrb[0].mxu0
    %6674 = vmatprep.mubr.f32.mxu0 0.0
    %v6675 = vand.u32 %v5022, 4294901760
    %6676 = vmatmul.mubr.f32.gmra.mrb[0].mxu0 %v6675
    %v6677 = vpop.f32.mrb[0].mxu0
    %v6678 = vadd.f32 %v6448, %v6677
    %v6679 = vpop.f32.mrb[0].mxu0
    %6680 = vmatprep.mubr.f32.mxu0 0.0
    %v6681 = vand.u32 %v5025, 4294901760
    %6682 = vmatmul.mubr.f32.gmra.mrb[0].mxu0 %v6681
    %v6683 = vpop.f32.mrb[0].mxu0
    %v6684 = vadd.f32 %v6454, %v6683
    %v6685 = vpop.f32.mrb[0].mxu0
    %6686 = vdwg.mxu0
    %v6687 = vmax.f32 %v6540, 0.0
    %v6688 = vmax.f32 %v6546, 0.0
    %v6689 = vmax.f32 %v6552, 0.0
    %v6690 = vmax.f32 %v6558, 0.0
    %v6691 = vmax.f32 %v6564, 0.0
    %v6692 = vmax.f32 %v6570, 0.0
    %v6693 = vmax.f32 %v6576, 0.0
    %v6694 = vmax.f32 %v6582, 0.0
    %v6695 = vmax.f32 %v6588, 0.0
    %v6696 = vmax.f32 %v6594, 0.0
    %v6697 = vmax.f32 %v6600, 0.0
    %v6698 = vmax.f32 %v6606, 0.0
    %v6699 = vmax.f32 %v6612, 0.0
    %v6700 = vmax.f32 %v6618, 0.0
    %v6701 = vmax.f32 %v6624, 0.0
    %v6702 = vmax.f32 %v6630, 0.0
    %v6703 = vmax.f32 %v6636, 0.0
    %v6704 = vmax.f32 %v6642, 0.0
    %v6705 = vmax.f32 %v6648, 0.0
    %v6706 = vmax.f32 %v6654, 0.0
    %v6707 = vmax.f32 %v6660, 0.0
    %v6708 = vmax.f32 %v6666, 0.0
    %v6709 = vmax.f32 %v6672, 0.0
    %v6710 = vmax.f32 %v6678, 0.0
    %v6711 = vmax.f32 %v6684, 0.0
    %v6712 = vmax.f32 %v6687, %v6692
    %v6713 = vmax.f32 %v6688, %v6693
    %v6714 = vmax.f32 %v6689, %v6694
    %v6715 = vmax.f32 %v6690, %v6695
    %v6716 = vmax.f32 %v6691, %v6696
    %v6717 = vmax.f32 %v6712, %v6697
    %v6718 = vmax.f32 %v6713, %v6698
    %v6719 = vmax.f32 %v6714, %v6699
    %v6720 = vmax.f32 %v6715, %v6700
    %v6721 = vmax.f32 %v6716, %v6701
    %v6722 = vmax.f32 %v6717, %v6702
    %v6723 = vmax.f32 %v6718, %v6703
    %v6724 = vmax.f32 %v6719, %v6704
    %v6725 = vmax.f32 %v6720, %v6705
    %v6726 = vmax.f32 %v6721, %v6706
    %v6727 = vmax.f32 %v6722, %v6707
    %v6728 = vmax.f32 %v6723, %v6708
    %v6729 = vmax.f32 %v6724, %v6709
    %v6730 = vmax.f32 %v6725, %v6710
    %v6731 = vmax.f32 %v6726, %v6711
    %v6732 = vld [vmem:[%s5] sm:$0xff]
    %v6733 = vld [vmem:[%s5 + $0x8] sm:$0xff]
    %v6734 = vld [vmem:[%s5 + $0x10] sm:$0xff]
    %v6735 = vld [vmem:[%s6] sm:$0xff]
    %v6736 = vld [vmem:[%s6 + $0x8] sm:$0xff]
    %v6737 = vld [vmem:[%s6 + $0x10] sm:$0xff]
    %6739 = vset.pattern.permute.xlu0 0
    %6740 = vperm.xlu0 %6739, %v6735
    %v6741 = vpop.permute.xlu0 %6740
    %6744 = vset.pattern.permute.xlu0 0
    %6745 = vperm.xlu0 %6744, %v6736
    %v6746 = vpop.permute.xlu0 %6745
    %6749 = vset.pattern.permute.xlu0 0
    %6750 = vperm.xlu0 %6749, %v6737
    %v6751 = vpop.permute.xlu0 %6750
    %vm6753 = vcmask 326656
    %v6755 = vsel %vm6753, %v6732, 0
    %v6758 = vsel %vm6753, %v6733, 0
    %v6761 = vsel %vm6753, %v6734, 0
    %6763 = vmatprep.subr.mxu0 0.0
    %v6764 = vand.u32 %v6727, 4294901760
    %6765 = vmatpush1.msra.mxu0 %v6764
    %6766 = vmatprep.subr.mxu0 0.0
    %v6767 = vand.u32 %v6728, 4294901760
    %6768 = vmatpush1.msra.mxu0 %v6767
    %6769 = vmatprep.subr.mxu0 0.0
    %v6770 = vand.u32 %v6729, 4294901760
    %6771 = vmatpush1.msra.mxu0 %v6770
    %6772 = vmatprep.subr.mxu0 0.0
    %v6773 = vand.u32 %v6730, 4294901760
    %6774 = vmatpush1.msra.mxu0 %v6773
    %6775 = vmatprep.subr.mxu0 0.0
    %v6776 = vand.u32 %v6731, 4294901760
    %6777 = vmatpush1.msra.mxu0 %v6776
    %6778 = vmatprep.subr.mxu0 0.0
    %6779 = vmatpush1.msra.mxu0 0.0
    %6780 = vmatprep.subr.mxu0 0.0
    %6781 = vmatpush1.msra.mxu0 0.0
    %6782 = vmatprep.subr.mxu0 0.0
    %6783 = vmatpush1.msra.mxu0 0.0
    %6784 = vmatprep.subr.mxu0 0.0
    %6785 = vmatpush1.msra.mxu0 0.0
    %6786 = vmatprep.subr.mxu0 0.0
    %6787 = vmatpush1.msra.mxu0 0.0
    %6788 = vmatprep.subr.mxu0 0.0
    %6789 = vmatpush1.msra.mxu0 0.0
    %6790 = vmatprep.subr.mxu0 0.0
    %6791 = vmatpush1.msra.mxu0 0.0
    %6792 = vmatprep.subr.mxu0 0.0
    %6793 = vmatpush1.msra.mxu0 0.0
    %6794 = vmatprep.subr.mxu0 0.0
    %6795 = vmatpush1.msra.mxu0 0.0
    %6796 = vmatprep.subr.mxu0 0.0
    %6797 = vmatpush1.msra.mxu0 0.0
    %6798 = vmatprep.subr.mxu0 0.0
    %6799 = vmatpush1.msra.mxu0 0.0
    %6800 = vmatprep.subr.mxu0 0.0
    %6801 = vmatpush1.msra.mxu0 0.0
    %6802 = vmatprep.subr.mxu0 0.0
    %6803 = vmatpush1.msra.mxu0 0.0
    %6804 = vmatprep.subr.mxu0 0.0
    %6805 = vmatpush1.msra.mxu0 0.0
    %6806 = vmatprep.subr.mxu0 0.0
    %6807 = vmatpush1.msra.mxu0 0.0
    %6808 = vmatprep.subr.mxu0 0.0
    %6809 = vmatpush1.msra.mxu0 0.0
    %6810 = vmatprep.subr.mxu0 0.0
    %6811 = vmatpush1.msra.mxu0 0.0
    %6812 = vmatprep.subr.mxu0 0.0
    %6813 = vmatpush1.msra.mxu0 0.0
    %6814 = vmatprep.subr.mxu0 0.0
    %6815 = vmatpush1.msra.mxu0 0.0
    %6816 = vmatprep.subr.mxu0 0.0
    %6817 = vmatpush1.msra.mxu0 0.0
    %6818 = vmatprep.subr.mxu0 0.0
    %6819 = vmatpush1.msra.mxu0 0.0
    %6820 = vmatprep.subr.mxu0 0.0
    %6821 = vmatpush1.msra.mxu0 0.0
    %6822 = vmatprep.subr.mxu0 0.0
    %6823 = vmatpush1.msra.mxu0 0.0
    %6824 = vmatprep.subr.mxu0 0.0
    %6825 = vmatpush1.msra.mxu0 0.0
    %6826 = vmatprep.subr.mxu0 0.0
    %6827 = vmatpush1.msra.mxu0 0.0
    %6828 = vmatprep.subr.mxu0 0.0
    %6829 = vmatpush1.msra.mxu0 0.0
    %6830 = vmatprep.subr.mxu0 0.0
    %6831 = vmatpush1.msra.mxu0 0.0
    %6832 = vmatprep.mubr.f32.mxu0 0.0
    %v6833 = vand.u32 %v6755, 4294901760
    %v6834 = vsub.f32 %v6755, %v6833
    %v6835 = vand.u32 %v6834, 4294901760
    %v6836 = vsub.f32 %v6834, %v6835
    %v6837 = vand.u32 %v6836, 4294901760
    %6838 = vmatmul.mubr.f32.gmra.mrb[0].mxu0 %v6837
    %v6839 = vpop.f32.mrb[0].mxu0
    %v6840 = vadd.f32 %v6741, %v6839
    %v6841 = vpop.f32.mrb[0].mxu0
    %6842 = vmatprep.mubr.f32.mxu0 0.0
    %v6843 = vand.u32 %v6758, 4294901760
    %v6844 = vsub.f32 %v6758, %v6843
    %v6845 = vand.u32 %v6844, 4294901760
    %v6846 = vsub.f32 %v6844, %v6845
    %v6847 = vand.u32 %v6846, 4294901760
    %6848 = vmatmul.mubr.f32.gmra.mrb[0].mxu0 %v6847
    %v6849 = vpop.f32.mrb[0].mxu0
    %v6850 = vadd.f32 %v6746, %v6849
    %v6851 = vpop.f32.mrb[0].mxu0
    %6852 = vmatprep.mubr.f32.mxu0 0.0
    %v6853 = vand.u32 %v6761, 4294901760
    %v6854 = vsub.f32 %v6761, %v6853
    %v6855 = vand.u32 %v6854, 4294901760
    %v6856 = vsub.f32 %v6854, %v6855
    %v6857 = vand.u32 %v6856, 4294901760
    %6858 = vmatmul.mubr.f32.gmra.mrb[0].mxu0 %v6857
    %v6859 = vpop.f32.mrb[0].mxu0
    %v6860 = vadd.f32 %v6751, %v6859
    %v6861 = vpop.f32.mrb[0].mxu0
    %6862 = vdwg.mxu0
    %6863 = vmatprep.subr.mxu0 0.0
    %v6864 = vand.u32 %v6727, 4294901760
    %v6865 = vsub.f32 %v6727, %v6864
    %v6866 = vand.u32 %v6865, 4294901760
    %v6867 = vsub.f32 %v6865, %v6866
    %v6868 = vand.u32 %v6867, 4294901760
    %6869 = vmatpush1.msra.mxu0 %v6868
    %6870 = vmatprep.subr.mxu0 0.0
    %v6871 = vand.u32 %v6728, 4294901760
    %v6872 = vsub.f32 %v6728, %v6871
    %v6873 = vand.u32 %v6872, 4294901760
    %v6874 = vsub.f32 %v6872, %v6873
    %v6875 = vand.u32 %v6874, 4294901760
    %6876 = vmatpush1.msra.mxu0 %v6875
    %6877 = vmatprep.subr.mxu0 0.0
    %v6878 = vand.u32 %v6729, 4294901760
    %v6879 = vsub.f32 %v6729, %v6878
    %v6880 = vand.u32 %v6879, 4294901760
    %v6881 = vsub.f32 %v6879, %v6880
    %v6882 = vand.u32 %v6881, 4294901760
    %6883 = vmatpush1.msra.mxu0 %v6882
    %6884 = vmatprep.subr.mxu0 0.0
    %v6885 = vand.u32 %v6730, 4294901760
    %v6886 = vsub.f32 %v6730, %v6885
    %v6887 = vand.u32 %v6886, 4294901760
    %v6888 = vsub.f32 %v6886, %v6887
    %v6889 = vand.u32 %v6888, 4294901760
    %6890 = vmatpush1.msra.mxu0 %v6889
    %6891 = vmatprep.subr.mxu0 0.0
    %v6892 = vand.u32 %v6731, 4294901760
    %v6893 = vsub.f32 %v6731, %v6892
    %v6894 = vand.u32 %v6893, 4294901760
    %v6895 = vsub.f32 %v6893, %v6894
    %v6896 = vand.u32 %v6895, 4294901760
    %6897 = vmatpush1.msra.mxu0 %v6896
    %6898 = vmatprep.subr.mxu0 0.0
    %6899 = vmatpush1.msra.mxu0 0.0
    %6900 = vmatprep.subr.mxu0 0.0
    %6901 = vmatpush1.msra.mxu0 0.0
    %6902 = vmatprep.subr.mxu0 0.0
    %6903 = vmatpush1.msra.mxu0 0.0
    %6904 = vmatprep.subr.mxu0 0.0
    %6905 = vmatpush1.msra.mxu0 0.0
    %6906 = vmatprep.subr.mxu0 0.0
    %6907 = vmatpush1.msra.mxu0 0.0
    %6908 = vmatprep.subr.mxu0 0.0
    %6909 = vmatpush1.msra.mxu0 0.0
    %6910 = vmatprep.subr.mxu0 0.0
    %6911 = vmatpush1.msra.mxu0 0.0
    %6912 = vmatprep.subr.mxu0 0.0
    %6913 = vmatpush1.msra.mxu0 0.0
    %6914 = vmatprep.subr.mxu0 0.0
    %6915 = vmatpush1.msra.mxu0 0.0
    %6916 = vmatprep.subr.mxu0 0.0
    %6917 = vmatpush1.msra.mxu0 0.0
    %6918 = vmatprep.subr.mxu0 0.0
    %6919 = vmatpush1.msra.mxu0 0.0
    %6920 = vmatprep.subr.mxu0 0.0
    %6921 = vmatpush1.msra.mxu0 0.0
    %6922 = vmatprep.subr.mxu0 0.0
    %6923 = vmatpush1.msra.mxu0 0.0
    %6924 = vmatprep.subr.mxu0 0.0
    %6925 = vmatpush1.msra.mxu0 0.0
    %6926 = vmatprep.subr.mxu0 0.0
    %6927 = vmatpush1.msra.mxu0 0.0
    %6928 = vmatprep.subr.mxu0 0.0
    %6929 = vmatpush1.msra.mxu0 0.0
    %6930 = vmatprep.subr.mxu0 0.0
    %6931 = vmatpush1.msra.mxu0 0.0
    %6932 = vmatprep.subr.mxu0 0.0
    %6933 = vmatpush1.msra.mxu0 0.0
    %6934 = vmatprep.subr.mxu0 0.0
    %6935 = vmatpush1.msra.mxu0 0.0
    %6936 = vmatprep.subr.mxu0 0.0
    %6937 = vmatpush1.msra.mxu0 0.0
    %6938 = vmatprep.subr.mxu0 0.0
    %6939 = vmatpush1.msra.mxu0 0.0
    %6940 = vmatprep.subr.mxu0 0.0
    %6941 = vmatpush1.msra.mxu0 0.0
    %6942 = vmatprep.subr.mxu0 0.0
    %6943 = vmatpush1.msra.mxu0 0.0
    %6944 = vmatprep.subr.mxu0 0.0
    %6945 = vmatpush1.msra.mxu0 0.0
    %6946 = vmatprep.subr.mxu0 0.0
    %6947 = vmatpush1.msra.mxu0 0.0
    %6948 = vmatprep.subr.mxu0 0.0
    %6949 = vmatpush1.msra.mxu0 0.0
    %6950 = vmatprep.subr.mxu0 0.0
    %6951 = vmatpush1.msra.mxu0 0.0
    %6952 = vmatprep.mubr.f32.mxu0 0.0
    %v6953 = vand.u32 %v6755, 4294901760
    %6954 = vmatmul.mubr.f32.gmra.mrb[0].mxu0 %v6953
    %v6955 = vpop.f32.mrb[0].mxu0
    %v6956 = vadd.f32 %v6840, %v6955
    %v6957 = vpop.f32.mrb[0].mxu0
    %6958 = vmatprep.mubr.f32.mxu0 0.0
    %v6959 = vand.u32 %v6758, 4294901760
    %6960 = vmatmul.mubr.f32.gmra.mrb[0].mxu0 %v6959
    %v6961 = vpop.f32.mrb[0].mxu0
    %v6962 = vadd.f32 %v6850, %v6961
    %v6963 = vpop.f32.mrb[0].mxu0
    %6964 = vmatprep.mubr.f32.mxu0 0.0
    %v6965 = vand.u32 %v6761, 4294901760
    %6966 = vmatmul.mubr.f32.gmra.mrb[0].mxu0 %v6965
    %v6967 = vpop.f32.mrb[0].mxu0
    %v6968 = vadd.f32 %v6860, %v6967
    %v6969 = vpop.f32.mrb[0].mxu0
    %6970 = vdwg.mxu0
    %6971 = vmatprep.subr.mxu0 0.0
    %v6972 = vand.u32 %v6727, 4294901760
    %v6973 = vsub.f32 %v6727, %v6972
    %6974 = vmatpush1.msra.mxu0 %v6973
    %6975 = vmatprep.subr.mxu0 0.0
    %v6976 = vand.u32 %v6728, 4294901760
    %v6977 = vsub.f32 %v6728, %v6976
    %6978 = vmatpush1.msra.mxu0 %v6977
    %6979 = vmatprep.subr.mxu0 0.0
    %v6980 = vand.u32 %v6729, 4294901760
    %v6981 = vsub.f32 %v6729, %v6980
    %6982 = vmatpush1.msra.mxu0 %v6981
    %6983 = vmatprep.subr.mxu0 0.0
    %v6984 = vand.u32 %v6730, 4294901760
    %v6985 = vsub.f32 %v6730, %v6984
    %6986 = vmatpush1.msra.mxu0 %v6985
    %6987 = vmatprep.subr.mxu0 0.0
    %v6988 = vand.u32 %v6731, 4294901760
    %v6989 = vsub.f32 %v6731, %v6988
    %6990 = vmatpush1.msra.mxu0 %v6989
    %6991 = vmatprep.subr.mxu0 0.0
    %6992 = vmatpush1.msra.mxu0 0.0
    %6993 = vmatprep.subr.mxu0 0.0
    %6994 = vmatpush1.msra.mxu0 0.0
    %6995 = vmatprep.subr.mxu0 0.0
    %6996 = vmatpush1.msra.mxu0 0.0
    %6997 = vmatprep.subr.mxu0 0.0
    %6998 = vmatpush1.msra.mxu0 0.0
    %6999 = vmatprep.subr.mxu0 0.0
    %7000 = vmatpush1.msra.mxu0 0.0
    %7001 = vmatprep.subr.mxu0 0.0
    %7002 = vmatpush1.msra.mxu0 0.0
    %7003 = vmatprep.subr.mxu0 0.0
    %7004 = vmatpush1.msra.mxu0 0.0
    %7005 = vmatprep.subr.mxu0 0.0
    %7006 = vmatpush1.msra.mxu0 0.0
    %7007 = vmatprep.subr.mxu0 0.0
    %7008 = vmatpush1.msra.mxu0 0.0
    %7009 = vmatprep.subr.mxu0 0.0
    %7010 = vmatpush1.msra.mxu0 0.0
    %7011 = vmatprep.subr.mxu0 0.0
    %7012 = vmatpush1.msra.mxu0 0.0
    %7013 = vmatprep.subr.mxu0 0.0
    %7014 = vmatpush1.msra.mxu0 0.0
    %7015 = vmatprep.subr.mxu0 0.0
    %7016 = vmatpush1.msra.mxu0 0.0
    %7017 = vmatprep.subr.mxu0 0.0
    %7018 = vmatpush1.msra.mxu0 0.0
    %7019 = vmatprep.subr.mxu0 0.0
    %7020 = vmatpush1.msra.mxu0 0.0
    %7021 = vmatprep.subr.mxu0 0.0
    %7022 = vmatpush1.msra.mxu0 0.0
    %7023 = vmatprep.subr.mxu0 0.0
    %7024 = vmatpush1.msra.mxu0 0.0
    %7025 = vmatprep.subr.mxu0 0.0
    %7026 = vmatpush1.msra.mxu0 0.0
    %7027 = vmatprep.subr.mxu0 0.0
    %7028 = vmatpush1.msra.mxu0 0.0
    %7029 = vmatprep.subr.mxu0 0.0
    %7030 = vmatpush1.msra.mxu0 0.0
    %7031 = vmatprep.subr.mxu0 0.0
    %7032 = vmatpush1.msra.mxu0 0.0
    %7033 = vmatprep.subr.mxu0 0.0
    %7034 = vmatpush1.msra.mxu0 0.0
    %7035 = vmatprep.subr.mxu0 0.0
    %7036 = vmatpush1.msra.mxu0 0.0
    %7037 = vmatprep.subr.mxu0 0.0
    %7038 = vmatpush1.msra.mxu0 0.0
    %7039 = vmatprep.subr.mxu0 0.0
    %7040 = vmatpush1.msra.mxu0 0.0
    %7041 = vmatprep.subr.mxu0 0.0
    %7042 = vmatpush1.msra.mxu0 0.0
    %7043 = vmatprep.subr.mxu0 0.0
    %7044 = vmatpush1.msra.mxu0 0.0
    %7045 = vmatprep.mubr.f32.mxu0 0.0
    %v7046 = vand.u32 %v6755, 4294901760
    %v7047 = vsub.f32 %v6755, %v7046
    %7048 = vmatmul.mubr.f32.gmra.mrb[0].mxu0 %v7047
    %v7049 = vpop.f32.mrb[0].mxu0
    %v7050 = vadd.f32 %v6956, %v7049
    %v7051 = vpop.f32.mrb[0].mxu0
    %7052 = vmatprep.mubr.f32.mxu0 0.0
    %v7053 = vand.u32 %v6758, 4294901760
    %v7054 = vsub.f32 %v6758, %v7053
    %7055 = vmatmul.mubr.f32.gmra.mrb[0].mxu0 %v7054
    %v7056 = vpop.f32.mrb[0].mxu0
    %v7057 = vadd.f32 %v6962, %v7056
    %v7058 = vpop.f32.mrb[0].mxu0
    %7059 = vmatprep.mubr.f32.mxu0 0.0
    %v7060 = vand.u32 %v6761, 4294901760
    %v7061 = vsub.f32 %v6761, %v7060
    %7062 = vmatmul.mubr.f32.gmra.mrb[0].mxu0 %v7061
    %v7063 = vpop.f32.mrb[0].mxu0
    %v7064 = vadd.f32 %v6968, %v7063
    %v7065 = vpop.f32.mrb[0].mxu0
    %7066 = vdwg.mxu0
    %7067 = vmatprep.subr.mxu0 0.0
    %v7068 = vand.u32 %v6727, 4294901760
    %7069 = vmatpush1.msra.mxu0 %v7068
    %7070 = vmatprep.subr.mxu0 0.0
    %v7071 = vand.u32 %v6728, 4294901760
    %7072 = vmatpush1.msra.mxu0 %v7071
    %7073 = vmatprep.subr.mxu0 0.0
    %v7074 = vand.u32 %v6729, 4294901760
    %7075 = vmatpush1.msra.mxu0 %v7074
    %7076 = vmatprep.subr.mxu0 0.0
    %v7077 = vand.u32 %v6730, 4294901760
    %7078 = vmatpush1.msra.mxu0 %v7077
    %7079 = vmatprep.subr.mxu0 0.0
    %v7080 = vand.u32 %v6731, 4294901760
    %7081 = vmatpush1.msra.mxu0 %v7080
    %7082 = vmatprep.subr.mxu0 0.0
    %7083 = vmatpush1.msra.mxu0 0.0
    %7084 = vmatprep.subr.mxu0 0.0
    %7085 = vmatpush1.msra.mxu0 0.0
    %7086 = vmatprep.subr.mxu0 0.0
    %7087 = vmatpush1.msra.mxu0 0.0
    %7088 = vmatprep.subr.mxu0 0.0
    %7089 = vmatpush1.msra.mxu0 0.0
    %7090 = vmatprep.subr.mxu0 0.0
    %7091 = vmatpush1.msra.mxu0 0.0
    %7092 = vmatprep.subr.mxu0 0.0
    %7093 = vmatpush1.msra.mxu0 0.0
    %7094 = vmatprep.subr.mxu0 0.0
    %7095 = vmatpush1.msra.mxu0 0.0
    %7096 = vmatprep.subr.mxu0 0.0
    %7097 = vmatpush1.msra.mxu0 0.0
    %7098 = vmatprep.subr.mxu0 0.0
    %7099 = vmatpush1.msra.mxu0 0.0
    %7100 = vmatprep.subr.mxu0 0.0
    %7101 = vmatpush1.msra.mxu0 0.0
    %7102 = vmatprep.subr.mxu0 0.0
    %7103 = vmatpush1.msra.mxu0 0.0
    %7104 = vmatprep.subr.mxu0 0.0
    %7105 = vmatpush1.msra.mxu0 0.0
    %7106 = vmatprep.subr.mxu0 0.0
    %7107 = vmatpush1.msra.mxu0 0.0
    %7108 = vmatprep.subr.mxu0 0.0
    %7109 = vmatpush1.msra.mxu0 0.0
    %7110 = vmatprep.subr.mxu0 0.0
    %7111 = vmatpush1.msra.mxu0 0.0
    %7112 = vmatprep.subr.mxu0 0.0
    %7113 = vmatpush1.msra.mxu0 0.0
    %7114 = vmatprep.subr.mxu0 0.0
    %7115 = vmatpush1.msra.mxu0 0.0
    %7116 = vmatprep.subr.mxu0 0.0
    %7117 = vmatpush1.msra.mxu0 0.0
    %7118 = vmatprep.subr.mxu0 0.0
    %7119 = vmatpush1.msra.mxu0 0.0
    %7120 = vmatprep.subr.mxu0 0.0
    %7121 = vmatpush1.msra.mxu0 0.0
    %7122 = vmatprep.subr.mxu0 0.0
    %7123 = vmatpush1.msra.mxu0 0.0
    %7124 = vmatprep.subr.mxu0 0.0
    %7125 = vmatpush1.msra.mxu0 0.0
    %7126 = vmatprep.subr.mxu0 0.0
    %7127 = vmatpush1.msra.mxu0 0.0
    %7128 = vmatprep.subr.mxu0 0.0
    %7129 = vmatpush1.msra.mxu0 0.0
    %7130 = vmatprep.subr.mxu0 0.0
    %7131 = vmatpush1.msra.mxu0 0.0
    %7132 = vmatprep.subr.mxu0 0.0
    %7133 = vmatpush1.msra.mxu0 0.0
    %7134 = vmatprep.subr.mxu0 0.0
    %7135 = vmatpush1.msra.mxu0 0.0
    %7136 = vmatprep.mubr.f32.mxu0 0.0
    %v7137 = vand.u32 %v6755, 4294901760
    %v7138 = vsub.f32 %v6755, %v7137
    %v7139 = vand.u32 %v7138, 4294901760
    %7140 = vmatmul.mubr.f32.gmra.mrb[0].mxu0 %v7139
    %v7141 = vpop.f32.mrb[0].mxu0
    %v7142 = vadd.f32 %v7050, %v7141
    %v7143 = vpop.f32.mrb[0].mxu0
    %7144 = vmatprep.mubr.f32.mxu0 0.0
    %v7145 = vand.u32 %v6758, 4294901760
    %v7146 = vsub.f32 %v6758, %v7145
    %v7147 = vand.u32 %v7146, 4294901760
    %7148 = vmatmul.mubr.f32.gmra.mrb[0].mxu0 %v7147
    %v7149 = vpop.f32.mrb[0].mxu0
    %v7150 = vadd.f32 %v7057, %v7149
    %v7151 = vpop.f32.mrb[0].mxu0
    %7152 = vmatprep.mubr.f32.mxu0 0.0
    %v7153 = vand.u32 %v6761, 4294901760
    %v7154 = vsub.f32 %v6761, %v7153
    %v7155 = vand.u32 %v7154, 4294901760
    %7156 = vmatmul.mubr.f32.gmra.mrb[0].mxu0 %v7155
    %v7157 = vpop.f32.mrb[0].mxu0
    %v7158 = vadd.f32 %v7064, %v7157
    %v7159 = vpop.f32.mrb[0].mxu0
    %7160 = vdwg.mxu0
    %7161 = vmatprep.subr.mxu0 0.0
    %v7162 = vand.u32 %v6727, 4294901760
    %v7163 = vsub.f32 %v6727, %v7162
    %v7164 = vand.u32 %v7163, 4294901760
    %7165 = vmatpush1.msra.mxu0 %v7164
    %7166 = vmatprep.subr.mxu0 0.0
    %v7167 = vand.u32 %v6728, 4294901760
    %v7168 = vsub.f32 %v6728, %v7167
    %v7169 = vand.u32 %v7168, 4294901760
    %7170 = vmatpush1.msra.mxu0 %v7169
    %7171 = vmatprep.subr.mxu0 0.0
    %v7172 = vand.u32 %v6729, 4294901760
    %v7173 = vsub.f32 %v6729, %v7172
    %v7174 = vand.u32 %v7173, 4294901760
    %7175 = vmatpush1.msra.mxu0 %v7174
    %7176 = vmatprep.subr.mxu0 0.0
    %v7177 = vand.u32 %v6730, 4294901760
    %v7178 = vsub.f32 %v6730, %v7177
    %v7179 = vand.u32 %v7178, 4294901760
    %7180 = vmatpush1.msra.mxu0 %v7179
    %7181 = vmatprep.subr.mxu0 0.0
    %v7182 = vand.u32 %v6731, 4294901760
    %v7183 = vsub.f32 %v6731, %v7182
    %v7184 = vand.u32 %v7183, 4294901760
    %7185 = vmatpush1.msra.mxu0 %v7184
    %7186 = vmatprep.subr.mxu0 0.0
    %7187 = vmatpush1.msra.mxu0 0.0
    %7188 = vmatprep.subr.mxu0 0.0
    %7189 = vmatpush1.msra.mxu0 0.0
    %7190 = vmatprep.subr.mxu0 0.0
    %7191 = vmatpush1.msra.mxu0 0.0
    %7192 = vmatprep.subr.mxu0 0.0
    %7193 = vmatpush1.msra.mxu0 0.0
    %7194 = vmatprep.subr.mxu0 0.0
    %7195 = vmatpush1.msra.mxu0 0.0
    %7196 = vmatprep.subr.mxu0 0.0
    %7197 = vmatpush1.msra.mxu0 0.0
    %7198 = vmatprep.subr.mxu0 0.0
    %7199 = vmatpush1.msra.mxu0 0.0
    %7200 = vmatprep.subr.mxu0 0.0
    %7201 = vmatpush1.msra.mxu0 0.0
    %7202 = vmatprep.subr.mxu0 0.0
    %7203 = vmatpush1.msra.mxu0 0.0
    %7204 = vmatprep.subr.mxu0 0.0
    %7205 = vmatpush1.msra.mxu0 0.0
    %7206 = vmatprep.subr.mxu0 0.0
    %7207 = vmatpush1.msra.mxu0 0.0
    %7208 = vmatprep.subr.mxu0 0.0
    %7209 = vmatpush1.msra.mxu0 0.0
    %7210 = vmatprep.subr.mxu0 0.0
    %7211 = vmatpush1.msra.mxu0 0.0
    %7212 = vmatprep.subr.mxu0 0.0
    %7213 = vmatpush1.msra.mxu0 0.0
    %7214 = vmatprep.subr.mxu0 0.0
    %7215 = vmatpush1.msra.mxu0 0.0
    %7216 = vmatprep.subr.mxu0 0.0
    %7217 = vmatpush1.msra.mxu0 0.0
    %7218 = vmatprep.subr.mxu0 0.0
    %7219 = vmatpush1.msra.mxu0 0.0
    %7220 = vmatprep.subr.mxu0 0.0
    %7221 = vmatpush1.msra.mxu0 0.0
    %7222 = vmatprep.subr.mxu0 0.0
    %7223 = vmatpush1.msra.mxu0 0.0
    %7224 = vmatprep.subr.mxu0 0.0
    %7225 = vmatpush1.msra.mxu0 0.0
    %7226 = vmatprep.subr.mxu0 0.0
    %7227 = vmatpush1.msra.mxu0 0.0
    %7228 = vmatprep.subr.mxu0 0.0
    %7229 = vmatpush1.msra.mxu0 0.0
    %7230 = vmatprep.subr.mxu0 0.0
    %7231 = vmatpush1.msra.mxu0 0.0
    %7232 = vmatprep.subr.mxu0 0.0
    %7233 = vmatpush1.msra.mxu0 0.0
    %7234 = vmatprep.subr.mxu0 0.0
    %7235 = vmatpush1.msra.mxu0 0.0
    %7236 = vmatprep.subr.mxu0 0.0
    %7237 = vmatpush1.msra.mxu0 0.0
    %7238 = vmatprep.subr.mxu0 0.0
    %7239 = vmatpush1.msra.mxu0 0.0
    %7240 = vmatprep.mubr.f32.mxu0 0.0
    %v7241 = vand.u32 %v6755, 4294901760
    %7242 = vmatmul.mubr.f32.gmra.mrb[0].mxu0 %v7241
    %v7243 = vpop.f32.mrb[0].mxu0
    %v7244 = vadd.f32 %v7142, %v7243
    %v7245 = vpop.f32.mrb[0].mxu0
    %7246 = vmatprep.mubr.f32.mxu0 0.0
    %v7247 = vand.u32 %v6758, 4294901760
    %7248 = vmatmul.mubr.f32.gmra.mrb[0].mxu0 %v7247
    %v7249 = vpop.f32.mrb[0].mxu0
    %v7250 = vadd.f32 %v7150, %v7249
    %v7251 = vpop.f32.mrb[0].mxu0
    %7252 = vmatprep.mubr.f32.mxu0 0.0
    %v7253 = vand.u32 %v6761, 4294901760
    %7254 = vmatmul.mubr.f32.gmra.mrb[0].mxu0 %v7253
    %v7255 = vpop.f32.mrb[0].mxu0
    %v7256 = vadd.f32 %v7158, %v7255
    %v7257 = vpop.f32.mrb[0].mxu0
    %7258 = vdwg.mxu0
    %7259 = vmatprep.subr.mxu0 0.0
    %v7260 = vand.u32 %v6727, 4294901760
    %7261 = vmatpush1.msra.mxu0 %v7260
    %7262 = vmatprep.subr.mxu0 0.0
    %v7263 = vand.u32 %v6728, 4294901760
    %7264 = vmatpush1.msra.mxu0 %v7263
    %7265 = vmatprep.subr.mxu0 0.0
    %v7266 = vand.u32 %v6729, 4294901760
    %7267 = vmatpush1.msra.mxu0 %v7266
    %7268 = vmatprep.subr.mxu0 0.0
    %v7269 = vand.u32 %v6730, 4294901760
    %7270 = vmatpush1.msra.mxu0 %v7269
    %7271 = vmatprep.subr.mxu0 0.0
    %v7272 = vand.u32 %v6731, 4294901760
    %7273 = vmatpush1.msra.mxu0 %v7272
    %7274 = vmatprep.subr.mxu0 0.0
    %7275 = vmatpush1.msra.mxu0 0.0
    %7276 = vmatprep.subr.mxu0 0.0
    %7277 = vmatpush1.msra.mxu0 0.0
    %7278 = vmatprep.subr.mxu0 0.0
    %7279 = vmatpush1.msra.mxu0 0.0
    %7280 = vmatprep.subr.mxu0 0.0
    %7281 = vmatpush1.msra.mxu0 0.0
    %7282 = vmatprep.subr.mxu0 0.0
    %7283 = vmatpush1.msra.mxu0 0.0
    %7284 = vmatprep.subr.mxu0 0.0
    %7285 = vmatpush1.msra.mxu0 0.0
    %7286 = vmatprep.subr.mxu0 0.0
    %7287 = vmatpush1.msra.mxu0 0.0
    %7288 = vmatprep.subr.mxu0 0.0
    %7289 = vmatpush1.msra.mxu0 0.0
    %7290 = vmatprep.subr.mxu0 0.0
    %7291 = vmatpush1.msra.mxu0 0.0
    %7292 = vmatprep.subr.mxu0 0.0
    %7293 = vmatpush1.msra.mxu0 0.0
    %7294 = vmatprep.subr.mxu0 0.0
    %7295 = vmatpush1.msra.mxu0 0.0
    %7296 = vmatprep.subr.mxu0 0.0
    %7297 = vmatpush1.msra.mxu0 0.0
    %7298 = vmatprep.subr.mxu0 0.0
    %7299 = vmatpush1.msra.mxu0 0.0
    %7300 = vmatprep.subr.mxu0 0.0
    %7301 = vmatpush1.msra.mxu0 0.0
    %7302 = vmatprep.subr.mxu0 0.0
    %7303 = vmatpush1.msra.mxu0 0.0
    %7304 = vmatprep.subr.mxu0 0.0
    %7305 = vmatpush1.msra.mxu0 0.0
    %7306 = vmatprep.subr.mxu0 0.0
    %7307 = vmatpush1.msra.mxu0 0.0
    %7308 = vmatprep.subr.mxu0 0.0
    %7309 = vmatpush1.msra.mxu0 0.0
    %7310 = vmatprep.subr.mxu0 0.0
    %7311 = vmatpush1.msra.mxu0 0.0
    %7312 = vmatprep.subr.mxu0 0.0
    %7313 = vmatpush1.msra.mxu0 0.0
    %7314 = vmatprep.subr.mxu0 0.0
    %7315 = vmatpush1.msra.mxu0 0.0
    %7316 = vmatprep.subr.mxu0 0.0
    %7317 = vmatpush1.msra.mxu0 0.0
    %7318 = vmatprep.subr.mxu0 0.0
    %7319 = vmatpush1.msra.mxu0 0.0
    %7320 = vmatprep.subr.mxu0 0.0
    %7321 = vmatpush1.msra.mxu0 0.0
    %7322 = vmatprep.subr.mxu0 0.0
    %7323 = vmatpush1.msra.mxu0 0.0
    %7324 = vmatprep.subr.mxu0 0.0
    %7325 = vmatpush1.msra.mxu0 0.0
    %7326 = vmatprep.subr.mxu0 0.0
    %7327 = vmatpush1.msra.mxu0 0.0
    %7328 = vmatprep.mubr.f32.mxu0 0.0
    %v7329 = vand.u32 %v6755, 4294901760
    %7330 = vmatmul.mubr.f32.gmra.mrb[0].mxu0 %v7329
    %v7331 = vpop.f32.mrb[0].mxu0
    %v7332 = vadd.f32 %v7244, %v7331
    %v7333 = vpop.f32.mrb[0].mxu0
    %7334 = vmatprep.mubr.f32.mxu0 0.0
    %v7335 = vand.u32 %v6758, 4294901760
    %7336 = vmatmul.mubr.f32.gmra.mrb[0].mxu0 %v7335
    %v7337 = vpop.f32.mrb[0].mxu0
    %v7338 = vadd.f32 %v7250, %v7337
    %v7339 = vpop.f32.mrb[0].mxu0
    %7340 = vmatprep.mubr.f32.mxu0 0.0
    %v7341 = vand.u32 %v6761, 4294901760
    %7342 = vmatmul.mubr.f32.gmra.mrb[0].mxu0 %v7341
    %v7343 = vpop.f32.mrb[0].mxu0
    %v7344 = vadd.f32 %v7256, %v7343
    %v7345 = vpop.f32.mrb[0].mxu0
    %7346 = vdwg.mxu0
    %v7347 = vmax.f32 %v7332, 0.0
    %v7348 = vmax.f32 %v7338, 0.0
    %v7349 = vmax.f32 %v7344, 0.0
    %v7350 = vld [vmem:[%s7] sm:$0xff]
    %v7351 = vld [vmem:[%s8] sm:$0xff]
    %7353 = vset.pattern.permute.xlu0 0
    %7354 = vperm.xlu0 %7353, %v7351
    %v7355 = vpop.permute.xlu0 %7354
    %vm7357 = vcmask 195584
    %v7359 = vsel %vm7357, %v7350, 0
    %7361 = vmatprep.subr.mxu0 0.0
    %v7362 = vand.u32 %v7347, 4294901760
    %7363 = vmatpush1.msra.mxu0 %v7362
    %7364 = vmatprep.subr.mxu0 0.0
    %v7365 = vand.u32 %v7348, 4294901760
    %7366 = vmatpush1.msra.mxu0 %v7365
    %7367 = vmatprep.subr.mxu0 0.0
    %v7368 = vand.u32 %v7349, 4294901760
    %7369 = vmatpush1.msra.mxu0 %v7368
    %7370 = vmatprep.subr.mxu0 0.0
    %7371 = vmatpush1.msra.mxu0 0.0
    %7372 = vmatprep.subr.mxu0 0.0
    %7373 = vmatpush1.msra.mxu0 0.0
    %7374 = vmatprep.subr.mxu0 0.0
    %7375 = vmatpush1.msra.mxu0 0.0
    %7376 = vmatprep.subr.mxu0 0.0
    %7377 = vmatpush1.msra.mxu0 0.0
    %7378 = vmatprep.subr.mxu0 0.0
    %7379 = vmatpush1.msra.mxu0 0.0
    %7380 = vmatprep.subr.mxu0 0.0
    %7381 = vmatpush1.msra.mxu0 0.0
    %7382 = vmatprep.subr.mxu0 0.0
    %7383 = vmatpush1.msra.mxu0 0.0
    %7384 = vmatprep.subr.mxu0 0.0
    %7385 = vmatpush1.msra.mxu0 0.0
    %7386 = vmatprep.subr.mxu0 0.0
    %7387 = vmatpush1.msra.mxu0 0.0
    %7388 = vmatprep.subr.mxu0 0.0
    %7389 = vmatpush1.msra.mxu0 0.0
    %7390 = vmatprep.subr.mxu0 0.0
    %7391 = vmatpush1.msra.mxu0 0.0
    %7392 = vmatprep.subr.mxu0 0.0
    %7393 = vmatpush1.msra.mxu0 0.0
    %7394 = vmatprep.subr.mxu0 0.0
    %7395 = vmatpush1.msra.mxu0 0.0
    %7396 = vmatprep.subr.mxu0 0.0
    %7397 = vmatpush1.msra.mxu0 0.0
    %7398 = vmatprep.subr.mxu0 0.0
    %7399 = vmatpush1.msra.mxu0 0.0
    %7400 = vmatprep.subr.mxu0 0.0
    %7401 = vmatpush1.msra.mxu0 0.0
    %7402 = vmatprep.subr.mxu0 0.0
    %7403 = vmatpush1.msra.mxu0 0.0
    %7404 = vmatprep.subr.mxu0 0.0
    %7405 = vmatpush1.msra.mxu0 0.0
    %7406 = vmatprep.subr.mxu0 0.0
    %7407 = vmatpush1.msra.mxu0 0.0
    %7408 = vmatprep.subr.mxu0 0.0
    %7409 = vmatpush1.msra.mxu0 0.0
    %7410 = vmatprep.subr.mxu0 0.0
    %7411 = vmatpush1.msra.mxu0 0.0
    %7412 = vmatprep.subr.mxu0 0.0
    %7413 = vmatpush1.msra.mxu0 0.0
    %7414 = vmatprep.subr.mxu0 0.0
    %7415 = vmatpush1.msra.mxu0 0.0
    %7416 = vmatprep.subr.mxu0 0.0
    %7417 = vmatpush1.msra.mxu0 0.0
    %7418 = vmatprep.subr.mxu0 0.0
    %7419 = vmatpush1.msra.mxu0 0.0
    %7420 = vmatprep.subr.mxu0 0.0
    %7421 = vmatpush1.msra.mxu0 0.0
    %7422 = vmatprep.subr.mxu0 0.0
    %7423 = vmatpush1.msra.mxu0 0.0
    %7424 = vmatprep.subr.mxu0 0.0
    %7425 = vmatpush1.msra.mxu0 0.0
    %7426 = vmatprep.subr.mxu0 0.0
    %7427 = vmatpush1.msra.mxu0 0.0
    %7428 = vmatprep.mubr.f32.mxu0 0.0
    %v7429 = vand.u32 %v7359, 4294901760
    %v7430 = vsub.f32 %v7359, %v7429
    %v7431 = vand.u32 %v7430, 4294901760
    %v7432 = vsub.f32 %v7430, %v7431
    %v7433 = vand.u32 %v7432, 4294901760
    %7434 = vmatmul.mubr.f32.gmra.mrb[0].mxu0 %v7433
    %v7435 = vpop.f32.mrb[0].mxu0
    %v7436 = vadd.f32 %v7355, %v7435
    %v7437 = vpop.f32.mrb[0].mxu0
    %7438 = vdwg.mxu0
    %7439 = vmatprep.subr.mxu0 0.0
    %v7440 = vand.u32 %v7347, 4294901760
    %v7441 = vsub.f32 %v7347, %v7440
    %v7442 = vand.u32 %v7441, 4294901760
    %v7443 = vsub.f32 %v7441, %v7442
    %v7444 = vand.u32 %v7443, 4294901760
    %7445 = vmatpush1.msra.mxu0 %v7444
    %7446 = vmatprep.subr.mxu0 0.0
    %v7447 = vand.u32 %v7348, 4294901760
    %v7448 = vsub.f32 %v7348, %v7447
    %v7449 = vand.u32 %v7448, 4294901760
    %v7450 = vsub.f32 %v7448, %v7449
    %v7451 = vand.u32 %v7450, 4294901760
    %7452 = vmatpush1.msra.mxu0 %v7451
    %7453 = vmatprep.subr.mxu0 0.0
    %v7454 = vand.u32 %v7349, 4294901760
    %v7455 = vsub.f32 %v7349, %v7454
    %v7456 = vand.u32 %v7455, 4294901760
    %v7457 = vsub.f32 %v7455, %v7456
    %v7458 = vand.u32 %v7457, 4294901760
    %7459 = vmatpush1.msra.mxu0 %v7458
    %7460 = vmatprep.subr.mxu0 0.0
    %7461 = vmatpush1.msra.mxu0 0.0
    %7462 = vmatprep.subr.mxu0 0.0
    %7463 = vmatpush1.msra.mxu0 0.0
    %7464 = vmatprep.subr.mxu0 0.0
    %7465 = vmatpush1.msra.mxu0 0.0
    %7466 = vmatprep.subr.mxu0 0.0
    %7467 = vmatpush1.msra.mxu0 0.0
    %7468 = vmatprep.subr.mxu0 0.0
    %7469 = vmatpush1.msra.mxu0 0.0
    %7470 = vmatprep.subr.mxu0 0.0
    %7471 = vmatpush1.msra.mxu0 0.0
    %7472 = vmatprep.subr.mxu0 0.0
    %7473 = vmatpush1.msra.mxu0 0.0
    %7474 = vmatprep.subr.mxu0 0.0
    %7475 = vmatpush1.msra.mxu0 0.0
    %7476 = vmatprep.subr.mxu0 0.0
    %7477 = vmatpush1.msra.mxu0 0.0
    %7478 = vmatprep.subr.mxu0 0.0
    %7479 = vmatpush1.msra.mxu0 0.0
    %7480 = vmatprep.subr.mxu0 0.0
    %7481 = vmatpush1.msra.mxu0 0.0
    %7482 = vmatprep.subr.mxu0 0.0
    %7483 = vmatpush1.msra.mxu0 0.0
    %7484 = vmatprep.subr.mxu0 0.0
    %7485 = vmatpush1.msra.mxu0 0.0
    %7486 = vmatprep.subr.mxu0 0.0
    %7487 = vmatpush1.msra.mxu0 0.0
    %7488 = vmatprep.subr.mxu0 0.0
    %7489 = vmatpush1.msra.mxu0 0.0
    %7490 = vmatprep.subr.mxu0 0.0
    %7491 = vmatpush1.msra.mxu0 0.0
    %7492 = vmatprep.subr.mxu0 0.0
    %7493 = vmatpush1.msra.mxu0 0.0
    %7494 = vmatprep.subr.mxu0 0.0
    %7495 = vmatpush1.msra.mxu0 0.0
    %7496 = vmatprep.subr.mxu0 0.0
    %7497 = vmatpush1.msra.mxu0 0.0
    %7498 = vmatprep.subr.mxu0 0.0
    %7499 = vmatpush1.msra.mxu0 0.0
    %7500 = vmatprep.subr.mxu0 0.0
    %7501 = vmatpush1.msra.mxu0 0.0
    %7502 = vmatprep.subr.mxu0 0.0
    %7503 = vmatpush1.msra.mxu0 0.0
    %7504 = vmatprep.subr.mxu0 0.0
    %7505 = vmatpush1.msra.mxu0 0.0
    %7506 = vmatprep.subr.mxu0 0.0
    %7507 = vmatpush1.msra.mxu0 0.0
    %7508 = vmatprep.subr.mxu0 0.0
    %7509 = vmatpush1.msra.mxu0 0.0
    %7510 = vmatprep.subr.mxu0 0.0
    %7511 = vmatpush1.msra.mxu0 0.0
    %7512 = vmatprep.subr.mxu0 0.0
    %7513 = vmatpush1.msra.mxu0 0.0
    %7514 = vmatprep.subr.mxu0 0.0
    %7515 = vmatpush1.msra.mxu0 0.0
    %7516 = vmatprep.subr.mxu0 0.0
    %7517 = vmatpush1.msra.mxu0 0.0
    %7518 = vmatprep.mubr.f32.mxu0 0.0
    %v7519 = vand.u32 %v7359, 4294901760
    %7520 = vmatmul.mubr.f32.gmra.mrb[0].mxu0 %v7519
    %v7521 = vpop.f32.mrb[0].mxu0
    %v7522 = vadd.f32 %v7436, %v7521
    %v7523 = vpop.f32.mrb[0].mxu0
    %7524 = vdwg.mxu0
    %7525 = vmatprep.subr.mxu0 0.0
    %v7526 = vand.u32 %v7347, 4294901760
    %v7527 = vsub.f32 %v7347, %v7526
    %7528 = vmatpush1.msra.mxu0 %v7527
    %7529 = vmatprep.subr.mxu0 0.0
    %v7530 = vand.u32 %v7348, 4294901760
    %v7531 = vsub.f32 %v7348, %v7530
    %7532 = vmatpush1.msra.mxu0 %v7531
    %7533 = vmatprep.subr.mxu0 0.0
    %v7534 = vand.u32 %v7349, 4294901760
    %v7535 = vsub.f32 %v7349, %v7534
    %7536 = vmatpush1.msra.mxu0 %v7535
    %7537 = vmatprep.subr.mxu0 0.0
    %7538 = vmatpush1.msra.mxu0 0.0
    %7539 = vmatprep.subr.mxu0 0.0
    %7540 = vmatpush1.msra.mxu0 0.0
    %7541 = vmatprep.subr.mxu0 0.0
    %7542 = vmatpush1.msra.mxu0 0.0
    %7543 = vmatprep.subr.mxu0 0.0
    %7544 = vmatpush1.msra.mxu0 0.0
    %7545 = vmatprep.subr.mxu0 0.0
    %7546 = vmatpush1.msra.mxu0 0.0
    %7547 = vmatprep.subr.mxu0 0.0
    %7548 = vmatpush1.msra.mxu0 0.0
    %7549 = vmatprep.subr.mxu0 0.0
    %7550 = vmatpush1.msra.mxu0 0.0
    %7551 = vmatprep.subr.mxu0 0.0
    %7552 = vmatpush1.msra.mxu0 0.0
    %7553 = vmatprep.subr.mxu0 0.0
    %7554 = vmatpush1.msra.mxu0 0.0
    %7555 = vmatprep.subr.mxu0 0.0
    %7556 = vmatpush1.msra.mxu0 0.0
    %7557 = vmatprep.subr.mxu0 0.0
    %7558 = vmatpush1.msra.mxu0 0.0
    %7559 = vmatprep.subr.mxu0 0.0
    %7560 = vmatpush1.msra.mxu0 0.0
    %7561 = vmatprep.subr.mxu0 0.0
    %7562 = vmatpush1.msra.mxu0 0.0
    %7563 = vmatprep.subr.mxu0 0.0
    %7564 = vmatpush1.msra.mxu0 0.0
    %7565 = vmatprep.subr.mxu0 0.0
    %7566 = vmatpush1.msra.mxu0 0.0
    %7567 = vmatprep.subr.mxu0 0.0
    %7568 = vmatpush1.msra.mxu0 0.0
    %7569 = vmatprep.subr.mxu0 0.0
    %7570 = vmatpush1.msra.mxu0 0.0
    %7571 = vmatprep.subr.mxu0 0.0
    %7572 = vmatpush1.msra.mxu0 0.0
    %7573 = vmatprep.subr.mxu0 0.0
    %7574 = vmatpush1.msra.mxu0 0.0
    %7575 = vmatprep.subr.mxu0 0.0
    %7576 = vmatpush1.msra.mxu0 0.0
    %7577 = vmatprep.subr.mxu0 0.0
    %7578 = vmatpush1.msra.mxu0 0.0
    %7579 = vmatprep.subr.mxu0 0.0
    %7580 = vmatpush1.msra.mxu0 0.0
    %7581 = vmatprep.subr.mxu0 0.0
    %7582 = vmatpush1.msra.mxu0 0.0
    %7583 = vmatprep.subr.mxu0 0.0
    %7584 = vmatpush1.msra.mxu0 0.0
    %7585 = vmatprep.subr.mxu0 0.0
    %7586 = vmatpush1.msra.mxu0 0.0
    %7587 = vmatprep.subr.mxu0 0.0
    %7588 = vmatpush1.msra.mxu0 0.0
    %7589 = vmatprep.subr.mxu0 0.0
    %7590 = vmatpush1.msra.mxu0 0.0
    %7591 = vmatprep.subr.mxu0 0.0
    %7592 = vmatpush1.msra.mxu0 0.0
    %7593 = vmatprep.subr.mxu0 0.0
    %7594 = vmatpush1.msra.mxu0 0.0
    %7595 = vmatprep.mubr.f32.mxu0 0.0
    %v7596 = vand.u32 %v7359, 4294901760
    %v7597 = vsub.f32 %v7359, %v7596
    %7598 = vmatmul.mubr.f32.gmra.mrb[0].mxu0 %v7597
    %v7599 = vpop.f32.mrb[0].mxu0
    %v7600 = vadd.f32 %v7522, %v7599
    %v7601 = vpop.f32.mrb[0].mxu0
    %7602 = vdwg.mxu0
    %7603 = vmatprep.subr.mxu0 0.0
    %v7604 = vand.u32 %v7347, 4294901760
    %7605 = vmatpush1.msra.mxu0 %v7604
    %7606 = vmatprep.subr.mxu0 0.0
    %v7607 = vand.u32 %v7348, 4294901760
    %7608 = vmatpush1.msra.mxu0 %v7607
    %7609 = vmatprep.subr.mxu0 0.0
    %v7610 = vand.u32 %v7349, 4294901760
    %7611 = vmatpush1.msra.mxu0 %v7610
    %7612 = vmatprep.subr.mxu0 0.0
    %7613 = vmatpush1.msra.mxu0 0.0
    %7614 = vmatprep.subr.mxu0 0.0
    %7615 = vmatpush1.msra.mxu0 0.0
    %7616 = vmatprep.subr.mxu0 0.0
    %7617 = vmatpush1.msra.mxu0 0.0
    %7618 = vmatprep.subr.mxu0 0.0
    %7619 = vmatpush1.msra.mxu0 0.0
    %7620 = vmatprep.subr.mxu0 0.0
    %7621 = vmatpush1.msra.mxu0 0.0
    %7622 = vmatprep.subr.mxu0 0.0
    %7623 = vmatpush1.msra.mxu0 0.0
    %7624 = vmatprep.subr.mxu0 0.0
    %7625 = vmatpush1.msra.mxu0 0.0
    %7626 = vmatprep.subr.mxu0 0.0
    %7627 = vmatpush1.msra.mxu0 0.0
    %7628 = vmatprep.subr.mxu0 0.0
    %7629 = vmatpush1.msra.mxu0 0.0
    %7630 = vmatprep.subr.mxu0 0.0
    %7631 = vmatpush1.msra.mxu0 0.0
    %7632 = vmatprep.subr.mxu0 0.0
    %7633 = vmatpush1.msra.mxu0 0.0
    %7634 = vmatprep.subr.mxu0 0.0
    %7635 = vmatpush1.msra.mxu0 0.0
    %7636 = vmatprep.subr.mxu0 0.0
    %7637 = vmatpush1.msra.mxu0 0.0
    %7638 = vmatprep.subr.mxu0 0.0
    %7639 = vmatpush1.msra.mxu0 0.0
    %7640 = vmatprep.subr.mxu0 0.0
    %7641 = vmatpush1.msra.mxu0 0.0
    %7642 = vmatprep.subr.mxu0 0.0
    %7643 = vmatpush1.msra.mxu0 0.0
    %7644 = vmatprep.subr.mxu0 0.0
    %7645 = vmatpush1.msra.mxu0 0.0
    %7646 = vmatprep.subr.mxu0 0.0
    %7647 = vmatpush1.msra.mxu0 0.0
    %7648 = vmatprep.subr.mxu0 0.0
    %7649 = vmatpush1.msra.mxu0 0.0
    %7650 = vmatprep.subr.mxu0 0.0
    %7651 = vmatpush1.msra.mxu0 0.0
    %7652 = vmatprep.subr.mxu0 0.0
    %7653 = vmatpush1.msra.mxu0 0.0
    %7654 = vmatprep.subr.mxu0 0.0
    %7655 = vmatpush1.msra.mxu0 0.0
    %7656 = vmatprep.subr.mxu0 0.0
    %7657 = vmatpush1.msra.mxu0 0.0
    %7658 = vmatprep.subr.mxu0 0.0
    %7659 = vmatpush1.msra.mxu0 0.0
    %7660 = vmatprep.subr.mxu0 0.0
    %7661 = vmatpush1.msra.mxu0 0.0
    %7662 = vmatprep.subr.mxu0 0.0
    %7663 = vmatpush1.msra.mxu0 0.0
    %7664 = vmatprep.subr.mxu0 0.0
    %7665 = vmatpush1.msra.mxu0 0.0
    %7666 = vmatprep.subr.mxu0 0.0
    %7667 = vmatpush1.msra.mxu0 0.0
    %7668 = vmatprep.subr.mxu0 0.0
    %7669 = vmatpush1.msra.mxu0 0.0
    %7670 = vmatprep.mubr.f32.mxu0 0.0
    %v7671 = vand.u32 %v7359, 4294901760
    %v7672 = vsub.f32 %v7359, %v7671
    %v7673 = vand.u32 %v7672, 4294901760
    %7674 = vmatmul.mubr.f32.gmra.mrb[0].mxu0 %v7673
    %v7675 = vpop.f32.mrb[0].mxu0
    %v7676 = vadd.f32 %v7600, %v7675
    %v7677 = vpop.f32.mrb[0].mxu0
    %7678 = vdwg.mxu0
    %7679 = vmatprep.subr.mxu0 0.0
    %v7680 = vand.u32 %v7347, 4294901760
    %v7681 = vsub.f32 %v7347, %v7680
    %v7682 = vand.u32 %v7681, 4294901760
    %7683 = vmatpush1.msra.mxu0 %v7682
    %7684 = vmatprep.subr.mxu0 0.0
    %v7685 = vand.u32 %v7348, 4294901760
    %v7686 = vsub.f32 %v7348, %v7685
    %v7687 = vand.u32 %v7686, 4294901760
    %7688 = vmatpush1.msra.mxu0 %v7687
    %7689 = vmatprep.subr.mxu0 0.0
    %v7690 = vand.u32 %v7349, 4294901760
    %v7691 = vsub.f32 %v7349, %v7690
    %v7692 = vand.u32 %v7691, 4294901760
    %7693 = vmatpush1.msra.mxu0 %v7692
    %7694 = vmatprep.subr.mxu0 0.0
    %7695 = vmatpush1.msra.mxu0 0.0
    %7696 = vmatprep.subr.mxu0 0.0
    %7697 = vmatpush1.msra.mxu0 0.0
    %7698 = vmatprep.subr.mxu0 0.0
    %7699 = vmatpush1.msra.mxu0 0.0
    %7700 = vmatprep.subr.mxu0 0.0
    %7701 = vmatpush1.msra.mxu0 0.0
    %7702 = vmatprep.subr.mxu0 0.0
    %7703 = vmatpush1.msra.mxu0 0.0
    %7704 = vmatprep.subr.mxu0 0.0
    %7705 = vmatpush1.msra.mxu0 0.0
    %7706 = vmatprep.subr.mxu0 0.0
    %7707 = vmatpush1.msra.mxu0 0.0
    %7708 = vmatprep.subr.mxu0 0.0
    %7709 = vmatpush1.msra.mxu0 0.0
    %7710 = vmatprep.subr.mxu0 0.0
    %7711 = vmatpush1.msra.mxu0 0.0
    %7712 = vmatprep.subr.mxu0 0.0
    %7713 = vmatpush1.msra.mxu0 0.0
    %7714 = vmatprep.subr.mxu0 0.0
    %7715 = vmatpush1.msra.mxu0 0.0
    %7716 = vmatprep.subr.mxu0 0.0
    %7717 = vmatpush1.msra.mxu0 0.0
    %7718 = vmatprep.subr.mxu0 0.0
    %7719 = vmatpush1.msra.mxu0 0.0
    %7720 = vmatprep.subr.mxu0 0.0
    %7721 = vmatpush1.msra.mxu0 0.0
    %7722 = vmatprep.subr.mxu0 0.0
    %7723 = vmatpush1.msra.mxu0 0.0
    %7724 = vmatprep.subr.mxu0 0.0
    %7725 = vmatpush1.msra.mxu0 0.0
    %7726 = vmatprep.subr.mxu0 0.0
    %7727 = vmatpush1.msra.mxu0 0.0
    %7728 = vmatprep.subr.mxu0 0.0
    %7729 = vmatpush1.msra.mxu0 0.0
    %7730 = vmatprep.subr.mxu0 0.0
    %7731 = vmatpush1.msra.mxu0 0.0
    %7732 = vmatprep.subr.mxu0 0.0
    %7733 = vmatpush1.msra.mxu0 0.0
    %7734 = vmatprep.subr.mxu0 0.0
    %7735 = vmatpush1.msra.mxu0 0.0
    %7736 = vmatprep.subr.mxu0 0.0
    %7737 = vmatpush1.msra.mxu0 0.0
    %7738 = vmatprep.subr.mxu0 0.0
    %7739 = vmatpush1.msra.mxu0 0.0
    %7740 = vmatprep.subr.mxu0 0.0
    %7741 = vmatpush1.msra.mxu0 0.0
    %7742 = vmatprep.subr.mxu0 0.0
    %7743 = vmatpush1.msra.mxu0 0.0
    %7744 = vmatprep.subr.mxu0 0.0
    %7745 = vmatpush1.msra.mxu0 0.0
    %7746 = vmatprep.subr.mxu0 0.0
    %7747 = vmatpush1.msra.mxu0 0.0
    %7748 = vmatprep.subr.mxu0 0.0
    %7749 = vmatpush1.msra.mxu0 0.0
    %7750 = vmatprep.subr.mxu0 0.0
    %7751 = vmatpush1.msra.mxu0 0.0
    %7752 = vmatprep.mubr.f32.mxu0 0.0
    %v7753 = vand.u32 %v7359, 4294901760
    %7754 = vmatmul.mubr.f32.gmra.mrb[0].mxu0 %v7753
    %v7755 = vpop.f32.mrb[0].mxu0
    %v7756 = vadd.f32 %v7676, %v7755
    %v7757 = vpop.f32.mrb[0].mxu0
    %7758 = vdwg.mxu0
    %7759 = vmatprep.subr.mxu0 0.0
    %v7760 = vand.u32 %v7347, 4294901760
    %7761 = vmatpush1.msra.mxu0 %v7760
    %7762 = vmatprep.subr.mxu0 0.0
    %v7763 = vand.u32 %v7348, 4294901760
    %7764 = vmatpush1.msra.mxu0 %v7763
    %7765 = vmatprep.subr.mxu0 0.0
    %v7766 = vand.u32 %v7349, 4294901760
    %7767 = vmatpush1.msra.mxu0 %v7766
    %7768 = vmatprep.subr.mxu0 0.0
    %7769 = vmatpush1.msra.mxu0 0.0
    %7770 = vmatprep.subr.mxu0 0.0
    %7771 = vmatpush1.msra.mxu0 0.0
    %7772 = vmatprep.subr.mxu0 0.0
    %7773 = vmatpush1.msra.mxu0 0.0
    %7774 = vmatprep.subr.mxu0 0.0
    %7775 = vmatpush1.msra.mxu0 0.0
    %7776 = vmatprep.subr.mxu0 0.0
    %7777 = vmatpush1.msra.mxu0 0.0
    %7778 = vmatprep.subr.mxu0 0.0
    %7779 = vmatpush1.msra.mxu0 0.0
    %7780 = vmatprep.subr.mxu0 0.0
    %7781 = vmatpush1.msra.mxu0 0.0
    %7782 = vmatprep.subr.mxu0 0.0
    %7783 = vmatpush1.msra.mxu0 0.0
    %7784 = vmatprep.subr.mxu0 0.0
    %7785 = vmatpush1.msra.mxu0 0.0
    %7786 = vmatprep.subr.mxu0 0.0
    %7787 = vmatpush1.msra.mxu0 0.0
    %7788 = vmatprep.subr.mxu0 0.0
    %7789 = vmatpush1.msra.mxu0 0.0
    %7790 = vmatprep.subr.mxu0 0.0
    %7791 = vmatpush1.msra.mxu0 0.0
    %7792 = vmatprep.subr.mxu0 0.0
    %7793 = vmatpush1.msra.mxu0 0.0
    %7794 = vmatprep.subr.mxu0 0.0
    %7795 = vmatpush1.msra.mxu0 0.0
    %7796 = vmatprep.subr.mxu0 0.0
    %7797 = vmatpush1.msra.mxu0 0.0
    %7798 = vmatprep.subr.mxu0 0.0
    %7799 = vmatpush1.msra.mxu0 0.0
    %7800 = vmatprep.subr.mxu0 0.0
    %7801 = vmatpush1.msra.mxu0 0.0
    %7802 = vmatprep.subr.mxu0 0.0
    %7803 = vmatpush1.msra.mxu0 0.0
    %7804 = vmatprep.subr.mxu0 0.0
    %7805 = vmatpush1.msra.mxu0 0.0
    %7806 = vmatprep.subr.mxu0 0.0
    %7807 = vmatpush1.msra.mxu0 0.0
    %7808 = vmatprep.subr.mxu0 0.0
    %7809 = vmatpush1.msra.mxu0 0.0
    %7810 = vmatprep.subr.mxu0 0.0
    %7811 = vmatpush1.msra.mxu0 0.0
    %7812 = vmatprep.subr.mxu0 0.0
    %7813 = vmatpush1.msra.mxu0 0.0
    %7814 = vmatprep.subr.mxu0 0.0
    %7815 = vmatpush1.msra.mxu0 0.0
    %7816 = vmatprep.subr.mxu0 0.0
    %7817 = vmatpush1.msra.mxu0 0.0
    %7818 = vmatprep.subr.mxu0 0.0
    %7819 = vmatpush1.msra.mxu0 0.0
    %7820 = vmatprep.subr.mxu0 0.0
    %7821 = vmatpush1.msra.mxu0 0.0
    %7822 = vmatprep.subr.mxu0 0.0
    %7823 = vmatpush1.msra.mxu0 0.0
    %7824 = vmatprep.subr.mxu0 0.0
    %7825 = vmatpush1.msra.mxu0 0.0
    %7826 = vmatprep.mubr.f32.mxu0 0.0
    %v7827 = vand.u32 %v7359, 4294901760
    %7828 = vmatmul.mubr.f32.gmra.mrb[0].mxu0 %v7827
    %v7829 = vpop.f32.mrb[0].mxu0
    %v7830 = vadd.f32 %v7756, %v7829
    %v7831 = vpop.f32.mrb[0].mxu0
    %7832 = vdwg.mxu0
    %7833 = vst [vmem:[#allocation5] sm:$0xff] %v7830
    // Predicated region
    $region42: #{tpu_custom_call.1} parent=1 // pred_check
      _
    $region43: #{tpu_custom_call.1} parent=1 // pred_check_branch
      %7835 = sbr.rel (0) target = $region45
    $region44: #{tpu_custom_call.1} parent=1 // pred_region
      %s7837 = ssub.s32 128, 128
      %7838 = vsyncadd [#allocation4], %s7837
      %s7840 = sshll.u32 [#allocation5], 4
      %s7841 = int_to_ptr.vmem [resolvable:$true] %s7840
      %7843 = dma.vmem_to_hbm [thread:$0]  %s7841, 128, %s9, [#allocation4]
    $region45: #{tpu_custom_call.1} parent=1 // pred_fallthru
      _
    // Predicated region
    $region46: #{tpu_custom_call.1} parent=1 // pred_check
      _
    $region47: #{tpu_custom_call.1} parent=1 // pred_check_branch
      %7845 = sbr.rel (0) target = $region49
    $region48: #{tpu_custom_call.1} parent=1 // pred_region
      %7846 = dma.done [#allocation4], 128
    $region49: #{tpu_custom_call.1} parent=1 // pred_fallthru
      _
    %7847 = vsyncpa [#allocation3], 1
    %7848 = vsyncpa [#allocation4], 1

</llo_original>
